<compile_context>
chip_gen: v7x
topology: tpu7x:2x2x1
jax: 0.10.0
libtpu: 0.0.40
codegen_flags: <defaults>
</compile_context>

<pallas_src>
import functools
import math

import jax
import jax.numpy as jnp
from jax import lax
from jax.experimental import pallas as pl
from jax.experimental.pallas import tpu as pltpu


# ----------------------------- Pallas kernel ------------------------------

def _head_kernel(x9_ref, w1_ref, g1_ref, b1_ref,
                 wmid_ref, gmid_ref, bmid_ref,
                 wf_ref, bfin_ref, gmat_ref,
                 o_ref, xs_ref,
                 *, H, W, C_in9, C_f, C_out_pad, cnt_inv, eps):
    """Whole HeadModel branch for one (branch, sample) grid step."""
    HW = H * W
    C3 = 3 * C_f
    bf16 = jnp.bfloat16

    def gn_relu(acc, gamma, beta):
        # GroupNorm (biased var) + affine + ReLU, f32 epilogue, FMA form.
        # Group-reduce + per-channel broadcast of both stats is ONE small
        # (2, C) x (C, C) matmul against the block-diagonal membership matrix
        # (was 4 dependent M=1 MXU pushes).
        s1 = jnp.sum(acc, axis=0, keepdims=True)                   # (1, C)
        s2 = jnp.sum(acc * acc, axis=0, keepdims=True)             # (1, C)
        stats = jnp.concatenate([s1, s2], axis=0) * cnt_inv        # (2, C)
        stats_c = jnp.dot(stats, gmat_ref[...],
                          preferred_element_type=jnp.float32)      # (2, C)
        mean_c = stats_c[0:1, :]
        var_c = jnp.maximum(stats_c[1:2, :] - mean_c * mean_c, 0.0)
        inv_c = lax.rsqrt(var_c + eps)
        scale = inv_c * gamma
        shift = beta - mean_c * scale
        return jnp.maximum(acc * scale + shift, 0.0)

    def write_act(act):
        # Single f32 -> bf16 cast, then store the activation into the
        # kx-expanded scratch: xs[h', w, kx*C:(kx+1)*C] = padded_act[h', w+kx].
        # The halo (row 0, row H+1, shifted-out columns) is never written.
        a = act.reshape(H, W, C_f).astype(bf16)
        xs_ref[1:H + 1, 1:W, 0:C_f] = a[:, 0:W - 1, :]        # kx = 0
        xs_ref[1:H + 1, 0:W, C_f:2 * C_f] = a                 # kx = 1
        xs_ref[1:H + 1, 0:W - 1, 2 * C_f:C3] = a[:, 1:W, :]   # kx = 2

    def conv3x3(get_w3, c_out):
        # 3x3 conv (pad=1) as 3 per-ky MXU matmuls with K = 3*C_f.
        acc = jnp.zeros((HW, c_out), jnp.float32)
        for ky in range(3):
            tap = xs_ref[ky:ky + H, :, :].reshape(HW, C3)      # contiguous
            acc = acc + jnp.dot(tap, get_w3(ky),
                                preferred_element_type=jnp.float32)
        return acc

    # Zero ONLY the halo strips each step (tiny), not the whole scratch.
    zrow = jnp.zeros((1, W, C3), bf16)
    xs_ref[0:1, :, :] = zrow
    xs_ref[H + 1:H + 2, :, :] = zrow
    zcol = jnp.zeros((H + 2, 1, C_f), bf16)
    xs_ref[:, 0:1, 0:C_f] = zcol                 # kx=0 block, shifted-in halo
    xs_ref[:, W - 1:W, 2 * C_f:C3] = zcol        # kx=2 block, shifted-in halo

    # ---- layer 1: single K = 9*C_in matmul on the wrapper-built im2col ----
    patch = x9_ref[0].reshape(HW, C_in9)                        # bf16
    acc = jnp.dot(patch, w1_ref[0], preferred_element_type=jnp.float32)
    write_act(gn_relu(acc, g1_ref[0], b1_ref[0]))

    # ---- layers 2..4: ConvNorm + ReLU, intermediates stay in VMEM ---------
    for l in range(3):
        acc = conv3x3(lambda ky, l=l: wmid_ref[l, ky], C_f)
        write_act(gn_relu(acc, gmid_ref[l], bmid_ref[l]))

    # ---- final 3x3 conv with bias, lane-dense (128-padded) output ---------
    acc = conv3x3(lambda ky: wf_ref[0, ky], C_out_pad)
    acc = acc + bfin_ref[0]
    o_ref[...] = acc.reshape(1, H, W, C_out_pad).astype(o_ref.dtype)


# ------------------------------ JAX wrapper --------------------------------

@functools.partial(jax.jit, static_argnames=("groups", "eps"))
def head_forward(params, x_nhwc, *, groups, eps=1e-5):
    """Fused HeadModel forward.  Returns (feature_kernel, feature_cls), NHWC."""
    N, H, W, C_in = x_nhwc.shape
    C_f = params["k1"]["w"].shape[2]
    cko = params["kernel"]["w"].shape[2]
    ncls = params["cls"]["w"].shape[2]
    # TODO(synk): at production sizes pad each branch's output channels to its
    # own multiple of 128 (separate out_shapes) and consider bf16 writeback;
    # at these test shapes both pad to the same 128 so it changes nothing.
    C_out_pad = max(128, ((max(cko, ncls) + 127) // 128) * 128)
    cg = C_f // groups

    # Wrapper-side im2col of the (tiny-channel) input: (N, H, W, 9*C_in),
    # channel index = t*C_in + c with t = ky*3 + kx.
    # TODO(synk): at production C_in=258 pass the padded input directly and do
    # the layer-1 taps in-kernel instead (the 9x im2col HBM amplification is
    # the dominant input cost on v5e); keep im2col only for tiny C_in.
    xp = jnp.pad(x_nhwc, ((0, 0), (1, 1), (1, 1), (0, 0)))
    x9 = jnp.concatenate([xp[:, ky:ky + H, kx:kx + W, :]
                          for ky in range(3) for kx in range(3)],
                         axis=-1).astype(jnp.bfloat16)

    # Stack per-branch params: branch 0 = kernel head, branch 1 = cls head.
    # Dropping the last 2 input channels for the cls branch == zero weight rows.
    w1_k = params["k1"]["w"]                                       # (9, C_in, C_f)
    w1_c = jnp.pad(params["c1"]["w"], ((0, 0), (0, 2), (0, 0)))    # (9, C_in, C_f)
    w1 = jnp.stack([w1_k, w1_c]).reshape(2, 9 * C_in, C_f).astype(jnp.bfloat16)
    g1 = jnp.stack([params["k1"]["gamma"], params["c1"]["gamma"]]).reshape(2, 1, C_f)
    b1 = jnp.stack([params["k1"]["beta"], params["c1"]["beta"]]).reshape(2, 1, C_f)

    names = [f"k{i}" for i in (2, 3, 4)] + [f"c{i}" for i in (2, 3, 4)]
    # Per-ky K-combined weight layout: (layer, ky, 3*C_f, C_f), row = kx*C_f+c.
    wmid = jnp.stack([params[n]["w"] for n in names]) \
              .reshape(6, 3, 3 * C_f, C_f).astype(jnp.bfloat16)
    gmid = jnp.stack([params[n]["gamma"] for n in names]).reshape(6, 1, C_f)
    bmid = jnp.stack([params[n]["beta"] for n in names]).reshape(6, 1, C_f)

    wf = jnp.stack([
        jnp.pad(params["kernel"]["w"], ((0, 0), (0, 0), (0, C_out_pad - cko))),
        jnp.pad(params["cls"]["w"], ((0, 0), (0, 0), (0, C_out_pad - ncls))),
    ]).reshape(2, 3, 3 * C_f, C_out_pad).astype(jnp.bfloat16)
    bfin = jnp.stack([
        jnp.pad(params["kernel"]["b"], (0, C_out_pad - cko)),
        jnp.pad(params["cls"]["b"], (0, C_out_pad - ncls)),
    ]).reshape(2, 1, C_out_pad)

    # Block-diagonal group membership matrix (C_f, C_f): one matmul performs
    # the group reduction AND the per-channel broadcast of the GN statistics.
    gmat = jnp.kron(jnp.eye(groups, dtype=jnp.float32),
                    jnp.ones((cg, cg), jnp.float32))

    kernel = functools.partial(
        _head_kernel, H=H, W=W, C_in9=9 * C_in, C_f=C_f,
        C_out_pad=C_out_pad, cnt_inv=1.0 / float(H * W * cg), eps=eps)

    out = pl.pallas_call(
        kernel,
        out_shape=jax.ShapeDtypeStruct((2 * N, H, W, C_out_pad), jnp.float32),
        grid=(2, N),   # (branch, batch)
        in_specs=[
            pl.BlockSpec((1, H, W, 9 * C_in), lambda b, n: (n, 0, 0, 0)),
            # The weight/param blocks below depend only on the branch axis.
            # TODO(synk): at production C_f=512, add pipeline_mode=pl.Buffered(1)
            # to these grid-invariant specs and tile H into bands so the block
            # budget fits v7x's 64 MiB per-TC VMEM.
            pl.BlockSpec((1, 9 * C_in, C_f), lambda b, n: (b, 0, 0)),
            pl.BlockSpec((1, 1, C_f), lambda b, n: (b, 0, 0)),
            pl.BlockSpec((1, 1, C_f), lambda b, n: (b, 0, 0)),
            pl.BlockSpec((3, 3, 3 * C_f, C_f), lambda b, n: (b, 0, 0, 0)),
            pl.BlockSpec((3, 1, C_f), lambda b, n: (b, 0, 0)),
            pl.BlockSpec((3, 1, C_f), lambda b, n: (b, 0, 0)),
            pl.BlockSpec((1, 3, 3 * C_f, C_out_pad), lambda b, n: (b, 0, 0, 0)),
            pl.BlockSpec((1, 1, C_out_pad), lambda b, n: (b, 0, 0)),
            pl.BlockSpec((C_f, C_f), lambda b, n: (0, 0)),
        ],
        out_specs=pl.BlockSpec((1, H, W, C_out_pad),
                               lambda b, n: (b * N + n, 0, 0, 0)),
        scratch_shapes=[pltpu.VMEM((H + 2, W, 3 * C_f), jnp.bfloat16)],
        compiler_params=pltpu.CompilerParams(
            dimension_semantics=("parallel", "parallel"),
            vmem_limit_bytes=16 * 1024 * 1024,   # honest sizing (~3 MiB used)
        ),
    )(x9, w1, g1, b1, wmid, gmid, bmid, wf, bfin, gmat)

    feature_kernel = out[:N, :, :, :cko]
    feature_cls = out[N:, :, :, :ncls]
    return feature_kernel, feature_cls


# ---------------------------- params & reference ---------------------------

def init_head_params(key, *, chin_in, ch_feature, num_classes, ch_kernel_out):
    """Deterministic synthetic init (shapes match the PyTorch module)."""
    keys = jax.random.split(key, 10)

    def convnorm(k, cin, cout):
        w = jax.random.normal(k, (9, cin, cout), jnp.float32) * 0.05
        return dict(w=w, gamma=jnp.ones((cout,), jnp.float32),
                    beta=jnp.zeros((cout,), jnp.float32))

    return {
        "k1": convnorm(keys[0], chin_in, ch_feature),
        "c1": convnorm(keys[1], chin_in - 2, ch_feature),
        "k2": convnorm(keys[2], ch_feature, ch_feature),
        "c2": convnorm(keys[3], ch_feature, ch_feature),
        "k3": convnorm(keys[4], ch_feature, ch_feature),
        "c3": convnorm(keys[5], ch_feature, ch_feature),
        "k4": convnorm(keys[6], ch_feature, ch_feature),
        "c4": convnorm(keys[7], ch_feature, ch_feature),
        "kernel": dict(
            w=jax.random.normal(keys[8], (9, ch_feature, ch_kernel_out),
                                jnp.float32) * 0.01,
            b=jnp.zeros((ch_kernel_out,), jnp.float32)),
        "cls": dict(
            w=jax.random.normal(keys[9], (9, ch_feature, num_classes),
                                jnp.float32) * 0.01,
            b=jnp.full((num_classes,), math.log(1.0 / 99.0), jnp.float32)),
    }


def reference_forward(params, x_nhwc, *, groups, eps=1e-5):
    """Pure-JAX (XLA) reference with the same bf16 matmul / f32-epilogue numerics."""
    def conv(x, w9, bias=None):
        cin, cout = w9.shape[1], w9.shape[2]
        w = w9.reshape(3, 3, cin, cout).astype(jnp.bfloat16)
        y = lax.conv_general_dilated(
            x.astype(jnp.bfloat16), w, window_strides=(1, 1),
            padding=((1, 1), (1, 1)),
            dimension_numbers=("NHWC", "HWIO", "NHWC"),
            preferred_element_type=jnp.float32)
        return y if bias is None else y + bias

    def gn_relu(x, gamma, beta):
        n, h, w, c = x.shape
        cg = c // groups
        xg = x.reshape(n, h, w, groups, cg)
        mean = jnp.mean(xg, axis=(1, 2, 4), keepdims=True)
        var = jnp.mean((xg - mean) ** 2, axis=(1, 2, 4), keepdims=True)
        xg = (xg - mean) * lax.rsqrt(var + eps)
        return jnp.maximum(xg.reshape(n, h, w, c) * gamma + beta, 0.0)

    fk, fc = x_nhwc, x_nhwc[..., :-2]
    for i in range(1, 5):
        pk, pc = params[f"k{i}"], params[f"c{i}"]
        fk = gn_relu(conv(fk, pk["w"]), pk["gamma"], pk["beta"])
        fc = gn_relu(conv(fc, pc["w"]), pc["gamma"], pc["beta"])
    fk = conv(fk, params["kernel"]["w"], params["kernel"]["b"])
    fc = conv(fc, params["cls"]["w"], params["cls"]["b"])
    return fk, fc


# --------------------------------- main ------------------------------------

if __name__ == "__main__":
    # Small shapes consistent with the module structure.
    N, H, W = 2, 16, 16
    CHIN_IN = 10           # (module default 258)
    CH_FEATURE = 128       # (module default 512); divisible by groups=32
    CH_KERNEL_OUT = 16     # (module default 256)
    NUM_CLASSES = 8        # (module default 80)
    GROUPS = 32            # GroupNorm groups (module default)

    key = jax.random.PRNGKey(0)
    k_x, k_p = jax.random.split(key)

    # PyTorch-style NCHW input, transposed to NHWC for the kernel.
    x_nchw = jax.random.normal(k_x, (N, CHIN_IN, H, W), jnp.float32)
    x_nhwc = jnp.transpose(x_nchw, (0, 2, 3, 1))

    params = init_head_params(k_p, chin_in=CHIN_IN, ch_feature=CH_FEATURE,
                              num_classes=NUM_CLASSES,
                              ch_kernel_out=CH_KERNEL_OUT)

    feat_kernel, feat_cls = head_forward(params, x_nhwc, groups=GROUPS)
    feat_kernel = jax.block_until_ready(feat_kernel)
    feat_cls = jax.block_until_ready(feat_cls)

    assert feat_kernel.shape == (N, H, W, CH_KERNEL_OUT)
    assert feat_cls.shape == (N, H, W, NUM_CLASSES)
    assert bool(jnp.isfinite(feat_kernel).all())
    assert bool(jnp.isfinite(feat_cls).all())

    # Cross-check against the pure-JAX reference (generous tol for bf16 MXU).
    ref_k, ref_c = reference_forward(params, x_nhwc, groups=GROUPS)
    err_k = float(jnp.max(jnp.abs(feat_kernel - ref_k)))
    err_c = float(jnp.max(jnp.abs(feat_cls - ref_c)))
    assert err_k < 4e-2 and err_c < 4e-2, (err_k, err_c)

    print("KERNEL_OK")
</pallas_src>

<mosaic_0001>
module attributes {stable_mosaic.version = 11 : i64} {
  func.func @_head_kernel(%arg0: i32, %arg1: i32, %arg2: memref<1x16x16x90xbf16, #tpu.memory_space<vmem>>, %arg3: memref<1x90x128xbf16, #tpu.memory_space<vmem>>, %arg4: memref<1x1x128xf32, #tpu.memory_space<vmem>>, %arg5: memref<1x1x128xf32, #tpu.memory_space<vmem>>, %arg6: memref<3x3x384x128xbf16, #tpu.memory_space<vmem>>, %arg7: memref<3x1x128xf32, #tpu.memory_space<vmem>>, %arg8: memref<3x1x128xf32, #tpu.memory_space<vmem>>, %arg9: memref<1x3x384x128xbf16, #tpu.memory_space<vmem>>, %arg10: memref<1x1x128xf32, #tpu.memory_space<vmem>>, %arg11: memref<128x128xf32, #tpu.memory_space<vmem>>, %arg12: memref<1x16x16x128xf32, #tpu.memory_space<vmem>>, %arg13: memref<18x16x384xbf16, #tpu.memory_space<vmem>>) attributes {dimension_semantics = [#tpu.dimension_semantics<parallel>, #tpu.dimension_semantics<parallel>], iteration_bounds = array<i64: 2, 2>, scalar_prefetch = 0 : i64, scratch_operands = 1 : i64, tpu.core_type = #tpu.core_type<tc>, window_params = [{transform_indices = @transform_0, window_bounds = array<i64: 1, 16, 16, 90>}, {transform_indices = @transform_1, window_bounds = array<i64: 1, 90, 128>}, {transform_indices = @transform_2, window_bounds = array<i64: 1, 1, 128>}, {transform_indices = @transform_3, window_bounds = array<i64: 1, 1, 128>}, {transform_indices = @transform_4, window_bounds = array<i64: 3, 3, 384, 128>}, {transform_indices = @transform_5, window_bounds = array<i64: 3, 1, 128>}, {transform_indices = @transform_6, window_bounds = array<i64: 3, 1, 128>}, {transform_indices = @transform_7, window_bounds = array<i64: 1, 3, 384, 128>}, {transform_indices = @transform_8, window_bounds = array<i64: 1, 1, 128>}, {pipeline_mode = #tpu.pipeline_mode<synchronous>, transform_indices = @transform_9, window_bounds = array<i64: 128, 128>}, {transform_indices = @transform_10, window_bounds = array<i64: 1, 16, 16, 128>}]} {
    %cst = arith.constant 0.000000e+00 : bf16
    %0 = vector.broadcast %cst : bf16 to vector<1x16x384xbf16>
    %c0 = arith.constant 0 : index
    %c0_0 = arith.constant 0 : index
    %c0_1 = arith.constant 0 : index
    %1 = vector.load %arg13[%c0, %c0_0, %c0_1] : memref<18x16x384xbf16, #tpu.memory_space<vmem>>, vector<1x16x384xbf16>
    tpu.vector_store %arg13[%c0, %c0_0, %c0_1], %0 {strides = array<i32>} : memref<18x16x384xbf16, #tpu.memory_space<vmem>>, vector<1x16x384xbf16>,
    %c17 = arith.constant 17 : index
    %c0_2 = arith.constant 0 : index
    %c0_3 = arith.constant 0 : index
    %2 = vector.load %arg13[%c17, %c0_2, %c0_3] : memref<18x16x384xbf16, #tpu.memory_space<vmem>>, vector<1x16x384xbf16>
    tpu.vector_store %arg13[%c17, %c0_2, %c0_3], %0 {strides = array<i32>} : memref<18x16x384xbf16, #tpu.memory_space<vmem>>, vector<1x16x384xbf16>,
    %cst_4 = arith.constant 0.000000e+00 : bf16
    %3 = vector.broadcast %cst_4 : bf16 to vector<18x1x128xbf16>
    %c0_5 = arith.constant 0 : index
    %c0_6 = arith.constant 0 : index
    %c0_7 = arith.constant 0 : index
    %4 = vector.load %arg13[%c0_5, %c0_6, %c0_7] : memref<18x16x384xbf16, #tpu.memory_space<vmem>>, vector<18x1x128xbf16>
    tpu.vector_store %arg13[%c0_5, %c0_6, %c0_7], %3 {strides = array<i32>} : memref<18x16x384xbf16, #tpu.memory_space<vmem>>, vector<18x1x128xbf16>,
    %c0_8 = arith.constant 0 : index
    %c15 = arith.constant 15 : index
    %c256 = arith.constant 256 : index
    %5 = vector.load %arg13[%c0_8, %c15, %c256] : memref<18x16x384xbf16, #tpu.memory_space<vmem>>, vector<18x1x128xbf16>
    tpu.vector_store %arg13[%c0_8, %c15, %c256], %3 {strides = array<i32>} : memref<18x16x384xbf16, #tpu.memory_space<vmem>>, vector<18x1x128xbf16>,
    %c0_9 = arith.constant 0 : index
    %c0_10 = arith.constant 0 : index
    %c0_11 = arith.constant 0 : index
    %c0_12 = arith.constant 0 : index
    %6 = vector.load %arg2[%c0_9, %c0_10, %c0_11, %c0_12] : memref<1x16x16x90xbf16, #tpu.memory_space<vmem>>, vector<1x16x16x90xbf16>
    %7 = vector.shape_cast %6 : vector<1x16x16x90xbf16> to vector<16x16x90xbf16>
    %8 = vector.shape_cast %7 : vector<16x16x90xbf16> to vector<256x90xbf16>
    %c0_13 = arith.constant 0 : index
    %c0_14 = arith.constant 0 : index
    %c0_15 = arith.constant 0 : index
    %9 = vector.load %arg3[%c0_13, %c0_14, %c0_15] : memref<1x90x128xbf16, #tpu.memory_space<vmem>>, vector<1x90x128xbf16>
    %10 = vector.shape_cast %9 : vector<1x90x128xbf16> to vector<90x128xbf16>
    %cst_16 = arith.constant dense<0.000000e+00> : vector<256x128xf32>
    %11 = tpu.matmul %8, %10, %cst_16 {dimension_numbers = #tpu.dot_dimension_numbers<[1], [0], [0], [1], [0, 0, 1, 1], [], []>} : vector<256x90xbf16>, vector<90x128xbf16>, vector<256x128xf32> -> vector<256x128xf32>
    %c0_17 = arith.constant 0 : index
    %c0_18 = arith.constant 0 : index
    %c0_19 = arith.constant 0 : index
    %12 = vector.load %arg4[%c0_17, %c0_18, %c0_19] : memref<1x1x128xf32, #tpu.memory_space<vmem>>, vector<1x1x128xf32>
    %13 = vector.shape_cast %12 : vector<1x1x128xf32> to vector<1x128xf32>
    %c0_20 = arith.constant 0 : index
    %c0_21 = arith.constant 0 : index
    %c0_22 = arith.constant 0 : index
    %14 = vector.load %arg5[%c0_20, %c0_21, %c0_22] : memref<1x1x128xf32, #tpu.memory_space<vmem>>, vector<1x1x128xf32>
    %15 = vector.shape_cast %14 : vector<1x1x128xf32> to vector<1x128xf32>
    %cst_23 = arith.constant dense<0.000000e+00> : vector<128xf32>
    %16 = vector.multi_reduction <add>, %11, %cst_23 [0] : vector<256x128xf32> to vector<128xf32>
    %17 = vector.shape_cast %16 : vector<128xf32> to vector<1x128xf32>
    %18 = arith.mulf %11, %11 : vector<256x128xf32>
    %cst_24 = arith.constant dense<0.000000e+00> : vector<128xf32>
    %19 = vector.multi_reduction <add>, %18, %cst_24 [0] : vector<256x128xf32> to vector<128xf32>
    %20 = vector.shape_cast %19 : vector<128xf32> to vector<1x128xf32>
    %21 = tpu.concatenate %17, %20 in 0 : vector<1x128xf32>, vector<1x128xf32> -> vector<2x128xf32>
    %cst_25 = arith.constant 9.765625E-4 : f32
    %22 = vector.broadcast %cst_25 : f32 to vector<2x128xf32>
    %23 = arith.mulf %21, %22 : vector<2x128xf32>
    %c0_26 = arith.constant 0 : index
    %c0_27 = arith.constant 0 : index
    %24 = vector.load %arg11[%c0_26, %c0_27] : memref<128x128xf32, #tpu.memory_space<vmem>>, vector<128x128xf32>
    %cst_28 = arith.constant dense<0.000000e+00> : vector<2x128xf32>
    %25 = tpu.matmul %23, %24, %cst_28 {dimension_numbers = #tpu.dot_dimension_numbers<[1], [0], [0], [1], [0, 0, 1, 1], [], []>} : vector<2x128xf32>, vector<128x128xf32>, vector<2x128xf32> -> vector<2x128xf32>
    %26 = vector.extract_strided_slice %25 {offsets = [0, 0], sizes = [1, 128], strides = [1, 1]} : vector<2x128xf32> to vector<1x128xf32>
    %27 = vector.extract_strided_slice %25 {offsets = [1, 0], sizes = [1, 128], strides = [1, 1]} : vector<2x128xf32> to vector<1x128xf32>
    %28 = arith.mulf %26, %26 : vector<1x128xf32>
    %29 = arith.subf %27, %28 : vector<1x128xf32>
    %cst_29 = arith.constant 0.000000e+00 : f32
    %30 = vector.broadcast %cst_29 : f32 to vector<1x128xf32>
    %31 = arith.maximumf %29, %30 : vector<1x128xf32>
    %cst_30 = arith.constant 9.99999974E-6 : f32
    %32 = vector.broadcast %cst_30 : f32 to vector<1x128xf32>
    %33 = arith.addf %31, %32 : vector<1x128xf32>
    %34 = math.rsqrt %33 : vector<1x128xf32>
    %35 = arith.mulf %34, %13 : vector<1x128xf32>
    %36 = arith.mulf %26, %35 : vector<1x128xf32>
    %37 = arith.subf %15, %36 : vector<1x128xf32>
    %38 = vector.broadcast %35 : vector<1x128xf32> to vector<256x128xf32>
    %39 = arith.mulf %11, %38 : vector<256x128xf32>
    %40 = vector.broadcast %37 : vector<1x128xf32> to vector<256x128xf32>
    %41 = arith.addf %39, %40 : vector<256x128xf32>
    %cst_31 = arith.constant 0.000000e+00 : f32
    %42 = vector.broadcast %cst_31 : f32 to vector<256x128xf32>
    %43 = arith.maximumf %41, %42 : vector<256x128xf32>
    %44 = vector.shape_cast %43 : vector<256x128xf32> to vector<16x16x128xf32>
    %45 = arith.truncf %44 : vector<16x16x128xf32> to vector<16x16x128xbf16>
    %46 = vector.extract_strided_slice %45 {offsets = [0, 0, 0], sizes = [16, 15, 128], strides = [1, 1, 1]} : vector<16x16x128xbf16> to vector<16x15x128xbf16>
    %c1 = arith.constant 1 : index
    %c1_32 = arith.constant 1 : index
    %c0_33 = arith.constant 0 : index
    %47 = vector.load %arg13[%c1, %c1_32, %c0_33] : memref<18x16x384xbf16, #tpu.memory_space<vmem>>, vector<16x15x128xbf16>
    tpu.vector_store %arg13[%c1, %c1_32, %c0_33], %46 {strides = array<i32>} : memref<18x16x384xbf16, #tpu.memory_space<vmem>>, vector<16x15x128xbf16>,
    %c1_34 = arith.constant 1 : index
    %c0_35 = arith.constant 0 : index
    %c128 = arith.constant 128 : index
    %48 = vector.load %arg13[%c1_34, %c0_35, %c128] : memref<18x16x384xbf16, #tpu.memory_space<vmem>>, vector<16x16x128xbf16>
    tpu.vector_store %arg13[%c1_34, %c0_35, %c128], %45 {strides = array<i32>} : memref<18x16x384xbf16, #tpu.memory_space<vmem>>, vector<16x16x128xbf16>,
    %49 = vector.extract_strided_slice %45 {offsets = [0, 1, 0], sizes = [16, 15, 128], strides = [1, 1, 1]} : vector<16x16x128xbf16> to vector<16x15x128xbf16>
    %c1_36 = arith.constant 1 : index
    %c0_37 = arith.constant 0 : index
    %c256_38 = arith.constant 256 : index
    %50 = vector.load %arg13[%c1_36, %c0_37, %c256_38] : memref<18x16x384xbf16, #tpu.memory_space<vmem>>, vector<16x15x128xbf16>
    tpu.vector_store %arg13[%c1_36, %c0_37, %c256_38], %49 {strides = array<i32>} : memref<18x16x384xbf16, #tpu.memory_space<vmem>>, vector<16x15x128xbf16>,
    %cst_39 = arith.constant 0.000000e+00 : f32
    %51 = vector.broadcast %cst_39 : f32 to vector<256x128xf32>
    %c0_40 = arith.constant 0 : index
    %c0_41 = arith.constant 0 : index
    %c0_42 = arith.constant 0 : index
    %52 = vector.load %arg13[%c0_40, %c0_41, %c0_42] : memref<18x16x384xbf16, #tpu.memory_space<vmem>>, vector<16x16x384xbf16>
    %53 = vector.shape_cast %52 : vector<16x16x384xbf16> to vector<256x384xbf16>
    %c0_43 = arith.constant 0 : index
    %c0_44 = arith.constant 0 : index
    %c0_45 = arith.constant 0 : index
    %c0_46 = arith.constant 0 : index
    %54 = vector.load %arg6[%c0_43, %c0_44, %c0_45, %c0_46] : memref<3x3x384x128xbf16, #tpu.memory_space<vmem>>, vector<1x1x384x128xbf16>
    %55 = vector.shape_cast %54 : vector<1x1x384x128xbf16> to vector<384x128xbf16>
    %cst_47 = arith.constant dense<0.000000e+00> : vector<256x128xf32>
    %56 = tpu.matmul %53, %55, %cst_47 {dimension_numbers = #tpu.dot_dimension_numbers<[1], [0], [0], [1], [0, 0, 1, 1], [], []>} : vector<256x384xbf16>, vector<384x128xbf16>, vector<256x128xf32> -> vector<256x128xf32>
    %57 = arith.addf %51, %56 : vector<256x128xf32>
    %c1_48 = arith.constant 1 : index
    %c0_49 = arith.constant 0 : index
    %c0_50 = arith.constant 0 : index
    %58 = vector.load %arg13[%c1_48, %c0_49, %c0_50] : memref<18x16x384xbf16, #tpu.memory_space<vmem>>, vector<16x16x384xbf16>
    %59 = vector.shape_cast %58 : vector<16x16x384xbf16> to vector<256x384xbf16>
    %c0_51 = arith.constant 0 : index
    %c1_52 = arith.constant 1 : index
    %c0_53 = arith.constant 0 : index
    %c0_54 = arith.constant 0 : index
    %60 = vector.load %arg6[%c0_51, %c1_52, %c0_53, %c0_54] : memref<3x3x384x128xbf16, #tpu.memory_space<vmem>>, vector<1x1x384x128xbf16>
    %61 = vector.shape_cast %60 : vector<1x1x384x128xbf16> to vector<384x128xbf16>
    %cst_55 = arith.constant dense<0.000000e+00> : vector<256x128xf32>
    %62 = tpu.matmul %59, %61, %cst_55 {dimension_numbers = #tpu.dot_dimension_numbers<[1], [0], [0], [1], [0, 0, 1, 1], [], []>} : vector<256x384xbf16>, vector<384x128xbf16>, vector<256x128xf32> -> vector<256x128xf32>
    %63 = arith.addf %57, %62 : vector<256x128xf32>
    %c2 = arith.constant 2 : index
    %c0_56 = arith.constant 0 : index
    %c0_57 = arith.constant 0 : index
    %64 = vector.load %arg13[%c2, %c0_56, %c0_57] : memref<18x16x384xbf16, #tpu.memory_space<vmem>>, vector<16x16x384xbf16>
    %65 = vector.shape_cast %64 : vector<16x16x384xbf16> to vector<256x384xbf16>
    %c0_58 = arith.constant 0 : index
    %c2_59 = arith.constant 2 : index
    %c0_60 = arith.constant 0 : index
    %c0_61 = arith.constant 0 : index
    %66 = vector.load %arg6[%c0_58, %c2_59, %c0_60, %c0_61] : memref<3x3x384x128xbf16, #tpu.memory_space<vmem>>, vector<1x1x384x128xbf16>
    %67 = vector.shape_cast %66 : vector<1x1x384x128xbf16> to vector<384x128xbf16>
    %cst_62 = arith.constant dense<0.000000e+00> : vector<256x128xf32>
    %68 = tpu.matmul %65, %67, %cst_62 {dimension_numbers = #tpu.dot_dimension_numbers<[1], [0], [0], [1], [0, 0, 1, 1], [], []>} : vector<256x384xbf16>, vector<384x128xbf16>, vector<256x128xf32> -> vector<256x128xf32>
    %69 = arith.addf %63, %68 : vector<256x128xf32>
    %c0_63 = arith.constant 0 : index
    %c0_64 = arith.constant 0 : index
    %c0_65 = arith.constant 0 : index
    %70 = vector.load %arg7[%c0_63, %c0_64, %c0_65] : memref<3x1x128xf32, #tpu.memory_space<vmem>>, vector<1x1x128xf32>
    %71 = vector.shape_cast %70 : vector<1x1x128xf32> to vector<1x128xf32>
    %c0_66 = arith.constant 0 : index
    %c0_67 = arith.constant 0 : index
    %c0_68 = arith.constant 0 : index
    %72 = vector.load %arg8[%c0_66, %c0_67, %c0_68] : memref<3x1x128xf32, #tpu.memory_space<vmem>>, vector<1x1x128xf32>
    %73 = vector.shape_cast %72 : vector<1x1x128xf32> to vector<1x128xf32>
    %cst_69 = arith.constant dense<0.000000e+00> : vector<128xf32>
    %74 = vector.multi_reduction <add>, %69, %cst_69 [0] : vector<256x128xf32> to vector<128xf32>
    %75 = vector.shape_cast %74 : vector<128xf32> to vector<1x128xf32>
    %76 = arith.mulf %69, %69 : vector<256x128xf32>
    %cst_70 = arith.constant dense<0.000000e+00> : vector<128xf32>
    %77 = vector.multi_reduction <add>, %76, %cst_70 [0] : vector<256x128xf32> to vector<128xf32>
    %78 = vector.shape_cast %77 : vector<128xf32> to vector<1x128xf32>
    %79 = tpu.concatenate %75, %78 in 0 : vector<1x128xf32>, vector<1x128xf32> -> vector<2x128xf32>
    %cst_71 = arith.constant 9.765625E-4 : f32
    %80 = vector.broadcast %cst_71 : f32 to vector<2x128xf32>
    %81 = arith.mulf %79, %80 : vector<2x128xf32>
    %c0_72 = arith.constant 0 : index
    %c0_73 = arith.constant 0 : index
    %82 = vector.load %arg11[%c0_72, %c0_73] : memref<128x128xf32, #tpu.memory_space<vmem>>, vector<128x128xf32>
    %cst_74 = arith.constant dense<0.000000e+00> : vector<2x128xf32>
    %83 = tpu.matmul %81, %82, %cst_74 {dimension_numbers = #tpu.dot_dimension_numbers<[1], [0], [0], [1], [0, 0, 1, 1], [], []>} : vector<2x128xf32>, vector<128x128xf32>, vector<2x128xf32> -> vector<2x128xf32>
    %84 = vector.extract_strided_slice %83 {offsets = [0, 0], sizes = [1, 128], strides = [1, 1]} : vector<2x128xf32> to vector<1x128xf32>
    %85 = vector.extract_strided_slice %83 {offsets = [1, 0], sizes = [1, 128], strides = [1, 1]} : vector<2x128xf32> to vector<1x128xf32>
    %86 = arith.mulf %84, %84 : vector<1x128xf32>
    %87 = arith.subf %85, %86 : vector<1x128xf32>
    %cst_75 = arith.constant 0.000000e+00 : f32
    %88 = vector.broadcast %cst_75 : f32 to vector<1x128xf32>
    %89 = arith.maximumf %87, %88 : vector<1x128xf32>
    %cst_76 = arith.constant 9.99999974E-6 : f32
    %90 = vector.broadcast %cst_76 : f32 to vector<1x128xf32>
    %91 = arith.addf %89, %90 : vector<1x128xf32>
    %92 = math.rsqrt %91 : vector<1x128xf32>
    %93 = arith.mulf %92, %71 : vector<1x128xf32>
    %94 = arith.mulf %84, %93 : vector<1x128xf32>
    %95 = arith.subf %73, %94 : vector<1x128xf32>
    %96 = vector.broadcast %93 : vector<1x128xf32> to vector<256x128xf32>
    %97 = arith.mulf %69, %96 : vector<256x128xf32>
    %98 = vector.broadcast %95 : vector<1x128xf32> to vector<256x128xf32>
    %99 = arith.addf %97, %98 : vector<256x128xf32>
    %cst_77 = arith.constant 0.000000e+00 : f32
    %100 = vector.broadcast %cst_77 : f32 to vector<256x128xf32>
    %101 = arith.maximumf %99, %100 : vector<256x128xf32>
    %102 = vector.shape_cast %101 : vector<256x128xf32> to vector<16x16x128xf32>
    %103 = arith.truncf %102 : vector<16x16x128xf32> to vector<16x16x128xbf16>
    %104 = vector.extract_strided_slice %103 {offsets = [0, 0, 0], sizes = [16, 15, 128], strides = [1, 1, 1]} : vector<16x16x128xbf16> to vector<16x15x128xbf16>
    %c1_78 = arith.constant 1 : index
    %c1_79 = arith.constant 1 : index
    %c0_80 = arith.constant 0 : index
    %105 = vector.load %arg13[%c1_78, %c1_79, %c0_80] : memref<18x16x384xbf16, #tpu.memory_space<vmem>>, vector<16x15x128xbf16>
    tpu.vector_store %arg13[%c1_78, %c1_79, %c0_80], %104 {strides = array<i32>} : memref<18x16x384xbf16, #tpu.memory_space<vmem>>, vector<16x15x128xbf16>,
    %c1_81 = arith.constant 1 : index
    %c0_82 = arith.constant 0 : index
    %c128_83 = arith.constant 128 : index
    %106 = vector.load %arg13[%c1_81, %c0_82, %c128_83] : memref<18x16x384xbf16, #tpu.memory_space<vmem>>, vector<16x16x128xbf16>
    tpu.vector_store %arg13[%c1_81, %c0_82, %c128_83], %103 {strides = array<i32>} : memref<18x16x384xbf16, #tpu.memory_space<vmem>>, vector<16x16x128xbf16>,
    %107 = vector.extract_strided_slice %103 {offsets = [0, 1, 0], sizes = [16, 15, 128], strides = [1, 1, 1]} : vector<16x16x128xbf16> to vector<16x15x128xbf16>
    %c1_84 = arith.constant 1 : index
    %c0_85 = arith.constant 0 : index
    %c256_86 = arith.constant 256 : index
    %108 = vector.load %arg13[%c1_84, %c0_85, %c256_86] : memref<18x16x384xbf16, #tpu.memory_space<vmem>>, vector<16x15x128xbf16>
    tpu.vector_store %arg13[%c1_84, %c0_85, %c256_86], %107 {strides = array<i32>} : memref<18x16x384xbf16, #tpu.memory_space<vmem>>, vector<16x15x128xbf16>,
    %cst_87 = arith.constant 0.000000e+00 : f32
    %109 = vector.broadcast %cst_87 : f32 to vector<256x128xf32>
    %c0_88 = arith.constant 0 : index
    %c0_89 = arith.constant 0 : index
    %c0_90 = arith.constant 0 : index
    %110 = vector.load %arg13[%c0_88, %c0_89, %c0_90] : memref<18x16x384xbf16, #tpu.memory_space<vmem>>, vector<16x16x384xbf16>
    %111 = vector.shape_cast %110 : vector<16x16x384xbf16> to vector<256x384xbf16>
    %c1_91 = arith.constant 1 : index
    %c0_92 = arith.constant 0 : index
    %c0_93 = arith.constant 0 : index
    %c0_94 = arith.constant 0 : index
    %112 = vector.load %arg6[%c1_91, %c0_92, %c0_93, %c0_94] : memref<3x3x384x128xbf16, #tpu.memory_space<vmem>>, vector<1x1x384x128xbf16>
    %113 = vector.shape_cast %112 : vector<1x1x384x128xbf16> to vector<384x128xbf16>
    %cst_95 = arith.constant dense<0.000000e+00> : vector<256x128xf32>
    %114 = tpu.matmul %111, %113, %cst_95 {dimension_numbers = #tpu.dot_dimension_numbers<[1], [0], [0], [1], [0, 0, 1, 1], [], []>} : vector<256x384xbf16>, vector<384x128xbf16>, vector<256x128xf32> -> vector<256x128xf32>
    %115 = arith.addf %109, %114 : vector<256x128xf32>
    %c1_96 = arith.constant 1 : index
    %c0_97 = arith.constant 0 : index
    %c0_98 = arith.constant 0 : index
    %116 = vector.load %arg13[%c1_96, %c0_97, %c0_98] : memref<18x16x384xbf16, #tpu.memory_space<vmem>>, vector<16x16x384xbf16>
    %117 = vector.shape_cast %116 : vector<16x16x384xbf16> to vector<256x384xbf16>
    %c1_99 = arith.constant 1 : index
    %c1_100 = arith.constant 1 : index
    %c0_101 = arith.constant 0 : index
    %c0_102 = arith.constant 0 : index
    %118 = vector.load %arg6[%c1_99, %c1_100, %c0_101, %c0_102] : memref<3x3x384x128xbf16, #tpu.memory_space<vmem>>, vector<1x1x384x128xbf16>
    %119 = vector.shape_cast %118 : vector<1x1x384x128xbf16> to vector<384x128xbf16>
    %cst_103 = arith.constant dense<0.000000e+00> : vector<256x128xf32>
    %120 = tpu.matmul %117, %119, %cst_103 {dimension_numbers = #tpu.dot_dimension_numbers<[1], [0], [0], [1], [0, 0, 1, 1], [], []>} : vector<256x384xbf16>, vector<384x128xbf16>, vector<256x128xf32> -> vector<256x128xf32>
    %121 = arith.addf %115, %120 : vector<256x128xf32>
    %c2_104 = arith.constant 2 : index
    %c0_105 = arith.constant 0 : index
    %c0_106 = arith.constant 0 : index
    %122 = vector.load %arg13[%c2_104, %c0_105, %c0_106] : memref<18x16x384xbf16, #tpu.memory_space<vmem>>, vector<16x16x384xbf16>
    %123 = vector.shape_cast %122 : vector<16x16x384xbf16> to vector<256x384xbf16>
    %c1_107 = arith.constant 1 : index
    %c2_108 = arith.constant 2 : index
    %c0_109 = arith.constant 0 : index
    %c0_110 = arith.constant 0 : index
    %124 = vector.load %arg6[%c1_107, %c2_108, %c0_109, %c0_110] : memref<3x3x384x128xbf16, #tpu.memory_space<vmem>>, vector<1x1x384x128xbf16>
    %125 = vector.shape_cast %124 : vector<1x1x384x128xbf16> to vector<384x128xbf16>
    %cst_111 = arith.constant dense<0.000000e+00> : vector<256x128xf32>
    %126 = tpu.matmul %123, %125, %cst_111 {dimension_numbers = #tpu.dot_dimension_numbers<[1], [0], [0], [1], [0, 0, 1, 1], [], []>} : vector<256x384xbf16>, vector<384x128xbf16>, vector<256x128xf32> -> vector<256x128xf32>
    %127 = arith.addf %121, %126 : vector<256x128xf32>
    %c1_112 = arith.constant 1 : index
    %c0_113 = arith.constant 0 : index
    %c0_114 = arith.constant 0 : index
    %128 = vector.load %arg7[%c1_112, %c0_113, %c0_114] : memref<3x1x128xf32, #tpu.memory_space<vmem>>, vector<1x1x128xf32>
    %129 = vector.shape_cast %128 : vector<1x1x128xf32> to vector<1x128xf32>
    %c1_115 = arith.constant 1 : index
    %c0_116 = arith.constant 0 : index
    %c0_117 = arith.constant 0 : index
    %130 = vector.load %arg8[%c1_115, %c0_116, %c0_117] : memref<3x1x128xf32, #tpu.memory_space<vmem>>, vector<1x1x128xf32>
    %131 = vector.shape_cast %130 : vector<1x1x128xf32> to vector<1x128xf32>
    %cst_118 = arith.constant dense<0.000000e+00> : vector<128xf32>
    %132 = vector.multi_reduction <add>, %127, %cst_118 [0] : vector<256x128xf32> to vector<128xf32>
    %133 = vector.shape_cast %132 : vector<128xf32> to vector<1x128xf32>
    %134 = arith.mulf %127, %127 : vector<256x128xf32>
    %cst_119 = arith.constant dense<0.000000e+00> : vector<128xf32>
    %135 = vector.multi_reduction <add>, %134, %cst_119 [0] : vector<256x128xf32> to vector<128xf32>
    %136 = vector.shape_cast %135 : vector<128xf32> to vector<1x128xf32>
    %137 = tpu.concatenate %133, %136 in 0 : vector<1x128xf32>, vector<1x128xf32> -> vector<2x128xf32>
    %cst_120 = arith.constant 9.765625E-4 : f32
    %138 = vector.broadcast %cst_120 : f32 to vector<2x128xf32>
    %139 = arith.mulf %137, %138 : vector<2x128xf32>
    %c0_121 = arith.constant 0 : index
    %c0_122 = arith.constant 0 : index
    %140 = vector.load %arg11[%c0_121, %c0_122] : memref<128x128xf32, #tpu.memory_space<vmem>>, vector<128x128xf32>
    %cst_123 = arith.constant dense<0.000000e+00> : vector<2x128xf32>
    %141 = tpu.matmul %139, %140, %cst_123 {dimension_numbers = #tpu.dot_dimension_numbers<[1], [0], [0], [1], [0, 0, 1, 1], [], []>} : vector<2x128xf32>, vector<128x128xf32>, vector<2x128xf32> -> vector<2x128xf32>
    %142 = vector.extract_strided_slice %141 {offsets = [0, 0], sizes = [1, 128], strides = [1, 1]} : vector<2x128xf32> to vector<1x128xf32>
    %143 = vector.extract_strided_slice %141 {offsets = [1, 0], sizes = [1, 128], strides = [1, 1]} : vector<2x128xf32> to vector<1x128xf32>
    %144 = arith.mulf %142, %142 : vector<1x128xf32>
    %145 = arith.subf %143, %144 : vector<1x128xf32>
    %cst_124 = arith.constant 0.000000e+00 : f32
    %146 = vector.broadcast %cst_124 : f32 to vector<1x128xf32>
    %147 = arith.maximumf %145, %146 : vector<1x128xf32>
    %cst_125 = arith.constant 9.99999974E-6 : f32
    %148 = vector.broadcast %cst_125 : f32 to vector<1x128xf32>
    %149 = arith.addf %147, %148 : vector<1x128xf32>
    %150 = math.rsqrt %149 : vector<1x128xf32>
    %151 = arith.mulf %150, %129 : vector<1x128xf32>
    %152 = arith.mulf %142, %151 : vector<1x128xf32>
    %153 = arith.subf %131, %152 : vector<1x128xf32>
    %154 = vector.broadcast %151 : vector<1x128xf32> to vector<256x128xf32>
    %155 = arith.mulf %127, %154 : vector<256x128xf32>
    %156 = vector.broadcast %153 : vector<1x128xf32> to vector<256x128xf32>
    %157 = arith.addf %155, %156 : vector<256x128xf32>
    %cst_126 = arith.constant 0.000000e+00 : f32
    %158 = vector.broadcast %cst_126 : f32 to vector<256x128xf32>
    %159 = arith.maximumf %157, %158 : vector<256x128xf32>
    %160 = vector.shape_cast %159 : vector<256x128xf32> to vector<16x16x128xf32>
    %161 = arith.truncf %160 : vector<16x16x128xf32> to vector<16x16x128xbf16>
    %162 = vector.extract_strided_slice %161 {offsets = [0, 0, 0], sizes = [16, 15, 128], strides = [1, 1, 1]} : vector<16x16x128xbf16> to vector<16x15x128xbf16>
    %c1_127 = arith.constant 1 : index
    %c1_128 = arith.constant 1 : index
    %c0_129 = arith.constant 0 : index
    %163 = vector.load %arg13[%c1_127, %c1_128, %c0_129] : memref<18x16x384xbf16, #tpu.memory_space<vmem>>, vector<16x15x128xbf16>
    tpu.vector_store %arg13[%c1_127, %c1_128, %c0_129], %162 {strides = array<i32>} : memref<18x16x384xbf16, #tpu.memory_space<vmem>>, vector<16x15x128xbf16>,
    %c1_130 = arith.constant 1 : index
    %c0_131 = arith.constant 0 : index
    %c128_132 = arith.constant 128 : index
    %164 = vector.load %arg13[%c1_130, %c0_131, %c128_132] : memref<18x16x384xbf16, #tpu.memory_space<vmem>>, vector<16x16x128xbf16>
    tpu.vector_store %arg13[%c1_130, %c0_131, %c128_132], %161 {strides = array<i32>} : memref<18x16x384xbf16, #tpu.memory_space<vmem>>, vector<16x16x128xbf16>,
    %165 = vector.extract_strided_slice %161 {offsets = [0, 1, 0], sizes = [16, 15, 128], strides = [1, 1, 1]} : vector<16x16x128xbf16> to vector<16x15x128xbf16>
    %c1_133 = arith.constant 1 : index
    %c0_134 = arith.constant 0 : index
    %c256_135 = arith.constant 256 : index
    %166 = vector.load %arg13[%c1_133, %c0_134, %c256_135] : memref<18x16x384xbf16, #tpu.memory_space<vmem>>, vector<16x15x128xbf16>
    tpu.vector_store %arg13[%c1_133, %c0_134, %c256_135], %165 {strides = array<i32>} : memref<18x16x384xbf16, #tpu.memory_space<vmem>>, vector<16x15x128xbf16>,
    %cst_136 = arith.constant 0.000000e+00 : f32
    %167 = vector.broadcast %cst_136 : f32 to vector<256x128xf32>
    %c0_137 = arith.constant 0 : index
    %c0_138 = arith.constant 0 : index
    %c0_139 = arith.constant 0 : index
    %168 = vector.load %arg13[%c0_137, %c0_138, %c0_139] : memref<18x16x384xbf16, #tpu.memory_space<vmem>>, vector<16x16x384xbf16>
    %169 = vector.shape_cast %168 : vector<16x16x384xbf16> to vector<256x384xbf16>
    %c2_140 = arith.constant 2 : index
    %c0_141 = arith.constant 0 : index
    %c0_142 = arith.constant 0 : index
    %c0_143 = arith.constant 0 : index
    %170 = vector.load %arg6[%c2_140, %c0_141, %c0_142, %c0_143] : memref<3x3x384x128xbf16, #tpu.memory_space<vmem>>, vector<1x1x384x128xbf16>
    %171 = vector.shape_cast %170 : vector<1x1x384x128xbf16> to vector<384x128xbf16>
    %cst_144 = arith.constant dense<0.000000e+00> : vector<256x128xf32>
    %172 = tpu.matmul %169, %171, %cst_144 {dimension_numbers = #tpu.dot_dimension_numbers<[1], [0], [0], [1], [0, 0, 1, 1], [], []>} : vector<256x384xbf16>, vector<384x128xbf16>, vector<256x128xf32> -> vector<256x128xf32>
    %173 = arith.addf %167, %172 : vector<256x128xf32>
    %c1_145 = arith.constant 1 : index
    %c0_146 = arith.constant 0 : index
    %c0_147 = arith.constant 0 : index
    %174 = vector.load %arg13[%c1_145, %c0_146, %c0_147] : memref<18x16x384xbf16, #tpu.memory_space<vmem>>, vector<16x16x384xbf16>
    %175 = vector.shape_cast %174 : vector<16x16x384xbf16> to vector<256x384xbf16>
    %c2_148 = arith.constant 2 : index
    %c1_149 = arith.constant 1 : index
    %c0_150 = arith.constant 0 : index
    %c0_151 = arith.constant 0 : index
    %176 = vector.load %arg6[%c2_148, %c1_149, %c0_150, %c0_151] : memref<3x3x384x128xbf16, #tpu.memory_space<vmem>>, vector<1x1x384x128xbf16>
    %177 = vector.shape_cast %176 : vector<1x1x384x128xbf16> to vector<384x128xbf16>
    %cst_152 = arith.constant dense<0.000000e+00> : vector<256x128xf32>
    %178 = tpu.matmul %175, %177, %cst_152 {dimension_numbers = #tpu.dot_dimension_numbers<[1], [0], [0], [1], [0, 0, 1, 1], [], []>} : vector<256x384xbf16>, vector<384x128xbf16>, vector<256x128xf32> -> vector<256x128xf32>
    %179 = arith.addf %173, %178 : vector<256x128xf32>
    %c2_153 = arith.constant 2 : index
    %c0_154 = arith.constant 0 : index
    %c0_155 = arith.constant 0 : index
    %180 = vector.load %arg13[%c2_153, %c0_154, %c0_155] : memref<18x16x384xbf16, #tpu.memory_space<vmem>>, vector<16x16x384xbf16>
    %181 = vector.shape_cast %180 : vector<16x16x384xbf16> to vector<256x384xbf16>
    %c2_156 = arith.constant 2 : index
    %c2_157 = arith.constant 2 : index
    %c0_158 = arith.constant 0 : index
    %c0_159 = arith.constant 0 : index
    %182 = vector.load %arg6[%c2_156, %c2_157, %c0_158, %c0_159] : memref<3x3x384x128xbf16, #tpu.memory_space<vmem>>, vector<1x1x384x128xbf16>
    %183 = vector.shape_cast %182 : vector<1x1x384x128xbf16> to vector<384x128xbf16>
    %cst_160 = arith.constant dense<0.000000e+00> : vector<256x128xf32>
    %184 = tpu.matmul %181, %183, %cst_160 {dimension_numbers = #tpu.dot_dimension_numbers<[1], [0], [0], [1], [0, 0, 1, 1], [], []>} : vector<256x384xbf16>, vector<384x128xbf16>, vector<256x128xf32> -> vector<256x128xf32>
    %185 = arith.addf %179, %184 : vector<256x128xf32>
    %c2_161 = arith.constant 2 : index
    %c0_162 = arith.constant 0 : index
    %c0_163 = arith.constant 0 : index
    %186 = vector.load %arg7[%c2_161, %c0_162, %c0_163] : memref<3x1x128xf32, #tpu.memory_space<vmem>>, vector<1x1x128xf32>
    %187 = vector.shape_cast %186 : vector<1x1x128xf32> to vector<1x128xf32>
    %c2_164 = arith.constant 2 : index
    %c0_165 = arith.constant 0 : index
    %c0_166 = arith.constant 0 : index
    %188 = vector.load %arg8[%c2_164, %c0_165, %c0_166] : memref<3x1x128xf32, #tpu.memory_space<vmem>>, vector<1x1x128xf32>
    %189 = vector.shape_cast %188 : vector<1x1x128xf32> to vector<1x128xf32>
    %cst_167 = arith.constant dense<0.000000e+00> : vector<128xf32>
    %190 = vector.multi_reduction <add>, %185, %cst_167 [0] : vector<256x128xf32> to vector<128xf32>
    %191 = vector.shape_cast %190 : vector<128xf32> to vector<1x128xf32>
    %192 = arith.mulf %185, %185 : vector<256x128xf32>
    %cst_168 = arith.constant dense<0.000000e+00> : vector<128xf32>
    %193 = vector.multi_reduction <add>, %192, %cst_168 [0] : vector<256x128xf32> to vector<128xf32>
    %194 = vector.shape_cast %193 : vector<128xf32> to vector<1x128xf32>
    %195 = tpu.concatenate %191, %194 in 0 : vector<1x128xf32>, vector<1x128xf32> -> vector<2x128xf32>
    %cst_169 = arith.constant 9.765625E-4 : f32
    %196 = vector.broadcast %cst_169 : f32 to vector<2x128xf32>
    %197 = arith.mulf %195, %196 : vector<2x128xf32>
    %c0_170 = arith.constant 0 : index
    %c0_171 = arith.constant 0 : index
    %198 = vector.load %arg11[%c0_170, %c0_171] : memref<128x128xf32, #tpu.memory_space<vmem>>, vector<128x128xf32>
    %cst_172 = arith.constant dense<0.000000e+00> : vector<2x128xf32>
    %199 = tpu.matmul %197, %198, %cst_172 {dimension_numbers = #tpu.dot_dimension_numbers<[1], [0], [0], [1], [0, 0, 1, 1], [], []>} : vector<2x128xf32>, vector<128x128xf32>, vector<2x128xf32> -> vector<2x128xf32>
    %200 = vector.extract_strided_slice %199 {offsets = [0, 0], sizes = [1, 128], strides = [1, 1]} : vector<2x128xf32> to vector<1x128xf32>
    %201 = vector.extract_strided_slice %199 {offsets = [1, 0], sizes = [1, 128], strides = [1, 1]} : vector<2x128xf32> to vector<1x128xf32>
    %202 = arith.mulf %200, %200 : vector<1x128xf32>
    %203 = arith.subf %201, %202 : vector<1x128xf32>
    %cst_173 = arith.constant 0.000000e+00 : f32
    %204 = vector.broadcast %cst_173 : f32 to vector<1x128xf32>
    %205 = arith.maximumf %203, %204 : vector<1x128xf32>
    %cst_174 = arith.constant 9.99999974E-6 : f32
    %206 = vector.broadcast %cst_174 : f32 to vector<1x128xf32>
    %207 = arith.addf %205, %206 : vector<1x128xf32>
    %208 = math.rsqrt %207 : vector<1x128xf32>
    %209 = arith.mulf %208, %187 : vector<1x128xf32>
    %210 = arith.mulf %200, %209 : vector<1x128xf32>
    %211 = arith.subf %189, %210 : vector<1x128xf32>
    %212 = vector.broadcast %209 : vector<1x128xf32> to vector<256x128xf32>
    %213 = arith.mulf %185, %212 : vector<256x128xf32>
    %214 = vector.broadcast %211 : vector<1x128xf32> to vector<256x128xf32>
    %215 = arith.addf %213, %214 : vector<256x128xf32>
    %cst_175 = arith.constant 0.000000e+00 : f32
    %216 = vector.broadcast %cst_175 : f32 to vector<256x128xf32>
    %217 = arith.maximumf %215, %216 : vector<256x128xf32>
    %218 = vector.shape_cast %217 : vector<256x128xf32> to vector<16x16x128xf32>
    %219 = arith.truncf %218 : vector<16x16x128xf32> to vector<16x16x128xbf16>
    %220 = vector.extract_strided_slice %219 {offsets = [0, 0, 0], sizes = [16, 15, 128], strides = [1, 1, 1]} : vector<16x16x128xbf16> to vector<16x15x128xbf16>
    %c1_176 = arith.constant 1 : index
    %c1_177 = arith.constant 1 : index
    %c0_178 = arith.constant 0 : index
    %221 = vector.load %arg13[%c1_176, %c1_177, %c0_178] : memref<18x16x384xbf16, #tpu.memory_space<vmem>>, vector<16x15x128xbf16>
    tpu.vector_store %arg13[%c1_176, %c1_177, %c0_178], %220 {strides = array<i32>} : memref<18x16x384xbf16, #tpu.memory_space<vmem>>, vector<16x15x128xbf16>,
    %c1_179 = arith.constant 1 : index
    %c0_180 = arith.constant 0 : index
    %c128_181 = arith.constant 128 : index
    %222 = vector.load %arg13[%c1_179, %c0_180, %c128_181] : memref<18x16x384xbf16, #tpu.memory_space<vmem>>, vector<16x16x128xbf16>
    tpu.vector_store %arg13[%c1_179, %c0_180, %c128_181], %219 {strides = array<i32>} : memref<18x16x384xbf16, #tpu.memory_space<vmem>>, vector<16x16x128xbf16>,
    %223 = vector.extract_strided_slice %219 {offsets = [0, 1, 0], sizes = [16, 15, 128], strides = [1, 1, 1]} : vector<16x16x128xbf16> to vector<16x15x128xbf16>
    %c1_182 = arith.constant 1 : index
    %c0_183 = arith.constant 0 : index
    %c256_184 = arith.constant 256 : index
    %224 = vector.load %arg13[%c1_182, %c0_183, %c256_184] : memref<18x16x384xbf16, #tpu.memory_space<vmem>>, vector<16x15x128xbf16>
    tpu.vector_store %arg13[%c1_182, %c0_183, %c256_184], %223 {strides = array<i32>} : memref<18x16x384xbf16, #tpu.memory_space<vmem>>, vector<16x15x128xbf16>,
    %cst_185 = arith.constant 0.000000e+00 : f32
    %225 = vector.broadcast %cst_185 : f32 to vector<256x128xf32>
    %c0_186 = arith.constant 0 : index
    %c0_187 = arith.constant 0 : index
    %c0_188 = arith.constant 0 : index
    %226 = vector.load %arg13[%c0_186, %c0_187, %c0_188] : memref<18x16x384xbf16, #tpu.memory_space<vmem>>, vector<16x16x384xbf16>
    %227 = vector.shape_cast %226 : vector<16x16x384xbf16> to vector<256x384xbf16>
    %c0_189 = arith.constant 0 : index
    %c0_190 = arith.constant 0 : index
    %c0_191 = arith.constant 0 : index
    %c0_192 = arith.constant 0 : index
    %228 = vector.load %arg9[%c0_189, %c0_190, %c0_191, %c0_192] : memref<1x3x384x128xbf16, #tpu.memory_space<vmem>>, vector<1x1x384x128xbf16>
    %229 = vector.shape_cast %228 : vector<1x1x384x128xbf16> to vector<384x128xbf16>
    %cst_193 = arith.constant dense<0.000000e+00> : vector<256x128xf32>
    %230 = tpu.matmul %227, %229, %cst_193 {dimension_numbers = #tpu.dot_dimension_numbers<[1], [0], [0], [1], [0, 0, 1, 1], [], []>} : vector<256x384xbf16>, vector<384x128xbf16>, vector<256x128xf32> -> vector<256x128xf32>
    %231 = arith.addf %225, %230 : vector<256x128xf32>
    %c1_194 = arith.constant 1 : index
    %c0_195 = arith.constant 0 : index
    %c0_196 = arith.constant 0 : index
    %232 = vector.load %arg13[%c1_194, %c0_195, %c0_196] : memref<18x16x384xbf16, #tpu.memory_space<vmem>>, vector<16x16x384xbf16>
    %233 = vector.shape_cast %232 : vector<16x16x384xbf16> to vector<256x384xbf16>
    %c0_197 = arith.constant 0 : index
    %c1_198 = arith.constant 1 : index
    %c0_199 = arith.constant 0 : index
    %c0_200 = arith.constant 0 : index
    %234 = vector.load %arg9[%c0_197, %c1_198, %c0_199, %c0_200] : memref<1x3x384x128xbf16, #tpu.memory_space<vmem>>, vector<1x1x384x128xbf16>
    %235 = vector.shape_cast %234 : vector<1x1x384x128xbf16> to vector<384x128xbf16>
    %cst_201 = arith.constant dense<0.000000e+00> : vector<256x128xf32>
    %236 = tpu.matmul %233, %235, %cst_201 {dimension_numbers = #tpu.dot_dimension_numbers<[1], [0], [0], [1], [0, 0, 1, 1], [], []>} : vector<256x384xbf16>, vector<384x128xbf16>, vector<256x128xf32> -> vector<256x128xf32>
    %237 = arith.addf %231, %236 : vector<256x128xf32>
    %c2_202 = arith.constant 2 : index
    %c0_203 = arith.constant 0 : index
    %c0_204 = arith.constant 0 : index
    %238 = vector.load %arg13[%c2_202, %c0_203, %c0_204] : memref<18x16x384xbf16, #tpu.memory_space<vmem>>, vector<16x16x384xbf16>
    %239 = vector.shape_cast %238 : vector<16x16x384xbf16> to vector<256x384xbf16>
    %c0_205 = arith.constant 0 : index
    %c2_206 = arith.constant 2 : index
    %c0_207 = arith.constant 0 : index
    %c0_208 = arith.constant 0 : index
    %240 = vector.load %arg9[%c0_205, %c2_206, %c0_207, %c0_208] : memref<1x3x384x128xbf16, #tpu.memory_space<vmem>>, vector<1x1x384x128xbf16>
    %241 = vector.shape_cast %240 : vector<1x1x384x128xbf16> to vector<384x128xbf16>
    %cst_209 = arith.constant dense<0.000000e+00> : vector<256x128xf32>
    %242 = tpu.matmul %239, %241, %cst_209 {dimension_numbers = #tpu.dot_dimension_numbers<[1], [0], [0], [1], [0, 0, 1, 1], [], []>} : vector<256x384xbf16>, vector<384x128xbf16>, vector<256x128xf32> -> vector<256x128xf32>
    %243 = arith.addf %237, %242 : vector<256x128xf32>
    %c0_210 = arith.constant 0 : index
    %c0_211 = arith.constant 0 : index
    %c0_212 = arith.constant 0 : index
    %244 = vector.load %arg10[%c0_210, %c0_211, %c0_212] : memref<1x1x128xf32, #tpu.memory_space<vmem>>, vector<1x1x128xf32>
    %245 = vector.shape_cast %244 : vector<1x1x128xf32> to vector<1x128xf32>
    %246 = vector.broadcast %245 : vector<1x128xf32> to vector<256x128xf32>
    %247 = arith.addf %243, %246 : vector<256x128xf32>
    %248 = vector.shape_cast %247 : vector<256x128xf32> to vector<1x16x16x128xf32>
    %c0_213 = arith.constant 0 : index
    %c0_214 = arith.constant 0 : index
    %c0_215 = arith.constant 0 : index
    %c0_216 = arith.constant 0 : index
    %249 = vector.load %arg12[%c0_213, %c0_214, %c0_215, %c0_216] : memref<1x16x16x128xf32, #tpu.memory_space<vmem>>, vector<1x16x16x128xf32>
    tpu.vector_store %arg12[%c0_213, %c0_214, %c0_215, %c0_216], %248 {strides = array<i32>} : memref<1x16x16x128xf32, #tpu.memory_space<vmem>>, vector<1x16x16x128xf32>,
    return
  }
  func.func @transform_0(%arg0: i32, %arg1: i32) -> (i32, i32, i32, i32) {
    %c0_i32 = arith.constant 0 : i32
    %c0_i32_0 = arith.constant 0 : i32
    %c0_i32_1 = arith.constant 0 : i32
    %c0_i32_2 = arith.constant 0 : i32
    return %arg1, %c0_i32, %c0_i32_0, %c0_i32_1 : i32, i32, i32, i32
  }
  func.func @transform_1(%arg0: i32, %arg1: i32) -> (i32, i32, i32) {
    %c0_i32 = arith.constant 0 : i32
    %c0_i32_0 = arith.constant 0 : i32
    %c0_i32_1 = arith.constant 0 : i32
    return %arg0, %c0_i32, %c0_i32_0 : i32, i32, i32
  }
  func.func @transform_2(%arg0: i32, %arg1: i32) -> (i32, i32, i32) {
    %c0_i32 = arith.constant 0 : i32
    %c0_i32_0 = arith.constant 0 : i32
    %c0_i32_1 = arith.constant 0 : i32
    return %arg0, %c0_i32, %c0_i32_0 : i32, i32, i32
  }
  func.func @transform_3(%arg0: i32, %arg1: i32) -> (i32, i32, i32) {
    %c0_i32 = arith.constant 0 : i32
    %c0_i32_0 = arith.constant 0 : i32
    %c0_i32_1 = arith.constant 0 : i32
    return %arg0, %c0_i32, %c0_i32_0 : i32, i32, i32
  }
  func.func @transform_4(%arg0: i32, %arg1: i32) -> (i32, i32, i32, i32) {
    %c0_i32 = arith.constant 0 : i32
    %c0_i32_0 = arith.constant 0 : i32
    %c0_i32_1 = arith.constant 0 : i32
    %c0_i32_2 = arith.constant 0 : i32
    return %arg0, %c0_i32, %c0_i32_0, %c0_i32_1 : i32, i32, i32, i32
  }
  func.func @transform_5(%arg0: i32, %arg1: i32) -> (i32, i32, i32) {
    %c0_i32 = arith.constant 0 : i32
    %c0_i32_0 = arith.constant 0 : i32
    %c0_i32_1 = arith.constant 0 : i32
    return %arg0, %c0_i32, %c0_i32_0 : i32, i32, i32
  }
  func.func @transform_6(%arg0: i32, %arg1: i32) -> (i32, i32, i32) {
    %c0_i32 = arith.constant 0 : i32
    %c0_i32_0 = arith.constant 0 : i32
    %c0_i32_1 = arith.constant 0 : i32
    return %arg0, %c0_i32, %c0_i32_0 : i32, i32, i32
  }
  func.func @transform_7(%arg0: i32, %arg1: i32) -> (i32, i32, i32, i32) {
    %c0_i32 = arith.constant 0 : i32
    %c0_i32_0 = arith.constant 0 : i32
    %c0_i32_1 = arith.constant 0 : i32
    %c0_i32_2 = arith.constant 0 : i32
    return %arg0, %c0_i32, %c0_i32_0, %c0_i32_1 : i32, i32, i32, i32
  }
  func.func @transform_8(%arg0: i32, %arg1: i32) -> (i32, i32, i32) {
    %c0_i32 = arith.constant 0 : i32
    %c0_i32_0 = arith.constant 0 : i32
    %c0_i32_1 = arith.constant 0 : i32
    return %arg0, %c0_i32, %c0_i32_0 : i32, i32, i32
  }
  func.func @transform_9(%arg0: i32, %arg1: i32) -> (i32, i32) {
    %c0_i32 = arith.constant 0 : i32
    %c0_i32_0 = arith.constant 0 : i32
    %c0_i32_1 = arith.constant 0 : i32
    return %c0_i32, %c0_i32_0 : i32, i32
  }
  func.func @transform_10(%arg0: i32, %arg1: i32) -> (i32, i32, i32, i32) {
    %c2_i32 = arith.constant 2 : i32
    %0 = arith.muli %arg0, %c2_i32 : i32
    %1 = arith.addi %0, %arg1 : i32
    %c0_i32 = arith.constant 0 : i32
    %c0_i32_0 = arith.constant 0 : i32
    %c0_i32_1 = arith.constant 0 : i32
    %c0_i32_2 = arith.constant 0 : i32
    return %1, %c0_i32, %c0_i32_0, %c0_i32_1 : i32, i32, i32, i32
  }
}

</mosaic_0001>

<llo_original>
// kernel: head_forward.1
$region0: #{head_forward.1}
  #allocation0 [shape = 'u32[]', space=smem, size = 0x4, offset = 0x4, fixed_abs, tag = 'smem constant byte address 0x4 - core index']
  #allocation1 [shape = 'u32[144,128]{1,0:T(1,128)}', space=vmem, size = 0x12000, scoped, tag = 'internal scratch']
  #allocation2 [shape = 'bf16[18,16,384]{2,1,0:T(16,128)(2,1)}', space=vmem, size = 0x36000, scoped, tag = 'scratch operand']
  %s0 = inlined_call_operand.vmem [shape: bf16[2,16,16,90], index: 0, kind: input, shape index: {}]
  %s1 = inlined_call_operand.vmem [shape: bf16[2,90,128], index: 1, kind: input, shape index: {}]
  %s2 = inlined_call_operand.vmem [shape: f32[2,1,128], index: 2, kind: input, shape index: {}]
  %s3 = inlined_call_operand.vmem [shape: f32[2,1,128], index: 3, kind: input, shape index: {}]
  %s4 = inlined_call_operand.vmem [shape: bf16[6,3,384,128], index: 4, kind: input, shape index: {}]
  %s5 = inlined_call_operand.vmem [shape: f32[6,1,128], index: 5, kind: input, shape index: {}]
  %s6 = inlined_call_operand.vmem [shape: f32[6,1,128], index: 6, kind: input, shape index: {}]
  %s7 = inlined_call_operand.vmem [shape: bf16[2,3,384,128], index: 7, kind: input, shape index: {}]
  %s8 = inlined_call_operand.vmem [shape: f32[2,1,128], index: 8, kind: input, shape index: {}]
  %s9 = inlined_call_operand.vmem [shape: f32[128,128], index: 9, kind: input, shape index: {}]
  %s10 = inlined_call_operand.vmem [shape: f32[4,16,16,128], index: 10, kind: output, shape index: {}]
  %s11 = sld [smem:[#allocation0]]
  $region73: #{head_forward.1} parent=0
    _
  %s13 = ssub.s32 1, %s11
  %s14 = scalar_select 0, %s13, %s11
  loop: start=0, step=1, limit=6
  $region2: #{head_forward.1} parent=0 // loop_pre_header
    _
  $region3: #{head_forward.1} parent=0 // loop_header
    %s16 = sphi 0, %s20
    %p17 = scmp.ge.s32.totalorder %s16, 6
    %s23 = sphi 0, %s35
    %s24 = sphi 0, %s31
    %s25 = sphi 0, %s23
    %s26 = sphi 0, %s24
    %s27 = sphi 0, %s25
    %s28 = sphi 0, %s26
    %s38 = sphi 0, %s40
    %s41 = sphi 0, %s38
    %s42 = sphi 0, %s41
    %s58 = sphi 0, %s42
    %s64 = sphi 0, %s66
    %s67 = sphi 0, %s64
    %s68 = sphi 0, %s67
    %s84 = sphi 0, %s68
    %s90 = sphi 0, %s92
    %s93 = sphi 0, %s90
    %s94 = sphi 0, %s93
    %s110 = sphi 0, %s94
    %s116 = sphi 0, %s118
    %s119 = sphi 0, %s116
    %s120 = sphi 0, %s119
    %s136 = sphi 0, %s120
    %s142 = sphi 0, %s144
    %s145 = sphi 0, %s142
    %s146 = sphi 0, %s145
    %s162 = sphi 0, %s146
    %s168 = sphi 0, %s170
    %s171 = sphi 0, %s168
    %s172 = sphi 0, %s171
    %s188 = sphi 0, %s172
    %s194 = sphi 0, %s196
    %s197 = sphi 0, %s194
    %s198 = sphi 0, %s197
    %s214 = sphi 0, %s198
    %s220 = sphi 0, %s222
    %s223 = sphi 0, %s220
    %s224 = sphi 0, %s223
    %s240 = sphi 0, %s224
    %s246 = sphi 0, %s248
    %s249 = sphi 0, %s246
    %s250 = sphi 0, %s249
    %s266 = sphi 0, %s250
    %s270 = sphi 0, %s270
    %s272 = sphi 0, %s270
    %s273 = sphi 0, %s272
    %s287 = sphi 0, %s273
    %s297 = sphi 0, %s299
    %s300 = sphi 0, %s297
    %s301 = sphi 0, %s300
    %s317 = sphi 0, %s301
  $region4: #{head_forward.1} parent=0 // loop_header_branch
    %19 = sbr.rel (%p17) target = $region8
  $region5: #{head_forward.1} parent=0 // loop_body
    %s21 = ssub.s32 %s16, 1
    %s22 = ssub.s32 %s16, 2
    %s29 = sadd.s32 1, %s24
    %p30 = scmp.ge.s32.totalorder %s29, 2
    %s31 = scalar_select %p30, 0, %s29
    %s32 = sadd.s32 1, %s23
    %s33 = scalar_select %p30, %s32, %s23
    %p34 = scmp.ge.s32.totalorder %s33, 2
    %s35 = scalar_select %p34, 0, %s33
    %s36 = ssub.s32 %s24, %s31
    %p37 = scmp.eq.s32.totalorder %s36, 0
    %s39 = sadd.s32 %s38, 1
    %s40 = scalar_select %p37, %s38, %s39
    %p43 = pneg %p37
    %p44 = scmp.eq.s32.totalorder %s16, 3
    %p45 = por %p43, %p44
    %p46 = scmp.ne.s32.totalorder %s38, %s41
    %p47 = scmp.eq.s32.totalorder %s16, 0
    %p48 = por %p46, %p47
    %p49 = scmp.ne.s32.totalorder %s38, %s41
    %p50 = scmp.eq.s32.totalorder %s21, 3
    %p51 = por %p49, %p50
    %p52 = scmp.ne.s32.totalorder %s41, %s42
    %p53 = scmp.eq.s32.totalorder %s21, 0
    %p54 = por %p52, %p53
    %p55 = scmp.ne.s32.totalorder %s41, %s42
    %p56 = scmp.eq.s32.totalorder %s22, 3
    %p57 = por %p55, %p56
    %p59 = scmp.ne.s32.totalorder %s42, %s58
    %p60 = scmp.eq.s32.totalorder %s22, 0
    %p61 = por %p59, %p60
    %s62 = ssub.s32 %s23, %s35
    %p63 = scmp.eq.s32.totalorder %s62, 0
    %s65 = sadd.s32 %s64, 1
    %s66 = scalar_select %p63, %s64, %s65
    %p69 = pneg %p63
    %p70 = scmp.eq.s32.totalorder %s16, 3
    %p71 = por %p69, %p70
    %p72 = scmp.ne.s32.totalorder %s64, %s67
    %p73 = scmp.eq.s32.totalorder %s16, 0
    %p74 = por %p72, %p73
    %p75 = scmp.ne.s32.totalorder %s64, %s67
    %p76 = scmp.eq.s32.totalorder %s21, 3
    %p77 = por %p75, %p76
    %p78 = scmp.ne.s32.totalorder %s67, %s68
    %p79 = scmp.eq.s32.totalorder %s21, 0
    %p80 = por %p78, %p79
    %p81 = scmp.ne.s32.totalorder %s67, %s68
    %p82 = scmp.eq.s32.totalorder %s22, 3
    %p83 = por %p81, %p82
    %p85 = scmp.ne.s32.totalorder %s68, %s84
    %p86 = scmp.eq.s32.totalorder %s22, 0
    %p87 = por %p85, %p86
    %s88 = ssub.s32 %s23, %s35
    %p89 = scmp.eq.s32.totalorder %s88, 0
    %s91 = sadd.s32 %s90, 1
    %s92 = scalar_select %p89, %s90, %s91
    %p95 = pneg %p89
    %p96 = scmp.eq.s32.totalorder %s16, 3
    %p97 = por %p95, %p96
    %p98 = scmp.ne.s32.totalorder %s90, %s93
    %p99 = scmp.eq.s32.totalorder %s16, 0
    %p100 = por %p98, %p99
    %p101 = scmp.ne.s32.totalorder %s90, %s93
    %p102 = scmp.eq.s32.totalorder %s21, 3
    %p103 = por %p101, %p102
    %p104 = scmp.ne.s32.totalorder %s93, %s94
    %p105 = scmp.eq.s32.totalorder %s21, 0
    %p106 = por %p104, %p105
    %p107 = scmp.ne.s32.totalorder %s93, %s94
    %p108 = scmp.eq.s32.totalorder %s22, 3
    %p109 = por %p107, %p108
    %p111 = scmp.ne.s32.totalorder %s94, %s110
    %p112 = scmp.eq.s32.totalorder %s22, 0
    %p113 = por %p111, %p112
    %s114 = ssub.s32 %s23, %s35
    %p115 = scmp.eq.s32.totalorder %s114, 0
    %s117 = sadd.s32 %s116, 1
    %s118 = scalar_select %p115, %s116, %s117
    %p121 = pneg %p115
    %p122 = scmp.eq.s32.totalorder %s16, 3
    %p123 = por %p121, %p122
    %p124 = scmp.ne.s32.totalorder %s116, %s119
    %p125 = scmp.eq.s32.totalorder %s16, 0
    %p126 = por %p124, %p125
    %p127 = scmp.ne.s32.totalorder %s116, %s119
    %p128 = scmp.eq.s32.totalorder %s21, 3
    %p129 = por %p127, %p128
    %p130 = scmp.ne.s32.totalorder %s119, %s120
    %p131 = scmp.eq.s32.totalorder %s21, 0
    %p132 = por %p130, %p131
    %p133 = scmp.ne.s32.totalorder %s119, %s120
    %p134 = scmp.eq.s32.totalorder %s22, 3
    %p135 = por %p133, %p134
    %p137 = scmp.ne.s32.totalorder %s120, %s136
    %p138 = scmp.eq.s32.totalorder %s22, 0
    %p139 = por %p137, %p138
    %s140 = ssub.s32 %s23, %s35
    %p141 = scmp.eq.s32.totalorder %s140, 0
    %s143 = sadd.s32 %s142, 1
    %s144 = scalar_select %p141, %s142, %s143
    %p147 = pneg %p141
    %p148 = scmp.eq.s32.totalorder %s16, 3
    %p149 = por %p147, %p148
    %p150 = scmp.ne.s32.totalorder %s142, %s145
    %p151 = scmp.eq.s32.totalorder %s16, 0
    %p152 = por %p150, %p151
    %p153 = scmp.ne.s32.totalorder %s142, %s145
    %p154 = scmp.eq.s32.totalorder %s21, 3
    %p155 = por %p153, %p154
    %p156 = scmp.ne.s32.totalorder %s145, %s146
    %p157 = scmp.eq.s32.totalorder %s21, 0
    %p158 = por %p156, %p157
    %p159 = scmp.ne.s32.totalorder %s145, %s146
    %p160 = scmp.eq.s32.totalorder %s22, 3
    %p161 = por %p159, %p160
    %p163 = scmp.ne.s32.totalorder %s146, %s162
    %p164 = scmp.eq.s32.totalorder %s22, 0
    %p165 = por %p163, %p164
    %s166 = ssub.s32 %s23, %s35
    %p167 = scmp.eq.s32.totalorder %s166, 0
    %s169 = sadd.s32 %s168, 1
    %s170 = scalar_select %p167, %s168, %s169
    %p173 = pneg %p167
    %p174 = scmp.eq.s32.totalorder %s16, 3
    %p175 = por %p173, %p174
    %p176 = scmp.ne.s32.totalorder %s168, %s171
    %p177 = scmp.eq.s32.totalorder %s16, 0
    %p178 = por %p176, %p177
    %p179 = scmp.ne.s32.totalorder %s168, %s171
    %p180 = scmp.eq.s32.totalorder %s21, 3
    %p181 = por %p179, %p180
    %p182 = scmp.ne.s32.totalorder %s171, %s172
    %p183 = scmp.eq.s32.totalorder %s21, 0
    %p184 = por %p182, %p183
    %p185 = scmp.ne.s32.totalorder %s171, %s172
    %p186 = scmp.eq.s32.totalorder %s22, 3
    %p187 = por %p185, %p186
    %p189 = scmp.ne.s32.totalorder %s172, %s188
    %p190 = scmp.eq.s32.totalorder %s22, 0
    %p191 = por %p189, %p190
    %s192 = ssub.s32 %s23, %s35
    %p193 = scmp.eq.s32.totalorder %s192, 0
    %s195 = sadd.s32 %s194, 1
    %s196 = scalar_select %p193, %s194, %s195
    %p199 = pneg %p193
    %p200 = scmp.eq.s32.totalorder %s16, 3
    %p201 = por %p199, %p200
    %p202 = scmp.ne.s32.totalorder %s194, %s197
    %p203 = scmp.eq.s32.totalorder %s16, 0
    %p204 = por %p202, %p203
    %p205 = scmp.ne.s32.totalorder %s194, %s197
    %p206 = scmp.eq.s32.totalorder %s21, 3
    %p207 = por %p205, %p206
    %p208 = scmp.ne.s32.totalorder %s197, %s198
    %p209 = scmp.eq.s32.totalorder %s21, 0
    %p210 = por %p208, %p209
    %p211 = scmp.ne.s32.totalorder %s197, %s198
    %p212 = scmp.eq.s32.totalorder %s22, 3
    %p213 = por %p211, %p212
    %p215 = scmp.ne.s32.totalorder %s198, %s214
    %p216 = scmp.eq.s32.totalorder %s22, 0
    %p217 = por %p215, %p216
    %s218 = ssub.s32 %s23, %s35
    %p219 = scmp.eq.s32.totalorder %s218, 0
    %s221 = sadd.s32 %s220, 1
    %s222 = scalar_select %p219, %s220, %s221
    %p225 = pneg %p219
    %p226 = scmp.eq.s32.totalorder %s16, 3
    %p227 = por %p225, %p226
    %p228 = scmp.ne.s32.totalorder %s220, %s223
    %p229 = scmp.eq.s32.totalorder %s16, 0
    %p230 = por %p228, %p229
    %p231 = scmp.ne.s32.totalorder %s220, %s223
    %p232 = scmp.eq.s32.totalorder %s21, 3
    %p233 = por %p231, %p232
    %p234 = scmp.ne.s32.totalorder %s223, %s224
    %p235 = scmp.eq.s32.totalorder %s21, 0
    %p236 = por %p234, %p235
    %p237 = scmp.ne.s32.totalorder %s223, %s224
    %p238 = scmp.eq.s32.totalorder %s22, 3
    %p239 = por %p237, %p238
    %p241 = scmp.ne.s32.totalorder %s224, %s240
    %p242 = scmp.eq.s32.totalorder %s22, 0
    %p243 = por %p241, %p242
    %s244 = ssub.s32 %s23, %s35
    %p245 = scmp.eq.s32.totalorder %s244, 0
    %s247 = sadd.s32 %s246, 1
    %s248 = scalar_select %p245, %s246, %s247
    %p251 = pneg %p245
    %p252 = scmp.eq.s32.totalorder %s16, 3
    %p253 = por %p251, %p252
    %p254 = scmp.ne.s32.totalorder %s246, %s249
    %p255 = scmp.eq.s32.totalorder %s16, 0
    %p256 = por %p254, %p255
    %p257 = scmp.ne.s32.totalorder %s246, %s249
    %p258 = scmp.eq.s32.totalorder %s21, 3
    %p259 = por %p257, %p258
    %p260 = scmp.ne.s32.totalorder %s249, %s250
    %p261 = scmp.eq.s32.totalorder %s21, 0
    %p262 = por %p260, %p261
    %p263 = scmp.ne.s32.totalorder %s249, %s250
    %p264 = scmp.eq.s32.totalorder %s22, 3
    %p265 = por %p263, %p264
    %p267 = scmp.ne.s32.totalorder %s250, %s266
    %p268 = scmp.eq.s32.totalorder %s22, 0
    %p269 = por %p267, %p268
    %s271 = sadd.s32 %s270, 1
    %p274 = scmp.eq.s32.totalorder %s16, 3
    %p275 = scmp.ne.s32.totalorder %s270, %s272
    %p276 = scmp.eq.s32.totalorder %s16, 0
    %p277 = por %p275, %p276
    %p278 = scmp.ne.s32.totalorder %s270, %s272
    %p279 = scmp.eq.s32.totalorder %s21, 3
    %p280 = por %p278, %p279
    %p281 = scmp.ne.s32.totalorder %s272, %s273
    %p282 = scmp.eq.s32.totalorder %s21, 0
    %p283 = por %p281, %p282
    %p284 = scmp.ne.s32.totalorder %s272, %s273
    %p285 = scmp.eq.s32.totalorder %s22, 3
    %p286 = por %p284, %p285
    %p288 = scmp.ne.s32.totalorder %s273, %s287
    %p289 = scmp.eq.s32.totalorder %s22, 0
    %p290 = por %p288, %p289
    %s291 = smul.u32 %s23, 2
    %s292 = sadd.s32 %s291, %s24
    %s293 = smul.u32 %s35, 2
    %s294 = sadd.s32 %s293, %s31
    %s295 = ssub.s32 %s292, %s294
    %p296 = scmp.eq.s32.totalorder %s295, 0
    %s298 = sadd.s32 %s297, 1
    %s299 = scalar_select %p296, %s297, %s298
    %p302 = pneg %p296
    %p303 = scmp.eq.s32.totalorder %s16, 3
    %p304 = por %p302, %p303
    %p305 = scmp.ne.s32.totalorder %s297, %s300
    %p306 = scmp.eq.s32.totalorder %s16, 0
    %p307 = por %p305, %p306
    %p308 = scmp.ne.s32.totalorder %s297, %s300
    %p309 = scmp.eq.s32.totalorder %s21, 3
    %p310 = por %p308, %p309
    %p311 = scmp.ne.s32.totalorder %s300, %s301
    %p312 = scmp.eq.s32.totalorder %s21, 0
    %p313 = por %p311, %p312
    %p314 = scmp.ne.s32.totalorder %s300, %s301
    %p315 = scmp.eq.s32.totalorder %s22, 3
    %p316 = por %p314, %p315
    %p318 = scmp.ne.s32.totalorder %s301, %s317
    %p319 = scmp.eq.s32.totalorder %s22, 0
    %p320 = por %p318, %p319
    %p321 = scmp.le.s32.totalorder 1, %s16
    %p322 = scmp.lt.s32.totalorder %s16, 5
    %p323 = pnand %p321, %p322
    %p324 = pneg %p323
    // Predicated region
    $region9: #{head_forward.1} parent=5 // pred_check
      _
    $region10: #{head_forward.1} parent=5 // pred_check_branch
      %326 = sbr.rel (%p323) target = $region12
    $region11: #{head_forward.1} parent=5 // pred_region
      %s327 = ssub.s32 %s16, 1
      // Predicated region
      $region13: #{head_forward.1} parent=11 // pred_check
        %p328 = pneg %p283
      $region14: #{head_forward.1} parent=11 // pred_check_branch
        %330 = sbr.rel (%p328) target = $region16
      $region15: #{head_forward.1} parent=11 // pred_region
        _
      $region16: #{head_forward.1} parent=11 // pred_fallthru
        _
    $region12: #{head_forward.1} parent=5 // pred_fallthru
      _
    %p331 = scmp.lt.s32.totalorder %s16, 4
    // Predicated region
    $region17: #{head_forward.1} parent=5 // pred_check
      %p332 = pneg %p331
    $region18: #{head_forward.1} parent=5 // pred_check_branch
      %334 = sbr.rel (%p332) target = $region20
    $region19: #{head_forward.1} parent=5 // pred_region
      // Predicated region
      $region21: #{head_forward.1} parent=19 // pred_check
        %p335 = pneg %p48
      $region22: #{head_forward.1} parent=19 // pred_check_branch
        %337 = sbr.rel (%p335) target = $region24
      $region23: #{head_forward.1} parent=19 // pred_region
        %p338 = scmp.lt.s32.totalorder %s24, 1
        %s339 = scalar_select %p338, %s24, 1
        %s340 = smul.addr %s339, 32
        %s341 = smul.addr %s340, 4
        %s342 = scalar_lea.vmem %s0, %s341
      $region24: #{head_forward.1} parent=19 // pred_fallthru
        _
      // Predicated region
      $region25: #{head_forward.1} parent=19 // pred_check
        %p343 = pneg %p74
      $region26: #{head_forward.1} parent=19 // pred_check_branch
        %345 = sbr.rel (%p343) target = $region28
      $region27: #{head_forward.1} parent=19 // pred_region
        %p346 = scmp.lt.s32.totalorder %s23, 1
        %s347 = scalar_select %p346, %s23, 1
        %s348 = smul.addr %s347, 12
        %s349 = smul.addr %s348, 4
        %s350 = scalar_lea.vmem %s1, %s349
      $region28: #{head_forward.1} parent=19 // pred_fallthru
        _
      // Predicated region
      $region29: #{head_forward.1} parent=19 // pred_check
        %p351 = pneg %p100
      $region30: #{head_forward.1} parent=19 // pred_check_branch
        %353 = sbr.rel (%p351) target = $region32
      $region31: #{head_forward.1} parent=19 // pred_region
        %p354 = scmp.lt.s32.totalorder %s23, 1
        %s355 = scalar_select %p354, %s23, 1
        %s356 = scalar_lea.vmem %s2, %s355
      $region32: #{head_forward.1} parent=19 // pred_fallthru
        _
      // Predicated region
      $region33: #{head_forward.1} parent=19 // pred_check
        %p357 = pneg %p126
      $region34: #{head_forward.1} parent=19 // pred_check_branch
        %359 = sbr.rel (%p357) target = $region36
      $region35: #{head_forward.1} parent=19 // pred_region
        %p360 = scmp.lt.s32.totalorder %s23, 1
        %s361 = scalar_select %p360, %s23, 1
        %s362 = scalar_lea.vmem %s3, %s361
      $region36: #{head_forward.1} parent=19 // pred_fallthru
        _
      // Predicated region
      $region37: #{head_forward.1} parent=19 // pred_check
        %p363 = pneg %p152
      $region38: #{head_forward.1} parent=19 // pred_check_branch
        %365 = sbr.rel (%p363) target = $region40
      $region39: #{head_forward.1} parent=19 // pred_region
        %s366 = smul.u32 3, %s23
        %p367 = scmp.lt.s32.totalorder %s366, 5
        %s368 = scalar_select %p367, %s366, 5
        %s369 = smul.addr %s368, 144
        %s370 = smul.addr %s369, 4
        %s371 = scalar_lea.vmem %s4, %s370
        %s372 = smul.u32 3, %s23
      $region40: #{head_forward.1} parent=19 // pred_fallthru
        _
      // Predicated region
      $region41: #{head_forward.1} parent=19 // pred_check
        %p373 = pneg %p178
      $region42: #{head_forward.1} parent=19 // pred_check_branch
        %375 = sbr.rel (%p373) target = $region44
      $region43: #{head_forward.1} parent=19 // pred_region
        %s376 = smul.u32 3, %s23
        %p377 = scmp.lt.s32.totalorder %s376, 5
        %s378 = scalar_select %p377, %s376, 5
        %s379 = scalar_lea.vmem %s5, %s378
        %s380 = smul.u32 3, %s23
      $region44: #{head_forward.1} parent=19 // pred_fallthru
        _
      // Predicated region
      $region45: #{head_forward.1} parent=19 // pred_check
        %p381 = pneg %p204
      $region46: #{head_forward.1} parent=19 // pred_check_branch
        %383 = sbr.rel (%p381) target = $region48
      $region47: #{head_forward.1} parent=19 // pred_region
        %s384 = smul.u32 3, %s23
        %p385 = scmp.lt.s32.totalorder %s384, 5
        %s386 = scalar_select %p385, %s384, 5
        %s387 = scalar_lea.vmem %s6, %s386
        %s388 = smul.u32 3, %s23
      $region48: #{head_forward.1} parent=19 // pred_fallthru
        _
      // Predicated region
      $region49: #{head_forward.1} parent=19 // pred_check
        %p389 = pneg %p230
      $region50: #{head_forward.1} parent=19 // pred_check_branch
        %391 = sbr.rel (%p389) target = $region52
      $region51: #{head_forward.1} parent=19 // pred_region
        %p392 = scmp.lt.s32.totalorder %s23, 1
        %s393 = scalar_select %p392, %s23, 1
        %s394 = smul.addr %s393, 144
        %s395 = smul.addr %s394, 4
        %s396 = scalar_lea.vmem %s7, %s395
      $region52: #{head_forward.1} parent=19 // pred_fallthru
        _
      // Predicated region
      $region53: #{head_forward.1} parent=19 // pred_check
        %p397 = pneg %p256
      $region54: #{head_forward.1} parent=19 // pred_check_branch
        %399 = sbr.rel (%p397) target = $region56
      $region55: #{head_forward.1} parent=19 // pred_region
        %p400 = scmp.lt.s32.totalorder %s23, 1
        %s401 = scalar_select %p400, %s23, 1
        %s402 = scalar_lea.vmem %s8, %s401
      $region56: #{head_forward.1} parent=19 // pred_fallthru
        _
    $region20: #{head_forward.1} parent=5 // pred_fallthru
      _
    %p403 = scmp.le.s32.totalorder 1, %s16
    %p404 = scmp.lt.s32.totalorder %s16, 5
    %p405 = pnand %p403, %p404
    %p406 = pneg %p405
    // Predicated region
    $region57: #{head_forward.1} parent=5 // pred_check
      _
    $region58: #{head_forward.1} parent=5 // pred_check_branch
      %408 = sbr.rel (%p405) target = $region60
    $region59: #{head_forward.1} parent=5 // pred_region
      %s409 = ssub.s32 %s16, 1
      %p410 = scmp.lt.s32.totalorder %s26, 1
      %s411 = scalar_select %p410, %s26, 1
      %s412 = smul.addr %s411, 32
      %s413 = smul.addr %s412, 4
      %s414 = scalar_lea.vmem %s0, %s413
      %p415 = pneg %p54
      %p416 = pneg %p51
      %p417 = scmp.lt.s32.totalorder %s25, 1
      %s418 = scalar_select %p417, %s25, 1
      %s419 = smul.addr %s418, 12
      %s420 = smul.addr %s419, 4
      %s421 = scalar_lea.vmem %s1, %s420
      %p422 = pneg %p80
      %p423 = pneg %p77
      %p424 = scmp.lt.s32.totalorder %s25, 1
      %s425 = scalar_select %p424, %s25, 1
      %s426 = scalar_lea.vmem %s2, %s425
      %p427 = pneg %p106
      %p428 = pneg %p103
      %p429 = scmp.lt.s32.totalorder %s25, 1
      %s430 = scalar_select %p429, %s25, 1
      %s431 = scalar_lea.vmem %s3, %s430
      %p432 = pneg %p132
      %p433 = pneg %p129
      %s434 = smul.u32 3, %s25
      %p435 = scmp.lt.s32.totalorder %s434, 5
      %s436 = scalar_select %p435, %s434, 5
      %s437 = smul.addr %s436, 144
      %s438 = smul.addr %s437, 4
      %s439 = scalar_lea.vmem %s4, %s438
      %p440 = pneg %p158
      %p441 = pneg %p155
      %s442 = smul.u32 3, %s25
      %p443 = scmp.lt.s32.totalorder %s442, 5
      %s444 = scalar_select %p443, %s442, 5
      %s445 = scalar_lea.vmem %s5, %s444
      %p446 = pneg %p184
      %p447 = pneg %p181
      %s448 = smul.u32 3, %s25
      %p449 = scmp.lt.s32.totalorder %s448, 5
      %s450 = scalar_select %p449, %s448, 5
      %s451 = scalar_lea.vmem %s6, %s450
      %p452 = pneg %p210
      %p453 = pneg %p207
      %p454 = scmp.lt.s32.totalorder %s25, 1
      %s455 = scalar_select %p454, %s25, 1
      %s456 = smul.addr %s455, 144
      %s457 = smul.addr %s456, 4
      %s458 = scalar_lea.vmem %s7, %s457
      %p459 = pneg %p236
      %p460 = pneg %p233
      %p461 = scmp.lt.s32.totalorder %s25, 1
      %s462 = scalar_select %p461, %s25, 1
      %s463 = scalar_lea.vmem %s8, %s462
      %p464 = pneg %p262
      %p465 = pneg %p259
      %p466 = pneg %p283
      %p467 = pneg %p280
      %p468 = pneg %p313
      %p469 = pneg %p310
      %s470 = smul.u32 %s25, 2
      %s471 = sadd.s32 %s470, %s26
      %p472 = scmp.lt.s32.totalorder %s471, 3
      %s473 = scalar_select %p472, %s471, 3
      %s474 = smul.addr %s473, 32
      %s475 = smul.addr %s474, 8
      %s476 = scalar_lea.vmem %s10, %s475
      %p477 = scmp.lt.s32.totalorder %s26, 1
      %s478 = scalar_select %p477, %s26, 1
      %s479 = smul.addr %s478, 32
      %s480 = smul.addr %s479, 4
      %s481 = scalar_lea.vmem %s0, %s480
      %p482 = scmp.lt.s32.totalorder %s25, 1
      %s483 = scalar_select %p482, %s25, 1
      %s484 = smul.addr %s483, 12
      %s485 = smul.addr %s484, 4
      %s486 = scalar_lea.vmem %s1, %s485
      %p487 = scmp.lt.s32.totalorder %s25, 1
      %s488 = scalar_select %p487, %s25, 1
      %s489 = scalar_lea.vmem %s2, %s488
      %p490 = scmp.lt.s32.totalorder %s25, 1
      %s491 = scalar_select %p490, %s25, 1
      %s492 = scalar_lea.vmem %s3, %s491
      %s493 = smul.u32 3, %s25
      %p494 = scmp.lt.s32.totalorder %s493, 5
      %s495 = scalar_select %p494, %s493, 5
      %s496 = smul.addr %s495, 144
      %s497 = smul.addr %s496, 4
      %s498 = scalar_lea.vmem %s4, %s497
      %s499 = smul.u32 3, %s25
      %s500 = smul.u32 3, %s25
      %p501 = scmp.lt.s32.totalorder %s500, 5
      %s502 = scalar_select %p501, %s500, 5
      %s503 = scalar_lea.vmem %s5, %s502
      %s504 = smul.u32 3, %s25
      %s505 = smul.u32 3, %s25
      %p506 = scmp.lt.s32.totalorder %s505, 5
      %s507 = scalar_select %p506, %s505, 5
      %s508 = scalar_lea.vmem %s6, %s507
      %s509 = smul.u32 3, %s25
      %p510 = scmp.lt.s32.totalorder %s25, 1
      %s511 = scalar_select %p510, %s25, 1
      %s512 = smul.addr %s511, 144
      %s513 = smul.addr %s512, 4
      %s514 = scalar_lea.vmem %s7, %s513
      %p515 = scmp.lt.s32.totalorder %s25, 1
      %s516 = scalar_select %p515, %s25, 1
      %s517 = scalar_lea.vmem %s8, %s516
      %s518 = smul.u32 %s25, 2
      %s519 = sadd.s32 %s518, %s26
      %p520 = scmp.lt.s32.totalorder %s519, 3
      %s521 = scalar_select %p520, %s519, 3
      %s522 = smul.addr %s521, 32
      %s523 = smul.addr %s522, 8
      %s524 = scalar_lea.vmem %s10, %s523
      %s525 = smul.u32 %s25, 2
      %s526 = sadd.s32 %s525, %s26
      %528 = vst [vmem:[#allocation2] sm:$0xff] 0
      %529 = vst [vmem:[#allocation2 + $0x8] sm:$0xff] 0
      %530 = vst [vmem:[#allocation2 + $0x10] sm:$0xff] 0
      %s531 = scalar_lea.vmem [#allocation2], 408
      %532 = vst [vmem:[%s531] sm:$0xff] 0
      %533 = vst [vmem:[%s531 + $0x8] sm:$0xff] 0
      %534 = vst [vmem:[%s531 + $0x10] sm:$0xff] 0
      %vm535 = vcmask 1040384
      %vm536 = vsmask.f32 256
      %vm537 = vmand %vm535, %vm536
      %v538 = vld [vmem:[#allocation2] sm:$0x1]
      %v539 = vsel %vm537, 0, %v538
      %540 = vst [vmem:[#allocation2] sm:$0x1] %v539
      %v541 = vld [vmem:[#allocation2 + $0x18] sm:$0x1]
      %v542 = vsel %vm537, 0, %v541
      %543 = vst [vmem:[#allocation2 + $0x18] sm:$0x1] %v542
      %v544 = vld [vmem:[#allocation2 + $0x30] sm:$0x1]
      %v545 = vsel %vm537, 0, %v544
      %546 = vst [vmem:[#allocation2 + $0x30] sm:$0x1] %v545
      %v547 = vld [vmem:[#allocation2 + $0x48] sm:$0x1]
      %v548 = vsel %vm537, 0, %v547
      %549 = vst [vmem:[#allocation2 + $0x48] sm:$0x1] %v548
      %v550 = vld [vmem:[#allocation2 + $0x60] sm:$0x1]
      %v551 = vsel %vm537, 0, %v550
      %552 = vst [vmem:[#allocation2 + $0x60] sm:$0x1] %v551
      %v553 = vld [vmem:[#allocation2 + $0x78] sm:$0x1]
      %v554 = vsel %vm537, 0, %v553
      %555 = vst [vmem:[#allocation2 + $0x78] sm:$0x1] %v554
      %v556 = vld [vmem:[#allocation2 + $0x90] sm:$0x1]
      %v557 = vsel %vm537, 0, %v556
      %558 = vst [vmem:[#allocation2 + $0x90] sm:$0x1] %v557
      %v559 = vld [vmem:[#allocation2 + $0xa8] sm:$0x1]
      %v560 = vsel %vm537, 0, %v559
      %561 = vst [vmem:[#allocation2 + $0xa8] sm:$0x1] %v560
      %v562 = vld [vmem:[#allocation2 + $0xc0] sm:$0x1]
      %v563 = vsel %vm537, 0, %v562
      %564 = vst [vmem:[#allocation2 + $0xc0] sm:$0x1] %v563
      %v565 = vld [vmem:[#allocation2 + $0xd8] sm:$0x1]
      %v566 = vsel %vm537, 0, %v565
      %567 = vst [vmem:[#allocation2 + $0xd8] sm:$0x1] %v566
      %v568 = vld [vmem:[#allocation2 + $0xf0] sm:$0x1]
      %v569 = vsel %vm537, 0, %v568
      %570 = vst [vmem:[#allocation2 + $0xf0] sm:$0x1] %v569
      %v571 = vld [vmem:[#allocation2 + $0x108] sm:$0x1]
      %v572 = vsel %vm537, 0, %v571
      %573 = vst [vmem:[#allocation2 + $0x108] sm:$0x1] %v572
      %v574 = vld [vmem:[#allocation2 + $0x120] sm:$0x1]
      %v575 = vsel %vm537, 0, %v574
      %576 = vst [vmem:[#allocation2 + $0x120] sm:$0x1] %v575
      %v577 = vld [vmem:[#allocation2 + $0x138] sm:$0x1]
      %v578 = vsel %vm537, 0, %v577
      %579 = vst [vmem:[#allocation2 + $0x138] sm:$0x1] %v578
      %v580 = vld [vmem:[#allocation2 + $0x150] sm:$0x1]
      %v581 = vsel %vm537, 0, %v580
      %582 = vst [vmem:[#allocation2 + $0x150] sm:$0x1] %v581
      %v583 = vld [vmem:[#allocation2 + $0x168] sm:$0x1]
      %v584 = vsel %vm537, 0, %v583
      %585 = vst [vmem:[#allocation2 + $0x168] sm:$0x1] %v584
      %v586 = vld [vmem:[#allocation2 + $0x180] sm:$0x1]
      %v587 = vsel %vm537, 0, %v586
      %588 = vst [vmem:[#allocation2 + $0x180] sm:$0x1] %v587
      %v589 = vld [vmem:[#allocation2 + $0x198] sm:$0x1]
      %v590 = vsel %vm537, 0, %v589
      %591 = vst [vmem:[#allocation2 + $0x198] sm:$0x1] %v590
      %vm592 = vcmask 1047559
      %vm593 = vsmask.f32 7966
      %vm594 = vmand %vm592, %vm593
      %v595 = vld [vmem:[#allocation2 + $0x10] sm:$0x80]
      %v596 = vsel %vm594, 0, %v595
      %597 = vst [vmem:[#allocation2 + $0x10] sm:$0x80] %v596
      %v598 = vld [vmem:[#allocation2 + $0x28] sm:$0x80]
      %v599 = vsel %vm594, 0, %v598
      %600 = vst [vmem:[#allocation2 + $0x28] sm:$0x80] %v599
      %v601 = vld [vmem:[#allocation2 + $0x40] sm:$0x80]
      %v602 = vsel %vm594, 0, %v601
      %603 = vst [vmem:[#allocation2 + $0x40] sm:$0x80] %v602
      %v604 = vld [vmem:[#allocation2 + $0x58] sm:$0x80]
      %v605 = vsel %vm594, 0, %v604
      %606 = vst [vmem:[#allocation2 + $0x58] sm:$0x80] %v605
      %v607 = vld [vmem:[#allocation2 + $0x70] sm:$0x80]
      %v608 = vsel %vm594, 0, %v607
      %609 = vst [vmem:[#allocation2 + $0x70] sm:$0x80] %v608
      %v610 = vld [vmem:[#allocation2 + $0x88] sm:$0x80]
      %v611 = vsel %vm594, 0, %v610
      %612 = vst [vmem:[#allocation2 + $0x88] sm:$0x80] %v611
      %v613 = vld [vmem:[#allocation2 + $0xa0] sm:$0x80]
      %v614 = vsel %vm594, 0, %v613
      %615 = vst [vmem:[#allocation2 + $0xa0] sm:$0x80] %v614
      %v616 = vld [vmem:[#allocation2 + $0xb8] sm:$0x80]
      %v617 = vsel %vm594, 0, %v616
      %618 = vst [vmem:[#allocation2 + $0xb8] sm:$0x80] %v617
      %v619 = vld [vmem:[#allocation2 + $0xd0] sm:$0x80]
      %v620 = vsel %vm594, 0, %v619
      %621 = vst [vmem:[#allocation2 + $0xd0] sm:$0x80] %v620
      %v622 = vld [vmem:[#allocation2 + $0xe8] sm:$0x80]
      %v623 = vsel %vm594, 0, %v622
      %624 = vst [vmem:[#allocation2 + $0xe8] sm:$0x80] %v623
      %v625 = vld [vmem:[#allocation2 + $0x100] sm:$0x80]
      %v626 = vsel %vm594, 0, %v625
      %627 = vst [vmem:[#allocation2 + $0x100] sm:$0x80] %v626
      %v628 = vld [vmem:[#allocation2 + $0x118] sm:$0x80]
      %v629 = vsel %vm594, 0, %v628
      %630 = vst [vmem:[#allocation2 + $0x118] sm:$0x80] %v629
      %v631 = vld [vmem:[#allocation2 + $0x130] sm:$0x80]
      %v632 = vsel %vm594, 0, %v631
      %633 = vst [vmem:[#allocation2 + $0x130] sm:$0x80] %v632
      %v634 = vld [vmem:[#allocation2 + $0x148] sm:$0x80]
      %v635 = vsel %vm594, 0, %v634
      %636 = vst [vmem:[#allocation2 + $0x148] sm:$0x80] %v635
      %v637 = vld [vmem:[#allocation2 + $0x160] sm:$0x80]
      %v638 = vsel %vm594, 0, %v637
      %639 = vst [vmem:[#allocation2 + $0x160] sm:$0x80] %v638
      %v640 = vld [vmem:[#allocation2 + $0x178] sm:$0x80]
      %v641 = vsel %vm594, 0, %v640
      %642 = vst [vmem:[#allocation2 + $0x178] sm:$0x80] %v641
      %v643 = vld [vmem:[#allocation2 + $0x190] sm:$0x80]
      %v644 = vsel %vm594, 0, %v643
      %645 = vst [vmem:[#allocation2 + $0x190] sm:$0x80] %v644
      %v646 = vld [vmem:[#allocation2 + $0x1a8] sm:$0x80]
      %v647 = vsel %vm594, 0, %v646
      %648 = vst [vmem:[#allocation2 + $0x1a8] sm:$0x80] %v647
      %v649 = vld [vmem:[%s481] sm:$0xf]
      %v650 = vld [vmem:[%s481 + $0x4] sm:$0xf]
      %v651 = vld [vmem:[%s481 + $0x8] sm:$0xf]
      %v652 = vld [vmem:[%s481 + $0xc] sm:$0xf]
      %v653 = vld [vmem:[%s481 + $0x10] sm:$0xf]
      %v654 = vld [vmem:[%s481 + $0x14] sm:$0xf]
      %v655 = vld [vmem:[%s481 + $0x18] sm:$0xf]
      %v656 = vld [vmem:[%s481 + $0x1c] sm:$0xf]
      %v657 = vld [vmem:[%s481 + $0x20] sm:$0xf]
      %v658 = vld [vmem:[%s481 + $0x24] sm:$0xf]
      %v659 = vld [vmem:[%s481 + $0x28] sm:$0xf]
      %v660 = vld [vmem:[%s481 + $0x2c] sm:$0xf]
      %v661 = vld [vmem:[%s481 + $0x30] sm:$0xf]
      %v662 = vld [vmem:[%s481 + $0x34] sm:$0xf]
      %v663 = vld [vmem:[%s481 + $0x38] sm:$0xf]
      %v664 = vld [vmem:[%s481 + $0x3c] sm:$0xf]
      %v665 = vld [vmem:[%s481 + $0x40] sm:$0xf]
      %v666 = vld [vmem:[%s481 + $0x44] sm:$0xf]
      %v667 = vld [vmem:[%s481 + $0x48] sm:$0xf]
      %v668 = vld [vmem:[%s481 + $0x4c] sm:$0xf]
      %v669 = vld [vmem:[%s481 + $0x50] sm:$0xf]
      %v670 = vld [vmem:[%s481 + $0x54] sm:$0xf]
      %v671 = vld [vmem:[%s481 + $0x58] sm:$0xf]
      %v672 = vld [vmem:[%s481 + $0x5c] sm:$0xf]
      %v673 = vld [vmem:[%s481 + $0x60] sm:$0xf]
      %v674 = vld [vmem:[%s481 + $0x64] sm:$0xf]
      %v675 = vld [vmem:[%s481 + $0x68] sm:$0xf]
      %v676 = vld [vmem:[%s481 + $0x6c] sm:$0xf]
      %v677 = vld [vmem:[%s481 + $0x70] sm:$0xf]
      %v678 = vld [vmem:[%s481 + $0x74] sm:$0xf]
      %v679 = vld [vmem:[%s481 + $0x78] sm:$0xf]
      %v680 = vld [vmem:[%s481 + $0x7c] sm:$0xf]
      %v681 = vld [vmem:[%s486] sm:$0xf]
      %v682 = vld [vmem:[%s486 + $0x4] sm:$0xf]
      %v683 = vld [vmem:[%s486 + $0x8] sm:$0xf]
      %v684 = vld [vmem:[%s486 + $0xc] sm:$0xf]
      %v685 = vld [vmem:[%s486 + $0x10] sm:$0xf]
      %v686 = vld [vmem:[%s486 + $0x14] sm:$0xf]
      %v687 = vld [vmem:[%s486 + $0x18] sm:$0xf]
      %v688 = vld [vmem:[%s486 + $0x1c] sm:$0xf]
      %v689 = vld [vmem:[%s486 + $0x20] sm:$0xf]
      %v690 = vld [vmem:[%s486 + $0x24] sm:$0xf]
      %v691 = vld [vmem:[%s486 + $0x28] sm:$0xf]
      %v692 = vld [vmem:[%s486 + $0x2c] sm:$0x1]
      %v725 = vunpack.c.l.b16 %v649
      %v726 = vunpack.c.l.b16 %v650
      %v727 = vunpack.c.l.b16 %v651
      %v728 = vunpack.c.l.b16 %v652
      %v729 = vunpack.c.l.b16 %v653
      %v730 = vunpack.c.l.b16 %v654
      %v731 = vunpack.c.l.b16 %v655
      %v732 = vunpack.c.l.b16 %v656
      %v733 = vunpack.c.l.b16 %v657
      %v734 = vunpack.c.l.b16 %v658
      %v735 = vunpack.c.l.b16 %v659
      %v736 = vunpack.c.l.b16 %v660
      %v737 = vunpack.c.l.b16 %v661
      %v738 = vunpack.c.l.b16 %v662
      %v739 = vunpack.c.l.b16 %v663
      %v740 = vunpack.c.l.b16 %v664
      %v741 = vunpack.c.l.b16 %v665
      %v742 = vunpack.c.l.b16 %v666
      %v743 = vunpack.c.l.b16 %v667
      %v744 = vunpack.c.l.b16 %v668
      %v745 = vunpack.c.l.b16 %v669
      %v746 = vunpack.c.l.b16 %v670
      %v747 = vunpack.c.l.b16 %v671
      %v748 = vunpack.c.l.b16 %v672
      %v749 = vunpack.c.l.b16 %v673
      %v750 = vunpack.c.l.b16 %v674
      %v751 = vunpack.c.l.b16 %v675
      %v752 = vunpack.c.l.b16 %v676
      %v753 = vunpack.c.l.b16 %v677
      %v754 = vunpack.c.l.b16 %v678
      %v755 = vunpack.c.l.b16 %v679
      %v756 = vunpack.c.l.b16 %v680
      %v757 = vpack.c.b16 %v726, %v725
      %v758 = vpack.c.b16 %v728, %v727
      %v759 = vpack.c.b16 %v730, %v729
      %v760 = vpack.c.b16 %v732, %v731
      %v761 = vpack.c.b16 %v734, %v733
      %v762 = vpack.c.b16 %v736, %v735
      %v763 = vpack.c.b16 %v738, %v737
      %v764 = vpack.c.b16 %v740, %v739
      %v765 = vpack.c.b16 %v742, %v741
      %v766 = vpack.c.b16 %v744, %v743
      %v767 = vpack.c.b16 %v746, %v745
      %v768 = vpack.c.b16 %v748, %v747
      %v769 = vpack.c.b16 %v750, %v749
      %v770 = vpack.c.b16 %v752, %v751
      %v771 = vpack.c.b16 %v754, %v753
      %v772 = vpack.c.b16 %v756, %v755
      %v785 = vunpack.c.l.b16 %v681
      %v786 = vunpack.c.l.b16 %v682
      %v787 = vunpack.c.l.b16 %v683
      %v788 = vunpack.c.l.b16 %v684
      %v789 = vunpack.c.l.b16 %v685
      %v790 = vunpack.c.l.b16 %v686
      %v791 = vunpack.c.l.b16 %v687
      %v792 = vunpack.c.l.b16 %v688
      %v793 = vunpack.c.l.b16 %v689
      %v794 = vunpack.c.l.b16 %v690
      %v795 = vunpack.c.l.b16 %v691
      %v796 = vunpack.c.l.b16 %v692
      %v797 = vpack.c.b16 %v786, %v785
      %v798 = vpack.c.b16 %v788, %v787
      %v799 = vpack.c.b16 %v790, %v789
      %v800 = vpack.c.b16 %v792, %v791
      %v801 = vpack.c.b16 %v794, %v793
      %v802 = vpack.c.b16 %v796, %v795
      %vm808 = vcmask 736256
      %v810 = vsel %vm808, %v757, 0
      %v813 = vsel %vm808, %v758, 0
      %v816 = vsel %vm808, %v759, 0
      %v819 = vsel %vm808, %v760, 0
      %v822 = vsel %vm808, %v761, 0
      %v825 = vsel %vm808, %v762, 0
      %v828 = vsel %vm808, %v763, 0
      %v831 = vsel %vm808, %v764, 0
      %v834 = vsel %vm808, %v765, 0
      %v837 = vsel %vm808, %v766, 0
      %v840 = vsel %vm808, %v767, 0
      %v843 = vsel %vm808, %v768, 0
      %v846 = vsel %vm808, %v769, 0
      %v849 = vsel %vm808, %v770, 0
      %v852 = vsel %vm808, %v771, 0
      %v855 = vsel %vm808, %v772, 0
      %vm857 = vcmask 1044480
      %v859 = vsel %vm857, %v802, 0
      %861 = vmatprep.subr.bf16.mxu0 0
      %862 = vmatpush1.bf16.msra.mxu0 %v797
      %863 = vmatprep.subr.bf16.mxu0 0
      %864 = vmatpush1.bf16.msra.mxu0 %v798
      %865 = vmatprep.subr.bf16.mxu0 0
      %866 = vmatpush1.bf16.msra.mxu0 %v799
      %867 = vmatprep.subr.bf16.mxu0 0
      %868 = vmatpush1.bf16.msra.mxu0 %v800
      %869 = vmatprep.subr.bf16.mxu0 0
      %870 = vmatpush1.bf16.msra.mxu0 %v801
      %871 = vmatprep.subr.bf16.mxu0 0
      %872 = vmatpush1.bf16.msra.mxu0 %v859
      %873 = vmatprep.subr.bf16.mxu0 0
      %874 = vmatpush1.bf16.msra.mxu0 0
      %875 = vmatprep.subr.bf16.mxu0 0
      %876 = vmatpush1.bf16.msra.mxu0 0
      %877 = vmatprep.subr.bf16.mxu0 0
      %878 = vmatpush1.bf16.msra.mxu0 0
      %879 = vmatprep.subr.bf16.mxu0 0
      %880 = vmatpush1.bf16.msra.mxu0 0
      %881 = vmatprep.subr.bf16.mxu0 0
      %882 = vmatpush1.bf16.msra.mxu0 0
      %883 = vmatprep.subr.bf16.mxu0 0
      %884 = vmatpush1.bf16.msra.mxu0 0
      %885 = vmatprep.subr.bf16.mxu0 0
      %886 = vmatpush1.bf16.msra.mxu0 0
      %887 = vmatprep.subr.bf16.mxu0 0
      %888 = vmatpush1.bf16.msra.mxu0 0
      %889 = vmatprep.subr.bf16.mxu0 0
      %890 = vmatpush1.bf16.msra.mxu0 0
      %891 = vmatprep.subr.bf16.mxu0 0
      %892 = vmatpush1.bf16.msra.mxu0 0
      %893 = vmatprep.mubr.bf16.mxu0 0
      %894 = vmatmul.mubr.bf16.gmra.mrb[0].mxu0 %v810
      %v895 = vpop.f32.mrb[0].mxu0
      %v896 = vadd.f32 0.0, %v895
      %v897 = vpop.f32.mrb[0].mxu0
      %v898 = vpop.f32.mrb[0].mxu0
      %v899 = vadd.f32 0.0, %v898
      %v900 = vpop.f32.mrb[0].mxu0
      %901 = vmatprep.mubr.bf16.mxu0 0
      %902 = vmatmul.mubr.bf16.gmra.mrb[0].mxu0 %v813
      %v903 = vpop.f32.mrb[0].mxu0
      %v904 = vadd.f32 0.0, %v903
      %v905 = vpop.f32.mrb[0].mxu0
      %v906 = vpop.f32.mrb[0].mxu0
      %v907 = vadd.f32 0.0, %v906
      %v908 = vpop.f32.mrb[0].mxu0
      %909 = vmatprep.mubr.bf16.mxu0 0
      %910 = vmatmul.mubr.bf16.gmra.mrb[0].mxu0 %v816
      %v911 = vpop.f32.mrb[0].mxu0
      %v912 = vadd.f32 0.0, %v911
      %v913 = vpop.f32.mrb[0].mxu0
      %v914 = vpop.f32.mrb[0].mxu0
      %v915 = vadd.f32 0.0, %v914
      %v916 = vpop.f32.mrb[0].mxu0
      %917 = vmatprep.mubr.bf16.mxu0 0
      %918 = vmatmul.mubr.bf16.gmra.mrb[0].mxu0 %v819
      %v919 = vpop.f32.mrb[0].mxu0
      %v920 = vadd.f32 0.0, %v919
      %v921 = vpop.f32.mrb[0].mxu0
      %v922 = vpop.f32.mrb[0].mxu0
      %v923 = vadd.f32 0.0, %v922
      %v924 = vpop.f32.mrb[0].mxu0
      %925 = vmatprep.mubr.bf16.mxu0 0
      %926 = vmatmul.mubr.bf16.gmra.mrb[0].mxu0 %v822
      %v927 = vpop.f32.mrb[0].mxu0
      %v928 = vadd.f32 0.0, %v927
      %v929 = vpop.f32.mrb[0].mxu0
      %v930 = vpop.f32.mrb[0].mxu0
      %v931 = vadd.f32 0.0, %v930
      %v932 = vpop.f32.mrb[0].mxu0
      %933 = vmatprep.mubr.bf16.mxu0 0
      %934 = vmatmul.mubr.bf16.gmra.mrb[0].mxu0 %v825
      %v935 = vpop.f32.mrb[0].mxu0
      %v936 = vadd.f32 0.0, %v935
      %v937 = vpop.f32.mrb[0].mxu0
      %v938 = vpop.f32.mrb[0].mxu0
      %v939 = vadd.f32 0.0, %v938
      %v940 = vpop.f32.mrb[0].mxu0
      %941 = vmatprep.mubr.bf16.mxu0 0
      %942 = vmatmul.mubr.bf16.gmra.mrb[0].mxu0 %v828
      %v943 = vpop.f32.mrb[0].mxu0
      %v944 = vadd.f32 0.0, %v943
      %v945 = vpop.f32.mrb[0].mxu0
      %v946 = vpop.f32.mrb[0].mxu0
      %v947 = vadd.f32 0.0, %v946
      %v948 = vpop.f32.mrb[0].mxu0
      %949 = vmatprep.mubr.bf16.mxu0 0
      %950 = vmatmul.mubr.bf16.gmra.mrb[0].mxu0 %v831
      %v951 = vpop.f32.mrb[0].mxu0
      %v952 = vadd.f32 0.0, %v951
      %v953 = vpop.f32.mrb[0].mxu0
      %v954 = vpop.f32.mrb[0].mxu0
      %v955 = vadd.f32 0.0, %v954
      %v956 = vpop.f32.mrb[0].mxu0
      %957 = vmatprep.mubr.bf16.mxu0 0
      %958 = vmatmul.mubr.bf16.gmra.mrb[0].mxu0 %v834
      %v959 = vpop.f32.mrb[0].mxu0
      %v960 = vadd.f32 0.0, %v959
      %v961 = vpop.f32.mrb[0].mxu0
      %v962 = vpop.f32.mrb[0].mxu0
      %v963 = vadd.f32 0.0, %v962
      %v964 = vpop.f32.mrb[0].mxu0
      %965 = vmatprep.mubr.bf16.mxu0 0
      %966 = vmatmul.mubr.bf16.gmra.mrb[0].mxu0 %v837
      %v967 = vpop.f32.mrb[0].mxu0
      %v968 = vadd.f32 0.0, %v967
      %v969 = vpop.f32.mrb[0].mxu0
      %v970 = vpop.f32.mrb[0].mxu0
      %v971 = vadd.f32 0.0, %v970
      %v972 = vpop.f32.mrb[0].mxu0
      %973 = vmatprep.mubr.bf16.mxu0 0
      %974 = vmatmul.mubr.bf16.gmra.mrb[0].mxu0 %v840
      %v975 = vpop.f32.mrb[0].mxu0
      %v976 = vadd.f32 0.0, %v975
      %v977 = vpop.f32.mrb[0].mxu0
      %v978 = vpop.f32.mrb[0].mxu0
      %v979 = vadd.f32 0.0, %v978
      %v980 = vpop.f32.mrb[0].mxu0
      %981 = vmatprep.mubr.bf16.mxu0 0
      %982 = vmatmul.mubr.bf16.gmra.mrb[0].mxu0 %v843
      %v983 = vpop.f32.mrb[0].mxu0
      %v984 = vadd.f32 0.0, %v983
      %v985 = vpop.f32.mrb[0].mxu0
      %v986 = vpop.f32.mrb[0].mxu0
      %v987 = vadd.f32 0.0, %v986
      %v988 = vpop.f32.mrb[0].mxu0
      %989 = vmatprep.mubr.bf16.mxu0 0
      %990 = vmatmul.mubr.bf16.gmra.mrb[0].mxu0 %v846
      %v991 = vpop.f32.mrb[0].mxu0
      %v992 = vadd.f32 0.0, %v991
      %v993 = vpop.f32.mrb[0].mxu0
      %v994 = vpop.f32.mrb[0].mxu0
      %v995 = vadd.f32 0.0, %v994
      %v996 = vpop.f32.mrb[0].mxu0
      %997 = vmatprep.mubr.bf16.mxu0 0
      %998 = vmatmul.mubr.bf16.gmra.mrb[0].mxu0 %v849
      %v999 = vpop.f32.mrb[0].mxu0
      %v1000 = vadd.f32 0.0, %v999
      %v1001 = vpop.f32.mrb[0].mxu0
      %v1002 = vpop.f32.mrb[0].mxu0
      %v1003 = vadd.f32 0.0, %v1002
      %v1004 = vpop.f32.mrb[0].mxu0
      %1005 = vmatprep.mubr.bf16.mxu0 0
      %1006 = vmatmul.mubr.bf16.gmra.mrb[0].mxu0 %v852
      %v1007 = vpop.f32.mrb[0].mxu0
      %v1008 = vadd.f32 0.0, %v1007
      %v1009 = vpop.f32.mrb[0].mxu0
      %v1010 = vpop.f32.mrb[0].mxu0
      %v1011 = vadd.f32 0.0, %v1010
      %v1012 = vpop.f32.mrb[0].mxu0
      %1013 = vmatprep.mubr.bf16.mxu0 0
      %1014 = vmatmul.mubr.bf16.gmra.mrb[0].mxu0 %v855
      %v1015 = vpop.f32.mrb[0].mxu0
      %v1016 = vadd.f32 0.0, %v1015
      %v1017 = vpop.f32.mrb[0].mxu0
      %v1018 = vpop.f32.mrb[0].mxu0
      %v1019 = vadd.f32 0.0, %v1018
      %v1020 = vpop.f32.mrb[0].mxu0
      %1021 = vdwg.mxu0
      %v1022 = vld [vmem:[%s489] sm:$0x1]
      %v1023 = vld [vmem:[%s492] sm:$0x1]
      %v1024 = vadd.f32 %v896, %v899
      %v1025 = vadd.f32 %v1024, %v904
      %v1026 = vadd.f32 %v1025, %v907
      %v1027 = vadd.f32 %v1026, %v912
      %v1028 = vadd.f32 %v1027, %v915
      %v1029 = vadd.f32 %v1028, %v920
      %v1030 = vadd.f32 %v1029, %v923
      %v1031 = vadd.f32 %v1030, %v928
      %v1032 = vadd.f32 %v1031, %v931
      %v1033 = vadd.f32 %v1032, %v936
      %v1034 = vadd.f32 %v1033, %v939
      %v1035 = vadd.f32 %v1034, %v944
      %v1036 = vadd.f32 %v1035, %v947
      %v1037 = vadd.f32 %v1036, %v952
      %v1038 = vadd.f32 %v1037, %v955
      %v1039 = vadd.f32 %v1038, %v960
      %v1040 = vadd.f32 %v1039, %v963
      %v1041 = vadd.f32 %v1040, %v968
      %v1042 = vadd.f32 %v1041, %v971
      %v1043 = vadd.f32 %v1042, %v976
      %v1044 = vadd.f32 %v1043, %v979
      %v1045 = vadd.f32 %v1044, %v984
      %v1046 = vadd.f32 %v1045, %v987
      %v1047 = vadd.f32 %v1046, %v992
      %v1048 = vadd.f32 %v1047, %v995
      %v1049 = vadd.f32 %v1048, %v1000
      %v1050 = vadd.f32 %v1049, %v1003
      %v1051 = vadd.f32 %v1050, %v1008
      %v1052 = vadd.f32 %v1051, %v1011
      %v1053 = vadd.f32 %v1052, %v1016
      %v1054 = vadd.f32 %v1053, %v1019
      %v1055 = vrot.slane %v1054, 4
      %v1056 = vadd.f32 %v1054, %v1055
      %v1057 = vrot.slane %v1056, 2
      %v1058 = vadd.f32 %v1056, %v1057
      %v1059 = vrot.slane %v1058, 1
      %v1060 = vadd.f32 %v1058, %v1059
      %v1061 = vmul.f32 %v896, %v896
      %v1062 = vmul.f32 %v899, %v899
      %v1063 = vmul.f32 %v904, %v904
      %v1064 = vmul.f32 %v907, %v907
      %v1065 = vmul.f32 %v912, %v912
      %v1066 = vmul.f32 %v915, %v915
      %v1067 = vmul.f32 %v920, %v920
      %v1068 = vmul.f32 %v923, %v923
      %v1069 = vmul.f32 %v928, %v928
      %v1070 = vmul.f32 %v931, %v931
      %v1071 = vmul.f32 %v936, %v936
      %v1072 = vmul.f32 %v939, %v939
      %v1073 = vmul.f32 %v944, %v944
      %v1074 = vmul.f32 %v947, %v947
      %v1075 = vmul.f32 %v952, %v952
      %v1076 = vmul.f32 %v955, %v955
      %v1077 = vmul.f32 %v960, %v960
      %v1078 = vmul.f32 %v963, %v963
      %v1079 = vmul.f32 %v968, %v968
      %v1080 = vmul.f32 %v971, %v971
      %v1081 = vmul.f32 %v976, %v976
      %v1082 = vmul.f32 %v979, %v979
      %v1083 = vmul.f32 %v984, %v984
      %v1084 = vmul.f32 %v987, %v987
      %v1085 = vmul.f32 %v992, %v992
      %v1086 = vmul.f32 %v995, %v995
      %v1087 = vmul.f32 %v1000, %v1000
      %v1088 = vmul.f32 %v1003, %v1003
      %v1089 = vmul.f32 %v1008, %v1008
      %v1090 = vmul.f32 %v1011, %v1011
      %v1091 = vmul.f32 %v1016, %v1016
      %v1092 = vmul.f32 %v1019, %v1019
      %v1093 = vadd.f32 %v1061, %v1062
      %v1094 = vadd.f32 %v1093, %v1063
      %v1095 = vadd.f32 %v1094, %v1064
      %v1096 = vadd.f32 %v1095, %v1065
      %v1097 = vadd.f32 %v1096, %v1066
      %v1098 = vadd.f32 %v1097, %v1067
      %v1099 = vadd.f32 %v1098, %v1068
      %v1100 = vadd.f32 %v1099, %v1069
      %v1101 = vadd.f32 %v1100, %v1070
      %v1102 = vadd.f32 %v1101, %v1071
      %v1103 = vadd.f32 %v1102, %v1072
      %v1104 = vadd.f32 %v1103, %v1073
      %v1105 = vadd.f32 %v1104, %v1074
      %v1106 = vadd.f32 %v1105, %v1075
      %v1107 = vadd.f32 %v1106, %v1076
      %v1108 = vadd.f32 %v1107, %v1077
      %v1109 = vadd.f32 %v1108, %v1078
      %v1110 = vadd.f32 %v1109, %v1079
      %v1111 = vadd.f32 %v1110, %v1080
      %v1112 = vadd.f32 %v1111, %v1081
      %v1113 = vadd.f32 %v1112, %v1082
      %v1114 = vadd.f32 %v1113, %v1083
      %v1115 = vadd.f32 %v1114, %v1084
      %v1116 = vadd.f32 %v1115, %v1085
      %v1117 = vadd.f32 %v1116, %v1086
      %v1118 = vadd.f32 %v1117, %v1087
      %v1119 = vadd.f32 %v1118, %v1088
      %v1120 = vadd.f32 %v1119, %v1089
      %v1121 = vadd.f32 %v1120, %v1090
      %v1122 = vadd.f32 %v1121, %v1091
      %v1123 = vadd.f32 %v1122, %v1092
      %v1124 = vrot.slane %v1123, 4
      %v1125 = vadd.f32 %v1123, %v1124
      %v1126 = vrot.slane %v1125, 2
      %v1127 = vadd.f32 %v1125, %v1126
      %v1128 = vrot.slane %v1127, 1
      %v1129 = vadd.f32 %v1127, %v1128
      %vm1130 = vcmask 1040384
      %v1131 = vsel %vm1130, %v1060, %v1129
      %v1132 = vmul.f32 %v1131, 0.0009765625
      %v1133 = vld [vmem:[%s9] sm:$0xff]
      %v1134 = vld [vmem:[%s9 + $0x8] sm:$0xff]
      %v1135 = vld [vmem:[%s9 + $0x10] sm:$0xff]
      %v1136 = vld [vmem:[%s9 + $0x18] sm:$0xff]
      %v1137 = vld [vmem:[%s9 + $0x20] sm:$0xff]
      %v1138 = vld [vmem:[%s9 + $0x28] sm:$0xff]
      %v1139 = vld [vmem:[%s9 + $0x30] sm:$0xff]
      %v1140 = vld [vmem:[%s9 + $0x38] sm:$0xff]
      %v1141 = vld [vmem:[%s9 + $0x40] sm:$0xff]
      %v1142 = vld [vmem:[%s9 + $0x48] sm:$0xff]
      %v1143 = vld [vmem:[%s9 + $0x50] sm:$0xff]
      %v1144 = vld [vmem:[%s9 + $0x58] sm:$0xff]
      %v1145 = vld [vmem:[%s9 + $0x60] sm:$0xff]
      %v1146 = vld [vmem:[%s9 + $0x68] sm:$0xff]
      %v1147 = vld [vmem:[%s9 + $0x70] sm:$0xff]
      %v1148 = vld [vmem:[%s9 + $0x78] sm:$0xff]
      %1149 = vmatprep.subr.mxu0 0.0
      %1150 = vmatpush1.msra.mxu0 %v1133
      %1151 = vmatprep.subr.mxu0 0.0
      %1152 = vmatpush1.msra.mxu0 %v1134
      %1153 = vmatprep.subr.mxu0 0.0
      %1154 = vmatpush1.msra.mxu0 %v1135
      %1155 = vmatprep.subr.mxu0 0.0
      %1156 = vmatpush1.msra.mxu0 %v1136
      %1157 = vmatprep.subr.mxu0 0.0
      %1158 = vmatpush1.msra.mxu0 %v1137
      %1159 = vmatprep.subr.mxu0 0.0
      %1160 = vmatpush1.msra.mxu0 %v1138
      %1161 = vmatprep.subr.mxu0 0.0
      %1162 = vmatpush1.msra.mxu0 %v1139
      %1163 = vmatprep.subr.mxu0 0.0
      %1164 = vmatpush1.msra.mxu0 %v1140
      %1165 = vmatprep.subr.mxu0 0.0
      %1166 = vmatpush1.msra.mxu0 %v1141
      %1167 = vmatprep.subr.mxu0 0.0
      %1168 = vmatpush1.msra.mxu0 %v1142
      %1169 = vmatprep.subr.mxu0 0.0
      %1170 = vmatpush1.msra.mxu0 %v1143
      %1171 = vmatprep.subr.mxu0 0.0
      %1172 = vmatpush1.msra.mxu0 %v1144
      %1173 = vmatprep.subr.mxu0 0.0
      %1174 = vmatpush1.msra.mxu0 %v1145
      %1175 = vmatprep.subr.mxu0 0.0
      %1176 = vmatpush1.msra.mxu0 %v1146
      %1177 = vmatprep.subr.mxu0 0.0
      %1178 = vmatpush1.msra.mxu0 %v1147
      %1179 = vmatprep.subr.mxu0 0.0
      %1180 = vmatpush1.msra.mxu0 %v1148
      %1181 = vmatprep.subr.mxu0 0.0
      %1182 = vmatpush1.msra.mxu0 0.0
      %1183 = vmatprep.subr.mxu0 0.0
      %1184 = vmatpush1.msra.mxu0 0.0
      %1185 = vmatprep.subr.mxu0 0.0
      %1186 = vmatpush1.msra.mxu0 0.0
      %1187 = vmatprep.subr.mxu0 0.0
      %1188 = vmatpush1.msra.mxu0 0.0
      %1189 = vmatprep.subr.mxu0 0.0
      %1190 = vmatpush1.msra.mxu0 0.0
      %1191 = vmatprep.subr.mxu0 0.0
      %1192 = vmatpush1.msra.mxu0 0.0
      %1193 = vmatprep.subr.mxu0 0.0
      %1194 = vmatpush1.msra.mxu0 0.0
      %1195 = vmatprep.subr.mxu0 0.0
      %1196 = vmatpush1.msra.mxu0 0.0
      %1197 = vmatprep.subr.mxu0 0.0
      %1198 = vmatpush1.msra.mxu0 0.0
      %1199 = vmatprep.subr.mxu0 0.0
      %1200 = vmatpush1.msra.mxu0 0.0
      %1201 = vmatprep.subr.mxu0 0.0
      %1202 = vmatpush1.msra.mxu0 0.0
      %1203 = vmatprep.subr.mxu0 0.0
      %1204 = vmatpush1.msra.mxu0 0.0
      %1205 = vmatprep.subr.mxu0 0.0
      %1206 = vmatpush1.msra.mxu0 0.0
      %1207 = vmatprep.subr.mxu0 0.0
      %1208 = vmatpush1.msra.mxu0 0.0
      %1209 = vmatprep.subr.mxu0 0.0
      %1210 = vmatpush1.msra.mxu0 0.0
      %1211 = vmatprep.subr.mxu0 0.0
      %1212 = vmatpush1.msra.mxu0 0.0
      %1213 = vmatprep.mubr.f32.mxu0 0.0
      %1214 = vmatmul.mubr.f32.gmra.mrb[0].mxu0 %v1132
      %v1215 = vpop.f32.mrb[0].mxu0
      %v1216 = vadd.f32 0.0, %v1215
      %v1217 = vpop.f32.mrb[0].mxu0
      %1218 = vdwg.mxu0
      %v1219 = vmul.f32 %v1216, %v1216
      %v1221 = vrot.slane %v1219, 7
      %v1223 = vsub.f32 %v1216, %v1221
      %v1224 = vmax.f32 %v1223, 0.0
      %v1225 = vadd.f32 %v1224, 1e-05
      %v1226 = vrsqrt.pop %v1225
      %v1228 = vlaneseq
      %v1229 = vshrl.u32 %v1228, 7
      %v1230 = vsub.s32 0, %v1229
      %v1231 = vrot.slane %v1022, %v1230
      %v1233 = vmul.f32 %v1226, %v1231
      %v1235 = vrot.slane %v1233, 1
      %v1237 = vmul.f32 %v1216, %v1235
      %v1238 = vsub.f32 %v1023, %v1237
      %v1239 = vlaneseq
      %v1240 = vshrl.u32 %v1239, 7
      %v1241 = vsub.s32 1, %v1240
      %v1242 = vrot.slane %v1233, %v1241
      %v1243 = vmul.f32 %v896, %v1242
      %v1244 = vmul.f32 %v899, %v1242
      %v1245 = vmul.f32 %v904, %v1242
      %v1246 = vmul.f32 %v907, %v1242
      %v1247 = vmul.f32 %v912, %v1242
      %v1248 = vmul.f32 %v915, %v1242
      %v1249 = vmul.f32 %v920, %v1242
      %v1250 = vmul.f32 %v923, %v1242
      %v1251 = vmul.f32 %v928, %v1242
      %v1252 = vmul.f32 %v931, %v1242
      %v1253 = vmul.f32 %v936, %v1242
      %v1254 = vmul.f32 %v939, %v1242
      %v1255 = vmul.f32 %v944, %v1242
      %v1256 = vmul.f32 %v947, %v1242
      %v1257 = vmul.f32 %v952, %v1242
      %v1258 = vmul.f32 %v955, %v1242
      %v1259 = vmul.f32 %v960, %v1242
      %v1260 = vmul.f32 %v963, %v1242
      %v1261 = vmul.f32 %v968, %v1242
      %v1262 = vmul.f32 %v971, %v1242
      %v1263 = vmul.f32 %v976, %v1242
      %v1264 = vmul.f32 %v979, %v1242
      %v1265 = vmul.f32 %v984, %v1242
      %v1266 = vmul.f32 %v987, %v1242
      %v1267 = vmul.f32 %v992, %v1242
      %v1268 = vmul.f32 %v995, %v1242
      %v1269 = vmul.f32 %v1000, %v1242
      %v1270 = vmul.f32 %v1003, %v1242
      %v1271 = vmul.f32 %v1008, %v1242
      %v1272 = vmul.f32 %v1011, %v1242
      %v1273 = vmul.f32 %v1016, %v1242
      %v1274 = vmul.f32 %v1019, %v1242
      %v1276 = vlaneseq
      %v1277 = vshrl.u32 %v1276, 7
      %v1278 = vsub.s32 0, %v1277
      %v1279 = vrot.slane %v1238, %v1278
      %v1281 = vadd.f32 %v1243, %v1279
      %v1282 = vadd.f32 %v1244, %v1279
      %v1283 = vadd.f32 %v1245, %v1279
      %v1284 = vadd.f32 %v1246, %v1279
      %v1285 = vadd.f32 %v1247, %v1279
      %v1286 = vadd.f32 %v1248, %v1279
      %v1287 = vadd.f32 %v1249, %v1279
      %v1288 = vadd.f32 %v1250, %v1279
      %v1289 = vadd.f32 %v1251, %v1279
      %v1290 = vadd.f32 %v1252, %v1279
      %v1291 = vadd.f32 %v1253, %v1279
      %v1292 = vadd.f32 %v1254, %v1279
      %v1293 = vadd.f32 %v1255, %v1279
      %v1294 = vadd.f32 %v1256, %v1279
      %v1295 = vadd.f32 %v1257, %v1279
      %v1296 = vadd.f32 %v1258, %v1279
      %v1297 = vadd.f32 %v1259, %v1279
      %v1298 = vadd.f32 %v1260, %v1279
      %v1299 = vadd.f32 %v1261, %v1279
      %v1300 = vadd.f32 %v1262, %v1279
      %v1301 = vadd.f32 %v1263, %v1279
      %v1302 = vadd.f32 %v1264, %v1279
      %v1303 = vadd.f32 %v1265, %v1279
      %v1304 = vadd.f32 %v1266, %v1279
      %v1305 = vadd.f32 %v1267, %v1279
      %v1306 = vadd.f32 %v1268, %v1279
      %v1307 = vadd.f32 %v1269, %v1279
      %v1308 = vadd.f32 %v1270, %v1279
      %v1309 = vadd.f32 %v1271, %v1279
      %v1310 = vadd.f32 %v1272, %v1279
      %v1311 = vadd.f32 %v1273, %v1279
      %v1312 = vadd.f32 %v1274, %v1279
      %v1313 = vmax.f32 %v1281, 0.0
      %v1314 = vmax.f32 %v1282, 0.0
      %v1315 = vmax.f32 %v1283, 0.0
      %v1316 = vmax.f32 %v1284, 0.0
      %v1317 = vmax.f32 %v1285, 0.0
      %v1318 = vmax.f32 %v1286, 0.0
      %v1319 = vmax.f32 %v1287, 0.0
      %v1320 = vmax.f32 %v1288, 0.0
      %v1321 = vmax.f32 %v1289, 0.0
      %v1322 = vmax.f32 %v1290, 0.0
      %v1323 = vmax.f32 %v1291, 0.0
      %v1324 = vmax.f32 %v1292, 0.0
      %v1325 = vmax.f32 %v1293, 0.0
      %v1326 = vmax.f32 %v1294, 0.0
      %v1327 = vmax.f32 %v1295, 0.0
      %v1328 = vmax.f32 %v1296, 0.0
      %v1329 = vmax.f32 %v1297, 0.0
      %v1330 = vmax.f32 %v1298, 0.0
      %v1331 = vmax.f32 %v1299, 0.0
      %v1332 = vmax.f32 %v1300, 0.0
      %v1333 = vmax.f32 %v1301, 0.0
      %v1334 = vmax.f32 %v1302, 0.0
      %v1335 = vmax.f32 %v1303, 0.0
      %v1336 = vmax.f32 %v1304, 0.0
      %v1337 = vmax.f32 %v1305, 0.0
      %v1338 = vmax.f32 %v1306, 0.0
      %v1339 = vmax.f32 %v1307, 0.0
      %v1340 = vmax.f32 %v1308, 0.0
      %v1341 = vmax.f32 %v1309, 0.0
      %v1342 = vmax.f32 %v1310, 0.0
      %v1343 = vmax.f32 %v1311, 0.0
      %v1344 = vmax.f32 %v1312, 0.0
      %v1345 = vpack.c.bf16 %v1314, %v1313
      %v1346 = vpack.c.bf16 %v1316, %v1315
      %v1347 = vpack.c.bf16 %v1318, %v1317
      %v1348 = vpack.c.bf16 %v1320, %v1319
      %v1349 = vpack.c.bf16 %v1322, %v1321
      %v1350 = vpack.c.bf16 %v1324, %v1323
      %v1351 = vpack.c.bf16 %v1326, %v1325
      %v1352 = vpack.c.bf16 %v1328, %v1327
      %v1353 = vpack.c.bf16 %v1330, %v1329
      %v1354 = vpack.c.bf16 %v1332, %v1331
      %v1355 = vpack.c.bf16 %v1334, %v1333
      %v1356 = vpack.c.bf16 %v1336, %v1335
      %v1357 = vpack.c.bf16 %v1338, %v1337
      %v1358 = vpack.c.bf16 %v1340, %v1339
      %v1359 = vpack.c.bf16 %v1342, %v1341
      %v1360 = vpack.c.bf16 %v1344, %v1343
      %v1362 = vshrl.u32 %v1345, 16
      %v1364 = vrot.slane %v1362, 7
      %v1365 = vshll.u32 %v1345, 16
      %v1367 = vor.u32 %v1364, %v1365
      %v1369 = vshrl.u32 %v1346, 16
      %v1371 = vrot.slane %v1369, 7
      %v1372 = vshll.u32 %v1346, 16
      %v1374 = vor.u32 %v1371, %v1372
      %v1376 = vshrl.u32 %v1347, 16
      %v1378 = vrot.slane %v1376, 7
      %v1379 = vshll.u32 %v1347, 16
      %v1381 = vor.u32 %v1378, %v1379
      %v1383 = vshrl.u32 %v1348, 16
      %v1385 = vrot.slane %v1383, 7
      %v1386 = vshll.u32 %v1348, 16
      %v1388 = vor.u32 %v1385, %v1386
      %v1390 = vshrl.u32 %v1349, 16
      %v1392 = vrot.slane %v1390, 7
      %v1393 = vshll.u32 %v1349, 16
      %v1395 = vor.u32 %v1392, %v1393
      %v1397 = vshrl.u32 %v1350, 16
      %v1399 = vrot.slane %v1397, 7
      %v1400 = vshll.u32 %v1350, 16
      %v1402 = vor.u32 %v1399, %v1400
      %v1404 = vshrl.u32 %v1351, 16
      %v1406 = vrot.slane %v1404, 7
      %v1407 = vshll.u32 %v1351, 16
      %v1409 = vor.u32 %v1406, %v1407
      %v1411 = vshrl.u32 %v1352, 16
      %v1413 = vrot.slane %v1411, 7
      %v1414 = vshll.u32 %v1352, 16
      %v1416 = vor.u32 %v1413, %v1414
      %v1418 = vshrl.u32 %v1353, 16
      %v1420 = vrot.slane %v1418, 7
      %v1421 = vshll.u32 %v1353, 16
      %v1423 = vor.u32 %v1420, %v1421
      %v1425 = vshrl.u32 %v1354, 16
      %v1427 = vrot.slane %v1425, 7
      %v1428 = vshll.u32 %v1354, 16
      %v1430 = vor.u32 %v1427, %v1428
      %v1432 = vshrl.u32 %v1355, 16
      %v1434 = vrot.slane %v1432, 7
      %v1435 = vshll.u32 %v1355, 16
      %v1437 = vor.u32 %v1434, %v1435
      %v1439 = vshrl.u32 %v1356, 16
      %v1441 = vrot.slane %v1439, 7
      %v1442 = vshll.u32 %v1356, 16
      %v1444 = vor.u32 %v1441, %v1442
      %v1446 = vshrl.u32 %v1357, 16
      %v1448 = vrot.slane %v1446, 7
      %v1449 = vshll.u32 %v1357, 16
      %v1451 = vor.u32 %v1448, %v1449
      %v1453 = vshrl.u32 %v1358, 16
      %v1455 = vrot.slane %v1453, 7
      %v1456 = vshll.u32 %v1358, 16
      %v1458 = vor.u32 %v1455, %v1456
      %v1460 = vshrl.u32 %v1359, 16
      %v1462 = vrot.slane %v1460, 7
      %v1463 = vshll.u32 %v1359, 16
      %v1465 = vor.u32 %v1462, %v1463
      %v1467 = vshrl.u32 %v1360, 16
      %v1469 = vrot.slane %v1467, 7
      %v1470 = vshll.u32 %v1360, 16
      %v1472 = vor.u32 %v1469, %v1470
      %s1489 = scalar_lea.vmem [#allocation2], 24
      %vm1490 = vcmask 1047552
      %vm1491 = vsmask.f32 7938
      %vm1492 = vmand %vm1490, %vm1491
      %v1493 = vld [vmem:[%s1489] sm:$0xff]
      %v1494 = vsel %vm1492, %v1367, %v1493
      %1495 = vst [vmem:[%s1489] sm:$0xff] %v1494
      %v1496 = vld [vmem:[%s1489 + $0x18] sm:$0xff]
      %v1497 = vsel %vm1492, %v1374, %v1496
      %1498 = vst [vmem:[%s1489 + $0x18] sm:$0xff] %v1497
      %v1499 = vld [vmem:[%s1489 + $0x30] sm:$0xff]
      %v1500 = vsel %vm1492, %v1381, %v1499
      %1501 = vst [vmem:[%s1489 + $0x30] sm:$0xff] %v1500
      %v1502 = vld [vmem:[%s1489 + $0x48] sm:$0xff]
      %v1503 = vsel %vm1492, %v1388, %v1502
      %1504 = vst [vmem:[%s1489 + $0x48] sm:$0xff] %v1503
      %v1505 = vld [vmem:[%s1489 + $0x60] sm:$0xff]
      %v1506 = vsel %vm1492, %v1395, %v1505
      %1507 = vst [vmem:[%s1489 + $0x60] sm:$0xff] %v1506
      %v1508 = vld [vmem:[%s1489 + $0x78] sm:$0xff]
      %v1509 = vsel %vm1492, %v1402, %v1508
      %1510 = vst [vmem:[%s1489 + $0x78] sm:$0xff] %v1509
      %v1511 = vld [vmem:[%s1489 + $0x90] sm:$0xff]
      %v1512 = vsel %vm1492, %v1409, %v1511
      %1513 = vst [vmem:[%s1489 + $0x90] sm:$0xff] %v1512
      %v1514 = vld [vmem:[%s1489 + $0xa8] sm:$0xff]
      %v1515 = vsel %vm1492, %v1416, %v1514
      %1516 = vst [vmem:[%s1489 + $0xa8] sm:$0xff] %v1515
      %v1517 = vld [vmem:[%s1489 + $0xc0] sm:$0xff]
      %v1518 = vsel %vm1492, %v1423, %v1517
      %1519 = vst [vmem:[%s1489 + $0xc0] sm:$0xff] %v1518
      %v1520 = vld [vmem:[%s1489 + $0xd8] sm:$0xff]
      %v1521 = vsel %vm1492, %v1430, %v1520
      %1522 = vst [vmem:[%s1489 + $0xd8] sm:$0xff] %v1521
      %v1523 = vld [vmem:[%s1489 + $0xf0] sm:$0xff]
      %v1524 = vsel %vm1492, %v1437, %v1523
      %1525 = vst [vmem:[%s1489 + $0xf0] sm:$0xff] %v1524
      %v1526 = vld [vmem:[%s1489 + $0x108] sm:$0xff]
      %v1527 = vsel %vm1492, %v1444, %v1526
      %1528 = vst [vmem:[%s1489 + $0x108] sm:$0xff] %v1527
      %v1529 = vld [vmem:[%s1489 + $0x120] sm:$0xff]
      %v1530 = vsel %vm1492, %v1451, %v1529
      %1531 = vst [vmem:[%s1489 + $0x120] sm:$0xff] %v1530
      %v1532 = vld [vmem:[%s1489 + $0x138] sm:$0xff]
      %v1533 = vsel %vm1492, %v1458, %v1532
      %1534 = vst [vmem:[%s1489 + $0x138] sm:$0xff] %v1533
      %v1535 = vld [vmem:[%s1489 + $0x150] sm:$0xff]
      %v1536 = vsel %vm1492, %v1465, %v1535
      %1537 = vst [vmem:[%s1489 + $0x150] sm:$0xff] %v1536
      %v1538 = vld [vmem:[%s1489 + $0x168] sm:$0xff]
      %v1539 = vsel %vm1492, %v1472, %v1538
      %1540 = vst [vmem:[%s1489 + $0x168] sm:$0xff] %v1539
      %1541 = vst [vmem:[%s1489 + $0x8] sm:$0xff] %v1345
      %1542 = vst [vmem:[%s1489 + $0x20] sm:$0xff] %v1346
      %1543 = vst [vmem:[%s1489 + $0x38] sm:$0xff] %v1347
      %1544 = vst [vmem:[%s1489 + $0x50] sm:$0xff] %v1348
      %1545 = vst [vmem:[%s1489 + $0x68] sm:$0xff] %v1349
      %1546 = vst [vmem:[%s1489 + $0x80] sm:$0xff] %v1350
      %1547 = vst [vmem:[%s1489 + $0x98] sm:$0xff] %v1351
      %1548 = vst [vmem:[%s1489 + $0xb0] sm:$0xff] %v1352
      %1549 = vst [vmem:[%s1489 + $0xc8] sm:$0xff] %v1353
      %1550 = vst [vmem:[%s1489 + $0xe0] sm:$0xff] %v1354
      %1551 = vst [vmem:[%s1489 + $0xf8] sm:$0xff] %v1355
      %1552 = vst [vmem:[%s1489 + $0x110] sm:$0xff] %v1356
      %1553 = vst [vmem:[%s1489 + $0x128] sm:$0xff] %v1357
      %1554 = vst [vmem:[%s1489 + $0x140] sm:$0xff] %v1358
      %1555 = vst [vmem:[%s1489 + $0x158] sm:$0xff] %v1359
      %1556 = vst [vmem:[%s1489 + $0x170] sm:$0xff] %v1360
      %v1557 = vrot.slane %v1365, 1
      %v1558 = vor.u32 %v1362, %v1557
      %v1559 = vrot.slane %v1372, 1
      %v1560 = vor.u32 %v1369, %v1559
      %v1561 = vrot.slane %v1379, 1
      %v1562 = vor.u32 %v1376, %v1561
      %v1563 = vrot.slane %v1386, 1
      %v1564 = vor.u32 %v1383, %v1563
      %v1565 = vrot.slane %v1393, 1
      %v1566 = vor.u32 %v1390, %v1565
      %v1567 = vrot.slane %v1400, 1
      %v1568 = vor.u32 %v1397, %v1567
      %v1569 = vrot.slane %v1407, 1
      %v1570 = vor.u32 %v1404, %v1569
      %v1571 = vrot.slane %v1414, 1
      %v1572 = vor.u32 %v1411, %v1571
      %v1573 = vrot.slane %v1421, 1
      %v1574 = vor.u32 %v1418, %v1573
      %v1575 = vrot.slane %v1428, 1
      %v1576 = vor.u32 %v1425, %v1575
      %v1577 = vrot.slane %v1435, 1
      %v1578 = vor.u32 %v1432, %v1577
      %v1579 = vrot.slane %v1442, 1
      %v1580 = vor.u32 %v1439, %v1579
      %v1581 = vrot.slane %v1449, 1
      %v1582 = vor.u32 %v1446, %v1581
      %v1583 = vrot.slane %v1456, 1
      %v1584 = vor.u32 %v1453, %v1583
      %v1585 = vrot.slane %v1463, 1
      %v1586 = vor.u32 %v1460, %v1585
      %v1587 = vrot.slane %v1470, 1
      %v1588 = vor.u32 %v1467, %v1587
      %vm1605 = vsmask.f32 7424
      %vm1606 = vmand %vm1490, %vm1605
      %v1607 = vld [vmem:[%s1489 + $0x10] sm:$0xff]
      %v1608 = vsel %vm1606, %v1558, %v1607
      %1609 = vst [vmem:[%s1489 + $0x10] sm:$0xff] %v1608
      %v1610 = vld [vmem:[%s1489 + $0x28] sm:$0xff]
      %v1611 = vsel %vm1606, %v1560, %v1610
      %1612 = vst [vmem:[%s1489 + $0x28] sm:$0xff] %v1611
      %v1613 = vld [vmem:[%s1489 + $0x40] sm:$0xff]
      %v1614 = vsel %vm1606, %v1562, %v1613
      %1615 = vst [vmem:[%s1489 + $0x40] sm:$0xff] %v1614
      %v1616 = vld [vmem:[%s1489 + $0x58] sm:$0xff]
      %v1617 = vsel %vm1606, %v1564, %v1616
      %1618 = vst [vmem:[%s1489 + $0x58] sm:$0xff] %v1617
      %v1619 = vld [vmem:[%s1489 + $0x70] sm:$0xff]
      %v1620 = vsel %vm1606, %v1566, %v1619
      %1621 = vst [vmem:[%s1489 + $0x70] sm:$0xff] %v1620
      %v1622 = vld [vmem:[%s1489 + $0x88] sm:$0xff]
      %v1623 = vsel %vm1606, %v1568, %v1622
      %1624 = vst [vmem:[%s1489 + $0x88] sm:$0xff] %v1623
      %v1625 = vld [vmem:[%s1489 + $0xa0] sm:$0xff]
      %v1626 = vsel %vm1606, %v1570, %v1625
      %1627 = vst [vmem:[%s1489 + $0xa0] sm:$0xff] %v1626
      %v1628 = vld [vmem:[%s1489 + $0xb8] sm:$0xff]
      %v1629 = vsel %vm1606, %v1572, %v1628
      %1630 = vst [vmem:[%s1489 + $0xb8] sm:$0xff] %v1629
      %v1631 = vld [vmem:[%s1489 + $0xd0] sm:$0xff]
      %v1632 = vsel %vm1606, %v1574, %v1631
      %1633 = vst [vmem:[%s1489 + $0xd0] sm:$0xff] %v1632
      %v1634 = vld [vmem:[%s1489 + $0xe8] sm:$0xff]
      %v1635 = vsel %vm1606, %v1576, %v1634
      %1636 = vst [vmem:[%s1489 + $0xe8] sm:$0xff] %v1635
      %v1637 = vld [vmem:[%s1489 + $0x100] sm:$0xff]
      %v1638 = vsel %vm1606, %v1578, %v1637
      %1639 = vst [vmem:[%s1489 + $0x100] sm:$0xff] %v1638
      %v1640 = vld [vmem:[%s1489 + $0x118] sm:$0xff]
      %v1641 = vsel %vm1606, %v1580, %v1640
      %1642 = vst [vmem:[%s1489 + $0x118] sm:$0xff] %v1641
      %v1643 = vld [vmem:[%s1489 + $0x130] sm:$0xff]
      %v1644 = vsel %vm1606, %v1582, %v1643
      %1645 = vst [vmem:[%s1489 + $0x130] sm:$0xff] %v1644
      %v1646 = vld [vmem:[%s1489 + $0x148] sm:$0xff]
      %v1647 = vsel %vm1606, %v1584, %v1646
      %1648 = vst [vmem:[%s1489 + $0x148] sm:$0xff] %v1647
      %v1649 = vld [vmem:[%s1489 + $0x160] sm:$0xff]
      %v1650 = vsel %vm1606, %v1586, %v1649
      %1651 = vst [vmem:[%s1489 + $0x160] sm:$0xff] %v1650
      %v1652 = vld [vmem:[%s1489 + $0x178] sm:$0xff]
      %v1653 = vsel %vm1606, %v1588, %v1652
      %1654 = vst [vmem:[%s1489 + $0x178] sm:$0xff] %v1653
      %v1655 = vld [vmem:[#allocation2] sm:$0xff]
      %v1656 = vld [vmem:[#allocation2 + $0x8] sm:$0xff]
      %v1657 = vld [vmem:[#allocation2 + $0x10] sm:$0xff]
      %v1658 = vld [vmem:[#allocation2 + $0x18] sm:$0xff]
      %v1659 = vld [vmem:[#allocation2 + $0x20] sm:$0xff]
      %v1660 = vld [vmem:[#allocation2 + $0x28] sm:$0xff]
      %v1661 = vld [vmem:[#allocation2 + $0x30] sm:$0xff]
      %v1662 = vld [vmem:[#allocation2 + $0x38] sm:$0xff]
      %v1663 = vld [vmem:[#allocation2 + $0x40] sm:$0xff]
      %v1664 = vld [vmem:[#allocation2 + $0x48] sm:$0xff]
      %v1665 = vld [vmem:[#allocation2 + $0x50] sm:$0xff]
      %v1666 = vld [vmem:[#allocation2 + $0x58] sm:$0xff]
      %v1667 = vld [vmem:[#allocation2 + $0x60] sm:$0xff]
      %v1668 = vld [vmem:[#allocation2 + $0x68] sm:$0xff]
      %v1669 = vld [vmem:[#allocation2 + $0x70] sm:$0xff]
      %v1670 = vld [vmem:[#allocation2 + $0x78] sm:$0xff]
      %v1671 = vld [vmem:[#allocation2 + $0x80] sm:$0xff]
      %v1672 = vld [vmem:[#allocation2 + $0x88] sm:$0xff]
      %v1673 = vld [vmem:[#allocation2 + $0x90] sm:$0xff]
      %v1674 = vld [vmem:[#allocation2 + $0x98] sm:$0xff]
      %v1675 = vld [vmem:[#allocation2 + $0xa0] sm:$0xff]
      %v1676 = vld [vmem:[#allocation2 + $0xa8] sm:$0xff]
      %v1677 = vld [vmem:[#allocation2 + $0xb0] sm:$0xff]
      %v1678 = vld [vmem:[#allocation2 + $0xb8] sm:$0xff]
      %v1679 = vld [vmem:[#allocation2 + $0xc0] sm:$0xff]
      %v1680 = vld [vmem:[#allocation2 + $0xc8] sm:$0xff]
      %v1681 = vld [vmem:[#allocation2 + $0xd0] sm:$0xff]
      %v1682 = vld [vmem:[#allocation2 + $0xd8] sm:$0xff]
      %v1683 = vld [vmem:[#allocation2 + $0xe0] sm:$0xff]
      %v1684 = vld [vmem:[#allocation2 + $0xe8] sm:$0xff]
      %v1685 = vld [vmem:[#allocation2 + $0xf0] sm:$0xff]
      %v1686 = vld [vmem:[#allocation2 + $0xf8] sm:$0xff]
      %v1687 = vld [vmem:[#allocation2 + $0x100] sm:$0xff]
      %v1688 = vld [vmem:[#allocation2 + $0x108] sm:$0xff]
      %v1689 = vld [vmem:[#allocation2 + $0x110] sm:$0xff]
      %v1690 = vld [vmem:[#allocation2 + $0x118] sm:$0xff]
      %v1691 = vld [vmem:[#allocation2 + $0x120] sm:$0xff]
      %v1692 = vld [vmem:[#allocation2 + $0x128] sm:$0xff]
      %v1693 = vld [vmem:[#allocation2 + $0x130] sm:$0xff]
      %v1694 = vld [vmem:[#allocation2 + $0x138] sm:$0xff]
      %v1695 = vld [vmem:[#allocation2 + $0x140] sm:$0xff]
      %v1696 = vld [vmem:[#allocation2 + $0x148] sm:$0xff]
      %v1697 = vld [vmem:[#allocation2 + $0x150] sm:$0xff]
      %v1698 = vld [vmem:[#allocation2 + $0x158] sm:$0xff]
      %v1699 = vld [vmem:[#allocation2 + $0x160] sm:$0xff]
      %v1700 = vld [vmem:[#allocation2 + $0x168] sm:$0xff]
      %v1701 = vld [vmem:[#allocation2 + $0x170] sm:$0xff]
      %v1702 = vld [vmem:[#allocation2 + $0x178] sm:$0xff]
      %v1703 = vld [vmem:[%s498] sm:$0xf]
      %v1704 = vld [vmem:[%s498 + $0x4] sm:$0xf]
      %v1705 = vld [vmem:[%s498 + $0x8] sm:$0xf]
      %v1706 = vld [vmem:[%s498 + $0xc] sm:$0xf]
      %v1707 = vld [vmem:[%s498 + $0x10] sm:$0xf]
      %v1708 = vld [vmem:[%s498 + $0x14] sm:$0xf]
      %v1709 = vld [vmem:[%s498 + $0x18] sm:$0xf]
      %v1710 = vld [vmem:[%s498 + $0x1c] sm:$0xf]
      %v1711 = vld [vmem:[%s498 + $0x20] sm:$0xf]
      %v1712 = vld [vmem:[%s498 + $0x24] sm:$0xf]
      %v1713 = vld [vmem:[%s498 + $0x28] sm:$0xf]
      %v1714 = vld [vmem:[%s498 + $0x2c] sm:$0xf]
      %v1715 = vld [vmem:[%s498 + $0x30] sm:$0xf]
      %v1716 = vld [vmem:[%s498 + $0x34] sm:$0xf]
      %v1717 = vld [vmem:[%s498 + $0x38] sm:$0xf]
      %v1718 = vld [vmem:[%s498 + $0x3c] sm:$0xf]
      %v1719 = vld [vmem:[%s498 + $0x40] sm:$0xf]
      %v1720 = vld [vmem:[%s498 + $0x44] sm:$0xf]
      %v1721 = vld [vmem:[%s498 + $0x48] sm:$0xf]
      %v1722 = vld [vmem:[%s498 + $0x4c] sm:$0xf]
      %v1723 = vld [vmem:[%s498 + $0x50] sm:$0xf]
      %v1724 = vld [vmem:[%s498 + $0x54] sm:$0xf]
      %v1725 = vld [vmem:[%s498 + $0x58] sm:$0xf]
      %v1726 = vld [vmem:[%s498 + $0x5c] sm:$0xf]
      %v1727 = vld [vmem:[%s498 + $0x60] sm:$0xf]
      %v1728 = vld [vmem:[%s498 + $0x64] sm:$0xf]
      %v1729 = vld [vmem:[%s498 + $0x68] sm:$0xf]
      %v1730 = vld [vmem:[%s498 + $0x6c] sm:$0xf]
      %v1731 = vld [vmem:[%s498 + $0x70] sm:$0xf]
      %v1732 = vld [vmem:[%s498 + $0x74] sm:$0xf]
      %v1733 = vld [vmem:[%s498 + $0x78] sm:$0xf]
      %v1734 = vld [vmem:[%s498 + $0x7c] sm:$0xf]
      %v1735 = vld [vmem:[%s498 + $0x80] sm:$0xf]
      %v1736 = vld [vmem:[%s498 + $0x84] sm:$0xf]
      %v1737 = vld [vmem:[%s498 + $0x88] sm:$0xf]
      %v1738 = vld [vmem:[%s498 + $0x8c] sm:$0xf]
      %v1739 = vld [vmem:[%s498 + $0x90] sm:$0xf]
      %v1740 = vld [vmem:[%s498 + $0x94] sm:$0xf]
      %v1741 = vld [vmem:[%s498 + $0x98] sm:$0xf]
      %v1742 = vld [vmem:[%s498 + $0x9c] sm:$0xf]
      %v1743 = vld [vmem:[%s498 + $0xa0] sm:$0xf]
      %v1744 = vld [vmem:[%s498 + $0xa4] sm:$0xf]
      %v1745 = vld [vmem:[%s498 + $0xa8] sm:$0xf]
      %v1746 = vld [vmem:[%s498 + $0xac] sm:$0xf]
      %v1747 = vld [vmem:[%s498 + $0xb0] sm:$0xf]
      %v1748 = vld [vmem:[%s498 + $0xb4] sm:$0xf]
      %v1749 = vld [vmem:[%s498 + $0xb8] sm:$0xf]
      %v1750 = vld [vmem:[%s498 + $0xbc] sm:$0xf]
      %v1751 = vld [vmem:[%s1489] sm:$0xff]
      %v1752 = vld [vmem:[%s1489 + $0x8] sm:$0xff]
      %v1753 = vld [vmem:[%s1489 + $0x10] sm:$0xff]
      %v1754 = vld [vmem:[%s1489 + $0x18] sm:$0xff]
      %v1755 = vld [vmem:[%s1489 + $0x20] sm:$0xff]
      %v1756 = vld [vmem:[%s1489 + $0x28] sm:$0xff]
      %v1757 = vld [vmem:[%s1489 + $0x30] sm:$0xff]
      %v1758 = vld [vmem:[%s1489 + $0x38] sm:$0xff]
      %v1759 = vld [vmem:[%s1489 + $0x40] sm:$0xff]
      %v1760 = vld [vmem:[%s1489 + $0x48] sm:$0xff]
      %v1761 = vld [vmem:[%s1489 + $0x50] sm:$0xff]
      %v1762 = vld [vmem:[%s1489 + $0x58] sm:$0xff]
      %v1763 = vld [vmem:[%s1489 + $0x60] sm:$0xff]
      %v1764 = vld [vmem:[%s1489 + $0x68] sm:$0xff]
      %v1765 = vld [vmem:[%s1489 + $0x70] sm:$0xff]
      %v1766 = vld [vmem:[%s1489 + $0x78] sm:$0xff]
      %v1767 = vld [vmem:[%s1489 + $0x80] sm:$0xff]
      %v1768 = vld [vmem:[%s1489 + $0x88] sm:$0xff]
      %v1769 = vld [vmem:[%s1489 + $0x90] sm:$0xff]
      %v1770 = vld [vmem:[%s1489 + $0x98] sm:$0xff]
      %v1771 = vld [vmem:[%s1489 + $0xa0] sm:$0xff]
      %v1772 = vld [vmem:[%s1489 + $0xa8] sm:$0xff]
      %v1773 = vld [vmem:[%s1489 + $0xb0] sm:$0xff]
      %v1774 = vld [vmem:[%s1489 + $0xb8] sm:$0xff]
      %v1775 = vld [vmem:[%s1489 + $0xc0] sm:$0xff]
      %v1776 = vld [vmem:[%s1489 + $0xc8] sm:$0xff]
      %v1777 = vld [vmem:[%s1489 + $0xd0] sm:$0xff]
      %v1778 = vld [vmem:[%s1489 + $0xd8] sm:$0xff]
      %v1779 = vld [vmem:[%s1489 + $0xe0] sm:$0xff]
      %v1780 = vld [vmem:[%s1489 + $0xe8] sm:$0xff]
      %v1781 = vld [vmem:[%s1489 + $0xf0] sm:$0xff]
      %v1782 = vld [vmem:[%s1489 + $0xf8] sm:$0xff]
      %v1783 = vld [vmem:[%s1489 + $0x100] sm:$0xff]
      %v1784 = vld [vmem:[%s1489 + $0x108] sm:$0xff]
      %v1785 = vld [vmem:[%s1489 + $0x110] sm:$0xff]
      %v1786 = vld [vmem:[%s1489 + $0x118] sm:$0xff]
      %v1787 = vld [vmem:[%s1489 + $0x120] sm:$0xff]
      %v1788 = vld [vmem:[%s1489 + $0x128] sm:$0xff]
      %v1789 = vld [vmem:[%s1489 + $0x130] sm:$0xff]
      %v1790 = vld [vmem:[%s1489 + $0x138] sm:$0xff]
      %v1791 = vld [vmem:[%s1489 + $0x140] sm:$0xff]
      %v1792 = vld [vmem:[%s1489 + $0x148] sm:$0xff]
      %v1793 = vld [vmem:[%s1489 + $0x150] sm:$0xff]
      %v1794 = vld [vmem:[%s1489 + $0x158] sm:$0xff]
      %v1795 = vld [vmem:[%s1489 + $0x160] sm:$0xff]
      %v1796 = vld [vmem:[%s1489 + $0x168] sm:$0xff]
      %v1797 = vld [vmem:[%s1489 + $0x170] sm:$0xff]
      %v1798 = vld [vmem:[%s1489 + $0x178] sm:$0xff]
      %s1799 = scalar_lea.vmem %s498, 192
      %v1800 = vld [vmem:[%s1799] sm:$0xf]
      %v1801 = vld [vmem:[%s1799 + $0x4] sm:$0xf]
      %v1802 = vld [vmem:[%s1799 + $0x8] sm:$0xf]
      %v1803 = vld [vmem:[%s1799 + $0xc] sm:$0xf]
      %v1804 = vld [vmem:[%s1799 + $0x10] sm:$0xf]
      %v1805 = vld [vmem:[%s1799 + $0x14] sm:$0xf]
      %v1806 = vld [vmem:[%s1799 + $0x18] sm:$0xf]
      %v1807 = vld [vmem:[%s1799 + $0x1c] sm:$0xf]
      %v1808 = vld [vmem:[%s1799 + $0x20] sm:$0xf]
      %v1809 = vld [vmem:[%s1799 + $0x24] sm:$0xf]
      %v1810 = vld [vmem:[%s1799 + $0x28] sm:$0xf]
      %v1811 = vld [vmem:[%s1799 + $0x2c] sm:$0xf]
      %v1812 = vld [vmem:[%s1799 + $0x30] sm:$0xf]
      %v1813 = vld [vmem:[%s1799 + $0x34] sm:$0xf]
      %v1814 = vld [vmem:[%s1799 + $0x38] sm:$0xf]
      %v1815 = vld [vmem:[%s1799 + $0x3c] sm:$0xf]
      %v1816 = vld [vmem:[%s1799 + $0x40] sm:$0xf]
      %v1817 = vld [vmem:[%s1799 + $0x44] sm:$0xf]
      %v1818 = vld [vmem:[%s1799 + $0x48] sm:$0xf]
      %v1819 = vld [vmem:[%s1799 + $0x4c] sm:$0xf]
      %v1820 = vld [vmem:[%s1799 + $0x50] sm:$0xf]
      %v1821 = vld [vmem:[%s1799 + $0x54] sm:$0xf]
      %v1822 = vld [vmem:[%s1799 + $0x58] sm:$0xf]
      %v1823 = vld [vmem:[%s1799 + $0x5c] sm:$0xf]
      %v1824 = vld [vmem:[%s1799 + $0x60] sm:$0xf]
      %v1825 = vld [vmem:[%s1799 + $0x64] sm:$0xf]
      %v1826 = vld [vmem:[%s1799 + $0x68] sm:$0xf]
      %v1827 = vld [vmem:[%s1799 + $0x6c] sm:$0xf]
      %v1828 = vld [vmem:[%s1799 + $0x70] sm:$0xf]
      %v1829 = vld [vmem:[%s1799 + $0x74] sm:$0xf]
      %v1830 = vld [vmem:[%s1799 + $0x78] sm:$0xf]
      %v1831 = vld [vmem:[%s1799 + $0x7c] sm:$0xf]
      %v1832 = vld [vmem:[%s1799 + $0x80] sm:$0xf]
      %v1833 = vld [vmem:[%s1799 + $0x84] sm:$0xf]
      %v1834 = vld [vmem:[%s1799 + $0x88] sm:$0xf]
      %v1835 = vld [vmem:[%s1799 + $0x8c] sm:$0xf]
      %v1836 = vld [vmem:[%s1799 + $0x90] sm:$0xf]
      %v1837 = vld [vmem:[%s1799 + $0x94] sm:$0xf]
      %v1838 = vld [vmem:[%s1799 + $0x98] sm:$0xf]
      %v1839 = vld [vmem:[%s1799 + $0x9c] sm:$0xf]
      %v1840 = vld [vmem:[%s1799 + $0xa0] sm:$0xf]
      %v1841 = vld [vmem:[%s1799 + $0xa4] sm:$0xf]
      %v1842 = vld [vmem:[%s1799 + $0xa8] sm:$0xf]
      %v1843 = vld [vmem:[%s1799 + $0xac] sm:$0xf]
      %v1844 = vld [vmem:[%s1799 + $0xb0] sm:$0xf]
      %v1845 = vld [vmem:[%s1799 + $0xb4] sm:$0xf]
      %v1846 = vld [vmem:[%s1799 + $0xb8] sm:$0xf]
      %v1847 = vld [vmem:[%s1799 + $0xbc] sm:$0xf]
      %v1896 = vunpack.c.l.b16 %v1800
      %v1897 = vunpack.c.l.b16 %v1801
      %v1898 = vunpack.c.l.b16 %v1802
      %v1899 = vunpack.c.l.b16 %v1803
      %v1900 = vunpack.c.l.b16 %v1804
      %v1901 = vunpack.c.l.b16 %v1805
      %v1902 = vunpack.c.l.b16 %v1806
      %v1903 = vunpack.c.l.b16 %v1807
      %v1904 = vunpack.c.l.b16 %v1808
      %v1905 = vunpack.c.l.b16 %v1809
      %v1906 = vunpack.c.l.b16 %v1810
      %v1907 = vunpack.c.l.b16 %v1811
      %v1908 = vunpack.c.l.b16 %v1812
      %v1909 = vunpack.c.l.b16 %v1813
      %v1910 = vunpack.c.l.b16 %v1814
      %v1911 = vunpack.c.l.b16 %v1815
      %v1912 = vunpack.c.l.b16 %v1816
      %v1913 = vunpack.c.l.b16 %v1817
      %v1914 = vunpack.c.l.b16 %v1818
      %v1915 = vunpack.c.l.b16 %v1819
      %v1916 = vunpack.c.l.b16 %v1820
      %v1917 = vunpack.c.l.b16 %v1821
      %v1918 = vunpack.c.l.b16 %v1822
      %v1919 = vunpack.c.l.b16 %v1823
      %v1920 = vunpack.c.l.b16 %v1824
      %v1921 = vunpack.c.l.b16 %v1825
      %v1922 = vunpack.c.l.b16 %v1826
      %v1923 = vunpack.c.l.b16 %v1827
      %v1924 = vunpack.c.l.b16 %v1828
      %v1925 = vunpack.c.l.b16 %v1829
      %v1926 = vunpack.c.l.b16 %v1830
      %v1927 = vunpack.c.l.b16 %v1831
      %v1928 = vunpack.c.l.b16 %v1832
      %v1929 = vunpack.c.l.b16 %v1833
      %v1930 = vunpack.c.l.b16 %v1834
      %v1931 = vunpack.c.l.b16 %v1835
      %v1932 = vunpack.c.l.b16 %v1836
      %v1933 = vunpack.c.l.b16 %v1837
      %v1934 = vunpack.c.l.b16 %v1838
      %v1935 = vunpack.c.l.b16 %v1839
      %v1936 = vunpack.c.l.b16 %v1840
      %v1937 = vunpack.c.l.b16 %v1841
      %v1938 = vunpack.c.l.b16 %v1842
      %v1939 = vunpack.c.l.b16 %v1843
      %v1940 = vunpack.c.l.b16 %v1844
      %v1941 = vunpack.c.l.b16 %v1845
      %v1942 = vunpack.c.l.b16 %v1846
      %v1943 = vunpack.c.l.b16 %v1847
      %v1944 = vpack.c.b16 %v1897, %v1896
      %v1945 = vpack.c.b16 %v1899, %v1898
      %v1946 = vpack.c.b16 %v1901, %v1900
      %v1947 = vpack.c.b16 %v1903, %v1902
      %v1948 = vpack.c.b16 %v1905, %v1904
      %v1949 = vpack.c.b16 %v1907, %v1906
      %v1950 = vpack.c.b16 %v1909, %v1908
      %v1951 = vpack.c.b16 %v1911, %v1910
      %v1952 = vpack.c.b16 %v1913, %v1912
      %v1953 = vpack.c.b16 %v1915, %v1914
      %v1954 = vpack.c.b16 %v1917, %v1916
      %v1955 = vpack.c.b16 %v1919, %v1918
      %v1956 = vpack.c.b16 %v1921, %v1920
      %v1957 = vpack.c.b16 %v1923, %v1922
      %v1958 = vpack.c.b16 %v1925, %v1924
      %v1959 = vpack.c.b16 %v1927, %v1926
      %v1960 = vpack.c.b16 %v1929, %v1928
      %v1961 = vpack.c.b16 %v1931, %v1930
      %v1962 = vpack.c.b16 %v1933, %v1932
      %v1963 = vpack.c.b16 %v1935, %v1934
      %v1964 = vpack.c.b16 %v1937, %v1936
      %v1965 = vpack.c.b16 %v1939, %v1938
      %v1966 = vpack.c.b16 %v1941, %v1940
      %v1967 = vpack.c.b16 %v1943, %v1942
      %1992 = vmatprep.subr.bf16.mxu0 0
      %1993 = vmatpush1.bf16.msra.mxu0 %v1944
      %1994 = vmatprep.subr.bf16.mxu0 0
      %1995 = vmatpush1.bf16.msra.mxu0 %v1945
      %1996 = vmatprep.subr.bf16.mxu0 0
      %1997 = vmatpush1.bf16.msra.mxu0 %v1946
      %1998 = vmatprep.subr.bf16.mxu0 0
      %1999 = vmatpush1.bf16.msra.mxu0 %v1947
      %2000 = vmatprep.subr.bf16.mxu0 0
      %2001 = vmatpush1.bf16.msra.mxu0 %v1948
      %2002 = vmatprep.subr.bf16.mxu0 0
      %2003 = vmatpush1.bf16.msra.mxu0 %v1949
      %2004 = vmatprep.subr.bf16.mxu0 0
      %2005 = vmatpush1.bf16.msra.mxu0 %v1950
      %2006 = vmatprep.subr.bf16.mxu0 0
      %2007 = vmatpush1.bf16.msra.mxu0 %v1951
      %2008 = vmatprep.subr.bf16.mxu0 0
      %2009 = vmatpush1.bf16.msra.mxu0 %v1952
      %2010 = vmatprep.subr.bf16.mxu0 0
      %2011 = vmatpush1.bf16.msra.mxu0 %v1953
      %2012 = vmatprep.subr.bf16.mxu0 0
      %2013 = vmatpush1.bf16.msra.mxu0 %v1954
      %2014 = vmatprep.subr.bf16.mxu0 0
      %2015 = vmatpush1.bf16.msra.mxu0 %v1955
      %2016 = vmatprep.subr.bf16.mxu0 0
      %2017 = vmatpush1.bf16.msra.mxu0 %v1956
      %2018 = vmatprep.subr.bf16.mxu0 0
      %2019 = vmatpush1.bf16.msra.mxu0 %v1957
      %2020 = vmatprep.subr.bf16.mxu0 0
      %2021 = vmatpush1.bf16.msra.mxu0 %v1958
      %2022 = vmatprep.subr.bf16.mxu0 0
      %2023 = vmatpush1.bf16.msra.mxu0 %v1959
      %2024 = vmatprep.mubr.bf16.mxu0 %v1752
      %2025 = vmatmul.mubr.bf16.gmra.mrb[0].mxu0 %v1751
      %v2026 = vpop.f32.mrb[0].mxu0
      %v2027 = vadd.f32 0.0, %v2026
      %v2028 = vpop.f32.mrb[0].mxu0
      %v2029 = vpop.f32.mrb[0].mxu0
      %v2030 = vadd.f32 0.0, %v2029
      %v2031 = vpop.f32.mrb[0].mxu0
      %2032 = vmatprep.mubr.bf16.mxu0 %v1755
      %2033 = vmatmul.mubr.bf16.gmra.mrb[0].mxu0 %v1754
      %v2034 = vpop.f32.mrb[0].mxu0
      %v2035 = vadd.f32 0.0, %v2034
      %v2036 = vpop.f32.mrb[0].mxu0
      %v2037 = vpop.f32.mrb[0].mxu0
      %v2038 = vadd.f32 0.0, %v2037
      %v2039 = vpop.f32.mrb[0].mxu0
      %2040 = vmatprep.mubr.bf16.mxu0 %v1758
      %2041 = vmatmul.mubr.bf16.gmra.mrb[0].mxu0 %v1757
      %v2042 = vpop.f32.mrb[0].mxu0
      %v2043 = vadd.f32 0.0, %v2042
      %v2044 = vpop.f32.mrb[0].mxu0
      %v2045 = vpop.f32.mrb[0].mxu0
      %v2046 = vadd.f32 0.0, %v2045
      %v2047 = vpop.f32.mrb[0].mxu0
      %2048 = vmatprep.mubr.bf16.mxu0 %v1761
      %2049 = vmatmul.mubr.bf16.gmra.mrb[0].mxu0 %v1760
      %v2050 = vpop.f32.mrb[0].mxu0
      %v2051 = vadd.f32 0.0, %v2050
      %v2052 = vpop.f32.mrb[0].mxu0
      %v2053 = vpop.f32.mrb[0].mxu0
      %v2054 = vadd.f32 0.0, %v2053
      %v2055 = vpop.f32.mrb[0].mxu0
      %2056 = vmatprep.mubr.bf16.mxu0 %v1764
      %2057 = vmatmul.mubr.bf16.gmra.mrb[0].mxu0 %v1763
      %v2058 = vpop.f32.mrb[0].mxu0
      %v2059 = vadd.f32 0.0, %v2058
      %v2060 = vpop.f32.mrb[0].mxu0
      %v2061 = vpop.f32.mrb[0].mxu0
      %v2062 = vadd.f32 0.0, %v2061
      %v2063 = vpop.f32.mrb[0].mxu0
      %2064 = vmatprep.mubr.bf16.mxu0 %v1767
      %2065 = vmatmul.mubr.bf16.gmra.mrb[0].mxu0 %v1766
      %v2066 = vpop.f32.mrb[0].mxu0
      %v2067 = vadd.f32 0.0, %v2066
      %v2068 = vpop.f32.mrb[0].mxu0
      %v2069 = vpop.f32.mrb[0].mxu0
      %v2070 = vadd.f32 0.0, %v2069
      %v2071 = vpop.f32.mrb[0].mxu0
      %2072 = vmatprep.mubr.bf16.mxu0 %v1770
      %2073 = vmatmul.mubr.bf16.gmra.mrb[0].mxu0 %v1769
      %v2074 = vpop.f32.mrb[0].mxu0
      %v2075 = vadd.f32 0.0, %v2074
      %v2076 = vpop.f32.mrb[0].mxu0
      %v2077 = vpop.f32.mrb[0].mxu0
      %v2078 = vadd.f32 0.0, %v2077
      %v2079 = vpop.f32.mrb[0].mxu0
      %2080 = vmatprep.mubr.bf16.mxu0 %v1773
      %2081 = vmatmul.mubr.bf16.gmra.mrb[0].mxu0 %v1772
      %v2082 = vpop.f32.mrb[0].mxu0
      %v2083 = vadd.f32 0.0, %v2082
      %v2084 = vpop.f32.mrb[0].mxu0
      %v2085 = vpop.f32.mrb[0].mxu0
      %v2086 = vadd.f32 0.0, %v2085
      %v2087 = vpop.f32.mrb[0].mxu0
      %2088 = vmatprep.mubr.bf16.mxu0 %v1776
      %2089 = vmatmul.mubr.bf16.gmra.mrb[0].mxu0 %v1775
      %v2090 = vpop.f32.mrb[0].mxu0
      %v2091 = vadd.f32 0.0, %v2090
      %v2092 = vpop.f32.mrb[0].mxu0
      %v2093 = vpop.f32.mrb[0].mxu0
      %v2094 = vadd.f32 0.0, %v2093
      %v2095 = vpop.f32.mrb[0].mxu0
      %2096 = vmatprep.mubr.bf16.mxu0 %v1779
      %2097 = vmatmul.mubr.bf16.gmra.mrb[0].mxu0 %v1778
      %v2098 = vpop.f32.mrb[0].mxu0
      %v2099 = vadd.f32 0.0, %v2098
      %v2100 = vpop.f32.mrb[0].mxu0
      %v2101 = vpop.f32.mrb[0].mxu0
      %v2102 = vadd.f32 0.0, %v2101
      %v2103 = vpop.f32.mrb[0].mxu0
      %2104 = vmatprep.mubr.bf16.mxu0 %v1782
      %2105 = vmatmul.mubr.bf16.gmra.mrb[0].mxu0 %v1781
      %v2106 = vpop.f32.mrb[0].mxu0
      %v2107 = vadd.f32 0.0, %v2106
      %v2108 = vpop.f32.mrb[0].mxu0
      %v2109 = vpop.f32.mrb[0].mxu0
      %v2110 = vadd.f32 0.0, %v2109
      %v2111 = vpop.f32.mrb[0].mxu0
      %2112 = vmatprep.mubr.bf16.mxu0 %v1785
      %2113 = vmatmul.mubr.bf16.gmra.mrb[0].mxu0 %v1784
      %v2114 = vpop.f32.mrb[0].mxu0
      %v2115 = vadd.f32 0.0, %v2114
      %v2116 = vpop.f32.mrb[0].mxu0
      %v2117 = vpop.f32.mrb[0].mxu0
      %v2118 = vadd.f32 0.0, %v2117
      %v2119 = vpop.f32.mrb[0].mxu0
      %2120 = vmatprep.mubr.bf16.mxu0 %v1788
      %2121 = vmatmul.mubr.bf16.gmra.mrb[0].mxu0 %v1787
      %v2122 = vpop.f32.mrb[0].mxu0
      %v2123 = vadd.f32 0.0, %v2122
      %v2124 = vpop.f32.mrb[0].mxu0
      %v2125 = vpop.f32.mrb[0].mxu0
      %v2126 = vadd.f32 0.0, %v2125
      %v2127 = vpop.f32.mrb[0].mxu0
      %2128 = vmatprep.mubr.bf16.mxu0 %v1791
      %2129 = vmatmul.mubr.bf16.gmra.mrb[0].mxu0 %v1790
      %v2130 = vpop.f32.mrb[0].mxu0
      %v2131 = vadd.f32 0.0, %v2130
      %v2132 = vpop.f32.mrb[0].mxu0
      %v2133 = vpop.f32.mrb[0].mxu0
      %v2134 = vadd.f32 0.0, %v2133
      %v2135 = vpop.f32.mrb[0].mxu0
      %2136 = vmatprep.mubr.bf16.mxu0 %v1794
      %2137 = vmatmul.mubr.bf16.gmra.mrb[0].mxu0 %v1793
      %v2138 = vpop.f32.mrb[0].mxu0
      %v2139 = vadd.f32 0.0, %v2138
      %v2140 = vpop.f32.mrb[0].mxu0
      %v2141 = vpop.f32.mrb[0].mxu0
      %v2142 = vadd.f32 0.0, %v2141
      %v2143 = vpop.f32.mrb[0].mxu0
      %2144 = vmatprep.mubr.bf16.mxu0 %v1797
      %2145 = vmatmul.mubr.bf16.gmra.mrb[0].mxu0 %v1796
      %v2146 = vpop.f32.mrb[0].mxu0
      %v2147 = vadd.f32 0.0, %v2146
      %v2148 = vpop.f32.mrb[0].mxu0
      %v2149 = vpop.f32.mrb[0].mxu0
      %v2150 = vadd.f32 0.0, %v2149
      %v2151 = vpop.f32.mrb[0].mxu0
      %2152 = vdwg.mxu0
      %2153 = vmatprep.subr.bf16.mxu0 0
      %2154 = vmatpush1.bf16.msra.mxu0 %v1960
      %2155 = vmatprep.subr.bf16.mxu0 0
      %2156 = vmatpush1.bf16.msra.mxu0 %v1961
      %2157 = vmatprep.subr.bf16.mxu0 0
      %2158 = vmatpush1.bf16.msra.mxu0 %v1962
      %2159 = vmatprep.subr.bf16.mxu0 0
      %2160 = vmatpush1.bf16.msra.mxu0 %v1963
      %2161 = vmatprep.subr.bf16.mxu0 0
      %2162 = vmatpush1.bf16.msra.mxu0 %v1964
      %2163 = vmatprep.subr.bf16.mxu0 0
      %2164 = vmatpush1.bf16.msra.mxu0 %v1965
      %2165 = vmatprep.subr.bf16.mxu0 0
      %2166 = vmatpush1.bf16.msra.mxu0 %v1966
      %2167 = vmatprep.subr.bf16.mxu0 0
      %2168 = vmatpush1.bf16.msra.mxu0 %v1967
      %2169 = vmatprep.subr.bf16.mxu0 0
      %2170 = vmatpush1.bf16.msra.mxu0 0
      %2171 = vmatprep.subr.bf16.mxu0 0
      %2172 = vmatpush1.bf16.msra.mxu0 0
      %2173 = vmatprep.subr.bf16.mxu0 0
      %2174 = vmatpush1.bf16.msra.mxu0 0
      %2175 = vmatprep.subr.bf16.mxu0 0
      %2176 = vmatpush1.bf16.msra.mxu0 0
      %2177 = vmatprep.subr.bf16.mxu0 0
      %2178 = vmatpush1.bf16.msra.mxu0 0
      %2179 = vmatprep.subr.bf16.mxu0 0
      %2180 = vmatpush1.bf16.msra.mxu0 0
      %2181 = vmatprep.subr.bf16.mxu0 0
      %2182 = vmatpush1.bf16.msra.mxu0 0
      %2183 = vmatprep.subr.bf16.mxu0 0
      %2184 = vmatpush1.bf16.msra.mxu0 0
      %2185 = vmatprep.mubr.bf16.mxu0 0
      %2186 = vmatmul.mubr.bf16.gmra.mrb[0].mxu0 %v1753
      %v2187 = vpop.f32.mrb[0].mxu0
      %v2188 = vadd.f32 %v2027, %v2187
      %v2189 = vpop.f32.mrb[0].mxu0
      %v2190 = vpop.f32.mrb[0].mxu0
      %v2191 = vadd.f32 %v2030, %v2190
      %v2192 = vpop.f32.mrb[0].mxu0
      %2193 = vmatprep.mubr.bf16.mxu0 0
      %2194 = vmatmul.mubr.bf16.gmra.mrb[0].mxu0 %v1756
      %v2195 = vpop.f32.mrb[0].mxu0
      %v2196 = vadd.f32 %v2035, %v2195
      %v2197 = vpop.f32.mrb[0].mxu0
      %v2198 = vpop.f32.mrb[0].mxu0
      %v2199 = vadd.f32 %v2038, %v2198
      %v2200 = vpop.f32.mrb[0].mxu0
      %2201 = vmatprep.mubr.bf16.mxu0 0
      %2202 = vmatmul.mubr.bf16.gmra.mrb[0].mxu0 %v1759
      %v2203 = vpop.f32.mrb[0].mxu0
      %v2204 = vadd.f32 %v2043, %v2203
      %v2205 = vpop.f32.mrb[0].mxu0
      %v2206 = vpop.f32.mrb[0].mxu0
      %v2207 = vadd.f32 %v2046, %v2206
      %v2208 = vpop.f32.mrb[0].mxu0
      %2209 = vmatprep.mubr.bf16.mxu0 0
      %2210 = vmatmul.mubr.bf16.gmra.mrb[0].mxu0 %v1762
      %v2211 = vpop.f32.mrb[0].mxu0
      %v2212 = vadd.f32 %v2051, %v2211
      %v2213 = vpop.f32.mrb[0].mxu0
      %v2214 = vpop.f32.mrb[0].mxu0
      %v2215 = vadd.f32 %v2054, %v2214
      %v2216 = vpop.f32.mrb[0].mxu0
      %2217 = vmatprep.mubr.bf16.mxu0 0
      %2218 = vmatmul.mubr.bf16.gmra.mrb[0].mxu0 %v1765
      %v2219 = vpop.f32.mrb[0].mxu0
      %v2220 = vadd.f32 %v2059, %v2219
      %v2221 = vpop.f32.mrb[0].mxu0
      %v2222 = vpop.f32.mrb[0].mxu0
      %v2223 = vadd.f32 %v2062, %v2222
      %v2224 = vpop.f32.mrb[0].mxu0
      %2225 = vmatprep.mubr.bf16.mxu0 0
      %2226 = vmatmul.mubr.bf16.gmra.mrb[0].mxu0 %v1768
      %v2227 = vpop.f32.mrb[0].mxu0
      %v2228 = vadd.f32 %v2067, %v2227
      %v2229 = vpop.f32.mrb[0].mxu0
      %v2230 = vpop.f32.mrb[0].mxu0
      %v2231 = vadd.f32 %v2070, %v2230
      %v2232 = vpop.f32.mrb[0].mxu0
      %2233 = vmatprep.mubr.bf16.mxu0 0
      %2234 = vmatmul.mubr.bf16.gmra.mrb[0].mxu0 %v1771
      %v2235 = vpop.f32.mrb[0].mxu0
      %v2236 = vadd.f32 %v2075, %v2235
      %v2237 = vpop.f32.mrb[0].mxu0
      %v2238 = vpop.f32.mrb[0].mxu0
      %v2239 = vadd.f32 %v2078, %v2238
      %v2240 = vpop.f32.mrb[0].mxu0
      %2241 = vmatprep.mubr.bf16.mxu0 0
      %2242 = vmatmul.mubr.bf16.gmra.mrb[0].mxu0 %v1774
      %v2243 = vpop.f32.mrb[0].mxu0
      %v2244 = vadd.f32 %v2083, %v2243
      %v2245 = vpop.f32.mrb[0].mxu0
      %v2246 = vpop.f32.mrb[0].mxu0
      %v2247 = vadd.f32 %v2086, %v2246
      %v2248 = vpop.f32.mrb[0].mxu0
      %2249 = vmatprep.mubr.bf16.mxu0 0
      %2250 = vmatmul.mubr.bf16.gmra.mrb[0].mxu0 %v1777
      %v2251 = vpop.f32.mrb[0].mxu0
      %v2252 = vadd.f32 %v2091, %v2251
      %v2253 = vpop.f32.mrb[0].mxu0
      %v2254 = vpop.f32.mrb[0].mxu0
      %v2255 = vadd.f32 %v2094, %v2254
      %v2256 = vpop.f32.mrb[0].mxu0
      %2257 = vmatprep.mubr.bf16.mxu0 0
      %2258 = vmatmul.mubr.bf16.gmra.mrb[0].mxu0 %v1780
      %v2259 = vpop.f32.mrb[0].mxu0
      %v2260 = vadd.f32 %v2099, %v2259
      %v2261 = vpop.f32.mrb[0].mxu0
      %v2262 = vpop.f32.mrb[0].mxu0
      %v2263 = vadd.f32 %v2102, %v2262
      %v2264 = vpop.f32.mrb[0].mxu0
      %2265 = vmatprep.mubr.bf16.mxu0 0
      %2266 = vmatmul.mubr.bf16.gmra.mrb[0].mxu0 %v1783
      %v2267 = vpop.f32.mrb[0].mxu0
      %v2268 = vadd.f32 %v2107, %v2267
      %v2269 = vpop.f32.mrb[0].mxu0
      %v2270 = vpop.f32.mrb[0].mxu0
      %v2271 = vadd.f32 %v2110, %v2270
      %v2272 = vpop.f32.mrb[0].mxu0
      %2273 = vmatprep.mubr.bf16.mxu0 0
      %2274 = vmatmul.mubr.bf16.gmra.mrb[0].mxu0 %v1786
      %v2275 = vpop.f32.mrb[0].mxu0
      %v2276 = vadd.f32 %v2115, %v2275
      %v2277 = vpop.f32.mrb[0].mxu0
      %v2278 = vpop.f32.mrb[0].mxu0
      %v2279 = vadd.f32 %v2118, %v2278
      %v2280 = vpop.f32.mrb[0].mxu0
      %2281 = vmatprep.mubr.bf16.mxu0 0
      %2282 = vmatmul.mubr.bf16.gmra.mrb[0].mxu0 %v1789
      %v2283 = vpop.f32.mrb[0].mxu0
      %v2284 = vadd.f32 %v2123, %v2283
      %v2285 = vpop.f32.mrb[0].mxu0
      %v2286 = vpop.f32.mrb[0].mxu0
      %v2287 = vadd.f32 %v2126, %v2286
      %v2288 = vpop.f32.mrb[0].mxu0
      %2289 = vmatprep.mubr.bf16.mxu0 0
      %2290 = vmatmul.mubr.bf16.gmra.mrb[0].mxu0 %v1792
      %v2291 = vpop.f32.mrb[0].mxu0
      %v2292 = vadd.f32 %v2131, %v2291
      %v2293 = vpop.f32.mrb[0].mxu0
      %v2294 = vpop.f32.mrb[0].mxu0
      %v2295 = vadd.f32 %v2134, %v2294
      %v2296 = vpop.f32.mrb[0].mxu0
      %2297 = vmatprep.mubr.bf16.mxu0 0
      %2298 = vmatmul.mubr.bf16.gmra.mrb[0].mxu0 %v1795
      %v2299 = vpop.f32.mrb[0].mxu0
      %v2300 = vadd.f32 %v2139, %v2299
      %v2301 = vpop.f32.mrb[0].mxu0
      %v2302 = vpop.f32.mrb[0].mxu0
      %v2303 = vadd.f32 %v2142, %v2302
      %v2304 = vpop.f32.mrb[0].mxu0
      %2305 = vmatprep.mubr.bf16.mxu0 0
      %2306 = vmatmul.mubr.bf16.gmra.mrb[0].mxu0 %v1798
      %v2307 = vpop.f32.mrb[0].mxu0
      %v2308 = vadd.f32 %v2147, %v2307
      %v2309 = vpop.f32.mrb[0].mxu0
      %v2310 = vpop.f32.mrb[0].mxu0
      %v2311 = vadd.f32 %v2150, %v2310
      %v2312 = vpop.f32.mrb[0].mxu0
      %2313 = vdwg.mxu0
      %v2362 = vunpack.c.l.b16 %v1703
      %v2363 = vunpack.c.l.b16 %v1704
      %v2364 = vunpack.c.l.b16 %v1705
      %v2365 = vunpack.c.l.b16 %v1706
      %v2366 = vunpack.c.l.b16 %v1707
      %v2367 = vunpack.c.l.b16 %v1708
      %v2368 = vunpack.c.l.b16 %v1709
      %v2369 = vunpack.c.l.b16 %v1710
      %v2370 = vunpack.c.l.b16 %v1711
      %v2371 = vunpack.c.l.b16 %v1712
      %v2372 = vunpack.c.l.b16 %v1713
      %v2373 = vunpack.c.l.b16 %v1714
      %v2374 = vunpack.c.l.b16 %v1715
      %v2375 = vunpack.c.l.b16 %v1716
      %v2376 = vunpack.c.l.b16 %v1717
      %v2377 = vunpack.c.l.b16 %v1718
      %v2378 = vunpack.c.l.b16 %v1719
      %v2379 = vunpack.c.l.b16 %v1720
      %v2380 = vunpack.c.l.b16 %v1721
      %v2381 = vunpack.c.l.b16 %v1722
      %v2382 = vunpack.c.l.b16 %v1723
      %v2383 = vunpack.c.l.b16 %v1724
      %v2384 = vunpack.c.l.b16 %v1725
      %v2385 = vunpack.c.l.b16 %v1726
      %v2386 = vunpack.c.l.b16 %v1727
      %v2387 = vunpack.c.l.b16 %v1728
      %v2388 = vunpack.c.l.b16 %v1729
      %v2389 = vunpack.c.l.b16 %v1730
      %v2390 = vunpack.c.l.b16 %v1731
      %v2391 = vunpack.c.l.b16 %v1732
      %v2392 = vunpack.c.l.b16 %v1733
      %v2393 = vunpack.c.l.b16 %v1734
      %v2394 = vunpack.c.l.b16 %v1735
      %v2395 = vunpack.c.l.b16 %v1736
      %v2396 = vunpack.c.l.b16 %v1737
      %v2397 = vunpack.c.l.b16 %v1738
      %v2398 = vunpack.c.l.b16 %v1739
      %v2399 = vunpack.c.l.b16 %v1740
      %v2400 = vunpack.c.l.b16 %v1741
      %v2401 = vunpack.c.l.b16 %v1742
      %v2402 = vunpack.c.l.b16 %v1743
      %v2403 = vunpack.c.l.b16 %v1744
      %v2404 = vunpack.c.l.b16 %v1745
      %v2405 = vunpack.c.l.b16 %v1746
      %v2406 = vunpack.c.l.b16 %v1747
      %v2407 = vunpack.c.l.b16 %v1748
      %v2408 = vunpack.c.l.b16 %v1749
      %v2409 = vunpack.c.l.b16 %v1750
      %v2410 = vpack.c.b16 %v2363, %v2362
      %v2411 = vpack.c.b16 %v2365, %v2364
      %v2412 = vpack.c.b16 %v2367, %v2366
      %v2413 = vpack.c.b16 %v2369, %v2368
      %v2414 = vpack.c.b16 %v2371, %v2370
      %v2415 = vpack.c.b16 %v2373, %v2372
      %v2416 = vpack.c.b16 %v2375, %v2374
      %v2417 = vpack.c.b16 %v2377, %v2376
      %v2418 = vpack.c.b16 %v2379, %v2378
      %v2419 = vpack.c.b16 %v2381, %v2380
      %v2420 = vpack.c.b16 %v2383, %v2382
      %v2421 = vpack.c.b16 %v2385, %v2384
      %v2422 = vpack.c.b16 %v2387, %v2386
      %v2423 = vpack.c.b16 %v2389, %v2388
      %v2424 = vpack.c.b16 %v2391, %v2390
      %v2425 = vpack.c.b16 %v2393, %v2392
      %v2426 = vpack.c.b16 %v2395, %v2394
      %v2427 = vpack.c.b16 %v2397, %v2396
      %v2428 = vpack.c.b16 %v2399, %v2398
      %v2429 = vpack.c.b16 %v2401, %v2400
      %v2430 = vpack.c.b16 %v2403, %v2402
      %v2431 = vpack.c.b16 %v2405, %v2404
      %v2432 = vpack.c.b16 %v2407, %v2406
      %v2433 = vpack.c.b16 %v2409, %v2408
      %2458 = vmatprep.subr.bf16.mxu0 0
      %2459 = vmatpush1.bf16.msra.mxu0 %v2410
      %2460 = vmatprep.subr.bf16.mxu0 0
      %2461 = vmatpush1.bf16.msra.mxu0 %v2411
      %2462 = vmatprep.subr.bf16.mxu0 0
      %2463 = vmatpush1.bf16.msra.mxu0 %v2412
      %2464 = vmatprep.subr.bf16.mxu0 0
      %2465 = vmatpush1.bf16.msra.mxu0 %v2413
      %2466 = vmatprep.subr.bf16.mxu0 0
      %2467 = vmatpush1.bf16.msra.mxu0 %v2414
      %2468 = vmatprep.subr.bf16.mxu0 0
      %2469 = vmatpush1.bf16.msra.mxu0 %v2415
      %2470 = vmatprep.subr.bf16.mxu0 0
      %2471 = vmatpush1.bf16.msra.mxu0 %v2416
      %2472 = vmatprep.subr.bf16.mxu0 0
      %2473 = vmatpush1.bf16.msra.mxu0 %v2417
      %2474 = vmatprep.subr.bf16.mxu0 0
      %2475 = vmatpush1.bf16.msra.mxu0 %v2418
      %2476 = vmatprep.subr.bf16.mxu0 0
      %2477 = vmatpush1.bf16.msra.mxu0 %v2419
      %2478 = vmatprep.subr.bf16.mxu0 0
      %2479 = vmatpush1.bf16.msra.mxu0 %v2420
      %2480 = vmatprep.subr.bf16.mxu0 0
      %2481 = vmatpush1.bf16.msra.mxu0 %v2421
      %2482 = vmatprep.subr.bf16.mxu0 0
      %2483 = vmatpush1.bf16.msra.mxu0 %v2422
      %2484 = vmatprep.subr.bf16.mxu0 0
      %2485 = vmatpush1.bf16.msra.mxu0 %v2423
      %2486 = vmatprep.subr.bf16.mxu0 0
      %2487 = vmatpush1.bf16.msra.mxu0 %v2424
      %2488 = vmatprep.subr.bf16.mxu0 0
      %2489 = vmatpush1.bf16.msra.mxu0 %v2425
      %2490 = vmatprep.mubr.bf16.mxu0 %v1656
      %2491 = vmatmul.mubr.bf16.gmra.mrb[0].mxu0 %v1655
      %v2492 = vpop.f32.mrb[0].mxu0
      %v2493 = vadd.f32 %v2188, %v2492
      %v2494 = vpop.f32.mrb[0].mxu0
      %v2495 = vpop.f32.mrb[0].mxu0
      %v2496 = vadd.f32 %v2191, %v2495
      %v2497 = vpop.f32.mrb[0].mxu0
      %2498 = vmatprep.mubr.bf16.mxu0 %v1659
      %2499 = vmatmul.mubr.bf16.gmra.mrb[0].mxu0 %v1658
      %v2500 = vpop.f32.mrb[0].mxu0
      %v2501 = vadd.f32 %v2196, %v2500
      %v2502 = vpop.f32.mrb[0].mxu0
      %v2503 = vpop.f32.mrb[0].mxu0
      %v2504 = vadd.f32 %v2199, %v2503
      %v2505 = vpop.f32.mrb[0].mxu0
      %2506 = vmatprep.mubr.bf16.mxu0 %v1662
      %2507 = vmatmul.mubr.bf16.gmra.mrb[0].mxu0 %v1661
      %v2508 = vpop.f32.mrb[0].mxu0
      %v2509 = vadd.f32 %v2204, %v2508
      %v2510 = vpop.f32.mrb[0].mxu0
      %v2511 = vpop.f32.mrb[0].mxu0
      %v2512 = vadd.f32 %v2207, %v2511
      %v2513 = vpop.f32.mrb[0].mxu0
      %2514 = vmatprep.mubr.bf16.mxu0 %v1665
      %2515 = vmatmul.mubr.bf16.gmra.mrb[0].mxu0 %v1664
      %v2516 = vpop.f32.mrb[0].mxu0
      %v2517 = vadd.f32 %v2212, %v2516
      %v2518 = vpop.f32.mrb[0].mxu0
      %v2519 = vpop.f32.mrb[0].mxu0
      %v2520 = vadd.f32 %v2215, %v2519
      %v2521 = vpop.f32.mrb[0].mxu0
      %2522 = vmatprep.mubr.bf16.mxu0 %v1668
      %2523 = vmatmul.mubr.bf16.gmra.mrb[0].mxu0 %v1667
      %v2524 = vpop.f32.mrb[0].mxu0
      %v2525 = vadd.f32 %v2220, %v2524
      %v2526 = vpop.f32.mrb[0].mxu0
      %v2527 = vpop.f32.mrb[0].mxu0
      %v2528 = vadd.f32 %v2223, %v2527
      %v2529 = vpop.f32.mrb[0].mxu0
      %2530 = vmatprep.mubr.bf16.mxu0 %v1671
      %2531 = vmatmul.mubr.bf16.gmra.mrb[0].mxu0 %v1670
      %v2532 = vpop.f32.mrb[0].mxu0
      %v2533 = vadd.f32 %v2228, %v2532
      %v2534 = vpop.f32.mrb[0].mxu0
      %v2535 = vpop.f32.mrb[0].mxu0
      %v2536 = vadd.f32 %v2231, %v2535
      %v2537 = vpop.f32.mrb[0].mxu0
      %2538 = vmatprep.mubr.bf16.mxu0 %v1674
      %2539 = vmatmul.mubr.bf16.gmra.mrb[0].mxu0 %v1673
      %v2540 = vpop.f32.mrb[0].mxu0
      %v2541 = vadd.f32 %v2236, %v2540
      %v2542 = vpop.f32.mrb[0].mxu0
      %v2543 = vpop.f32.mrb[0].mxu0
      %v2544 = vadd.f32 %v2239, %v2543
      %v2545 = vpop.f32.mrb[0].mxu0
      %2546 = vmatprep.mubr.bf16.mxu0 %v1677
      %2547 = vmatmul.mubr.bf16.gmra.mrb[0].mxu0 %v1676
      %v2548 = vpop.f32.mrb[0].mxu0
      %v2549 = vadd.f32 %v2244, %v2548
      %v2550 = vpop.f32.mrb[0].mxu0
      %v2551 = vpop.f32.mrb[0].mxu0
      %v2552 = vadd.f32 %v2247, %v2551
      %v2553 = vpop.f32.mrb[0].mxu0
      %2554 = vmatprep.mubr.bf16.mxu0 %v1680
      %2555 = vmatmul.mubr.bf16.gmra.mrb[0].mxu0 %v1679
      %v2556 = vpop.f32.mrb[0].mxu0
      %v2557 = vadd.f32 %v2252, %v2556
      %v2558 = vpop.f32.mrb[0].mxu0
      %v2559 = vpop.f32.mrb[0].mxu0
      %v2560 = vadd.f32 %v2255, %v2559
      %v2561 = vpop.f32.mrb[0].mxu0
      %2562 = vmatprep.mubr.bf16.mxu0 %v1683
      %2563 = vmatmul.mubr.bf16.gmra.mrb[0].mxu0 %v1682
      %v2564 = vpop.f32.mrb[0].mxu0
      %v2565 = vadd.f32 %v2260, %v2564
      %v2566 = vpop.f32.mrb[0].mxu0
      %v2567 = vpop.f32.mrb[0].mxu0
      %v2568 = vadd.f32 %v2263, %v2567
      %v2569 = vpop.f32.mrb[0].mxu0
      %2570 = vmatprep.mubr.bf16.mxu0 %v1686
      %2571 = vmatmul.mubr.bf16.gmra.mrb[0].mxu0 %v1685
      %v2572 = vpop.f32.mrb[0].mxu0
      %v2573 = vadd.f32 %v2268, %v2572
      %v2574 = vpop.f32.mrb[0].mxu0
      %v2575 = vpop.f32.mrb[0].mxu0
      %v2576 = vadd.f32 %v2271, %v2575
      %v2577 = vpop.f32.mrb[0].mxu0
      %2578 = vmatprep.mubr.bf16.mxu0 %v1689
      %2579 = vmatmul.mubr.bf16.gmra.mrb[0].mxu0 %v1688
      %v2580 = vpop.f32.mrb[0].mxu0
      %v2581 = vadd.f32 %v2276, %v2580
      %v2582 = vpop.f32.mrb[0].mxu0
      %v2583 = vpop.f32.mrb[0].mxu0
      %v2584 = vadd.f32 %v2279, %v2583
      %v2585 = vpop.f32.mrb[0].mxu0
      %2586 = vmatprep.mubr.bf16.mxu0 %v1692
      %2587 = vmatmul.mubr.bf16.gmra.mrb[0].mxu0 %v1691
      %v2588 = vpop.f32.mrb[0].mxu0
      %v2589 = vadd.f32 %v2284, %v2588
      %v2590 = vpop.f32.mrb[0].mxu0
      %v2591 = vpop.f32.mrb[0].mxu0
      %v2592 = vadd.f32 %v2287, %v2591
      %v2593 = vpop.f32.mrb[0].mxu0
      %2594 = vmatprep.mubr.bf16.mxu0 %v1695
      %2595 = vmatmul.mubr.bf16.gmra.mrb[0].mxu0 %v1694
      %v2596 = vpop.f32.mrb[0].mxu0
      %v2597 = vadd.f32 %v2292, %v2596
      %v2598 = vpop.f32.mrb[0].mxu0
      %v2599 = vpop.f32.mrb[0].mxu0
      %v2600 = vadd.f32 %v2295, %v2599
      %v2601 = vpop.f32.mrb[0].mxu0
      %2602 = vmatprep.mubr.bf16.mxu0 %v1698
      %2603 = vmatmul.mubr.bf16.gmra.mrb[0].mxu0 %v1697
      %v2604 = vpop.f32.mrb[0].mxu0
      %v2605 = vadd.f32 %v2300, %v2604
      %v2606 = vpop.f32.mrb[0].mxu0
      %v2607 = vpop.f32.mrb[0].mxu0
      %v2608 = vadd.f32 %v2303, %v2607
      %v2609 = vpop.f32.mrb[0].mxu0
      %2610 = vmatprep.mubr.bf16.mxu0 %v1701
      %2611 = vmatmul.mubr.bf16.gmra.mrb[0].mxu0 %v1700
      %v2612 = vpop.f32.mrb[0].mxu0
      %v2613 = vadd.f32 %v2308, %v2612
      %v2614 = vpop.f32.mrb[0].mxu0
      %v2615 = vpop.f32.mrb[0].mxu0
      %v2616 = vadd.f32 %v2311, %v2615
      %v2617 = vpop.f32.mrb[0].mxu0
      %2618 = vdwg.mxu0
      %2619 = vmatprep.subr.bf16.mxu0 0
      %2620 = vmatpush1.bf16.msra.mxu0 %v2426
      %2621 = vmatprep.subr.bf16.mxu0 0
      %2622 = vmatpush1.bf16.msra.mxu0 %v2427
      %2623 = vmatprep.subr.bf16.mxu0 0
      %2624 = vmatpush1.bf16.msra.mxu0 %v2428
      %2625 = vmatprep.subr.bf16.mxu0 0
      %2626 = vmatpush1.bf16.msra.mxu0 %v2429
      %2627 = vmatprep.subr.bf16.mxu0 0
      %2628 = vmatpush1.bf16.msra.mxu0 %v2430
      %2629 = vmatprep.subr.bf16.mxu0 0
      %2630 = vmatpush1.bf16.msra.mxu0 %v2431
      %2631 = vmatprep.subr.bf16.mxu0 0
      %2632 = vmatpush1.bf16.msra.mxu0 %v2432
      %2633 = vmatprep.subr.bf16.mxu0 0
      %2634 = vmatpush1.bf16.msra.mxu0 %v2433
      %2635 = vmatprep.subr.bf16.mxu0 0
      %2636 = vmatpush1.bf16.msra.mxu0 0
      %2637 = vmatprep.subr.bf16.mxu0 0
      %2638 = vmatpush1.bf16.msra.mxu0 0
      %2639 = vmatprep.subr.bf16.mxu0 0
      %2640 = vmatpush1.bf16.msra.mxu0 0
      %2641 = vmatprep.subr.bf16.mxu0 0
      %2642 = vmatpush1.bf16.msra.mxu0 0
      %2643 = vmatprep.subr.bf16.mxu0 0
      %2644 = vmatpush1.bf16.msra.mxu0 0
      %2645 = vmatprep.subr.bf16.mxu0 0
      %2646 = vmatpush1.bf16.msra.mxu0 0
      %2647 = vmatprep.subr.bf16.mxu0 0
      %2648 = vmatpush1.bf16.msra.mxu0 0
      %2649 = vmatprep.subr.bf16.mxu0 0
      %2650 = vmatpush1.bf16.msra.mxu0 0
      %2651 = vmatprep.mubr.bf16.mxu0 0
      %2652 = vmatmul.mubr.bf16.gmra.mrb[0].mxu0 %v1657
      %v2653 = vpop.f32.mrb[0].mxu0
      %v2654 = vadd.f32 %v2493, %v2653
      %v2655 = vpop.f32.mrb[0].mxu0
      %v2656 = vpop.f32.mrb[0].mxu0
      %v2657 = vadd.f32 %v2496, %v2656
      %v2658 = vpop.f32.mrb[0].mxu0
      %2659 = vmatprep.mubr.bf16.mxu0 0
      %2660 = vmatmul.mubr.bf16.gmra.mrb[0].mxu0 %v1660
      %v2661 = vpop.f32.mrb[0].mxu0
      %v2662 = vadd.f32 %v2501, %v2661
      %v2663 = vpop.f32.mrb[0].mxu0
      %v2664 = vpop.f32.mrb[0].mxu0
      %v2665 = vadd.f32 %v2504, %v2664
      %v2666 = vpop.f32.mrb[0].mxu0
      %2667 = vmatprep.mubr.bf16.mxu0 0
      %2668 = vmatmul.mubr.bf16.gmra.mrb[0].mxu0 %v1663
      %v2669 = vpop.f32.mrb[0].mxu0
      %v2670 = vadd.f32 %v2509, %v2669
      %v2671 = vpop.f32.mrb[0].mxu0
      %v2672 = vpop.f32.mrb[0].mxu0
      %v2673 = vadd.f32 %v2512, %v2672
      %v2674 = vpop.f32.mrb[0].mxu0
      %2675 = vmatprep.mubr.bf16.mxu0 0
      %2676 = vmatmul.mubr.bf16.gmra.mrb[0].mxu0 %v1666
      %v2677 = vpop.f32.mrb[0].mxu0
      %v2678 = vadd.f32 %v2517, %v2677
      %v2679 = vpop.f32.mrb[0].mxu0
      %v2680 = vpop.f32.mrb[0].mxu0
      %v2681 = vadd.f32 %v2520, %v2680
      %v2682 = vpop.f32.mrb[0].mxu0
      %2683 = vmatprep.mubr.bf16.mxu0 0
      %2684 = vmatmul.mubr.bf16.gmra.mrb[0].mxu0 %v1669
      %v2685 = vpop.f32.mrb[0].mxu0
      %v2686 = vadd.f32 %v2525, %v2685
      %v2687 = vpop.f32.mrb[0].mxu0
      %v2688 = vpop.f32.mrb[0].mxu0
      %v2689 = vadd.f32 %v2528, %v2688
      %v2690 = vpop.f32.mrb[0].mxu0
      %2691 = vmatprep.mubr.bf16.mxu0 0
      %2692 = vmatmul.mubr.bf16.gmra.mrb[0].mxu0 %v1672
      %v2693 = vpop.f32.mrb[0].mxu0
      %v2694 = vadd.f32 %v2533, %v2693
      %v2695 = vpop.f32.mrb[0].mxu0
      %v2696 = vpop.f32.mrb[0].mxu0
      %v2697 = vadd.f32 %v2536, %v2696
      %v2698 = vpop.f32.mrb[0].mxu0
      %2699 = vmatprep.mubr.bf16.mxu0 0
      %2700 = vmatmul.mubr.bf16.gmra.mrb[0].mxu0 %v1675
      %v2701 = vpop.f32.mrb[0].mxu0
      %v2702 = vadd.f32 %v2541, %v2701
      %v2703 = vpop.f32.mrb[0].mxu0
      %v2704 = vpop.f32.mrb[0].mxu0
      %v2705 = vadd.f32 %v2544, %v2704
      %v2706 = vpop.f32.mrb[0].mxu0
      %2707 = vmatprep.mubr.bf16.mxu0 0
      %2708 = vmatmul.mubr.bf16.gmra.mrb[0].mxu0 %v1678
      %v2709 = vpop.f32.mrb[0].mxu0
      %v2710 = vadd.f32 %v2549, %v2709
      %v2711 = vpop.f32.mrb[0].mxu0
      %v2712 = vpop.f32.mrb[0].mxu0
      %v2713 = vadd.f32 %v2552, %v2712
      %v2714 = vpop.f32.mrb[0].mxu0
      %2715 = vmatprep.mubr.bf16.mxu0 0
      %2716 = vmatmul.mubr.bf16.gmra.mrb[0].mxu0 %v1681
      %v2717 = vpop.f32.mrb[0].mxu0
      %v2718 = vadd.f32 %v2557, %v2717
      %v2719 = vpop.f32.mrb[0].mxu0
      %v2720 = vpop.f32.mrb[0].mxu0
      %v2721 = vadd.f32 %v2560, %v2720
      %v2722 = vpop.f32.mrb[0].mxu0
      %2723 = vmatprep.mubr.bf16.mxu0 0
      %2724 = vmatmul.mubr.bf16.gmra.mrb[0].mxu0 %v1684
      %v2725 = vpop.f32.mrb[0].mxu0
      %v2726 = vadd.f32 %v2565, %v2725
      %v2727 = vpop.f32.mrb[0].mxu0
      %v2728 = vpop.f32.mrb[0].mxu0
      %v2729 = vadd.f32 %v2568, %v2728
      %v2730 = vpop.f32.mrb[0].mxu0
      %2731 = vmatprep.mubr.bf16.mxu0 0
      %2732 = vmatmul.mubr.bf16.gmra.mrb[0].mxu0 %v1687
      %v2733 = vpop.f32.mrb[0].mxu0
      %v2734 = vadd.f32 %v2573, %v2733
      %v2735 = vpop.f32.mrb[0].mxu0
      %v2736 = vpop.f32.mrb[0].mxu0
      %v2737 = vadd.f32 %v2576, %v2736
      %v2738 = vpop.f32.mrb[0].mxu0
      %2739 = vmatprep.mubr.bf16.mxu0 0
      %2740 = vmatmul.mubr.bf16.gmra.mrb[0].mxu0 %v1690
      %v2741 = vpop.f32.mrb[0].mxu0
      %v2742 = vadd.f32 %v2581, %v2741
      %v2743 = vpop.f32.mrb[0].mxu0
      %v2744 = vpop.f32.mrb[0].mxu0
      %v2745 = vadd.f32 %v2584, %v2744
      %v2746 = vpop.f32.mrb[0].mxu0
      %2747 = vmatprep.mubr.bf16.mxu0 0
      %2748 = vmatmul.mubr.bf16.gmra.mrb[0].mxu0 %v1693
      %v2749 = vpop.f32.mrb[0].mxu0
      %v2750 = vadd.f32 %v2589, %v2749
      %v2751 = vpop.f32.mrb[0].mxu0
      %v2752 = vpop.f32.mrb[0].mxu0
      %v2753 = vadd.f32 %v2592, %v2752
      %v2754 = vpop.f32.mrb[0].mxu0
      %2755 = vmatprep.mubr.bf16.mxu0 0
      %2756 = vmatmul.mubr.bf16.gmra.mrb[0].mxu0 %v1696
      %v2757 = vpop.f32.mrb[0].mxu0
      %v2758 = vadd.f32 %v2597, %v2757
      %v2759 = vpop.f32.mrb[0].mxu0
      %v2760 = vpop.f32.mrb[0].mxu0
      %v2761 = vadd.f32 %v2600, %v2760
      %v2762 = vpop.f32.mrb[0].mxu0
      %2763 = vmatprep.mubr.bf16.mxu0 0
      %2764 = vmatmul.mubr.bf16.gmra.mrb[0].mxu0 %v1699
      %v2765 = vpop.f32.mrb[0].mxu0
      %v2766 = vadd.f32 %v2605, %v2765
      %v2767 = vpop.f32.mrb[0].mxu0
      %v2768 = vpop.f32.mrb[0].mxu0
      %v2769 = vadd.f32 %v2608, %v2768
      %v2770 = vpop.f32.mrb[0].mxu0
      %2771 = vmatprep.mubr.bf16.mxu0 0
      %2772 = vmatmul.mubr.bf16.gmra.mrb[0].mxu0 %v1702
      %v2773 = vpop.f32.mrb[0].mxu0
      %v2774 = vadd.f32 %v2613, %v2773
      %v2775 = vpop.f32.mrb[0].mxu0
      %v2776 = vpop.f32.mrb[0].mxu0
      %v2777 = vadd.f32 %v2616, %v2776
      %v2778 = vpop.f32.mrb[0].mxu0
      %2779 = vdwg.mxu0
      %s2780 = scalar_lea.vmem [#allocation2], 48
      %v2781 = vld [vmem:[%s2780] sm:$0xff]
      %v2782 = vld [vmem:[%s2780 + $0x8] sm:$0xff]
      %v2783 = vld [vmem:[%s2780 + $0x10] sm:$0xff]
      %v2784 = vld [vmem:[%s2780 + $0x18] sm:$0xff]
      %v2785 = vld [vmem:[%s2780 + $0x20] sm:$0xff]
      %v2786 = vld [vmem:[%s2780 + $0x28] sm:$0xff]
      %v2787 = vld [vmem:[%s2780 + $0x30] sm:$0xff]
      %v2788 = vld [vmem:[%s2780 + $0x38] sm:$0xff]
      %v2789 = vld [vmem:[%s2780 + $0x40] sm:$0xff]
      %v2790 = vld [vmem:[%s2780 + $0x48] sm:$0xff]
      %v2791 = vld [vmem:[%s2780 + $0x50] sm:$0xff]
      %v2792 = vld [vmem:[%s2780 + $0x58] sm:$0xff]
      %v2793 = vld [vmem:[%s2780 + $0x60] sm:$0xff]
      %v2794 = vld [vmem:[%s2780 + $0x68] sm:$0xff]
      %v2795 = vld [vmem:[%s2780 + $0x70] sm:$0xff]
      %v2796 = vld [vmem:[%s2780 + $0x78] sm:$0xff]
      %v2797 = vld [vmem:[%s2780 + $0x80] sm:$0xff]
      %v2798 = vld [vmem:[%s2780 + $0x88] sm:$0xff]
      %v2799 = vld [vmem:[%s2780 + $0x90] sm:$0xff]
      %v2800 = vld [vmem:[%s2780 + $0x98] sm:$0xff]
      %v2801 = vld [vmem:[%s2780 + $0xa0] sm:$0xff]
      %v2802 = vld [vmem:[%s2780 + $0xa8] sm:$0xff]
      %v2803 = vld [vmem:[%s2780 + $0xb0] sm:$0xff]
      %v2804 = vld [vmem:[%s2780 + $0xb8] sm:$0xff]
      %v2805 = vld [vmem:[%s2780 + $0xc0] sm:$0xff]
      %v2806 = vld [vmem:[%s2780 + $0xc8] sm:$0xff]
      %v2807 = vld [vmem:[%s2780 + $0xd0] sm:$0xff]
      %v2808 = vld [vmem:[%s2780 + $0xd8] sm:$0xff]
      %v2809 = vld [vmem:[%s2780 + $0xe0] sm:$0xff]
      %v2810 = vld [vmem:[%s2780 + $0xe8] sm:$0xff]
      %v2811 = vld [vmem:[%s2780 + $0xf0] sm:$0xff]
      %v2812 = vld [vmem:[%s2780 + $0xf8] sm:$0xff]
      %v2813 = vld [vmem:[%s2780 + $0x100] sm:$0xff]
      %v2814 = vld [vmem:[%s2780 + $0x108] sm:$0xff]
      %v2815 = vld [vmem:[%s2780 + $0x110] sm:$0xff]
      %v2816 = vld [vmem:[%s2780 + $0x118] sm:$0xff]
      %v2817 = vld [vmem:[%s2780 + $0x120] sm:$0xff]
      %v2818 = vld [vmem:[%s2780 + $0x128] sm:$0xff]
      %v2819 = vld [vmem:[%s2780 + $0x130] sm:$0xff]
      %v2820 = vld [vmem:[%s2780 + $0x138] sm:$0xff]
      %v2821 = vld [vmem:[%s2780 + $0x140] sm:$0xff]
      %v2822 = vld [vmem:[%s2780 + $0x148] sm:$0xff]
      %v2823 = vld [vmem:[%s2780 + $0x150] sm:$0xff]
      %v2824 = vld [vmem:[%s2780 + $0x158] sm:$0xff]
      %v2825 = vld [vmem:[%s2780 + $0x160] sm:$0xff]
      %v2826 = vld [vmem:[%s2780 + $0x168] sm:$0xff]
      %v2827 = vld [vmem:[%s2780 + $0x170] sm:$0xff]
      %v2828 = vld [vmem:[%s2780 + $0x178] sm:$0xff]
      %s2829 = scalar_lea.vmem %s498, 384
      %v2830 = vld [vmem:[%s2829] sm:$0xf]
      %v2831 = vld [vmem:[%s2829 + $0x4] sm:$0xf]
      %v2832 = vld [vmem:[%s2829 + $0x8] sm:$0xf]
      %v2833 = vld [vmem:[%s2829 + $0xc] sm:$0xf]
      %v2834 = vld [vmem:[%s2829 + $0x10] sm:$0xf]
      %v2835 = vld [vmem:[%s2829 + $0x14] sm:$0xf]
      %v2836 = vld [vmem:[%s2829 + $0x18] sm:$0xf]
      %v2837 = vld [vmem:[%s2829 + $0x1c] sm:$0xf]
      %v2838 = vld [vmem:[%s2829 + $0x20] sm:$0xf]
      %v2839 = vld [vmem:[%s2829 + $0x24] sm:$0xf]
      %v2840 = vld [vmem:[%s2829 + $0x28] sm:$0xf]
      %v2841 = vld [vmem:[%s2829 + $0x2c] sm:$0xf]
      %v2842 = vld [vmem:[%s2829 + $0x30] sm:$0xf]
      %v2843 = vld [vmem:[%s2829 + $0x34] sm:$0xf]
      %v2844 = vld [vmem:[%s2829 + $0x38] sm:$0xf]
      %v2845 = vld [vmem:[%s2829 + $0x3c] sm:$0xf]
      %v2846 = vld [vmem:[%s2829 + $0x40] sm:$0xf]
      %v2847 = vld [vmem:[%s2829 + $0x44] sm:$0xf]
      %v2848 = vld [vmem:[%s2829 + $0x48] sm:$0xf]
      %v2849 = vld [vmem:[%s2829 + $0x4c] sm:$0xf]
      %v2850 = vld [vmem:[%s2829 + $0x50] sm:$0xf]
      %v2851 = vld [vmem:[%s2829 + $0x54] sm:$0xf]
      %v2852 = vld [vmem:[%s2829 + $0x58] sm:$0xf]
      %v2853 = vld [vmem:[%s2829 + $0x5c] sm:$0xf]
      %v2854 = vld [vmem:[%s2829 + $0x60] sm:$0xf]
      %v2855 = vld [vmem:[%s2829 + $0x64] sm:$0xf]
      %v2856 = vld [vmem:[%s2829 + $0x68] sm:$0xf]
      %v2857 = vld [vmem:[%s2829 + $0x6c] sm:$0xf]
      %v2858 = vld [vmem:[%s2829 + $0x70] sm:$0xf]
      %v2859 = vld [vmem:[%s2829 + $0x74] sm:$0xf]
      %v2860 = vld [vmem:[%s2829 + $0x78] sm:$0xf]
      %v2861 = vld [vmem:[%s2829 + $0x7c] sm:$0xf]
      %v2862 = vld [vmem:[%s2829 + $0x80] sm:$0xf]
      %v2863 = vld [vmem:[%s2829 + $0x84] sm:$0xf]
      %v2864 = vld [vmem:[%s2829 + $0x88] sm:$0xf]
      %v2865 = vld [vmem:[%s2829 + $0x8c] sm:$0xf]
      %v2866 = vld [vmem:[%s2829 + $0x90] sm:$0xf]
      %v2867 = vld [vmem:[%s2829 + $0x94] sm:$0xf]
      %v2868 = vld [vmem:[%s2829 + $0x98] sm:$0xf]
      %v2869 = vld [vmem:[%s2829 + $0x9c] sm:$0xf]
      %v2870 = vld [vmem:[%s2829 + $0xa0] sm:$0xf]
      %v2871 = vld [vmem:[%s2829 + $0xa4] sm:$0xf]
      %v2872 = vld [vmem:[%s2829 + $0xa8] sm:$0xf]
      %v2873 = vld [vmem:[%s2829 + $0xac] sm:$0xf]
      %v2874 = vld [vmem:[%s2829 + $0xb0] sm:$0xf]
      %v2875 = vld [vmem:[%s2829 + $0xb4] sm:$0xf]
      %v2876 = vld [vmem:[%s2829 + $0xb8] sm:$0xf]
      %v2877 = vld [vmem:[%s2829 + $0xbc] sm:$0xf]
      %v2926 = vunpack.c.l.b16 %v2830
      %v2927 = vunpack.c.l.b16 %v2831
      %v2928 = vunpack.c.l.b16 %v2832
      %v2929 = vunpack.c.l.b16 %v2833
      %v2930 = vunpack.c.l.b16 %v2834
      %v2931 = vunpack.c.l.b16 %v2835
      %v2932 = vunpack.c.l.b16 %v2836
      %v2933 = vunpack.c.l.b16 %v2837
      %v2934 = vunpack.c.l.b16 %v2838
      %v2935 = vunpack.c.l.b16 %v2839
      %v2936 = vunpack.c.l.b16 %v2840
      %v2937 = vunpack.c.l.b16 %v2841
      %v2938 = vunpack.c.l.b16 %v2842
      %v2939 = vunpack.c.l.b16 %v2843
      %v2940 = vunpack.c.l.b16 %v2844
      %v2941 = vunpack.c.l.b16 %v2845
      %v2942 = vunpack.c.l.b16 %v2846
      %v2943 = vunpack.c.l.b16 %v2847
      %v2944 = vunpack.c.l.b16 %v2848
      %v2945 = vunpack.c.l.b16 %v2849
      %v2946 = vunpack.c.l.b16 %v2850
      %v2947 = vunpack.c.l.b16 %v2851
      %v2948 = vunpack.c.l.b16 %v2852
      %v2949 = vunpack.c.l.b16 %v2853
      %v2950 = vunpack.c.l.b16 %v2854
      %v2951 = vunpack.c.l.b16 %v2855
      %v2952 = vunpack.c.l.b16 %v2856
      %v2953 = vunpack.c.l.b16 %v2857
      %v2954 = vunpack.c.l.b16 %v2858
      %v2955 = vunpack.c.l.b16 %v2859
      %v2956 = vunpack.c.l.b16 %v2860
      %v2957 = vunpack.c.l.b16 %v2861
      %v2958 = vunpack.c.l.b16 %v2862
      %v2959 = vunpack.c.l.b16 %v2863
      %v2960 = vunpack.c.l.b16 %v2864
      %v2961 = vunpack.c.l.b16 %v2865
      %v2962 = vunpack.c.l.b16 %v2866
      %v2963 = vunpack.c.l.b16 %v2867
      %v2964 = vunpack.c.l.b16 %v2868
      %v2965 = vunpack.c.l.b16 %v2869
      %v2966 = vunpack.c.l.b16 %v2870
      %v2967 = vunpack.c.l.b16 %v2871
      %v2968 = vunpack.c.l.b16 %v2872
      %v2969 = vunpack.c.l.b16 %v2873
      %v2970 = vunpack.c.l.b16 %v2874
      %v2971 = vunpack.c.l.b16 %v2875
      %v2972 = vunpack.c.l.b16 %v2876
      %v2973 = vunpack.c.l.b16 %v2877
      %v2974 = vpack.c.b16 %v2927, %v2926
      %v2975 = vpack.c.b16 %v2929, %v2928
      %v2976 = vpack.c.b16 %v2931, %v2930
      %v2977 = vpack.c.b16 %v2933, %v2932
      %v2978 = vpack.c.b16 %v2935, %v2934
      %v2979 = vpack.c.b16 %v2937, %v2936
      %v2980 = vpack.c.b16 %v2939, %v2938
      %v2981 = vpack.c.b16 %v2941, %v2940
      %v2982 = vpack.c.b16 %v2943, %v2942
      %v2983 = vpack.c.b16 %v2945, %v2944
      %v2984 = vpack.c.b16 %v2947, %v2946
      %v2985 = vpack.c.b16 %v2949, %v2948
      %v2986 = vpack.c.b16 %v2951, %v2950
      %v2987 = vpack.c.b16 %v2953, %v2952
      %v2988 = vpack.c.b16 %v2955, %v2954
      %v2989 = vpack.c.b16 %v2957, %v2956
      %v2990 = vpack.c.b16 %v2959, %v2958
      %v2991 = vpack.c.b16 %v2961, %v2960
      %v2992 = vpack.c.b16 %v2963, %v2962
      %v2993 = vpack.c.b16 %v2965, %v2964
      %v2994 = vpack.c.b16 %v2967, %v2966
      %v2995 = vpack.c.b16 %v2969, %v2968
      %v2996 = vpack.c.b16 %v2971, %v2970
      %v2997 = vpack.c.b16 %v2973, %v2972
      %3022 = vmatprep.subr.bf16.mxu0 0
      %3023 = vmatpush1.bf16.msra.mxu0 %v2974
      %3024 = vmatprep.subr.bf16.mxu0 0
      %3025 = vmatpush1.bf16.msra.mxu0 %v2975
      %3026 = vmatprep.subr.bf16.mxu0 0
      %3027 = vmatpush1.bf16.msra.mxu0 %v2976
      %3028 = vmatprep.subr.bf16.mxu0 0
      %3029 = vmatpush1.bf16.msra.mxu0 %v2977
      %3030 = vmatprep.subr.bf16.mxu0 0
      %3031 = vmatpush1.bf16.msra.mxu0 %v2978
      %3032 = vmatprep.subr.bf16.mxu0 0
      %3033 = vmatpush1.bf16.msra.mxu0 %v2979
      %3034 = vmatprep.subr.bf16.mxu0 0
      %3035 = vmatpush1.bf16.msra.mxu0 %v2980
      %3036 = vmatprep.subr.bf16.mxu0 0
      %3037 = vmatpush1.bf16.msra.mxu0 %v2981
      %3038 = vmatprep.subr.bf16.mxu0 0
      %3039 = vmatpush1.bf16.msra.mxu0 %v2982
      %3040 = vmatprep.subr.bf16.mxu0 0
      %3041 = vmatpush1.bf16.msra.mxu0 %v2983
      %3042 = vmatprep.subr.bf16.mxu0 0
      %3043 = vmatpush1.bf16.msra.mxu0 %v2984
      %3044 = vmatprep.subr.bf16.mxu0 0
      %3045 = vmatpush1.bf16.msra.mxu0 %v2985
      %3046 = vmatprep.subr.bf16.mxu0 0
      %3047 = vmatpush1.bf16.msra.mxu0 %v2986
      %3048 = vmatprep.subr.bf16.mxu0 0
      %3049 = vmatpush1.bf16.msra.mxu0 %v2987
      %3050 = vmatprep.subr.bf16.mxu0 0
      %3051 = vmatpush1.bf16.msra.mxu0 %v2988
      %3052 = vmatprep.subr.bf16.mxu0 0
      %3053 = vmatpush1.bf16.msra.mxu0 %v2989
      %3054 = vmatprep.mubr.bf16.mxu0 %v2782
      %3055 = vmatmul.mubr.bf16.gmra.mrb[0].mxu0 %v2781
      %v3056 = vpop.f32.mrb[0].mxu0
      %v3057 = vadd.f32 0.0, %v3056
      %v3058 = vpop.f32.mrb[0].mxu0
      %v3059 = vpop.f32.mrb[0].mxu0
      %v3060 = vadd.f32 0.0, %v3059
      %v3061 = vpop.f32.mrb[0].mxu0
      %3062 = vmatprep.mubr.bf16.mxu0 %v2785
      %3063 = vmatmul.mubr.bf16.gmra.mrb[0].mxu0 %v2784
      %v3064 = vpop.f32.mrb[0].mxu0
      %v3065 = vadd.f32 0.0, %v3064
      %v3066 = vpop.f32.mrb[0].mxu0
      %v3067 = vpop.f32.mrb[0].mxu0
      %v3068 = vadd.f32 0.0, %v3067
      %v3069 = vpop.f32.mrb[0].mxu0
      %3070 = vmatprep.mubr.bf16.mxu0 %v2788
      %3071 = vmatmul.mubr.bf16.gmra.mrb[0].mxu0 %v2787
      %v3072 = vpop.f32.mrb[0].mxu0
      %v3073 = vadd.f32 0.0, %v3072
      %v3074 = vpop.f32.mrb[0].mxu0
      %v3075 = vpop.f32.mrb[0].mxu0
      %v3076 = vadd.f32 0.0, %v3075
      %v3077 = vpop.f32.mrb[0].mxu0
      %3078 = vmatprep.mubr.bf16.mxu0 %v2791
      %3079 = vmatmul.mubr.bf16.gmra.mrb[0].mxu0 %v2790
      %v3080 = vpop.f32.mrb[0].mxu0
      %v3081 = vadd.f32 0.0, %v3080
      %v3082 = vpop.f32.mrb[0].mxu0
      %v3083 = vpop.f32.mrb[0].mxu0
      %v3084 = vadd.f32 0.0, %v3083
      %v3085 = vpop.f32.mrb[0].mxu0
      %3086 = vmatprep.mubr.bf16.mxu0 %v2794
      %3087 = vmatmul.mubr.bf16.gmra.mrb[0].mxu0 %v2793
      %v3088 = vpop.f32.mrb[0].mxu0
      %v3089 = vadd.f32 0.0, %v3088
      %v3090 = vpop.f32.mrb[0].mxu0
      %v3091 = vpop.f32.mrb[0].mxu0
      %v3092 = vadd.f32 0.0, %v3091
      %v3093 = vpop.f32.mrb[0].mxu0
      %3094 = vmatprep.mubr.bf16.mxu0 %v2797
      %3095 = vmatmul.mubr.bf16.gmra.mrb[0].mxu0 %v2796
      %v3096 = vpop.f32.mrb[0].mxu0
      %v3097 = vadd.f32 0.0, %v3096
      %v3098 = vpop.f32.mrb[0].mxu0
      %v3099 = vpop.f32.mrb[0].mxu0
      %v3100 = vadd.f32 0.0, %v3099
      %v3101 = vpop.f32.mrb[0].mxu0
      %3102 = vmatprep.mubr.bf16.mxu0 %v2800
      %3103 = vmatmul.mubr.bf16.gmra.mrb[0].mxu0 %v2799
      %v3104 = vpop.f32.mrb[0].mxu0
      %v3105 = vadd.f32 0.0, %v3104
      %v3106 = vpop.f32.mrb[0].mxu0
      %v3107 = vpop.f32.mrb[0].mxu0
      %v3108 = vadd.f32 0.0, %v3107
      %v3109 = vpop.f32.mrb[0].mxu0
      %3110 = vmatprep.mubr.bf16.mxu0 %v2803
      %3111 = vmatmul.mubr.bf16.gmra.mrb[0].mxu0 %v2802
      %v3112 = vpop.f32.mrb[0].mxu0
      %v3113 = vadd.f32 0.0, %v3112
      %v3114 = vpop.f32.mrb[0].mxu0
      %v3115 = vpop.f32.mrb[0].mxu0
      %v3116 = vadd.f32 0.0, %v3115
      %v3117 = vpop.f32.mrb[0].mxu0
      %3118 = vmatprep.mubr.bf16.mxu0 %v2806
      %3119 = vmatmul.mubr.bf16.gmra.mrb[0].mxu0 %v2805
      %v3120 = vpop.f32.mrb[0].mxu0
      %v3121 = vadd.f32 0.0, %v3120
      %v3122 = vpop.f32.mrb[0].mxu0
      %v3123 = vpop.f32.mrb[0].mxu0
      %v3124 = vadd.f32 0.0, %v3123
      %v3125 = vpop.f32.mrb[0].mxu0
      %3126 = vmatprep.mubr.bf16.mxu0 %v2809
      %3127 = vmatmul.mubr.bf16.gmra.mrb[0].mxu0 %v2808
      %v3128 = vpop.f32.mrb[0].mxu0
      %v3129 = vadd.f32 0.0, %v3128
      %v3130 = vpop.f32.mrb[0].mxu0
      %v3131 = vpop.f32.mrb[0].mxu0
      %v3132 = vadd.f32 0.0, %v3131
      %v3133 = vpop.f32.mrb[0].mxu0
      %3134 = vmatprep.mubr.bf16.mxu0 %v2812
      %3135 = vmatmul.mubr.bf16.gmra.mrb[0].mxu0 %v2811
      %v3136 = vpop.f32.mrb[0].mxu0
      %v3137 = vadd.f32 0.0, %v3136
      %v3138 = vpop.f32.mrb[0].mxu0
      %v3139 = vpop.f32.mrb[0].mxu0
      %v3140 = vadd.f32 0.0, %v3139
      %v3141 = vpop.f32.mrb[0].mxu0
      %3142 = vmatprep.mubr.bf16.mxu0 %v2815
      %3143 = vmatmul.mubr.bf16.gmra.mrb[0].mxu0 %v2814
      %v3144 = vpop.f32.mrb[0].mxu0
      %v3145 = vadd.f32 0.0, %v3144
      %v3146 = vpop.f32.mrb[0].mxu0
      %v3147 = vpop.f32.mrb[0].mxu0
      %v3148 = vadd.f32 0.0, %v3147
      %v3149 = vpop.f32.mrb[0].mxu0
      %3150 = vmatprep.mubr.bf16.mxu0 %v2818
      %3151 = vmatmul.mubr.bf16.gmra.mrb[0].mxu0 %v2817
      %v3152 = vpop.f32.mrb[0].mxu0
      %v3153 = vadd.f32 0.0, %v3152
      %v3154 = vpop.f32.mrb[0].mxu0
      %v3155 = vpop.f32.mrb[0].mxu0
      %v3156 = vadd.f32 0.0, %v3155
      %v3157 = vpop.f32.mrb[0].mxu0
      %3158 = vmatprep.mubr.bf16.mxu0 %v2821
      %3159 = vmatmul.mubr.bf16.gmra.mrb[0].mxu0 %v2820
      %v3160 = vpop.f32.mrb[0].mxu0
      %v3161 = vadd.f32 0.0, %v3160
      %v3162 = vpop.f32.mrb[0].mxu0
      %v3163 = vpop.f32.mrb[0].mxu0
      %v3164 = vadd.f32 0.0, %v3163
      %v3165 = vpop.f32.mrb[0].mxu0
      %3166 = vmatprep.mubr.bf16.mxu0 %v2824
      %3167 = vmatmul.mubr.bf16.gmra.mrb[0].mxu0 %v2823
      %v3168 = vpop.f32.mrb[0].mxu0
      %v3169 = vadd.f32 0.0, %v3168
      %v3170 = vpop.f32.mrb[0].mxu0
      %v3171 = vpop.f32.mrb[0].mxu0
      %v3172 = vadd.f32 0.0, %v3171
      %v3173 = vpop.f32.mrb[0].mxu0
      %3174 = vmatprep.mubr.bf16.mxu0 %v2827
      %3175 = vmatmul.mubr.bf16.gmra.mrb[0].mxu0 %v2826
      %v3176 = vpop.f32.mrb[0].mxu0
      %v3177 = vadd.f32 0.0, %v3176
      %v3178 = vpop.f32.mrb[0].mxu0
      %v3179 = vpop.f32.mrb[0].mxu0
      %v3180 = vadd.f32 0.0, %v3179
      %v3181 = vpop.f32.mrb[0].mxu0
      %3182 = vdwg.mxu0
      %3183 = vmatprep.subr.bf16.mxu0 0
      %3184 = vmatpush1.bf16.msra.mxu0 %v2990
      %3185 = vmatprep.subr.bf16.mxu0 0
      %3186 = vmatpush1.bf16.msra.mxu0 %v2991
      %3187 = vmatprep.subr.bf16.mxu0 0
      %3188 = vmatpush1.bf16.msra.mxu0 %v2992
      %3189 = vmatprep.subr.bf16.mxu0 0
      %3190 = vmatpush1.bf16.msra.mxu0 %v2993
      %3191 = vmatprep.subr.bf16.mxu0 0
      %3192 = vmatpush1.bf16.msra.mxu0 %v2994
      %3193 = vmatprep.subr.bf16.mxu0 0
      %3194 = vmatpush1.bf16.msra.mxu0 %v2995
      %3195 = vmatprep.subr.bf16.mxu0 0
      %3196 = vmatpush1.bf16.msra.mxu0 %v2996
      %3197 = vmatprep.subr.bf16.mxu0 0
      %3198 = vmatpush1.bf16.msra.mxu0 %v2997
      %3199 = vmatprep.subr.bf16.mxu0 0
      %3200 = vmatpush1.bf16.msra.mxu0 0
      %3201 = vmatprep.subr.bf16.mxu0 0
      %3202 = vmatpush1.bf16.msra.mxu0 0
      %3203 = vmatprep.subr.bf16.mxu0 0
      %3204 = vmatpush1.bf16.msra.mxu0 0
      %3205 = vmatprep.subr.bf16.mxu0 0
      %3206 = vmatpush1.bf16.msra.mxu0 0
      %3207 = vmatprep.subr.bf16.mxu0 0
      %3208 = vmatpush1.bf16.msra.mxu0 0
      %3209 = vmatprep.subr.bf16.mxu0 0
      %3210 = vmatpush1.bf16.msra.mxu0 0
      %3211 = vmatprep.subr.bf16.mxu0 0
      %3212 = vmatpush1.bf16.msra.mxu0 0
      %3213 = vmatprep.subr.bf16.mxu0 0
      %3214 = vmatpush1.bf16.msra.mxu0 0
      %3215 = vmatprep.mubr.bf16.mxu0 0
      %3216 = vmatmul.mubr.bf16.gmra.mrb[0].mxu0 %v2783
      %v3217 = vpop.f32.mrb[0].mxu0
      %v3218 = vadd.f32 %v3057, %v3217
      %v3219 = vpop.f32.mrb[0].mxu0
      %v3220 = vpop.f32.mrb[0].mxu0
      %v3221 = vadd.f32 %v3060, %v3220
      %v3222 = vpop.f32.mrb[0].mxu0
      %3223 = vmatprep.mubr.bf16.mxu0 0
      %3224 = vmatmul.mubr.bf16.gmra.mrb[0].mxu0 %v2786
      %v3225 = vpop.f32.mrb[0].mxu0
      %v3226 = vadd.f32 %v3065, %v3225
      %v3227 = vpop.f32.mrb[0].mxu0
      %v3228 = vpop.f32.mrb[0].mxu0
      %v3229 = vadd.f32 %v3068, %v3228
      %v3230 = vpop.f32.mrb[0].mxu0
      %3231 = vmatprep.mubr.bf16.mxu0 0
      %3232 = vmatmul.mubr.bf16.gmra.mrb[0].mxu0 %v2789
      %v3233 = vpop.f32.mrb[0].mxu0
      %v3234 = vadd.f32 %v3073, %v3233
      %v3235 = vpop.f32.mrb[0].mxu0
      %v3236 = vpop.f32.mrb[0].mxu0
      %v3237 = vadd.f32 %v3076, %v3236
      %v3238 = vpop.f32.mrb[0].mxu0
      %3239 = vmatprep.mubr.bf16.mxu0 0
      %3240 = vmatmul.mubr.bf16.gmra.mrb[0].mxu0 %v2792
      %v3241 = vpop.f32.mrb[0].mxu0
      %v3242 = vadd.f32 %v3081, %v3241
      %v3243 = vpop.f32.mrb[0].mxu0
      %v3244 = vpop.f32.mrb[0].mxu0
      %v3245 = vadd.f32 %v3084, %v3244
      %v3246 = vpop.f32.mrb[0].mxu0
      %3247 = vmatprep.mubr.bf16.mxu0 0
      %3248 = vmatmul.mubr.bf16.gmra.mrb[0].mxu0 %v2795
      %v3249 = vpop.f32.mrb[0].mxu0
      %v3250 = vadd.f32 %v3089, %v3249
      %v3251 = vpop.f32.mrb[0].mxu0
      %v3252 = vpop.f32.mrb[0].mxu0
      %v3253 = vadd.f32 %v3092, %v3252
      %v3254 = vpop.f32.mrb[0].mxu0
      %3255 = vmatprep.mubr.bf16.mxu0 0
      %3256 = vmatmul.mubr.bf16.gmra.mrb[0].mxu0 %v2798
      %v3257 = vpop.f32.mrb[0].mxu0
      %v3258 = vadd.f32 %v3097, %v3257
      %v3259 = vpop.f32.mrb[0].mxu0
      %v3260 = vpop.f32.mrb[0].mxu0
      %v3261 = vadd.f32 %v3100, %v3260
      %v3262 = vpop.f32.mrb[0].mxu0
      %3263 = vmatprep.mubr.bf16.mxu0 0
      %3264 = vmatmul.mubr.bf16.gmra.mrb[0].mxu0 %v2801
      %v3265 = vpop.f32.mrb[0].mxu0
      %v3266 = vadd.f32 %v3105, %v3265
      %v3267 = vpop.f32.mrb[0].mxu0
      %v3268 = vpop.f32.mrb[0].mxu0
      %v3269 = vadd.f32 %v3108, %v3268
      %v3270 = vpop.f32.mrb[0].mxu0
      %3271 = vmatprep.mubr.bf16.mxu0 0
      %3272 = vmatmul.mubr.bf16.gmra.mrb[0].mxu0 %v2804
      %v3273 = vpop.f32.mrb[0].mxu0
      %v3274 = vadd.f32 %v3113, %v3273
      %v3275 = vpop.f32.mrb[0].mxu0
      %v3276 = vpop.f32.mrb[0].mxu0
      %v3277 = vadd.f32 %v3116, %v3276
      %v3278 = vpop.f32.mrb[0].mxu0
      %3279 = vmatprep.mubr.bf16.mxu0 0
      %3280 = vmatmul.mubr.bf16.gmra.mrb[0].mxu0 %v2807
      %v3281 = vpop.f32.mrb[0].mxu0
      %v3282 = vadd.f32 %v3121, %v3281
      %v3283 = vpop.f32.mrb[0].mxu0
      %v3284 = vpop.f32.mrb[0].mxu0
      %v3285 = vadd.f32 %v3124, %v3284
      %v3286 = vpop.f32.mrb[0].mxu0
      %3287 = vmatprep.mubr.bf16.mxu0 0
      %3288 = vmatmul.mubr.bf16.gmra.mrb[0].mxu0 %v2810
      %v3289 = vpop.f32.mrb[0].mxu0
      %v3290 = vadd.f32 %v3129, %v3289
      %v3291 = vpop.f32.mrb[0].mxu0
      %v3292 = vpop.f32.mrb[0].mxu0
      %v3293 = vadd.f32 %v3132, %v3292
      %v3294 = vpop.f32.mrb[0].mxu0
      %3295 = vmatprep.mubr.bf16.mxu0 0
      %3296 = vmatmul.mubr.bf16.gmra.mrb[0].mxu0 %v2813
      %v3297 = vpop.f32.mrb[0].mxu0
      %v3298 = vadd.f32 %v3137, %v3297
      %v3299 = vpop.f32.mrb[0].mxu0
      %v3300 = vpop.f32.mrb[0].mxu0
      %v3301 = vadd.f32 %v3140, %v3300
      %v3302 = vpop.f32.mrb[0].mxu0
      %3303 = vmatprep.mubr.bf16.mxu0 0
      %3304 = vmatmul.mubr.bf16.gmra.mrb[0].mxu0 %v2816
      %v3305 = vpop.f32.mrb[0].mxu0
      %v3306 = vadd.f32 %v3145, %v3305
      %v3307 = vpop.f32.mrb[0].mxu0
      %v3308 = vpop.f32.mrb[0].mxu0
      %v3309 = vadd.f32 %v3148, %v3308
      %v3310 = vpop.f32.mrb[0].mxu0
      %3311 = vmatprep.mubr.bf16.mxu0 0
      %3312 = vmatmul.mubr.bf16.gmra.mrb[0].mxu0 %v2819
      %v3313 = vpop.f32.mrb[0].mxu0
      %v3314 = vadd.f32 %v3153, %v3313
      %v3315 = vpop.f32.mrb[0].mxu0
      %v3316 = vpop.f32.mrb[0].mxu0
      %v3317 = vadd.f32 %v3156, %v3316
      %v3318 = vpop.f32.mrb[0].mxu0
      %3319 = vmatprep.mubr.bf16.mxu0 0
      %3320 = vmatmul.mubr.bf16.gmra.mrb[0].mxu0 %v2822
      %v3321 = vpop.f32.mrb[0].mxu0
      %v3322 = vadd.f32 %v3161, %v3321
      %v3323 = vpop.f32.mrb[0].mxu0
      %v3324 = vpop.f32.mrb[0].mxu0
      %v3325 = vadd.f32 %v3164, %v3324
      %v3326 = vpop.f32.mrb[0].mxu0
      %3327 = vmatprep.mubr.bf16.mxu0 0
      %3328 = vmatmul.mubr.bf16.gmra.mrb[0].mxu0 %v2825
      %v3329 = vpop.f32.mrb[0].mxu0
      %v3330 = vadd.f32 %v3169, %v3329
      %v3331 = vpop.f32.mrb[0].mxu0
      %v3332 = vpop.f32.mrb[0].mxu0
      %v3333 = vadd.f32 %v3172, %v3332
      %v3334 = vpop.f32.mrb[0].mxu0
      %3335 = vmatprep.mubr.bf16.mxu0 0
      %3336 = vmatmul.mubr.bf16.gmra.mrb[0].mxu0 %v2828
      %v3337 = vpop.f32.mrb[0].mxu0
      %v3338 = vadd.f32 %v3177, %v3337
      %v3339 = vpop.f32.mrb[0].mxu0
      %v3340 = vpop.f32.mrb[0].mxu0
      %v3341 = vadd.f32 %v3180, %v3340
      %v3342 = vpop.f32.mrb[0].mxu0
      %3343 = vdwg.mxu0
      %v3344 = vadd.f32 %v2654, %v3218
      %v3345 = vadd.f32 %v2657, %v3221
      %v3346 = vadd.f32 %v2662, %v3226
      %v3347 = vadd.f32 %v2665, %v3229
      %v3348 = vadd.f32 %v2670, %v3234
      %v3349 = vadd.f32 %v2673, %v3237
      %v3350 = vadd.f32 %v2678, %v3242
      %v3351 = vadd.f32 %v2681, %v3245
      %v3352 = vadd.f32 %v2686, %v3250
      %v3353 = vadd.f32 %v2689, %v3253
      %v3354 = vadd.f32 %v2694, %v3258
      %v3355 = vadd.f32 %v2697, %v3261
      %v3356 = vadd.f32 %v2702, %v3266
      %v3357 = vadd.f32 %v2705, %v3269
      %v3358 = vadd.f32 %v2710, %v3274
      %v3359 = vadd.f32 %v2713, %v3277
      %v3360 = vadd.f32 %v2718, %v3282
      %v3361 = vadd.f32 %v2721, %v3285
      %v3362 = vadd.f32 %v2726, %v3290
      %v3363 = vadd.f32 %v2729, %v3293
      %v3364 = vadd.f32 %v2734, %v3298
      %v3365 = vadd.f32 %v2737, %v3301
      %v3366 = vadd.f32 %v2742, %v3306
      %v3367 = vadd.f32 %v2745, %v3309
      %v3368 = vadd.f32 %v2750, %v3314
      %v3369 = vadd.f32 %v2753, %v3317
      %v3370 = vadd.f32 %v2758, %v3322
      %v3371 = vadd.f32 %v2761, %v3325
      %v3372 = vadd.f32 %v2766, %v3330
      %v3373 = vadd.f32 %v2769, %v3333
      %v3374 = vadd.f32 %v2774, %v3338
      %v3375 = vadd.f32 %v2777, %v3341
      %v3376 = vld [vmem:[%s503] sm:$0x1]
      %v3377 = vld [vmem:[%s508] sm:$0x1]
      %v3378 = vadd.f32 %v3344, %v3345
      %v3379 = vadd.f32 %v3378, %v3346
      %v3380 = vadd.f32 %v3379, %v3347
      %v3381 = vadd.f32 %v3380, %v3348
      %v3382 = vadd.f32 %v3381, %v3349
      %v3383 = vadd.f32 %v3382, %v3350
      %v3384 = vadd.f32 %v3383, %v3351
      %v3385 = vadd.f32 %v3384, %v3352
      %v3386 = vadd.f32 %v3385, %v3353
      %v3387 = vadd.f32 %v3386, %v3354
      %v3388 = vadd.f32 %v3387, %v3355
      %v3389 = vadd.f32 %v3388, %v3356
      %v3390 = vadd.f32 %v3389, %v3357
      %v3391 = vadd.f32 %v3390, %v3358
      %v3392 = vadd.f32 %v3391, %v3359
      %v3393 = vadd.f32 %v3392, %v3360
      %v3394 = vadd.f32 %v3393, %v3361
      %v3395 = vadd.f32 %v3394, %v3362
      %v3396 = vadd.f32 %v3395, %v3363
      %v3397 = vadd.f32 %v3396, %v3364
      %v3398 = vadd.f32 %v3397, %v3365
      %v3399 = vadd.f32 %v3398, %v3366
      %v3400 = vadd.f32 %v3399, %v3367
      %v3401 = vadd.f32 %v3400, %v3368
      %v3402 = vadd.f32 %v3401, %v3369
      %v3403 = vadd.f32 %v3402, %v3370
      %v3404 = vadd.f32 %v3403, %v3371
      %v3405 = vadd.f32 %v3404, %v3372
      %v3406 = vadd.f32 %v3405, %v3373
      %v3407 = vadd.f32 %v3406, %v3374
      %v3408 = vadd.f32 %v3407, %v3375
      %v3409 = vrot.slane %v3408, 4
      %v3410 = vadd.f32 %v3408, %v3409
      %v3411 = vrot.slane %v3410, 2
      %v3412 = vadd.f32 %v3410, %v3411
      %v3413 = vrot.slane %v3412, 1
      %v3414 = vadd.f32 %v3412, %v3413
      %v3415 = vmul.f32 %v3344, %v3344
      %v3416 = vmul.f32 %v3345, %v3345
      %v3417 = vmul.f32 %v3346, %v3346
      %v3418 = vmul.f32 %v3347, %v3347
      %v3419 = vmul.f32 %v3348, %v3348
      %v3420 = vmul.f32 %v3349, %v3349
      %v3421 = vmul.f32 %v3350, %v3350
      %v3422 = vmul.f32 %v3351, %v3351
      %v3423 = vmul.f32 %v3352, %v3352
      %v3424 = vmul.f32 %v3353, %v3353
      %v3425 = vmul.f32 %v3354, %v3354
      %v3426 = vmul.f32 %v3355, %v3355
      %v3427 = vmul.f32 %v3356, %v3356
      %v3428 = vmul.f32 %v3357, %v3357
      %v3429 = vmul.f32 %v3358, %v3358
      %v3430 = vmul.f32 %v3359, %v3359
      %v3431 = vmul.f32 %v3360, %v3360
      %v3432 = vmul.f32 %v3361, %v3361
      %v3433 = vmul.f32 %v3362, %v3362
      %v3434 = vmul.f32 %v3363, %v3363
      %v3435 = vmul.f32 %v3364, %v3364
      %v3436 = vmul.f32 %v3365, %v3365
      %v3437 = vmul.f32 %v3366, %v3366
      %v3438 = vmul.f32 %v3367, %v3367
      %v3439 = vmul.f32 %v3368, %v3368
      %v3440 = vmul.f32 %v3369, %v3369
      %v3441 = vmul.f32 %v3370, %v3370
      %v3442 = vmul.f32 %v3371, %v3371
      %v3443 = vmul.f32 %v3372, %v3372
      %v3444 = vmul.f32 %v3373, %v3373
      %v3445 = vmul.f32 %v3374, %v3374
      %v3446 = vmul.f32 %v3375, %v3375
      %v3447 = vadd.f32 %v3415, %v3416
      %v3448 = vadd.f32 %v3447, %v3417
      %v3449 = vadd.f32 %v3448, %v3418
      %v3450 = vadd.f32 %v3449, %v3419
      %v3451 = vadd.f32 %v3450, %v3420
      %v3452 = vadd.f32 %v3451, %v3421
      %v3453 = vadd.f32 %v3452, %v3422
      %v3454 = vadd.f32 %v3453, %v3423
      %v3455 = vadd.f32 %v3454, %v3424
      %v3456 = vadd.f32 %v3455, %v3425
      %v3457 = vadd.f32 %v3456, %v3426
      %v3458 = vadd.f32 %v3457, %v3427
      %v3459 = vadd.f32 %v3458, %v3428
      %v3460 = vadd.f32 %v3459, %v3429
      %v3461 = vadd.f32 %v3460, %v3430
      %v3462 = vadd.f32 %v3461, %v3431
      %v3463 = vadd.f32 %v3462, %v3432
      %v3464 = vadd.f32 %v3463, %v3433
      %v3465 = vadd.f32 %v3464, %v3434
      %v3466 = vadd.f32 %v3465, %v3435
      %v3467 = vadd.f32 %v3466, %v3436
      %v3468 = vadd.f32 %v3467, %v3437
      %v3469 = vadd.f32 %v3468, %v3438
      %v3470 = vadd.f32 %v3469, %v3439
      %v3471 = vadd.f32 %v3470, %v3440
      %v3472 = vadd.f32 %v3471, %v3441
      %v3473 = vadd.f32 %v3472, %v3442
      %v3474 = vadd.f32 %v3473, %v3443
      %v3475 = vadd.f32 %v3474, %v3444
      %v3476 = vadd.f32 %v3475, %v3445
      %v3477 = vadd.f32 %v3476, %v3446
      %v3478 = vrot.slane %v3477, 4
      %v3479 = vadd.f32 %v3477, %v3478
      %v3480 = vrot.slane %v3479, 2
      %v3481 = vadd.f32 %v3479, %v3480
      %v3482 = vrot.slane %v3481, 1
      %v3483 = vadd.f32 %v3481, %v3482
      %v3484 = vsel %vm1130, %v3414, %v3483
      %v3485 = vmul.f32 %v3484, 0.0009765625
      %v3486 = vld [vmem:[%s9] sm:$0xff]
      %v3487 = vld [vmem:[%s9 + $0x8] sm:$0xff]
      %v3488 = vld [vmem:[%s9 + $0x10] sm:$0xff]
      %v3489 = vld [vmem:[%s9 + $0x18] sm:$0xff]
      %v3490 = vld [vmem:[%s9 + $0x20] sm:$0xff]
      %v3491 = vld [vmem:[%s9 + $0x28] sm:$0xff]
      %v3492 = vld [vmem:[%s9 + $0x30] sm:$0xff]
      %v3493 = vld [vmem:[%s9 + $0x38] sm:$0xff]
      %v3494 = vld [vmem:[%s9 + $0x40] sm:$0xff]
      %v3495 = vld [vmem:[%s9 + $0x48] sm:$0xff]
      %v3496 = vld [vmem:[%s9 + $0x50] sm:$0xff]
      %v3497 = vld [vmem:[%s9 + $0x58] sm:$0xff]
      %v3498 = vld [vmem:[%s9 + $0x60] sm:$0xff]
      %v3499 = vld [vmem:[%s9 + $0x68] sm:$0xff]
      %v3500 = vld [vmem:[%s9 + $0x70] sm:$0xff]
      %v3501 = vld [vmem:[%s9 + $0x78] sm:$0xff]
      %3502 = vmatprep.subr.mxu0 0.0
      %3503 = vmatpush1.msra.mxu0 %v3486
      %3504 = vmatprep.subr.mxu0 0.0
      %3505 = vmatpush1.msra.mxu0 %v3487
      %3506 = vmatprep.subr.mxu0 0.0
      %3507 = vmatpush1.msra.mxu0 %v3488
      %3508 = vmatprep.subr.mxu0 0.0
      %3509 = vmatpush1.msra.mxu0 %v3489
      %3510 = vmatprep.subr.mxu0 0.0
      %3511 = vmatpush1.msra.mxu0 %v3490
      %3512 = vmatprep.subr.mxu0 0.0
      %3513 = vmatpush1.msra.mxu0 %v3491
      %3514 = vmatprep.subr.mxu0 0.0
      %3515 = vmatpush1.msra.mxu0 %v3492
      %3516 = vmatprep.subr.mxu0 0.0
      %3517 = vmatpush1.msra.mxu0 %v3493
      %3518 = vmatprep.subr.mxu0 0.0
      %3519 = vmatpush1.msra.mxu0 %v3494
      %3520 = vmatprep.subr.mxu0 0.0
      %3521 = vmatpush1.msra.mxu0 %v3495
      %3522 = vmatprep.subr.mxu0 0.0
      %3523 = vmatpush1.msra.mxu0 %v3496
      %3524 = vmatprep.subr.mxu0 0.0
      %3525 = vmatpush1.msra.mxu0 %v3497
      %3526 = vmatprep.subr.mxu0 0.0
      %3527 = vmatpush1.msra.mxu0 %v3498
      %3528 = vmatprep.subr.mxu0 0.0
      %3529 = vmatpush1.msra.mxu0 %v3499
      %3530 = vmatprep.subr.mxu0 0.0
      %3531 = vmatpush1.msra.mxu0 %v3500
      %3532 = vmatprep.subr.mxu0 0.0
      %3533 = vmatpush1.msra.mxu0 %v3501
      %3534 = vmatprep.subr.mxu0 0.0
      %3535 = vmatpush1.msra.mxu0 0.0
      %3536 = vmatprep.subr.mxu0 0.0
      %3537 = vmatpush1.msra.mxu0 0.0
      %3538 = vmatprep.subr.mxu0 0.0
      %3539 = vmatpush1.msra.mxu0 0.0
      %3540 = vmatprep.subr.mxu0 0.0
      %3541 = vmatpush1.msra.mxu0 0.0
      %3542 = vmatprep.subr.mxu0 0.0
      %3543 = vmatpush1.msra.mxu0 0.0
      %3544 = vmatprep.subr.mxu0 0.0
      %3545 = vmatpush1.msra.mxu0 0.0
      %3546 = vmatprep.subr.mxu0 0.0
      %3547 = vmatpush1.msra.mxu0 0.0
      %3548 = vmatprep.subr.mxu0 0.0
      %3549 = vmatpush1.msra.mxu0 0.0
      %3550 = vmatprep.subr.mxu0 0.0
      %3551 = vmatpush1.msra.mxu0 0.0
      %3552 = vmatprep.subr.mxu0 0.0
      %3553 = vmatpush1.msra.mxu0 0.0
      %3554 = vmatprep.subr.mxu0 0.0
      %3555 = vmatpush1.msra.mxu0 0.0
      %3556 = vmatprep.subr.mxu0 0.0
      %3557 = vmatpush1.msra.mxu0 0.0
      %3558 = vmatprep.subr.mxu0 0.0
      %3559 = vmatpush1.msra.mxu0 0.0
      %3560 = vmatprep.subr.mxu0 0.0
      %3561 = vmatpush1.msra.mxu0 0.0
      %3562 = vmatprep.subr.mxu0 0.0
      %3563 = vmatpush1.msra.mxu0 0.0
      %3564 = vmatprep.subr.mxu0 0.0
      %3565 = vmatpush1.msra.mxu0 0.0
      %3566 = vmatprep.mubr.f32.mxu0 0.0
      %3567 = vmatmul.mubr.f32.gmra.mrb[0].mxu0 %v3485
      %v3568 = vpop.f32.mrb[0].mxu0
      %v3569 = vadd.f32 0.0, %v3568
      %v3570 = vpop.f32.mrb[0].mxu0
      %3571 = vdwg.mxu0
      %v3572 = vmul.f32 %v3569, %v3569
      %v3574 = vrot.slane %v3572, 7
      %v3576 = vsub.f32 %v3569, %v3574
      %v3577 = vmax.f32 %v3576, 0.0
      %v3578 = vadd.f32 %v3577, 1e-05
      %v3579 = vrsqrt.pop %v3578
      %v3581 = vlaneseq
      %v3582 = vshrl.u32 %v3581, 7
      %v3583 = vsub.s32 0, %v3582
      %v3584 = vrot.slane %v3376, %v3583
      %v3586 = vmul.f32 %v3579, %v3584
      %v3588 = vrot.slane %v3586, 1
      %v3590 = vmul.f32 %v3569, %v3588
      %v3591 = vsub.f32 %v3377, %v3590
      %v3592 = vlaneseq
      %v3593 = vshrl.u32 %v3592, 7
      %v3594 = vsub.s32 1, %v3593
      %v3595 = vrot.slane %v3586, %v3594
      %v3596 = vmul.f32 %v3344, %v3595
      %v3597 = vmul.f32 %v3345, %v3595
      %v3598 = vmul.f32 %v3346, %v3595
      %v3599 = vmul.f32 %v3347, %v3595
      %v3600 = vmul.f32 %v3348, %v3595
      %v3601 = vmul.f32 %v3349, %v3595
      %v3602 = vmul.f32 %v3350, %v3595
      %v3603 = vmul.f32 %v3351, %v3595
      %v3604 = vmul.f32 %v3352, %v3595
      %v3605 = vmul.f32 %v3353, %v3595
      %v3606 = vmul.f32 %v3354, %v3595
      %v3607 = vmul.f32 %v3355, %v3595
      %v3608 = vmul.f32 %v3356, %v3595
      %v3609 = vmul.f32 %v3357, %v3595
      %v3610 = vmul.f32 %v3358, %v3595
      %v3611 = vmul.f32 %v3359, %v3595
      %v3612 = vmul.f32 %v3360, %v3595
      %v3613 = vmul.f32 %v3361, %v3595
      %v3614 = vmul.f32 %v3362, %v3595
      %v3615 = vmul.f32 %v3363, %v3595
      %v3616 = vmul.f32 %v3364, %v3595
      %v3617 = vmul.f32 %v3365, %v3595
      %v3618 = vmul.f32 %v3366, %v3595
      %v3619 = vmul.f32 %v3367, %v3595
      %v3620 = vmul.f32 %v3368, %v3595
      %v3621 = vmul.f32 %v3369, %v3595
      %v3622 = vmul.f32 %v3370, %v3595
      %v3623 = vmul.f32 %v3371, %v3595
      %v3624 = vmul.f32 %v3372, %v3595
      %v3625 = vmul.f32 %v3373, %v3595
      %v3626 = vmul.f32 %v3374, %v3595
      %v3627 = vmul.f32 %v3375, %v3595
      %v3629 = vlaneseq
      %v3630 = vshrl.u32 %v3629, 7
      %v3631 = vsub.s32 0, %v3630
      %v3632 = vrot.slane %v3591, %v3631
      %v3634 = vadd.f32 %v3596, %v3632
      %v3635 = vadd.f32 %v3597, %v3632
      %v3636 = vadd.f32 %v3598, %v3632
      %v3637 = vadd.f32 %v3599, %v3632
      %v3638 = vadd.f32 %v3600, %v3632
      %v3639 = vadd.f32 %v3601, %v3632
      %v3640 = vadd.f32 %v3602, %v3632
      %v3641 = vadd.f32 %v3603, %v3632
      %v3642 = vadd.f32 %v3604, %v3632
      %v3643 = vadd.f32 %v3605, %v3632
      %v3644 = vadd.f32 %v3606, %v3632
      %v3645 = vadd.f32 %v3607, %v3632
      %v3646 = vadd.f32 %v3608, %v3632
      %v3647 = vadd.f32 %v3609, %v3632
      %v3648 = vadd.f32 %v3610, %v3632
      %v3649 = vadd.f32 %v3611, %v3632
      %v3650 = vadd.f32 %v3612, %v3632
      %v3651 = vadd.f32 %v3613, %v3632
      %v3652 = vadd.f32 %v3614, %v3632
      %v3653 = vadd.f32 %v3615, %v3632
      %v3654 = vadd.f32 %v3616, %v3632
      %v3655 = vadd.f32 %v3617, %v3632
      %v3656 = vadd.f32 %v3618, %v3632
      %v3657 = vadd.f32 %v3619, %v3632
      %v3658 = vadd.f32 %v3620, %v3632
      %v3659 = vadd.f32 %v3621, %v3632
      %v3660 = vadd.f32 %v3622, %v3632
      %v3661 = vadd.f32 %v3623, %v3632
      %v3662 = vadd.f32 %v3624, %v3632
      %v3663 = vadd.f32 %v3625, %v3632
      %v3664 = vadd.f32 %v3626, %v3632
      %v3665 = vadd.f32 %v3627, %v3632
      %v3666 = vmax.f32 %v3634, 0.0
      %v3667 = vmax.f32 %v3635, 0.0
      %v3668 = vmax.f32 %v3636, 0.0
      %v3669 = vmax.f32 %v3637, 0.0
      %v3670 = vmax.f32 %v3638, 0.0
      %v3671 = vmax.f32 %v3639, 0.0
      %v3672 = vmax.f32 %v3640, 0.0
      %v3673 = vmax.f32 %v3641, 0.0
      %v3674 = vmax.f32 %v3642, 0.0
      %v3675 = vmax.f32 %v3643, 0.0
      %v3676 = vmax.f32 %v3644, 0.0
      %v3677 = vmax.f32 %v3645, 0.0
      %v3678 = vmax.f32 %v3646, 0.0
      %v3679 = vmax.f32 %v3647, 0.0
      %v3680 = vmax.f32 %v3648, 0.0
      %v3681 = vmax.f32 %v3649, 0.0
      %v3682 = vmax.f32 %v3650, 0.0
      %v3683 = vmax.f32 %v3651, 0.0
      %v3684 = vmax.f32 %v3652, 0.0
      %v3685 = vmax.f32 %v3653, 0.0
      %v3686 = vmax.f32 %v3654, 0.0
      %v3687 = vmax.f32 %v3655, 0.0
      %v3688 = vmax.f32 %v3656, 0.0
      %v3689 = vmax.f32 %v3657, 0.0
      %v3690 = vmax.f32 %v3658, 0.0
      %v3691 = vmax.f32 %v3659, 0.0
      %v3692 = vmax.f32 %v3660, 0.0
      %v3693 = vmax.f32 %v3661, 0.0
      %v3694 = vmax.f32 %v3662, 0.0
      %v3695 = vmax.f32 %v3663, 0.0
      %v3696 = vmax.f32 %v3664, 0.0
      %v3697 = vmax.f32 %v3665, 0.0
      %v3698 = vpack.c.bf16 %v3667, %v3666
      %v3699 = vpack.c.bf16 %v3669, %v3668
      %v3700 = vpack.c.bf16 %v3671, %v3670
      %v3701 = vpack.c.bf16 %v3673, %v3672
      %v3702 = vpack.c.bf16 %v3675, %v3674
      %v3703 = vpack.c.bf16 %v3677, %v3676
      %v3704 = vpack.c.bf16 %v3679, %v3678
      %v3705 = vpack.c.bf16 %v3681, %v3680
      %v3706 = vpack.c.bf16 %v3683, %v3682
      %v3707 = vpack.c.bf16 %v3685, %v3684
      %v3708 = vpack.c.bf16 %v3687, %v3686
      %v3709 = vpack.c.bf16 %v3689, %v3688
      %v3710 = vpack.c.bf16 %v3691, %v3690
      %v3711 = vpack.c.bf16 %v3693, %v3692
      %v3712 = vpack.c.bf16 %v3695, %v3694
      %v3713 = vpack.c.bf16 %v3697, %v3696
      %v3715 = vshrl.u32 %v3698, 16
      %v3717 = vrot.slane %v3715, 7
      %v3718 = vshll.u32 %v3698, 16
      %v3720 = vor.u32 %v3717, %v3718
      %v3722 = vshrl.u32 %v3699, 16
      %v3724 = vrot.slane %v3722, 7
      %v3725 = vshll.u32 %v3699, 16
      %v3727 = vor.u32 %v3724, %v3725
      %v3729 = vshrl.u32 %v3700, 16
      %v3731 = vrot.slane %v3729, 7
      %v3732 = vshll.u32 %v3700, 16
      %v3734 = vor.u32 %v3731, %v3732
      %v3736 = vshrl.u32 %v3701, 16
      %v3738 = vrot.slane %v3736, 7
      %v3739 = vshll.u32 %v3701, 16
      %v3741 = vor.u32 %v3738, %v3739
      %v3743 = vshrl.u32 %v3702, 16
      %v3745 = vrot.slane %v3743, 7
      %v3746 = vshll.u32 %v3702, 16
      %v3748 = vor.u32 %v3745, %v3746
      %v3750 = vshrl.u32 %v3703, 16
      %v3752 = vrot.slane %v3750, 7
      %v3753 = vshll.u32 %v3703, 16
      %v3755 = vor.u32 %v3752, %v3753
      %v3757 = vshrl.u32 %v3704, 16
      %v3759 = vrot.slane %v3757, 7
      %v3760 = vshll.u32 %v3704, 16
      %v3762 = vor.u32 %v3759, %v3760
      %v3764 = vshrl.u32 %v3705, 16
      %v3766 = vrot.slane %v3764, 7
      %v3767 = vshll.u32 %v3705, 16
      %v3769 = vor.u32 %v3766, %v3767
      %v3771 = vshrl.u32 %v3706, 16
      %v3773 = vrot.slane %v3771, 7
      %v3774 = vshll.u32 %v3706, 16
      %v3776 = vor.u32 %v3773, %v3774
      %v3778 = vshrl.u32 %v3707, 16
      %v3780 = vrot.slane %v3778, 7
      %v3781 = vshll.u32 %v3707, 16
      %v3783 = vor.u32 %v3780, %v3781
      %v3785 = vshrl.u32 %v3708, 16
      %v3787 = vrot.slane %v3785, 7
      %v3788 = vshll.u32 %v3708, 16
      %v3790 = vor.u32 %v3787, %v3788
      %v3792 = vshrl.u32 %v3709, 16
      %v3794 = vrot.slane %v3792, 7
      %v3795 = vshll.u32 %v3709, 16
      %v3797 = vor.u32 %v3794, %v3795
      %v3799 = vshrl.u32 %v3710, 16
      %v3801 = vrot.slane %v3799, 7
      %v3802 = vshll.u32 %v3710, 16
      %v3804 = vor.u32 %v3801, %v3802
      %v3806 = vshrl.u32 %v3711, 16
      %v3808 = vrot.slane %v3806, 7
      %v3809 = vshll.u32 %v3711, 16
      %v3811 = vor.u32 %v3808, %v3809
      %v3813 = vshrl.u32 %v3712, 16
      %v3815 = vrot.slane %v3813, 7
      %v3816 = vshll.u32 %v3712, 16
      %v3818 = vor.u32 %v3815, %v3816
      %v3820 = vshrl.u32 %v3713, 16
      %v3822 = vrot.slane %v3820, 7
      %v3823 = vshll.u32 %v3713, 16
      %v3825 = vor.u32 %v3822, %v3823
      %v3842 = vld [vmem:[%s1489] sm:$0xff]
      %v3843 = vsel %vm1492, %v3720, %v3842
      %3844 = vst [vmem:[%s1489] sm:$0xff] %v3843
      %v3845 = vld [vmem:[%s1489 + $0x18] sm:$0xff]
      %v3846 = vsel %vm1492, %v3727, %v3845
      %3847 = vst [vmem:[%s1489 + $0x18] sm:$0xff] %v3846
      %v3848 = vld [vmem:[%s1489 + $0x30] sm:$0xff]
      %v3849 = vsel %vm1492, %v3734, %v3848
      %3850 = vst [vmem:[%s1489 + $0x30] sm:$0xff] %v3849
      %v3851 = vld [vmem:[%s1489 + $0x48] sm:$0xff]
      %v3852 = vsel %vm1492, %v3741, %v3851
      %3853 = vst [vmem:[%s1489 + $0x48] sm:$0xff] %v3852
      %v3854 = vld [vmem:[%s1489 + $0x60] sm:$0xff]
      %v3855 = vsel %vm1492, %v3748, %v3854
      %3856 = vst [vmem:[%s1489 + $0x60] sm:$0xff] %v3855
      %v3857 = vld [vmem:[%s1489 + $0x78] sm:$0xff]
      %v3858 = vsel %vm1492, %v3755, %v3857
      %3859 = vst [vmem:[%s1489 + $0x78] sm:$0xff] %v3858
      %v3860 = vld [vmem:[%s1489 + $0x90] sm:$0xff]
      %v3861 = vsel %vm1492, %v3762, %v3860
      %3862 = vst [vmem:[%s1489 + $0x90] sm:$0xff] %v3861
      %v3863 = vld [vmem:[%s1489 + $0xa8] sm:$0xff]
      %v3864 = vsel %vm1492, %v3769, %v3863
      %3865 = vst [vmem:[%s1489 + $0xa8] sm:$0xff] %v3864
      %v3866 = vld [vmem:[%s1489 + $0xc0] sm:$0xff]
      %v3867 = vsel %vm1492, %v3776, %v3866
      %3868 = vst [vmem:[%s1489 + $0xc0] sm:$0xff] %v3867
      %v3869 = vld [vmem:[%s1489 + $0xd8] sm:$0xff]
      %v3870 = vsel %vm1492, %v3783, %v3869
      %3871 = vst [vmem:[%s1489 + $0xd8] sm:$0xff] %v3870
      %v3872 = vld [vmem:[%s1489 + $0xf0] sm:$0xff]
      %v3873 = vsel %vm1492, %v3790, %v3872
      %3874 = vst [vmem:[%s1489 + $0xf0] sm:$0xff] %v3873
      %v3875 = vld [vmem:[%s1489 + $0x108] sm:$0xff]
      %v3876 = vsel %vm1492, %v3797, %v3875
      %3877 = vst [vmem:[%s1489 + $0x108] sm:$0xff] %v3876
      %v3878 = vld [vmem:[%s1489 + $0x120] sm:$0xff]
      %v3879 = vsel %vm1492, %v3804, %v3878
      %3880 = vst [vmem:[%s1489 + $0x120] sm:$0xff] %v3879
      %v3881 = vld [vmem:[%s1489 + $0x138] sm:$0xff]
      %v3882 = vsel %vm1492, %v3811, %v3881
      %3883 = vst [vmem:[%s1489 + $0x138] sm:$0xff] %v3882
      %v3884 = vld [vmem:[%s1489 + $0x150] sm:$0xff]
      %v3885 = vsel %vm1492, %v3818, %v3884
      %3886 = vst [vmem:[%s1489 + $0x150] sm:$0xff] %v3885
      %v3887 = vld [vmem:[%s1489 + $0x168] sm:$0xff]
      %v3888 = vsel %vm1492, %v3825, %v3887
      %3889 = vst [vmem:[%s1489 + $0x168] sm:$0xff] %v3888
      %3890 = vst [vmem:[%s1489 + $0x8] sm:$0xff] %v3698
      %3891 = vst [vmem:[%s1489 + $0x20] sm:$0xff] %v3699
      %3892 = vst [vmem:[%s1489 + $0x38] sm:$0xff] %v3700
      %3893 = vst [vmem:[%s1489 + $0x50] sm:$0xff] %v3701
      %3894 = vst [vmem:[%s1489 + $0x68] sm:$0xff] %v3702
      %3895 = vst [vmem:[%s1489 + $0x80] sm:$0xff] %v3703
      %3896 = vst [vmem:[%s1489 + $0x98] sm:$0xff] %v3704
      %3897 = vst [vmem:[%s1489 + $0xb0] sm:$0xff] %v3705
      %3898 = vst [vmem:[%s1489 + $0xc8] sm:$0xff] %v3706
      %3899 = vst [vmem:[%s1489 + $0xe0] sm:$0xff] %v3707
      %3900 = vst [vmem:[%s1489 + $0xf8] sm:$0xff] %v3708
      %3901 = vst [vmem:[%s1489 + $0x110] sm:$0xff] %v3709
      %3902 = vst [vmem:[%s1489 + $0x128] sm:$0xff] %v3710
      %3903 = vst [vmem:[%s1489 + $0x140] sm:$0xff] %v3711
      %3904 = vst [vmem:[%s1489 + $0x158] sm:$0xff] %v3712
      %3905 = vst [vmem:[%s1489 + $0x170] sm:$0xff] %v3713
      %v3906 = vrot.slane %v3718, 1
      %v3907 = vor.u32 %v3715, %v3906
      %v3908 = vrot.slane %v3725, 1
      %v3909 = vor.u32 %v3722, %v3908
      %v3910 = vrot.slane %v3732, 1
      %v3911 = vor.u32 %v3729, %v3910
      %v3912 = vrot.slane %v3739, 1
      %v3913 = vor.u32 %v3736, %v3912
      %v3914 = vrot.slane %v3746, 1
      %v3915 = vor.u32 %v3743, %v3914
      %v3916 = vrot.slane %v3753, 1
      %v3917 = vor.u32 %v3750, %v3916
      %v3918 = vrot.slane %v3760, 1
      %v3919 = vor.u32 %v3757, %v3918
      %v3920 = vrot.slane %v3767, 1
      %v3921 = vor.u32 %v3764, %v3920
      %v3922 = vrot.slane %v3774, 1
      %v3923 = vor.u32 %v3771, %v3922
      %v3924 = vrot.slane %v3781, 1
      %v3925 = vor.u32 %v3778, %v3924
      %v3926 = vrot.slane %v3788, 1
      %v3927 = vor.u32 %v3785, %v3926
      %v3928 = vrot.slane %v3795, 1
      %v3929 = vor.u32 %v3792, %v3928
      %v3930 = vrot.slane %v3802, 1
      %v3931 = vor.u32 %v3799, %v3930
      %v3932 = vrot.slane %v3809, 1
      %v3933 = vor.u32 %v3806, %v3932
      %v3934 = vrot.slane %v3816, 1
      %v3935 = vor.u32 %v3813, %v3934
      %v3936 = vrot.slane %v3823, 1
      %v3937 = vor.u32 %v3820, %v3936
      %v3954 = vld [vmem:[%s1489 + $0x10] sm:$0xff]
      %v3955 = vsel %vm1606, %v3907, %v3954
      %3956 = vst [vmem:[%s1489 + $0x10] sm:$0xff] %v3955
      %v3957 = vld [vmem:[%s1489 + $0x28] sm:$0xff]
      %v3958 = vsel %vm1606, %v3909, %v3957
      %3959 = vst [vmem:[%s1489 + $0x28] sm:$0xff] %v3958
      %v3960 = vld [vmem:[%s1489 + $0x40] sm:$0xff]
      %v3961 = vsel %vm1606, %v3911, %v3960
      %3962 = vst [vmem:[%s1489 + $0x40] sm:$0xff] %v3961
      %v3963 = vld [vmem:[%s1489 + $0x58] sm:$0xff]
      %v3964 = vsel %vm1606, %v3913, %v3963
      %3965 = vst [vmem:[%s1489 + $0x58] sm:$0xff] %v3964
      %v3966 = vld [vmem:[%s1489 + $0x70] sm:$0xff]
      %v3967 = vsel %vm1606, %v3915, %v3966
      %3968 = vst [vmem:[%s1489 + $0x70] sm:$0xff] %v3967
      %v3969 = vld [vmem:[%s1489 + $0x88] sm:$0xff]
      %v3970 = vsel %vm1606, %v3917, %v3969
      %3971 = vst [vmem:[%s1489 + $0x88] sm:$0xff] %v3970
      %v3972 = vld [vmem:[%s1489 + $0xa0] sm:$0xff]
      %v3973 = vsel %vm1606, %v3919, %v3972
      %3974 = vst [vmem:[%s1489 + $0xa0] sm:$0xff] %v3973
      %v3975 = vld [vmem:[%s1489 + $0xb8] sm:$0xff]
      %v3976 = vsel %vm1606, %v3921, %v3975
      %3977 = vst [vmem:[%s1489 + $0xb8] sm:$0xff] %v3976
      %v3978 = vld [vmem:[%s1489 + $0xd0] sm:$0xff]
      %v3979 = vsel %vm1606, %v3923, %v3978
      %3980 = vst [vmem:[%s1489 + $0xd0] sm:$0xff] %v3979
      %v3981 = vld [vmem:[%s1489 + $0xe8] sm:$0xff]
      %v3982 = vsel %vm1606, %v3925, %v3981
      %3983 = vst [vmem:[%s1489 + $0xe8] sm:$0xff] %v3982
      %v3984 = vld [vmem:[%s1489 + $0x100] sm:$0xff]
      %v3985 = vsel %vm1606, %v3927, %v3984
      %3986 = vst [vmem:[%s1489 + $0x100] sm:$0xff] %v3985
      %v3987 = vld [vmem:[%s1489 + $0x118] sm:$0xff]
      %v3988 = vsel %vm1606, %v3929, %v3987
      %3989 = vst [vmem:[%s1489 + $0x118] sm:$0xff] %v3988
      %v3990 = vld [vmem:[%s1489 + $0x130] sm:$0xff]
      %v3991 = vsel %vm1606, %v3931, %v3990
      %3992 = vst [vmem:[%s1489 + $0x130] sm:$0xff] %v3991
      %v3993 = vld [vmem:[%s1489 + $0x148] sm:$0xff]
      %v3994 = vsel %vm1606, %v3933, %v3993
      %3995 = vst [vmem:[%s1489 + $0x148] sm:$0xff] %v3994
      %v3996 = vld [vmem:[%s1489 + $0x160] sm:$0xff]
      %v3997 = vsel %vm1606, %v3935, %v3996
      %3998 = vst [vmem:[%s1489 + $0x160] sm:$0xff] %v3997
      %v3999 = vld [vmem:[%s1489 + $0x178] sm:$0xff]
      %v4000 = vsel %vm1606, %v3937, %v3999
      %4001 = vst [vmem:[%s1489 + $0x178] sm:$0xff] %v4000
      %v4002 = vld [vmem:[#allocation2] sm:$0xff]
      %v4003 = vld [vmem:[#allocation2 + $0x8] sm:$0xff]
      %v4004 = vld [vmem:[#allocation2 + $0x10] sm:$0xff]
      %v4005 = vld [vmem:[#allocation2 + $0x18] sm:$0xff]
      %v4006 = vld [vmem:[#allocation2 + $0x20] sm:$0xff]
      %v4007 = vld [vmem:[#allocation2 + $0x28] sm:$0xff]
      %v4008 = vld [vmem:[#allocation2 + $0x30] sm:$0xff]
      %v4009 = vld [vmem:[#allocation2 + $0x38] sm:$0xff]
      %v4010 = vld [vmem:[#allocation2 + $0x40] sm:$0xff]
      %v4011 = vld [vmem:[#allocation2 + $0x48] sm:$0xff]
      %v4012 = vld [vmem:[#allocation2 + $0x50] sm:$0xff]
      %v4013 = vld [vmem:[#allocation2 + $0x58] sm:$0xff]
      %v4014 = vld [vmem:[#allocation2 + $0x60] sm:$0xff]
      %v4015 = vld [vmem:[#allocation2 + $0x68] sm:$0xff]
      %v4016 = vld [vmem:[#allocation2 + $0x70] sm:$0xff]
      %v4017 = vld [vmem:[#allocation2 + $0x78] sm:$0xff]
      %v4018 = vld [vmem:[#allocation2 + $0x80] sm:$0xff]
      %v4019 = vld [vmem:[#allocation2 + $0x88] sm:$0xff]
      %v4020 = vld [vmem:[#allocation2 + $0x90] sm:$0xff]
      %v4021 = vld [vmem:[#allocation2 + $0x98] sm:$0xff]
      %v4022 = vld [vmem:[#allocation2 + $0xa0] sm:$0xff]
      %v4023 = vld [vmem:[#allocation2 + $0xa8] sm:$0xff]
      %v4024 = vld [vmem:[#allocation2 + $0xb0] sm:$0xff]
      %v4025 = vld [vmem:[#allocation2 + $0xb8] sm:$0xff]
      %v4026 = vld [vmem:[#allocation2 + $0xc0] sm:$0xff]
      %v4027 = vld [vmem:[#allocation2 + $0xc8] sm:$0xff]
      %v4028 = vld [vmem:[#allocation2 + $0xd0] sm:$0xff]
      %v4029 = vld [vmem:[#allocation2 + $0xd8] sm:$0xff]
      %v4030 = vld [vmem:[#allocation2 + $0xe0] sm:$0xff]
      %v4031 = vld [vmem:[#allocation2 + $0xe8] sm:$0xff]
      %v4032 = vld [vmem:[#allocation2 + $0xf0] sm:$0xff]
      %v4033 = vld [vmem:[#allocation2 + $0xf8] sm:$0xff]
      %v4034 = vld [vmem:[#allocation2 + $0x100] sm:$0xff]
      %v4035 = vld [vmem:[#allocation2 + $0x108] sm:$0xff]
      %v4036 = vld [vmem:[#allocation2 + $0x110] sm:$0xff]
      %v4037 = vld [vmem:[#allocation2 + $0x118] sm:$0xff]
      %v4038 = vld [vmem:[#allocation2 + $0x120] sm:$0xff]
      %v4039 = vld [vmem:[#allocation2 + $0x128] sm:$0xff]
      %v4040 = vld [vmem:[#allocation2 + $0x130] sm:$0xff]
      %v4041 = vld [vmem:[#allocation2 + $0x138] sm:$0xff]
      %v4042 = vld [vmem:[#allocation2 + $0x140] sm:$0xff]
      %v4043 = vld [vmem:[#allocation2 + $0x148] sm:$0xff]
      %v4044 = vld [vmem:[#allocation2 + $0x150] sm:$0xff]
      %v4045 = vld [vmem:[#allocation2 + $0x158] sm:$0xff]
      %v4046 = vld [vmem:[#allocation2 + $0x160] sm:$0xff]
      %v4047 = vld [vmem:[#allocation2 + $0x168] sm:$0xff]
      %v4048 = vld [vmem:[#allocation2 + $0x170] sm:$0xff]
      %v4049 = vld [vmem:[#allocation2 + $0x178] sm:$0xff]
      %s4050 = scalar_lea.vmem %s498, 576
      %v4051 = vld [vmem:[%s4050] sm:$0xf]
      %v4052 = vld [vmem:[%s4050 + $0x4] sm:$0xf]
      %v4053 = vld [vmem:[%s4050 + $0x8] sm:$0xf]
      %v4054 = vld [vmem:[%s4050 + $0xc] sm:$0xf]
      %v4055 = vld [vmem:[%s4050 + $0x10] sm:$0xf]
      %v4056 = vld [vmem:[%s4050 + $0x14] sm:$0xf]
      %v4057 = vld [vmem:[%s4050 + $0x18] sm:$0xf]
      %v4058 = vld [vmem:[%s4050 + $0x1c] sm:$0xf]
      %v4059 = vld [vmem:[%s4050 + $0x20] sm:$0xf]
      %v4060 = vld [vmem:[%s4050 + $0x24] sm:$0xf]
      %v4061 = vld [vmem:[%s4050 + $0x28] sm:$0xf]
      %v4062 = vld [vmem:[%s4050 + $0x2c] sm:$0xf]
      %v4063 = vld [vmem:[%s4050 + $0x30] sm:$0xf]
      %v4064 = vld [vmem:[%s4050 + $0x34] sm:$0xf]
      %v4065 = vld [vmem:[%s4050 + $0x38] sm:$0xf]
      %v4066 = vld [vmem:[%s4050 + $0x3c] sm:$0xf]
      %v4067 = vld [vmem:[%s4050 + $0x40] sm:$0xf]
      %v4068 = vld [vmem:[%s4050 + $0x44] sm:$0xf]
      %v4069 = vld [vmem:[%s4050 + $0x48] sm:$0xf]
      %v4070 = vld [vmem:[%s4050 + $0x4c] sm:$0xf]
      %v4071 = vld [vmem:[%s4050 + $0x50] sm:$0xf]
      %v4072 = vld [vmem:[%s4050 + $0x54] sm:$0xf]
      %v4073 = vld [vmem:[%s4050 + $0x58] sm:$0xf]
      %v4074 = vld [vmem:[%s4050 + $0x5c] sm:$0xf]
      %v4075 = vld [vmem:[%s4050 + $0x60] sm:$0xf]
      %v4076 = vld [vmem:[%s4050 + $0x64] sm:$0xf]
      %v4077 = vld [vmem:[%s4050 + $0x68] sm:$0xf]
      %v4078 = vld [vmem:[%s4050 + $0x6c] sm:$0xf]
      %v4079 = vld [vmem:[%s4050 + $0x70] sm:$0xf]
      %v4080 = vld [vmem:[%s4050 + $0x74] sm:$0xf]
      %v4081 = vld [vmem:[%s4050 + $0x78] sm:$0xf]
      %v4082 = vld [vmem:[%s4050 + $0x7c] sm:$0xf]
      %v4083 = vld [vmem:[%s4050 + $0x80] sm:$0xf]
      %v4084 = vld [vmem:[%s4050 + $0x84] sm:$0xf]
      %v4085 = vld [vmem:[%s4050 + $0x88] sm:$0xf]
      %v4086 = vld [vmem:[%s4050 + $0x8c] sm:$0xf]
      %v4087 = vld [vmem:[%s4050 + $0x90] sm:$0xf]
      %v4088 = vld [vmem:[%s4050 + $0x94] sm:$0xf]
      %v4089 = vld [vmem:[%s4050 + $0x98] sm:$0xf]
      %v4090 = vld [vmem:[%s4050 + $0x9c] sm:$0xf]
      %v4091 = vld [vmem:[%s4050 + $0xa0] sm:$0xf]
      %v4092 = vld [vmem:[%s4050 + $0xa4] sm:$0xf]
      %v4093 = vld [vmem:[%s4050 + $0xa8] sm:$0xf]
      %v4094 = vld [vmem:[%s4050 + $0xac] sm:$0xf]
      %v4095 = vld [vmem:[%s4050 + $0xb0] sm:$0xf]
      %v4096 = vld [vmem:[%s4050 + $0xb4] sm:$0xf]
      %v4097 = vld [vmem:[%s4050 + $0xb8] sm:$0xf]
      %v4098 = vld [vmem:[%s4050 + $0xbc] sm:$0xf]
      %v4099 = vld [vmem:[%s1489] sm:$0xff]
      %v4100 = vld [vmem:[%s1489 + $0x8] sm:$0xff]
      %v4101 = vld [vmem:[%s1489 + $0x10] sm:$0xff]
      %v4102 = vld [vmem:[%s1489 + $0x18] sm:$0xff]
      %v4103 = vld [vmem:[%s1489 + $0x20] sm:$0xff]
      %v4104 = vld [vmem:[%s1489 + $0x28] sm:$0xff]
      %v4105 = vld [vmem:[%s1489 + $0x30] sm:$0xff]
      %v4106 = vld [vmem:[%s1489 + $0x38] sm:$0xff]
      %v4107 = vld [vmem:[%s1489 + $0x40] sm:$0xff]
      %v4108 = vld [vmem:[%s1489 + $0x48] sm:$0xff]
      %v4109 = vld [vmem:[%s1489 + $0x50] sm:$0xff]
      %v4110 = vld [vmem:[%s1489 + $0x58] sm:$0xff]
      %v4111 = vld [vmem:[%s1489 + $0x60] sm:$0xff]
      %v4112 = vld [vmem:[%s1489 + $0x68] sm:$0xff]
      %v4113 = vld [vmem:[%s1489 + $0x70] sm:$0xff]
      %v4114 = vld [vmem:[%s1489 + $0x78] sm:$0xff]
      %v4115 = vld [vmem:[%s1489 + $0x80] sm:$0xff]
      %v4116 = vld [vmem:[%s1489 + $0x88] sm:$0xff]
      %v4117 = vld [vmem:[%s1489 + $0x90] sm:$0xff]
      %v4118 = vld [vmem:[%s1489 + $0x98] sm:$0xff]
      %v4119 = vld [vmem:[%s1489 + $0xa0] sm:$0xff]
      %v4120 = vld [vmem:[%s1489 + $0xa8] sm:$0xff]
      %v4121 = vld [vmem:[%s1489 + $0xb0] sm:$0xff]
      %v4122 = vld [vmem:[%s1489 + $0xb8] sm:$0xff]
      %v4123 = vld [vmem:[%s1489 + $0xc0] sm:$0xff]
      %v4124 = vld [vmem:[%s1489 + $0xc8] sm:$0xff]
      %v4125 = vld [vmem:[%s1489 + $0xd0] sm:$0xff]
      %v4126 = vld [vmem:[%s1489 + $0xd8] sm:$0xff]
      %v4127 = vld [vmem:[%s1489 + $0xe0] sm:$0xff]
      %v4128 = vld [vmem:[%s1489 + $0xe8] sm:$0xff]
      %v4129 = vld [vmem:[%s1489 + $0xf0] sm:$0xff]
      %v4130 = vld [vmem:[%s1489 + $0xf8] sm:$0xff]
      %v4131 = vld [vmem:[%s1489 + $0x100] sm:$0xff]
      %v4132 = vld [vmem:[%s1489 + $0x108] sm:$0xff]
      %v4133 = vld [vmem:[%s1489 + $0x110] sm:$0xff]
      %v4134 = vld [vmem:[%s1489 + $0x118] sm:$0xff]
      %v4135 = vld [vmem:[%s1489 + $0x120] sm:$0xff]
      %v4136 = vld [vmem:[%s1489 + $0x128] sm:$0xff]
      %v4137 = vld [vmem:[%s1489 + $0x130] sm:$0xff]
      %v4138 = vld [vmem:[%s1489 + $0x138] sm:$0xff]
      %v4139 = vld [vmem:[%s1489 + $0x140] sm:$0xff]
      %v4140 = vld [vmem:[%s1489 + $0x148] sm:$0xff]
      %v4141 = vld [vmem:[%s1489 + $0x150] sm:$0xff]
      %v4142 = vld [vmem:[%s1489 + $0x158] sm:$0xff]
      %v4143 = vld [vmem:[%s1489 + $0x160] sm:$0xff]
      %v4144 = vld [vmem:[%s1489 + $0x168] sm:$0xff]
      %v4145 = vld [vmem:[%s1489 + $0x170] sm:$0xff]
      %v4146 = vld [vmem:[%s1489 + $0x178] sm:$0xff]
      %s4147 = scalar_lea.vmem %s498, 768
      %v4148 = vld [vmem:[%s4147] sm:$0xf]
      %v4149 = vld [vmem:[%s4147 + $0x4] sm:$0xf]
      %v4150 = vld [vmem:[%s4147 + $0x8] sm:$0xf]
      %v4151 = vld [vmem:[%s4147 + $0xc] sm:$0xf]
      %v4152 = vld [vmem:[%s4147 + $0x10] sm:$0xf]
      %v4153 = vld [vmem:[%s4147 + $0x14] sm:$0xf]
      %v4154 = vld [vmem:[%s4147 + $0x18] sm:$0xf]
      %v4155 = vld [vmem:[%s4147 + $0x1c] sm:$0xf]
      %v4156 = vld [vmem:[%s4147 + $0x20] sm:$0xf]
      %v4157 = vld [vmem:[%s4147 + $0x24] sm:$0xf]
      %v4158 = vld [vmem:[%s4147 + $0x28] sm:$0xf]
      %v4159 = vld [vmem:[%s4147 + $0x2c] sm:$0xf]
      %v4160 = vld [vmem:[%s4147 + $0x30] sm:$0xf]
      %v4161 = vld [vmem:[%s4147 + $0x34] sm:$0xf]
      %v4162 = vld [vmem:[%s4147 + $0x38] sm:$0xf]
      %v4163 = vld [vmem:[%s4147 + $0x3c] sm:$0xf]
      %v4164 = vld [vmem:[%s4147 + $0x40] sm:$0xf]
      %v4165 = vld [vmem:[%s4147 + $0x44] sm:$0xf]
      %v4166 = vld [vmem:[%s4147 + $0x48] sm:$0xf]
      %v4167 = vld [vmem:[%s4147 + $0x4c] sm:$0xf]
      %v4168 = vld [vmem:[%s4147 + $0x50] sm:$0xf]
      %v4169 = vld [vmem:[%s4147 + $0x54] sm:$0xf]
      %v4170 = vld [vmem:[%s4147 + $0x58] sm:$0xf]
      %v4171 = vld [vmem:[%s4147 + $0x5c] sm:$0xf]
      %v4172 = vld [vmem:[%s4147 + $0x60] sm:$0xf]
      %v4173 = vld [vmem:[%s4147 + $0x64] sm:$0xf]
      %v4174 = vld [vmem:[%s4147 + $0x68] sm:$0xf]
      %v4175 = vld [vmem:[%s4147 + $0x6c] sm:$0xf]
      %v4176 = vld [vmem:[%s4147 + $0x70] sm:$0xf]
      %v4177 = vld [vmem:[%s4147 + $0x74] sm:$0xf]
      %v4178 = vld [vmem:[%s4147 + $0x78] sm:$0xf]
      %v4179 = vld [vmem:[%s4147 + $0x7c] sm:$0xf]
      %v4180 = vld [vmem:[%s4147 + $0x80] sm:$0xf]
      %v4181 = vld [vmem:[%s4147 + $0x84] sm:$0xf]
      %v4182 = vld [vmem:[%s4147 + $0x88] sm:$0xf]
      %v4183 = vld [vmem:[%s4147 + $0x8c] sm:$0xf]
      %v4184 = vld [vmem:[%s4147 + $0x90] sm:$0xf]
      %v4185 = vld [vmem:[%s4147 + $0x94] sm:$0xf]
      %v4186 = vld [vmem:[%s4147 + $0x98] sm:$0xf]
      %v4187 = vld [vmem:[%s4147 + $0x9c] sm:$0xf]
      %v4188 = vld [vmem:[%s4147 + $0xa0] sm:$0xf]
      %v4189 = vld [vmem:[%s4147 + $0xa4] sm:$0xf]
      %v4190 = vld [vmem:[%s4147 + $0xa8] sm:$0xf]
      %v4191 = vld [vmem:[%s4147 + $0xac] sm:$0xf]
      %v4192 = vld [vmem:[%s4147 + $0xb0] sm:$0xf]
      %v4193 = vld [vmem:[%s4147 + $0xb4] sm:$0xf]
      %v4194 = vld [vmem:[%s4147 + $0xb8] sm:$0xf]
      %v4195 = vld [vmem:[%s4147 + $0xbc] sm:$0xf]
      %v4244 = vunpack.c.l.b16 %v4148
      %v4245 = vunpack.c.l.b16 %v4149
      %v4246 = vunpack.c.l.b16 %v4150
      %v4247 = vunpack.c.l.b16 %v4151
      %v4248 = vunpack.c.l.b16 %v4152
      %v4249 = vunpack.c.l.b16 %v4153
      %v4250 = vunpack.c.l.b16 %v4154
      %v4251 = vunpack.c.l.b16 %v4155
      %v4252 = vunpack.c.l.b16 %v4156
      %v4253 = vunpack.c.l.b16 %v4157
      %v4254 = vunpack.c.l.b16 %v4158
      %v4255 = vunpack.c.l.b16 %v4159
      %v4256 = vunpack.c.l.b16 %v4160
      %v4257 = vunpack.c.l.b16 %v4161
      %v4258 = vunpack.c.l.b16 %v4162
      %v4259 = vunpack.c.l.b16 %v4163
      %v4260 = vunpack.c.l.b16 %v4164
      %v4261 = vunpack.c.l.b16 %v4165
      %v4262 = vunpack.c.l.b16 %v4166
      %v4263 = vunpack.c.l.b16 %v4167
      %v4264 = vunpack.c.l.b16 %v4168
      %v4265 = vunpack.c.l.b16 %v4169
      %v4266 = vunpack.c.l.b16 %v4170
      %v4267 = vunpack.c.l.b16 %v4171
      %v4268 = vunpack.c.l.b16 %v4172
      %v4269 = vunpack.c.l.b16 %v4173
      %v4270 = vunpack.c.l.b16 %v4174
      %v4271 = vunpack.c.l.b16 %v4175
      %v4272 = vunpack.c.l.b16 %v4176
      %v4273 = vunpack.c.l.b16 %v4177
      %v4274 = vunpack.c.l.b16 %v4178
      %v4275 = vunpack.c.l.b16 %v4179
      %v4276 = vunpack.c.l.b16 %v4180
      %v4277 = vunpack.c.l.b16 %v4181
      %v4278 = vunpack.c.l.b16 %v4182
      %v4279 = vunpack.c.l.b16 %v4183
      %v4280 = vunpack.c.l.b16 %v4184
      %v4281 = vunpack.c.l.b16 %v4185
      %v4282 = vunpack.c.l.b16 %v4186
      %v4283 = vunpack.c.l.b16 %v4187
      %v4284 = vunpack.c.l.b16 %v4188
      %v4285 = vunpack.c.l.b16 %v4189
      %v4286 = vunpack.c.l.b16 %v4190
      %v4287 = vunpack.c.l.b16 %v4191
      %v4288 = vunpack.c.l.b16 %v4192
      %v4289 = vunpack.c.l.b16 %v4193
      %v4290 = vunpack.c.l.b16 %v4194
      %v4291 = vunpack.c.l.b16 %v4195
      %v4292 = vpack.c.b16 %v4245, %v4244
      %v4293 = vpack.c.b16 %v4247, %v4246
      %v4294 = vpack.c.b16 %v4249, %v4248
      %v4295 = vpack.c.b16 %v4251, %v4250
      %v4296 = vpack.c.b16 %v4253, %v4252
      %v4297 = vpack.c.b16 %v4255, %v4254
      %v4298 = vpack.c.b16 %v4257, %v4256
      %v4299 = vpack.c.b16 %v4259, %v4258
      %v4300 = vpack.c.b16 %v4261, %v4260
      %v4301 = vpack.c.b16 %v4263, %v4262
      %v4302 = vpack.c.b16 %v4265, %v4264
      %v4303 = vpack.c.b16 %v4267, %v4266
      %v4304 = vpack.c.b16 %v4269, %v4268
      %v4305 = vpack.c.b16 %v4271, %v4270
      %v4306 = vpack.c.b16 %v4273, %v4272
      %v4307 = vpack.c.b16 %v4275, %v4274
      %v4308 = vpack.c.b16 %v4277, %v4276
      %v4309 = vpack.c.b16 %v4279, %v4278
      %v4310 = vpack.c.b16 %v4281, %v4280
      %v4311 = vpack.c.b16 %v4283, %v4282
      %v4312 = vpack.c.b16 %v4285, %v4284
      %v4313 = vpack.c.b16 %v4287, %v4286
      %v4314 = vpack.c.b16 %v4289, %v4288
      %v4315 = vpack.c.b16 %v4291, %v4290
      %4340 = vmatprep.subr.bf16.mxu0 0
      %4341 = vmatpush1.bf16.msra.mxu0 %v4292
      %4342 = vmatprep.subr.bf16.mxu0 0
      %4343 = vmatpush1.bf16.msra.mxu0 %v4293
      %4344 = vmatprep.subr.bf16.mxu0 0
      %4345 = vmatpush1.bf16.msra.mxu0 %v4294
      %4346 = vmatprep.subr.bf16.mxu0 0
      %4347 = vmatpush1.bf16.msra.mxu0 %v4295
      %4348 = vmatprep.subr.bf16.mxu0 0
      %4349 = vmatpush1.bf16.msra.mxu0 %v4296
      %4350 = vmatprep.subr.bf16.mxu0 0
      %4351 = vmatpush1.bf16.msra.mxu0 %v4297
      %4352 = vmatprep.subr.bf16.mxu0 0
      %4353 = vmatpush1.bf16.msra.mxu0 %v4298
      %4354 = vmatprep.subr.bf16.mxu0 0
      %4355 = vmatpush1.bf16.msra.mxu0 %v4299
      %4356 = vmatprep.subr.bf16.mxu0 0
      %4357 = vmatpush1.bf16.msra.mxu0 %v4300
      %4358 = vmatprep.subr.bf16.mxu0 0
      %4359 = vmatpush1.bf16.msra.mxu0 %v4301
      %4360 = vmatprep.subr.bf16.mxu0 0
      %4361 = vmatpush1.bf16.msra.mxu0 %v4302
      %4362 = vmatprep.subr.bf16.mxu0 0
      %4363 = vmatpush1.bf16.msra.mxu0 %v4303
      %4364 = vmatprep.subr.bf16.mxu0 0
      %4365 = vmatpush1.bf16.msra.mxu0 %v4304
      %4366 = vmatprep.subr.bf16.mxu0 0
      %4367 = vmatpush1.bf16.msra.mxu0 %v4305
      %4368 = vmatprep.subr.bf16.mxu0 0
      %4369 = vmatpush1.bf16.msra.mxu0 %v4306
      %4370 = vmatprep.subr.bf16.mxu0 0
      %4371 = vmatpush1.bf16.msra.mxu0 %v4307
      %4372 = vmatprep.mubr.bf16.mxu0 %v4100
      %4373 = vmatmul.mubr.bf16.gmra.mrb[0].mxu0 %v4099
      %v4374 = vpop.f32.mrb[0].mxu0
      %v4375 = vadd.f32 0.0, %v4374
      %v4376 = vpop.f32.mrb[0].mxu0
      %v4377 = vpop.f32.mrb[0].mxu0
      %v4378 = vadd.f32 0.0, %v4377
      %v4379 = vpop.f32.mrb[0].mxu0
      %4380 = vmatprep.mubr.bf16.mxu0 %v4103
      %4381 = vmatmul.mubr.bf16.gmra.mrb[0].mxu0 %v4102
      %v4382 = vpop.f32.mrb[0].mxu0
      %v4383 = vadd.f32 0.0, %v4382
      %v4384 = vpop.f32.mrb[0].mxu0
      %v4385 = vpop.f32.mrb[0].mxu0
      %v4386 = vadd.f32 0.0, %v4385
      %v4387 = vpop.f32.mrb[0].mxu0
      %4388 = vmatprep.mubr.bf16.mxu0 %v4106
      %4389 = vmatmul.mubr.bf16.gmra.mrb[0].mxu0 %v4105
      %v4390 = vpop.f32.mrb[0].mxu0
      %v4391 = vadd.f32 0.0, %v4390
      %v4392 = vpop.f32.mrb[0].mxu0
      %v4393 = vpop.f32.mrb[0].mxu0
      %v4394 = vadd.f32 0.0, %v4393
      %v4395 = vpop.f32.mrb[0].mxu0
      %4396 = vmatprep.mubr.bf16.mxu0 %v4109
      %4397 = vmatmul.mubr.bf16.gmra.mrb[0].mxu0 %v4108
      %v4398 = vpop.f32.mrb[0].mxu0
      %v4399 = vadd.f32 0.0, %v4398
      %v4400 = vpop.f32.mrb[0].mxu0
      %v4401 = vpop.f32.mrb[0].mxu0
      %v4402 = vadd.f32 0.0, %v4401
      %v4403 = vpop.f32.mrb[0].mxu0
      %4404 = vmatprep.mubr.bf16.mxu0 %v4112
      %4405 = vmatmul.mubr.bf16.gmra.mrb[0].mxu0 %v4111
      %v4406 = vpop.f32.mrb[0].mxu0
      %v4407 = vadd.f32 0.0, %v4406
      %v4408 = vpop.f32.mrb[0].mxu0
      %v4409 = vpop.f32.mrb[0].mxu0
      %v4410 = vadd.f32 0.0, %v4409
      %v4411 = vpop.f32.mrb[0].mxu0
      %4412 = vmatprep.mubr.bf16.mxu0 %v4115
      %4413 = vmatmul.mubr.bf16.gmra.mrb[0].mxu0 %v4114
      %v4414 = vpop.f32.mrb[0].mxu0
      %v4415 = vadd.f32 0.0, %v4414
      %v4416 = vpop.f32.mrb[0].mxu0
      %v4417 = vpop.f32.mrb[0].mxu0
      %v4418 = vadd.f32 0.0, %v4417
      %v4419 = vpop.f32.mrb[0].mxu0
      %4420 = vmatprep.mubr.bf16.mxu0 %v4118
      %4421 = vmatmul.mubr.bf16.gmra.mrb[0].mxu0 %v4117
      %v4422 = vpop.f32.mrb[0].mxu0
      %v4423 = vadd.f32 0.0, %v4422
      %v4424 = vpop.f32.mrb[0].mxu0
      %v4425 = vpop.f32.mrb[0].mxu0
      %v4426 = vadd.f32 0.0, %v4425
      %v4427 = vpop.f32.mrb[0].mxu0
      %4428 = vmatprep.mubr.bf16.mxu0 %v4121
      %4429 = vmatmul.mubr.bf16.gmra.mrb[0].mxu0 %v4120
      %v4430 = vpop.f32.mrb[0].mxu0
      %v4431 = vadd.f32 0.0, %v4430
      %v4432 = vpop.f32.mrb[0].mxu0
      %v4433 = vpop.f32.mrb[0].mxu0
      %v4434 = vadd.f32 0.0, %v4433
      %v4435 = vpop.f32.mrb[0].mxu0
      %4436 = vmatprep.mubr.bf16.mxu0 %v4124
      %4437 = vmatmul.mubr.bf16.gmra.mrb[0].mxu0 %v4123
      %v4438 = vpop.f32.mrb[0].mxu0
      %v4439 = vadd.f32 0.0, %v4438
      %v4440 = vpop.f32.mrb[0].mxu0
      %v4441 = vpop.f32.mrb[0].mxu0
      %v4442 = vadd.f32 0.0, %v4441
      %v4443 = vpop.f32.mrb[0].mxu0
      %4444 = vmatprep.mubr.bf16.mxu0 %v4127
      %4445 = vmatmul.mubr.bf16.gmra.mrb[0].mxu0 %v4126
      %v4446 = vpop.f32.mrb[0].mxu0
      %v4447 = vadd.f32 0.0, %v4446
      %v4448 = vpop.f32.mrb[0].mxu0
      %v4449 = vpop.f32.mrb[0].mxu0
      %v4450 = vadd.f32 0.0, %v4449
      %v4451 = vpop.f32.mrb[0].mxu0
      %4452 = vmatprep.mubr.bf16.mxu0 %v4130
      %4453 = vmatmul.mubr.bf16.gmra.mrb[0].mxu0 %v4129
      %v4454 = vpop.f32.mrb[0].mxu0
      %v4455 = vadd.f32 0.0, %v4454
      %v4456 = vpop.f32.mrb[0].mxu0
      %v4457 = vpop.f32.mrb[0].mxu0
      %v4458 = vadd.f32 0.0, %v4457
      %v4459 = vpop.f32.mrb[0].mxu0
      %4460 = vmatprep.mubr.bf16.mxu0 %v4133
      %4461 = vmatmul.mubr.bf16.gmra.mrb[0].mxu0 %v4132
      %v4462 = vpop.f32.mrb[0].mxu0
      %v4463 = vadd.f32 0.0, %v4462
      %v4464 = vpop.f32.mrb[0].mxu0
      %v4465 = vpop.f32.mrb[0].mxu0
      %v4466 = vadd.f32 0.0, %v4465
      %v4467 = vpop.f32.mrb[0].mxu0
      %4468 = vmatprep.mubr.bf16.mxu0 %v4136
      %4469 = vmatmul.mubr.bf16.gmra.mrb[0].mxu0 %v4135
      %v4470 = vpop.f32.mrb[0].mxu0
      %v4471 = vadd.f32 0.0, %v4470
      %v4472 = vpop.f32.mrb[0].mxu0
      %v4473 = vpop.f32.mrb[0].mxu0
      %v4474 = vadd.f32 0.0, %v4473
      %v4475 = vpop.f32.mrb[0].mxu0
      %4476 = vmatprep.mubr.bf16.mxu0 %v4139
      %4477 = vmatmul.mubr.bf16.gmra.mrb[0].mxu0 %v4138
      %v4478 = vpop.f32.mrb[0].mxu0
      %v4479 = vadd.f32 0.0, %v4478
      %v4480 = vpop.f32.mrb[0].mxu0
      %v4481 = vpop.f32.mrb[0].mxu0
      %v4482 = vadd.f32 0.0, %v4481
      %v4483 = vpop.f32.mrb[0].mxu0
      %4484 = vmatprep.mubr.bf16.mxu0 %v4142
      %4485 = vmatmul.mubr.bf16.gmra.mrb[0].mxu0 %v4141
      %v4486 = vpop.f32.mrb[0].mxu0
      %v4487 = vadd.f32 0.0, %v4486
      %v4488 = vpop.f32.mrb[0].mxu0
      %v4489 = vpop.f32.mrb[0].mxu0
      %v4490 = vadd.f32 0.0, %v4489
      %v4491 = vpop.f32.mrb[0].mxu0
      %4492 = vmatprep.mubr.bf16.mxu0 %v4145
      %4493 = vmatmul.mubr.bf16.gmra.mrb[0].mxu0 %v4144
      %v4494 = vpop.f32.mrb[0].mxu0
      %v4495 = vadd.f32 0.0, %v4494
      %v4496 = vpop.f32.mrb[0].mxu0
      %v4497 = vpop.f32.mrb[0].mxu0
      %v4498 = vadd.f32 0.0, %v4497
      %v4499 = vpop.f32.mrb[0].mxu0
      %4500 = vdwg.mxu0
      %4501 = vmatprep.subr.bf16.mxu0 0
      %4502 = vmatpush1.bf16.msra.mxu0 %v4308
      %4503 = vmatprep.subr.bf16.mxu0 0
      %4504 = vmatpush1.bf16.msra.mxu0 %v4309
      %4505 = vmatprep.subr.bf16.mxu0 0
      %4506 = vmatpush1.bf16.msra.mxu0 %v4310
      %4507 = vmatprep.subr.bf16.mxu0 0
      %4508 = vmatpush1.bf16.msra.mxu0 %v4311
      %4509 = vmatprep.subr.bf16.mxu0 0
      %4510 = vmatpush1.bf16.msra.mxu0 %v4312
      %4511 = vmatprep.subr.bf16.mxu0 0
      %4512 = vmatpush1.bf16.msra.mxu0 %v4313
      %4513 = vmatprep.subr.bf16.mxu0 0
      %4514 = vmatpush1.bf16.msra.mxu0 %v4314
      %4515 = vmatprep.subr.bf16.mxu0 0
      %4516 = vmatpush1.bf16.msra.mxu0 %v4315
      %4517 = vmatprep.subr.bf16.mxu0 0
      %4518 = vmatpush1.bf16.msra.mxu0 0
      %4519 = vmatprep.subr.bf16.mxu0 0
      %4520 = vmatpush1.bf16.msra.mxu0 0
      %4521 = vmatprep.subr.bf16.mxu0 0
      %4522 = vmatpush1.bf16.msra.mxu0 0
      %4523 = vmatprep.subr.bf16.mxu0 0
      %4524 = vmatpush1.bf16.msra.mxu0 0
      %4525 = vmatprep.subr.bf16.mxu0 0
      %4526 = vmatpush1.bf16.msra.mxu0 0
      %4527 = vmatprep.subr.bf16.mxu0 0
      %4528 = vmatpush1.bf16.msra.mxu0 0
      %4529 = vmatprep.subr.bf16.mxu0 0
      %4530 = vmatpush1.bf16.msra.mxu0 0
      %4531 = vmatprep.subr.bf16.mxu0 0
      %4532 = vmatpush1.bf16.msra.mxu0 0
      %4533 = vmatprep.mubr.bf16.mxu0 0
      %4534 = vmatmul.mubr.bf16.gmra.mrb[0].mxu0 %v4101
      %v4535 = vpop.f32.mrb[0].mxu0
      %v4536 = vadd.f32 %v4375, %v4535
      %v4537 = vpop.f32.mrb[0].mxu0
      %v4538 = vpop.f32.mrb[0].mxu0
      %v4539 = vadd.f32 %v4378, %v4538
      %v4540 = vpop.f32.mrb[0].mxu0
      %4541 = vmatprep.mubr.bf16.mxu0 0
      %4542 = vmatmul.mubr.bf16.gmra.mrb[0].mxu0 %v4104
      %v4543 = vpop.f32.mrb[0].mxu0
      %v4544 = vadd.f32 %v4383, %v4543
      %v4545 = vpop.f32.mrb[0].mxu0
      %v4546 = vpop.f32.mrb[0].mxu0
      %v4547 = vadd.f32 %v4386, %v4546
      %v4548 = vpop.f32.mrb[0].mxu0
      %4549 = vmatprep.mubr.bf16.mxu0 0
      %4550 = vmatmul.mubr.bf16.gmra.mrb[0].mxu0 %v4107
      %v4551 = vpop.f32.mrb[0].mxu0
      %v4552 = vadd.f32 %v4391, %v4551
      %v4553 = vpop.f32.mrb[0].mxu0
      %v4554 = vpop.f32.mrb[0].mxu0
      %v4555 = vadd.f32 %v4394, %v4554
      %v4556 = vpop.f32.mrb[0].mxu0
      %4557 = vmatprep.mubr.bf16.mxu0 0
      %4558 = vmatmul.mubr.bf16.gmra.mrb[0].mxu0 %v4110
      %v4559 = vpop.f32.mrb[0].mxu0
      %v4560 = vadd.f32 %v4399, %v4559
      %v4561 = vpop.f32.mrb[0].mxu0
      %v4562 = vpop.f32.mrb[0].mxu0
      %v4563 = vadd.f32 %v4402, %v4562
      %v4564 = vpop.f32.mrb[0].mxu0
      %4565 = vmatprep.mubr.bf16.mxu0 0
      %4566 = vmatmul.mubr.bf16.gmra.mrb[0].mxu0 %v4113
      %v4567 = vpop.f32.mrb[0].mxu0
      %v4568 = vadd.f32 %v4407, %v4567
      %v4569 = vpop.f32.mrb[0].mxu0
      %v4570 = vpop.f32.mrb[0].mxu0
      %v4571 = vadd.f32 %v4410, %v4570
      %v4572 = vpop.f32.mrb[0].mxu0
      %4573 = vmatprep.mubr.bf16.mxu0 0
      %4574 = vmatmul.mubr.bf16.gmra.mrb[0].mxu0 %v4116
      %v4575 = vpop.f32.mrb[0].mxu0
      %v4576 = vadd.f32 %v4415, %v4575
      %v4577 = vpop.f32.mrb[0].mxu0
      %v4578 = vpop.f32.mrb[0].mxu0
      %v4579 = vadd.f32 %v4418, %v4578
      %v4580 = vpop.f32.mrb[0].mxu0
      %4581 = vmatprep.mubr.bf16.mxu0 0
      %4582 = vmatmul.mubr.bf16.gmra.mrb[0].mxu0 %v4119
      %v4583 = vpop.f32.mrb[0].mxu0
      %v4584 = vadd.f32 %v4423, %v4583
      %v4585 = vpop.f32.mrb[0].mxu0
      %v4586 = vpop.f32.mrb[0].mxu0
      %v4587 = vadd.f32 %v4426, %v4586
      %v4588 = vpop.f32.mrb[0].mxu0
      %4589 = vmatprep.mubr.bf16.mxu0 0
      %4590 = vmatmul.mubr.bf16.gmra.mrb[0].mxu0 %v4122
      %v4591 = vpop.f32.mrb[0].mxu0
      %v4592 = vadd.f32 %v4431, %v4591
      %v4593 = vpop.f32.mrb[0].mxu0
      %v4594 = vpop.f32.mrb[0].mxu0
      %v4595 = vadd.f32 %v4434, %v4594
      %v4596 = vpop.f32.mrb[0].mxu0
      %4597 = vmatprep.mubr.bf16.mxu0 0
      %4598 = vmatmul.mubr.bf16.gmra.mrb[0].mxu0 %v4125
      %v4599 = vpop.f32.mrb[0].mxu0
      %v4600 = vadd.f32 %v4439, %v4599
      %v4601 = vpop.f32.mrb[0].mxu0
      %v4602 = vpop.f32.mrb[0].mxu0
      %v4603 = vadd.f32 %v4442, %v4602
      %v4604 = vpop.f32.mrb[0].mxu0
      %4605 = vmatprep.mubr.bf16.mxu0 0
      %4606 = vmatmul.mubr.bf16.gmra.mrb[0].mxu0 %v4128
      %v4607 = vpop.f32.mrb[0].mxu0
      %v4608 = vadd.f32 %v4447, %v4607
      %v4609 = vpop.f32.mrb[0].mxu0
      %v4610 = vpop.f32.mrb[0].mxu0
      %v4611 = vadd.f32 %v4450, %v4610
      %v4612 = vpop.f32.mrb[0].mxu0
      %4613 = vmatprep.mubr.bf16.mxu0 0
      %4614 = vmatmul.mubr.bf16.gmra.mrb[0].mxu0 %v4131
      %v4615 = vpop.f32.mrb[0].mxu0
      %v4616 = vadd.f32 %v4455, %v4615
      %v4617 = vpop.f32.mrb[0].mxu0
      %v4618 = vpop.f32.mrb[0].mxu0
      %v4619 = vadd.f32 %v4458, %v4618
      %v4620 = vpop.f32.mrb[0].mxu0
      %4621 = vmatprep.mubr.bf16.mxu0 0
      %4622 = vmatmul.mubr.bf16.gmra.mrb[0].mxu0 %v4134
      %v4623 = vpop.f32.mrb[0].mxu0
      %v4624 = vadd.f32 %v4463, %v4623
      %v4625 = vpop.f32.mrb[0].mxu0
      %v4626 = vpop.f32.mrb[0].mxu0
      %v4627 = vadd.f32 %v4466, %v4626
      %v4628 = vpop.f32.mrb[0].mxu0
      %4629 = vmatprep.mubr.bf16.mxu0 0
      %4630 = vmatmul.mubr.bf16.gmra.mrb[0].mxu0 %v4137
      %v4631 = vpop.f32.mrb[0].mxu0
      %v4632 = vadd.f32 %v4471, %v4631
      %v4633 = vpop.f32.mrb[0].mxu0
      %v4634 = vpop.f32.mrb[0].mxu0
      %v4635 = vadd.f32 %v4474, %v4634
      %v4636 = vpop.f32.mrb[0].mxu0
      %4637 = vmatprep.mubr.bf16.mxu0 0
      %4638 = vmatmul.mubr.bf16.gmra.mrb[0].mxu0 %v4140
      %v4639 = vpop.f32.mrb[0].mxu0
      %v4640 = vadd.f32 %v4479, %v4639
      %v4641 = vpop.f32.mrb[0].mxu0
      %v4642 = vpop.f32.mrb[0].mxu0
      %v4643 = vadd.f32 %v4482, %v4642
      %v4644 = vpop.f32.mrb[0].mxu0
      %4645 = vmatprep.mubr.bf16.mxu0 0
      %4646 = vmatmul.mubr.bf16.gmra.mrb[0].mxu0 %v4143
      %v4647 = vpop.f32.mrb[0].mxu0
      %v4648 = vadd.f32 %v4487, %v4647
      %v4649 = vpop.f32.mrb[0].mxu0
      %v4650 = vpop.f32.mrb[0].mxu0
      %v4651 = vadd.f32 %v4490, %v4650
      %v4652 = vpop.f32.mrb[0].mxu0
      %4653 = vmatprep.mubr.bf16.mxu0 0
      %4654 = vmatmul.mubr.bf16.gmra.mrb[0].mxu0 %v4146
      %v4655 = vpop.f32.mrb[0].mxu0
      %v4656 = vadd.f32 %v4495, %v4655
      %v4657 = vpop.f32.mrb[0].mxu0
      %v4658 = vpop.f32.mrb[0].mxu0
      %v4659 = vadd.f32 %v4498, %v4658
      %v4660 = vpop.f32.mrb[0].mxu0
      %4661 = vdwg.mxu0
      %v4710 = vunpack.c.l.b16 %v4051
      %v4711 = vunpack.c.l.b16 %v4052
      %v4712 = vunpack.c.l.b16 %v4053
      %v4713 = vunpack.c.l.b16 %v4054
      %v4714 = vunpack.c.l.b16 %v4055
      %v4715 = vunpack.c.l.b16 %v4056
      %v4716 = vunpack.c.l.b16 %v4057
      %v4717 = vunpack.c.l.b16 %v4058
      %v4718 = vunpack.c.l.b16 %v4059
      %v4719 = vunpack.c.l.b16 %v4060
      %v4720 = vunpack.c.l.b16 %v4061
      %v4721 = vunpack.c.l.b16 %v4062
      %v4722 = vunpack.c.l.b16 %v4063
      %v4723 = vunpack.c.l.b16 %v4064
      %v4724 = vunpack.c.l.b16 %v4065
      %v4725 = vunpack.c.l.b16 %v4066
      %v4726 = vunpack.c.l.b16 %v4067
      %v4727 = vunpack.c.l.b16 %v4068
      %v4728 = vunpack.c.l.b16 %v4069
      %v4729 = vunpack.c.l.b16 %v4070
      %v4730 = vunpack.c.l.b16 %v4071
      %v4731 = vunpack.c.l.b16 %v4072
      %v4732 = vunpack.c.l.b16 %v4073
      %v4733 = vunpack.c.l.b16 %v4074
      %v4734 = vunpack.c.l.b16 %v4075
      %v4735 = vunpack.c.l.b16 %v4076
      %v4736 = vunpack.c.l.b16 %v4077
      %v4737 = vunpack.c.l.b16 %v4078
      %v4738 = vunpack.c.l.b16 %v4079
      %v4739 = vunpack.c.l.b16 %v4080
      %v4740 = vunpack.c.l.b16 %v4081
      %v4741 = vunpack.c.l.b16 %v4082
      %v4742 = vunpack.c.l.b16 %v4083
      %v4743 = vunpack.c.l.b16 %v4084
      %v4744 = vunpack.c.l.b16 %v4085
      %v4745 = vunpack.c.l.b16 %v4086
      %v4746 = vunpack.c.l.b16 %v4087
      %v4747 = vunpack.c.l.b16 %v4088
      %v4748 = vunpack.c.l.b16 %v4089
      %v4749 = vunpack.c.l.b16 %v4090
      %v4750 = vunpack.c.l.b16 %v4091
      %v4751 = vunpack.c.l.b16 %v4092
      %v4752 = vunpack.c.l.b16 %v4093
      %v4753 = vunpack.c.l.b16 %v4094
      %v4754 = vunpack.c.l.b16 %v4095
      %v4755 = vunpack.c.l.b16 %v4096
      %v4756 = vunpack.c.l.b16 %v4097
      %v4757 = vunpack.c.l.b16 %v4098
      %v4758 = vpack.c.b16 %v4711, %v4710
      %v4759 = vpack.c.b16 %v4713, %v4712
      %v4760 = vpack.c.b16 %v4715, %v4714
      %v4761 = vpack.c.b16 %v4717, %v4716
      %v4762 = vpack.c.b16 %v4719, %v4718
      %v4763 = vpack.c.b16 %v4721, %v4720
      %v4764 = vpack.c.b16 %v4723, %v4722
      %v4765 = vpack.c.b16 %v4725, %v4724
      %v4766 = vpack.c.b16 %v4727, %v4726
      %v4767 = vpack.c.b16 %v4729, %v4728
      %v4768 = vpack.c.b16 %v4731, %v4730
      %v4769 = vpack.c.b16 %v4733, %v4732
      %v4770 = vpack.c.b16 %v4735, %v4734
      %v4771 = vpack.c.b16 %v4737, %v4736
      %v4772 = vpack.c.b16 %v4739, %v4738
      %v4773 = vpack.c.b16 %v4741, %v4740
      %v4774 = vpack.c.b16 %v4743, %v4742
      %v4775 = vpack.c.b16 %v4745, %v4744
      %v4776 = vpack.c.b16 %v4747, %v4746
      %v4777 = vpack.c.b16 %v4749, %v4748
      %v4778 = vpack.c.b16 %v4751, %v4750
      %v4779 = vpack.c.b16 %v4753, %v4752
      %v4780 = vpack.c.b16 %v4755, %v4754
      %v4781 = vpack.c.b16 %v4757, %v4756
      %4806 = vmatprep.subr.bf16.mxu0 0
      %4807 = vmatpush1.bf16.msra.mxu0 %v4758
      %4808 = vmatprep.subr.bf16.mxu0 0
      %4809 = vmatpush1.bf16.msra.mxu0 %v4759
      %4810 = vmatprep.subr.bf16.mxu0 0
      %4811 = vmatpush1.bf16.msra.mxu0 %v4760
      %4812 = vmatprep.subr.bf16.mxu0 0
      %4813 = vmatpush1.bf16.msra.mxu0 %v4761
      %4814 = vmatprep.subr.bf16.mxu0 0
      %4815 = vmatpush1.bf16.msra.mxu0 %v4762
      %4816 = vmatprep.subr.bf16.mxu0 0
      %4817 = vmatpush1.bf16.msra.mxu0 %v4763
      %4818 = vmatprep.subr.bf16.mxu0 0
      %4819 = vmatpush1.bf16.msra.mxu0 %v4764
      %4820 = vmatprep.subr.bf16.mxu0 0
      %4821 = vmatpush1.bf16.msra.mxu0 %v4765
      %4822 = vmatprep.subr.bf16.mxu0 0
      %4823 = vmatpush1.bf16.msra.mxu0 %v4766
      %4824 = vmatprep.subr.bf16.mxu0 0
      %4825 = vmatpush1.bf16.msra.mxu0 %v4767
      %4826 = vmatprep.subr.bf16.mxu0 0
      %4827 = vmatpush1.bf16.msra.mxu0 %v4768
      %4828 = vmatprep.subr.bf16.mxu0 0
      %4829 = vmatpush1.bf16.msra.mxu0 %v4769
      %4830 = vmatprep.subr.bf16.mxu0 0
      %4831 = vmatpush1.bf16.msra.mxu0 %v4770
      %4832 = vmatprep.subr.bf16.mxu0 0
      %4833 = vmatpush1.bf16.msra.mxu0 %v4771
      %4834 = vmatprep.subr.bf16.mxu0 0
      %4835 = vmatpush1.bf16.msra.mxu0 %v4772
      %4836 = vmatprep.subr.bf16.mxu0 0
      %4837 = vmatpush1.bf16.msra.mxu0 %v4773
      %4838 = vmatprep.mubr.bf16.mxu0 %v4003
      %4839 = vmatmul.mubr.bf16.gmra.mrb[0].mxu0 %v4002
      %v4840 = vpop.f32.mrb[0].mxu0
      %v4841 = vadd.f32 %v4536, %v4840
      %v4842 = vpop.f32.mrb[0].mxu0
      %v4843 = vpop.f32.mrb[0].mxu0
      %v4844 = vadd.f32 %v4539, %v4843
      %v4845 = vpop.f32.mrb[0].mxu0
      %4846 = vmatprep.mubr.bf16.mxu0 %v4006
      %4847 = vmatmul.mubr.bf16.gmra.mrb[0].mxu0 %v4005
      %v4848 = vpop.f32.mrb[0].mxu0
      %v4849 = vadd.f32 %v4544, %v4848
      %v4850 = vpop.f32.mrb[0].mxu0
      %v4851 = vpop.f32.mrb[0].mxu0
      %v4852 = vadd.f32 %v4547, %v4851
      %v4853 = vpop.f32.mrb[0].mxu0
      %4854 = vmatprep.mubr.bf16.mxu0 %v4009
      %4855 = vmatmul.mubr.bf16.gmra.mrb[0].mxu0 %v4008
      %v4856 = vpop.f32.mrb[0].mxu0
      %v4857 = vadd.f32 %v4552, %v4856
      %v4858 = vpop.f32.mrb[0].mxu0
      %v4859 = vpop.f32.mrb[0].mxu0
      %v4860 = vadd.f32 %v4555, %v4859
      %v4861 = vpop.f32.mrb[0].mxu0
      %4862 = vmatprep.mubr.bf16.mxu0 %v4012
      %4863 = vmatmul.mubr.bf16.gmra.mrb[0].mxu0 %v4011
      %v4864 = vpop.f32.mrb[0].mxu0
      %v4865 = vadd.f32 %v4560, %v4864
      %v4866 = vpop.f32.mrb[0].mxu0
      %v4867 = vpop.f32.mrb[0].mxu0
      %v4868 = vadd.f32 %v4563, %v4867
      %v4869 = vpop.f32.mrb[0].mxu0
      %4870 = vmatprep.mubr.bf16.mxu0 %v4015
      %4871 = vmatmul.mubr.bf16.gmra.mrb[0].mxu0 %v4014
      %v4872 = vpop.f32.mrb[0].mxu0
      %v4873 = vadd.f32 %v4568, %v4872
      %v4874 = vpop.f32.mrb[0].mxu0
      %v4875 = vpop.f32.mrb[0].mxu0
      %v4876 = vadd.f32 %v4571, %v4875
      %v4877 = vpop.f32.mrb[0].mxu0
      %4878 = vmatprep.mubr.bf16.mxu0 %v4018
      %4879 = vmatmul.mubr.bf16.gmra.mrb[0].mxu0 %v4017
      %v4880 = vpop.f32.mrb[0].mxu0
      %v4881 = vadd.f32 %v4576, %v4880
      %v4882 = vpop.f32.mrb[0].mxu0
      %v4883 = vpop.f32.mrb[0].mxu0
      %v4884 = vadd.f32 %v4579, %v4883
      %v4885 = vpop.f32.mrb[0].mxu0
      %4886 = vmatprep.mubr.bf16.mxu0 %v4021
      %4887 = vmatmul.mubr.bf16.gmra.mrb[0].mxu0 %v4020
      %v4888 = vpop.f32.mrb[0].mxu0
      %v4889 = vadd.f32 %v4584, %v4888
      %v4890 = vpop.f32.mrb[0].mxu0
      %v4891 = vpop.f32.mrb[0].mxu0
      %v4892 = vadd.f32 %v4587, %v4891
      %v4893 = vpop.f32.mrb[0].mxu0
      %4894 = vmatprep.mubr.bf16.mxu0 %v4024
      %4895 = vmatmul.mubr.bf16.gmra.mrb[0].mxu0 %v4023
      %v4896 = vpop.f32.mrb[0].mxu0
      %v4897 = vadd.f32 %v4592, %v4896
      %v4898 = vpop.f32.mrb[0].mxu0
      %v4899 = vpop.f32.mrb[0].mxu0
      %v4900 = vadd.f32 %v4595, %v4899
      %v4901 = vpop.f32.mrb[0].mxu0
      %4902 = vmatprep.mubr.bf16.mxu0 %v4027
      %4903 = vmatmul.mubr.bf16.gmra.mrb[0].mxu0 %v4026
      %v4904 = vpop.f32.mrb[0].mxu0
      %v4905 = vadd.f32 %v4600, %v4904
      %v4906 = vpop.f32.mrb[0].mxu0
      %v4907 = vpop.f32.mrb[0].mxu0
      %v4908 = vadd.f32 %v4603, %v4907
      %v4909 = vpop.f32.mrb[0].mxu0
      %4910 = vmatprep.mubr.bf16.mxu0 %v4030
      %4911 = vmatmul.mubr.bf16.gmra.mrb[0].mxu0 %v4029
      %v4912 = vpop.f32.mrb[0].mxu0
      %v4913 = vadd.f32 %v4608, %v4912
      %v4914 = vpop.f32.mrb[0].mxu0
      %v4915 = vpop.f32.mrb[0].mxu0
      %v4916 = vadd.f32 %v4611, %v4915
      %v4917 = vpop.f32.mrb[0].mxu0
      %4918 = vmatprep.mubr.bf16.mxu0 %v4033
      %4919 = vmatmul.mubr.bf16.gmra.mrb[0].mxu0 %v4032
      %v4920 = vpop.f32.mrb[0].mxu0
      %v4921 = vadd.f32 %v4616, %v4920
      %v4922 = vpop.f32.mrb[0].mxu0
      %v4923 = vpop.f32.mrb[0].mxu0
      %v4924 = vadd.f32 %v4619, %v4923
      %v4925 = vpop.f32.mrb[0].mxu0
      %4926 = vmatprep.mubr.bf16.mxu0 %v4036
      %4927 = vmatmul.mubr.bf16.gmra.mrb[0].mxu0 %v4035
      %v4928 = vpop.f32.mrb[0].mxu0
      %v4929 = vadd.f32 %v4624, %v4928
      %v4930 = vpop.f32.mrb[0].mxu0
      %v4931 = vpop.f32.mrb[0].mxu0
      %v4932 = vadd.f32 %v4627, %v4931
      %v4933 = vpop.f32.mrb[0].mxu0
      %4934 = vmatprep.mubr.bf16.mxu0 %v4039
      %4935 = vmatmul.mubr.bf16.gmra.mrb[0].mxu0 %v4038
      %v4936 = vpop.f32.mrb[0].mxu0
      %v4937 = vadd.f32 %v4632, %v4936
      %v4938 = vpop.f32.mrb[0].mxu0
      %v4939 = vpop.f32.mrb[0].mxu0
      %v4940 = vadd.f32 %v4635, %v4939
      %v4941 = vpop.f32.mrb[0].mxu0
      %4942 = vmatprep.mubr.bf16.mxu0 %v4042
      %4943 = vmatmul.mubr.bf16.gmra.mrb[0].mxu0 %v4041
      %v4944 = vpop.f32.mrb[0].mxu0
      %v4945 = vadd.f32 %v4640, %v4944
      %v4946 = vpop.f32.mrb[0].mxu0
      %v4947 = vpop.f32.mrb[0].mxu0
      %v4948 = vadd.f32 %v4643, %v4947
      %v4949 = vpop.f32.mrb[0].mxu0
      %4950 = vmatprep.mubr.bf16.mxu0 %v4045
      %4951 = vmatmul.mubr.bf16.gmra.mrb[0].mxu0 %v4044
      %v4952 = vpop.f32.mrb[0].mxu0
      %v4953 = vadd.f32 %v4648, %v4952
      %v4954 = vpop.f32.mrb[0].mxu0
      %v4955 = vpop.f32.mrb[0].mxu0
      %v4956 = vadd.f32 %v4651, %v4955
      %v4957 = vpop.f32.mrb[0].mxu0
      %4958 = vmatprep.mubr.bf16.mxu0 %v4048
      %4959 = vmatmul.mubr.bf16.gmra.mrb[0].mxu0 %v4047
      %v4960 = vpop.f32.mrb[0].mxu0
      %v4961 = vadd.f32 %v4656, %v4960
      %v4962 = vpop.f32.mrb[0].mxu0
      %v4963 = vpop.f32.mrb[0].mxu0
      %v4964 = vadd.f32 %v4659, %v4963
      %v4965 = vpop.f32.mrb[0].mxu0
      %4966 = vdwg.mxu0
      %4967 = vmatprep.subr.bf16.mxu0 0
      %4968 = vmatpush1.bf16.msra.mxu0 %v4774
      %4969 = vmatprep.subr.bf16.mxu0 0
      %4970 = vmatpush1.bf16.msra.mxu0 %v4775
      %4971 = vmatprep.subr.bf16.mxu0 0
      %4972 = vmatpush1.bf16.msra.mxu0 %v4776
      %4973 = vmatprep.subr.bf16.mxu0 0
      %4974 = vmatpush1.bf16.msra.mxu0 %v4777
      %4975 = vmatprep.subr.bf16.mxu0 0
      %4976 = vmatpush1.bf16.msra.mxu0 %v4778
      %4977 = vmatprep.subr.bf16.mxu0 0
      %4978 = vmatpush1.bf16.msra.mxu0 %v4779
      %4979 = vmatprep.subr.bf16.mxu0 0
      %4980 = vmatpush1.bf16.msra.mxu0 %v4780
      %4981 = vmatprep.subr.bf16.mxu0 0
      %4982 = vmatpush1.bf16.msra.mxu0 %v4781
      %4983 = vmatprep.subr.bf16.mxu0 0
      %4984 = vmatpush1.bf16.msra.mxu0 0
      %4985 = vmatprep.subr.bf16.mxu0 0
      %4986 = vmatpush1.bf16.msra.mxu0 0
      %4987 = vmatprep.subr.bf16.mxu0 0
      %4988 = vmatpush1.bf16.msra.mxu0 0
      %4989 = vmatprep.subr.bf16.mxu0 0
      %4990 = vmatpush1.bf16.msra.mxu0 0
      %4991 = vmatprep.subr.bf16.mxu0 0
      %4992 = vmatpush1.bf16.msra.mxu0 0
      %4993 = vmatprep.subr.bf16.mxu0 0
      %4994 = vmatpush1.bf16.msra.mxu0 0
      %4995 = vmatprep.subr.bf16.mxu0 0
      %4996 = vmatpush1.bf16.msra.mxu0 0
      %4997 = vmatprep.subr.bf16.mxu0 0
      %4998 = vmatpush1.bf16.msra.mxu0 0
      %4999 = vmatprep.mubr.bf16.mxu0 0
      %5000 = vmatmul.mubr.bf16.gmra.mrb[0].mxu0 %v4004
      %v5001 = vpop.f32.mrb[0].mxu0
      %v5002 = vadd.f32 %v4841, %v5001
      %v5003 = vpop.f32.mrb[0].mxu0
      %v5004 = vpop.f32.mrb[0].mxu0
      %v5005 = vadd.f32 %v4844, %v5004
      %v5006 = vpop.f32.mrb[0].mxu0
      %5007 = vmatprep.mubr.bf16.mxu0 0
      %5008 = vmatmul.mubr.bf16.gmra.mrb[0].mxu0 %v4007
      %v5009 = vpop.f32.mrb[0].mxu0
      %v5010 = vadd.f32 %v4849, %v5009
      %v5011 = vpop.f32.mrb[0].mxu0
      %v5012 = vpop.f32.mrb[0].mxu0
      %v5013 = vadd.f32 %v4852, %v5012
      %v5014 = vpop.f32.mrb[0].mxu0
      %5015 = vmatprep.mubr.bf16.mxu0 0
      %5016 = vmatmul.mubr.bf16.gmra.mrb[0].mxu0 %v4010
      %v5017 = vpop.f32.mrb[0].mxu0
      %v5018 = vadd.f32 %v4857, %v5017
      %v5019 = vpop.f32.mrb[0].mxu0
      %v5020 = vpop.f32.mrb[0].mxu0
      %v5021 = vadd.f32 %v4860, %v5020
      %v5022 = vpop.f32.mrb[0].mxu0
      %5023 = vmatprep.mubr.bf16.mxu0 0
      %5024 = vmatmul.mubr.bf16.gmra.mrb[0].mxu0 %v4013
      %v5025 = vpop.f32.mrb[0].mxu0
      %v5026 = vadd.f32 %v4865, %v5025
      %v5027 = vpop.f32.mrb[0].mxu0
      %v5028 = vpop.f32.mrb[0].mxu0
      %v5029 = vadd.f32 %v4868, %v5028
      %v5030 = vpop.f32.mrb[0].mxu0
      %5031 = vmatprep.mubr.bf16.mxu0 0
      %5032 = vmatmul.mubr.bf16.gmra.mrb[0].mxu0 %v4016
      %v5033 = vpop.f32.mrb[0].mxu0
      %v5034 = vadd.f32 %v4873, %v5033
      %v5035 = vpop.f32.mrb[0].mxu0
      %v5036 = vpop.f32.mrb[0].mxu0
      %v5037 = vadd.f32 %v4876, %v5036
      %v5038 = vpop.f32.mrb[0].mxu0
      %5039 = vmatprep.mubr.bf16.mxu0 0
      %5040 = vmatmul.mubr.bf16.gmra.mrb[0].mxu0 %v4019
      %v5041 = vpop.f32.mrb[0].mxu0
      %v5042 = vadd.f32 %v4881, %v5041
      %v5043 = vpop.f32.mrb[0].mxu0
      %v5044 = vpop.f32.mrb[0].mxu0
      %v5045 = vadd.f32 %v4884, %v5044
      %v5046 = vpop.f32.mrb[0].mxu0
      %5047 = vmatprep.mubr.bf16.mxu0 0
      %5048 = vmatmul.mubr.bf16.gmra.mrb[0].mxu0 %v4022
      %v5049 = vpop.f32.mrb[0].mxu0
      %v5050 = vadd.f32 %v4889, %v5049
      %v5051 = vpop.f32.mrb[0].mxu0
      %v5052 = vpop.f32.mrb[0].mxu0
      %v5053 = vadd.f32 %v4892, %v5052
      %v5054 = vpop.f32.mrb[0].mxu0
      %5055 = vmatprep.mubr.bf16.mxu0 0
      %5056 = vmatmul.mubr.bf16.gmra.mrb[0].mxu0 %v4025
      %v5057 = vpop.f32.mrb[0].mxu0
      %v5058 = vadd.f32 %v4897, %v5057
      %v5059 = vpop.f32.mrb[0].mxu0
      %v5060 = vpop.f32.mrb[0].mxu0
      %v5061 = vadd.f32 %v4900, %v5060
      %v5062 = vpop.f32.mrb[0].mxu0
      %5063 = vmatprep.mubr.bf16.mxu0 0
      %5064 = vmatmul.mubr.bf16.gmra.mrb[0].mxu0 %v4028
      %v5065 = vpop.f32.mrb[0].mxu0
      %v5066 = vadd.f32 %v4905, %v5065
      %v5067 = vpop.f32.mrb[0].mxu0
      %v5068 = vpop.f32.mrb[0].mxu0
      %v5069 = vadd.f32 %v4908, %v5068
      %v5070 = vpop.f32.mrb[0].mxu0
      %5071 = vmatprep.mubr.bf16.mxu0 0
      %5072 = vmatmul.mubr.bf16.gmra.mrb[0].mxu0 %v4031
      %v5073 = vpop.f32.mrb[0].mxu0
      %v5074 = vadd.f32 %v4913, %v5073
      %v5075 = vpop.f32.mrb[0].mxu0
      %v5076 = vpop.f32.mrb[0].mxu0
      %v5077 = vadd.f32 %v4916, %v5076
      %v5078 = vpop.f32.mrb[0].mxu0
      %5079 = vmatprep.mubr.bf16.mxu0 0
      %5080 = vmatmul.mubr.bf16.gmra.mrb[0].mxu0 %v4034
      %v5081 = vpop.f32.mrb[0].mxu0
      %v5082 = vadd.f32 %v4921, %v5081
      %v5083 = vpop.f32.mrb[0].mxu0
      %v5084 = vpop.f32.mrb[0].mxu0
      %v5085 = vadd.f32 %v4924, %v5084
      %v5086 = vpop.f32.mrb[0].mxu0
      %5087 = vmatprep.mubr.bf16.mxu0 0
      %5088 = vmatmul.mubr.bf16.gmra.mrb[0].mxu0 %v4037
      %v5089 = vpop.f32.mrb[0].mxu0
      %v5090 = vadd.f32 %v4929, %v5089
      %v5091 = vpop.f32.mrb[0].mxu0
      %v5092 = vpop.f32.mrb[0].mxu0
      %v5093 = vadd.f32 %v4932, %v5092
      %v5094 = vpop.f32.mrb[0].mxu0
      %5095 = vmatprep.mubr.bf16.mxu0 0
      %5096 = vmatmul.mubr.bf16.gmra.mrb[0].mxu0 %v4040
      %v5097 = vpop.f32.mrb[0].mxu0
      %v5098 = vadd.f32 %v4937, %v5097
      %v5099 = vpop.f32.mrb[0].mxu0
      %v5100 = vpop.f32.mrb[0].mxu0
      %v5101 = vadd.f32 %v4940, %v5100
      %v5102 = vpop.f32.mrb[0].mxu0
      %5103 = vmatprep.mubr.bf16.mxu0 0
      %5104 = vmatmul.mubr.bf16.gmra.mrb[0].mxu0 %v4043
      %v5105 = vpop.f32.mrb[0].mxu0
      %v5106 = vadd.f32 %v4945, %v5105
      %v5107 = vpop.f32.mrb[0].mxu0
      %v5108 = vpop.f32.mrb[0].mxu0
      %v5109 = vadd.f32 %v4948, %v5108
      %v5110 = vpop.f32.mrb[0].mxu0
      %5111 = vmatprep.mubr.bf16.mxu0 0
      %5112 = vmatmul.mubr.bf16.gmra.mrb[0].mxu0 %v4046
      %v5113 = vpop.f32.mrb[0].mxu0
      %v5114 = vadd.f32 %v4953, %v5113
      %v5115 = vpop.f32.mrb[0].mxu0
      %v5116 = vpop.f32.mrb[0].mxu0
      %v5117 = vadd.f32 %v4956, %v5116
      %v5118 = vpop.f32.mrb[0].mxu0
      %5119 = vmatprep.mubr.bf16.mxu0 0
      %5120 = vmatmul.mubr.bf16.gmra.mrb[0].mxu0 %v4049
      %v5121 = vpop.f32.mrb[0].mxu0
      %v5122 = vadd.f32 %v4961, %v5121
      %v5123 = vpop.f32.mrb[0].mxu0
      %v5124 = vpop.f32.mrb[0].mxu0
      %v5125 = vadd.f32 %v4964, %v5124
      %v5126 = vpop.f32.mrb[0].mxu0
      %5127 = vdwg.mxu0
      %v5128 = vld [vmem:[%s2780] sm:$0xff]
      %v5129 = vld [vmem:[%s2780 + $0x8] sm:$0xff]
      %v5130 = vld [vmem:[%s2780 + $0x10] sm:$0xff]
      %v5131 = vld [vmem:[%s2780 + $0x18] sm:$0xff]
      %v5132 = vld [vmem:[%s2780 + $0x20] sm:$0xff]
      %v5133 = vld [vmem:[%s2780 + $0x28] sm:$0xff]
      %v5134 = vld [vmem:[%s2780 + $0x30] sm:$0xff]
      %v5135 = vld [vmem:[%s2780 + $0x38] sm:$0xff]
      %v5136 = vld [vmem:[%s2780 + $0x40] sm:$0xff]
      %v5137 = vld [vmem:[%s2780 + $0x48] sm:$0xff]
      %v5138 = vld [vmem:[%s2780 + $0x50] sm:$0xff]
      %v5139 = vld [vmem:[%s2780 + $0x58] sm:$0xff]
      %v5140 = vld [vmem:[%s2780 + $0x60] sm:$0xff]
      %v5141 = vld [vmem:[%s2780 + $0x68] sm:$0xff]
      %v5142 = vld [vmem:[%s2780 + $0x70] sm:$0xff]
      %v5143 = vld [vmem:[%s2780 + $0x78] sm:$0xff]
      %v5144 = vld [vmem:[%s2780 + $0x80] sm:$0xff]
      %v5145 = vld [vmem:[%s2780 + $0x88] sm:$0xff]
      %v5146 = vld [vmem:[%s2780 + $0x90] sm:$0xff]
      %v5147 = vld [vmem:[%s2780 + $0x98] sm:$0xff]
      %v5148 = vld [vmem:[%s2780 + $0xa0] sm:$0xff]
      %v5149 = vld [vmem:[%s2780 + $0xa8] sm:$0xff]
      %v5150 = vld [vmem:[%s2780 + $0xb0] sm:$0xff]
      %v5151 = vld [vmem:[%s2780 + $0xb8] sm:$0xff]
      %v5152 = vld [vmem:[%s2780 + $0xc0] sm:$0xff]
      %v5153 = vld [vmem:[%s2780 + $0xc8] sm:$0xff]
      %v5154 = vld [vmem:[%s2780 + $0xd0] sm:$0xff]
      %v5155 = vld [vmem:[%s2780 + $0xd8] sm:$0xff]
      %v5156 = vld [vmem:[%s2780 + $0xe0] sm:$0xff]
      %v5157 = vld [vmem:[%s2780 + $0xe8] sm:$0xff]
      %v5158 = vld [vmem:[%s2780 + $0xf0] sm:$0xff]
      %v5159 = vld [vmem:[%s2780 + $0xf8] sm:$0xff]
      %v5160 = vld [vmem:[%s2780 + $0x100] sm:$0xff]
      %v5161 = vld [vmem:[%s2780 + $0x108] sm:$0xff]
      %v5162 = vld [vmem:[%s2780 + $0x110] sm:$0xff]
      %v5163 = vld [vmem:[%s2780 + $0x118] sm:$0xff]
      %v5164 = vld [vmem:[%s2780 + $0x120] sm:$0xff]
      %v5165 = vld [vmem:[%s2780 + $0x128] sm:$0xff]
      %v5166 = vld [vmem:[%s2780 + $0x130] sm:$0xff]
      %v5167 = vld [vmem:[%s2780 + $0x138] sm:$0xff]
      %v5168 = vld [vmem:[%s2780 + $0x140] sm:$0xff]
      %v5169 = vld [vmem:[%s2780 + $0x148] sm:$0xff]
      %v5170 = vld [vmem:[%s2780 + $0x150] sm:$0xff]
      %v5171 = vld [vmem:[%s2780 + $0x158] sm:$0xff]
      %v5172 = vld [vmem:[%s2780 + $0x160] sm:$0xff]
      %v5173 = vld [vmem:[%s2780 + $0x168] sm:$0xff]
      %v5174 = vld [vmem:[%s2780 + $0x170] sm:$0xff]
      %v5175 = vld [vmem:[%s2780 + $0x178] sm:$0xff]
      %s5176 = scalar_lea.vmem %s498, 960
      %v5177 = vld [vmem:[%s5176] sm:$0xf]
      %v5178 = vld [vmem:[%s5176 + $0x4] sm:$0xf]
      %v5179 = vld [vmem:[%s5176 + $0x8] sm:$0xf]
      %v5180 = vld [vmem:[%s5176 + $0xc] sm:$0xf]
      %v5181 = vld [vmem:[%s5176 + $0x10] sm:$0xf]
      %v5182 = vld [vmem:[%s5176 + $0x14] sm:$0xf]
      %v5183 = vld [vmem:[%s5176 + $0x18] sm:$0xf]
      %v5184 = vld [vmem:[%s5176 + $0x1c] sm:$0xf]
      %v5185 = vld [vmem:[%s5176 + $0x20] sm:$0xf]
      %v5186 = vld [vmem:[%s5176 + $0x24] sm:$0xf]
      %v5187 = vld [vmem:[%s5176 + $0x28] sm:$0xf]
      %v5188 = vld [vmem:[%s5176 + $0x2c] sm:$0xf]
      %v5189 = vld [vmem:[%s5176 + $0x30] sm:$0xf]
      %v5190 = vld [vmem:[%s5176 + $0x34] sm:$0xf]
      %v5191 = vld [vmem:[%s5176 + $0x38] sm:$0xf]
      %v5192 = vld [vmem:[%s5176 + $0x3c] sm:$0xf]
      %v5193 = vld [vmem:[%s5176 + $0x40] sm:$0xf]
      %v5194 = vld [vmem:[%s5176 + $0x44] sm:$0xf]
      %v5195 = vld [vmem:[%s5176 + $0x48] sm:$0xf]
      %v5196 = vld [vmem:[%s5176 + $0x4c] sm:$0xf]
      %v5197 = vld [vmem:[%s5176 + $0x50] sm:$0xf]
      %v5198 = vld [vmem:[%s5176 + $0x54] sm:$0xf]
      %v5199 = vld [vmem:[%s5176 + $0x58] sm:$0xf]
      %v5200 = vld [vmem:[%s5176 + $0x5c] sm:$0xf]
      %v5201 = vld [vmem:[%s5176 + $0x60] sm:$0xf]
      %v5202 = vld [vmem:[%s5176 + $0x64] sm:$0xf]
      %v5203 = vld [vmem:[%s5176 + $0x68] sm:$0xf]
      %v5204 = vld [vmem:[%s5176 + $0x6c] sm:$0xf]
      %v5205 = vld [vmem:[%s5176 + $0x70] sm:$0xf]
      %v5206 = vld [vmem:[%s5176 + $0x74] sm:$0xf]
      %v5207 = vld [vmem:[%s5176 + $0x78] sm:$0xf]
      %v5208 = vld [vmem:[%s5176 + $0x7c] sm:$0xf]
      %v5209 = vld [vmem:[%s5176 + $0x80] sm:$0xf]
      %v5210 = vld [vmem:[%s5176 + $0x84] sm:$0xf]
      %v5211 = vld [vmem:[%s5176 + $0x88] sm:$0xf]
      %v5212 = vld [vmem:[%s5176 + $0x8c] sm:$0xf]
      %v5213 = vld [vmem:[%s5176 + $0x90] sm:$0xf]
      %v5214 = vld [vmem:[%s5176 + $0x94] sm:$0xf]
      %v5215 = vld [vmem:[%s5176 + $0x98] sm:$0xf]
      %v5216 = vld [vmem:[%s5176 + $0x9c] sm:$0xf]
      %v5217 = vld [vmem:[%s5176 + $0xa0] sm:$0xf]
      %v5218 = vld [vmem:[%s5176 + $0xa4] sm:$0xf]
      %v5219 = vld [vmem:[%s5176 + $0xa8] sm:$0xf]
      %v5220 = vld [vmem:[%s5176 + $0xac] sm:$0xf]
      %v5221 = vld [vmem:[%s5176 + $0xb0] sm:$0xf]
      %v5222 = vld [vmem:[%s5176 + $0xb4] sm:$0xf]
      %v5223 = vld [vmem:[%s5176 + $0xb8] sm:$0xf]
      %v5224 = vld [vmem:[%s5176 + $0xbc] sm:$0xf]
      %v5273 = vunpack.c.l.b16 %v5177
      %v5274 = vunpack.c.l.b16 %v5178
      %v5275 = vunpack.c.l.b16 %v5179
      %v5276 = vunpack.c.l.b16 %v5180
      %v5277 = vunpack.c.l.b16 %v5181
      %v5278 = vunpack.c.l.b16 %v5182
      %v5279 = vunpack.c.l.b16 %v5183
      %v5280 = vunpack.c.l.b16 %v5184
      %v5281 = vunpack.c.l.b16 %v5185
      %v5282 = vunpack.c.l.b16 %v5186
      %v5283 = vunpack.c.l.b16 %v5187
      %v5284 = vunpack.c.l.b16 %v5188
      %v5285 = vunpack.c.l.b16 %v5189
      %v5286 = vunpack.c.l.b16 %v5190
      %v5287 = vunpack.c.l.b16 %v5191
      %v5288 = vunpack.c.l.b16 %v5192
      %v5289 = vunpack.c.l.b16 %v5193
      %v5290 = vunpack.c.l.b16 %v5194
      %v5291 = vunpack.c.l.b16 %v5195
      %v5292 = vunpack.c.l.b16 %v5196
      %v5293 = vunpack.c.l.b16 %v5197
      %v5294 = vunpack.c.l.b16 %v5198
      %v5295 = vunpack.c.l.b16 %v5199
      %v5296 = vunpack.c.l.b16 %v5200
      %v5297 = vunpack.c.l.b16 %v5201
      %v5298 = vunpack.c.l.b16 %v5202
      %v5299 = vunpack.c.l.b16 %v5203
      %v5300 = vunpack.c.l.b16 %v5204
      %v5301 = vunpack.c.l.b16 %v5205
      %v5302 = vunpack.c.l.b16 %v5206
      %v5303 = vunpack.c.l.b16 %v5207
      %v5304 = vunpack.c.l.b16 %v5208
      %v5305 = vunpack.c.l.b16 %v5209
      %v5306 = vunpack.c.l.b16 %v5210
      %v5307 = vunpack.c.l.b16 %v5211
      %v5308 = vunpack.c.l.b16 %v5212
      %v5309 = vunpack.c.l.b16 %v5213
      %v5310 = vunpack.c.l.b16 %v5214
      %v5311 = vunpack.c.l.b16 %v5215
      %v5312 = vunpack.c.l.b16 %v5216
      %v5313 = vunpack.c.l.b16 %v5217
      %v5314 = vunpack.c.l.b16 %v5218
      %v5315 = vunpack.c.l.b16 %v5219
      %v5316 = vunpack.c.l.b16 %v5220
      %v5317 = vunpack.c.l.b16 %v5221
      %v5318 = vunpack.c.l.b16 %v5222
      %v5319 = vunpack.c.l.b16 %v5223
      %v5320 = vunpack.c.l.b16 %v5224
      %v5321 = vpack.c.b16 %v5274, %v5273
      %v5322 = vpack.c.b16 %v5276, %v5275
      %v5323 = vpack.c.b16 %v5278, %v5277
      %v5324 = vpack.c.b16 %v5280, %v5279
      %v5325 = vpack.c.b16 %v5282, %v5281
      %v5326 = vpack.c.b16 %v5284, %v5283
      %v5327 = vpack.c.b16 %v5286, %v5285
      %v5328 = vpack.c.b16 %v5288, %v5287
      %v5329 = vpack.c.b16 %v5290, %v5289
      %v5330 = vpack.c.b16 %v5292, %v5291
      %v5331 = vpack.c.b16 %v5294, %v5293
      %v5332 = vpack.c.b16 %v5296, %v5295
      %v5333 = vpack.c.b16 %v5298, %v5297
      %v5334 = vpack.c.b16 %v5300, %v5299
      %v5335 = vpack.c.b16 %v5302, %v5301
      %v5336 = vpack.c.b16 %v5304, %v5303
      %v5337 = vpack.c.b16 %v5306, %v5305
      %v5338 = vpack.c.b16 %v5308, %v5307
      %v5339 = vpack.c.b16 %v5310, %v5309
      %v5340 = vpack.c.b16 %v5312, %v5311
      %v5341 = vpack.c.b16 %v5314, %v5313
      %v5342 = vpack.c.b16 %v5316, %v5315
      %v5343 = vpack.c.b16 %v5318, %v5317
      %v5344 = vpack.c.b16 %v5320, %v5319
      %5369 = vmatprep.subr.bf16.mxu0 0
      %5370 = vmatpush1.bf16.msra.mxu0 %v5321
      %5371 = vmatprep.subr.bf16.mxu0 0
      %5372 = vmatpush1.bf16.msra.mxu0 %v5322
      %5373 = vmatprep.subr.bf16.mxu0 0
      %5374 = vmatpush1.bf16.msra.mxu0 %v5323
      %5375 = vmatprep.subr.bf16.mxu0 0
      %5376 = vmatpush1.bf16.msra.mxu0 %v5324
      %5377 = vmatprep.subr.bf16.mxu0 0
      %5378 = vmatpush1.bf16.msra.mxu0 %v5325
      %5379 = vmatprep.subr.bf16.mxu0 0
      %5380 = vmatpush1.bf16.msra.mxu0 %v5326
      %5381 = vmatprep.subr.bf16.mxu0 0
      %5382 = vmatpush1.bf16.msra.mxu0 %v5327
      %5383 = vmatprep.subr.bf16.mxu0 0
      %5384 = vmatpush1.bf16.msra.mxu0 %v5328
      %5385 = vmatprep.subr.bf16.mxu0 0
      %5386 = vmatpush1.bf16.msra.mxu0 %v5329
      %5387 = vmatprep.subr.bf16.mxu0 0
      %5388 = vmatpush1.bf16.msra.mxu0 %v5330
      %5389 = vmatprep.subr.bf16.mxu0 0
      %5390 = vmatpush1.bf16.msra.mxu0 %v5331
      %5391 = vmatprep.subr.bf16.mxu0 0
      %5392 = vmatpush1.bf16.msra.mxu0 %v5332
      %5393 = vmatprep.subr.bf16.mxu0 0
      %5394 = vmatpush1.bf16.msra.mxu0 %v5333
      %5395 = vmatprep.subr.bf16.mxu0 0
      %5396 = vmatpush1.bf16.msra.mxu0 %v5334
      %5397 = vmatprep.subr.bf16.mxu0 0
      %5398 = vmatpush1.bf16.msra.mxu0 %v5335
      %5399 = vmatprep.subr.bf16.mxu0 0
      %5400 = vmatpush1.bf16.msra.mxu0 %v5336
      %5401 = vmatprep.mubr.bf16.mxu0 %v5129
      %5402 = vmatmul.mubr.bf16.gmra.mrb[0].mxu0 %v5128
      %v5403 = vpop.f32.mrb[0].mxu0
      %v5404 = vadd.f32 0.0, %v5403
      %v5405 = vpop.f32.mrb[0].mxu0
      %v5406 = vpop.f32.mrb[0].mxu0
      %v5407 = vadd.f32 0.0, %v5406
      %v5408 = vpop.f32.mrb[0].mxu0
      %5409 = vmatprep.mubr.bf16.mxu0 %v5132
      %5410 = vmatmul.mubr.bf16.gmra.mrb[0].mxu0 %v5131
      %v5411 = vpop.f32.mrb[0].mxu0
      %v5412 = vadd.f32 0.0, %v5411
      %v5413 = vpop.f32.mrb[0].mxu0
      %v5414 = vpop.f32.mrb[0].mxu0
      %v5415 = vadd.f32 0.0, %v5414
      %v5416 = vpop.f32.mrb[0].mxu0
      %5417 = vmatprep.mubr.bf16.mxu0 %v5135
      %5418 = vmatmul.mubr.bf16.gmra.mrb[0].mxu0 %v5134
      %v5419 = vpop.f32.mrb[0].mxu0
      %v5420 = vadd.f32 0.0, %v5419
      %v5421 = vpop.f32.mrb[0].mxu0
      %v5422 = vpop.f32.mrb[0].mxu0
      %v5423 = vadd.f32 0.0, %v5422
      %v5424 = vpop.f32.mrb[0].mxu0
      %5425 = vmatprep.mubr.bf16.mxu0 %v5138
      %5426 = vmatmul.mubr.bf16.gmra.mrb[0].mxu0 %v5137
      %v5427 = vpop.f32.mrb[0].mxu0
      %v5428 = vadd.f32 0.0, %v5427
      %v5429 = vpop.f32.mrb[0].mxu0
      %v5430 = vpop.f32.mrb[0].mxu0
      %v5431 = vadd.f32 0.0, %v5430
      %v5432 = vpop.f32.mrb[0].mxu0
      %5433 = vmatprep.mubr.bf16.mxu0 %v5141
      %5434 = vmatmul.mubr.bf16.gmra.mrb[0].mxu0 %v5140
      %v5435 = vpop.f32.mrb[0].mxu0
      %v5436 = vadd.f32 0.0, %v5435
      %v5437 = vpop.f32.mrb[0].mxu0
      %v5438 = vpop.f32.mrb[0].mxu0
      %v5439 = vadd.f32 0.0, %v5438
      %v5440 = vpop.f32.mrb[0].mxu0
      %5441 = vmatprep.mubr.bf16.mxu0 %v5144
      %5442 = vmatmul.mubr.bf16.gmra.mrb[0].mxu0 %v5143
      %v5443 = vpop.f32.mrb[0].mxu0
      %v5444 = vadd.f32 0.0, %v5443
      %v5445 = vpop.f32.mrb[0].mxu0
      %v5446 = vpop.f32.mrb[0].mxu0
      %v5447 = vadd.f32 0.0, %v5446
      %v5448 = vpop.f32.mrb[0].mxu0
      %5449 = vmatprep.mubr.bf16.mxu0 %v5147
      %5450 = vmatmul.mubr.bf16.gmra.mrb[0].mxu0 %v5146
      %v5451 = vpop.f32.mrb[0].mxu0
      %v5452 = vadd.f32 0.0, %v5451
      %v5453 = vpop.f32.mrb[0].mxu0
      %v5454 = vpop.f32.mrb[0].mxu0
      %v5455 = vadd.f32 0.0, %v5454
      %v5456 = vpop.f32.mrb[0].mxu0
      %5457 = vmatprep.mubr.bf16.mxu0 %v5150
      %5458 = vmatmul.mubr.bf16.gmra.mrb[0].mxu0 %v5149
      %v5459 = vpop.f32.mrb[0].mxu0
      %v5460 = vadd.f32 0.0, %v5459
      %v5461 = vpop.f32.mrb[0].mxu0
      %v5462 = vpop.f32.mrb[0].mxu0
      %v5463 = vadd.f32 0.0, %v5462
      %v5464 = vpop.f32.mrb[0].mxu0
      %5465 = vmatprep.mubr.bf16.mxu0 %v5153
      %5466 = vmatmul.mubr.bf16.gmra.mrb[0].mxu0 %v5152
      %v5467 = vpop.f32.mrb[0].mxu0
      %v5468 = vadd.f32 0.0, %v5467
      %v5469 = vpop.f32.mrb[0].mxu0
      %v5470 = vpop.f32.mrb[0].mxu0
      %v5471 = vadd.f32 0.0, %v5470
      %v5472 = vpop.f32.mrb[0].mxu0
      %5473 = vmatprep.mubr.bf16.mxu0 %v5156
      %5474 = vmatmul.mubr.bf16.gmra.mrb[0].mxu0 %v5155
      %v5475 = vpop.f32.mrb[0].mxu0
      %v5476 = vadd.f32 0.0, %v5475
      %v5477 = vpop.f32.mrb[0].mxu0
      %v5478 = vpop.f32.mrb[0].mxu0
      %v5479 = vadd.f32 0.0, %v5478
      %v5480 = vpop.f32.mrb[0].mxu0
      %5481 = vmatprep.mubr.bf16.mxu0 %v5159
      %5482 = vmatmul.mubr.bf16.gmra.mrb[0].mxu0 %v5158
      %v5483 = vpop.f32.mrb[0].mxu0
      %v5484 = vadd.f32 0.0, %v5483
      %v5485 = vpop.f32.mrb[0].mxu0
      %v5486 = vpop.f32.mrb[0].mxu0
      %v5487 = vadd.f32 0.0, %v5486
      %v5488 = vpop.f32.mrb[0].mxu0
      %5489 = vmatprep.mubr.bf16.mxu0 %v5162
      %5490 = vmatmul.mubr.bf16.gmra.mrb[0].mxu0 %v5161
      %v5491 = vpop.f32.mrb[0].mxu0
      %v5492 = vadd.f32 0.0, %v5491
      %v5493 = vpop.f32.mrb[0].mxu0
      %v5494 = vpop.f32.mrb[0].mxu0
      %v5495 = vadd.f32 0.0, %v5494
      %v5496 = vpop.f32.mrb[0].mxu0
      %5497 = vmatprep.mubr.bf16.mxu0 %v5165
      %5498 = vmatmul.mubr.bf16.gmra.mrb[0].mxu0 %v5164
      %v5499 = vpop.f32.mrb[0].mxu0
      %v5500 = vadd.f32 0.0, %v5499
      %v5501 = vpop.f32.mrb[0].mxu0
      %v5502 = vpop.f32.mrb[0].mxu0
      %v5503 = vadd.f32 0.0, %v5502
      %v5504 = vpop.f32.mrb[0].mxu0
      %5505 = vmatprep.mubr.bf16.mxu0 %v5168
      %5506 = vmatmul.mubr.bf16.gmra.mrb[0].mxu0 %v5167
      %v5507 = vpop.f32.mrb[0].mxu0
      %v5508 = vadd.f32 0.0, %v5507
      %v5509 = vpop.f32.mrb[0].mxu0
      %v5510 = vpop.f32.mrb[0].mxu0
      %v5511 = vadd.f32 0.0, %v5510
      %v5512 = vpop.f32.mrb[0].mxu0
      %5513 = vmatprep.mubr.bf16.mxu0 %v5171
      %5514 = vmatmul.mubr.bf16.gmra.mrb[0].mxu0 %v5170
      %v5515 = vpop.f32.mrb[0].mxu0
      %v5516 = vadd.f32 0.0, %v5515
      %v5517 = vpop.f32.mrb[0].mxu0
      %v5518 = vpop.f32.mrb[0].mxu0
      %v5519 = vadd.f32 0.0, %v5518
      %v5520 = vpop.f32.mrb[0].mxu0
      %5521 = vmatprep.mubr.bf16.mxu0 %v5174
      %5522 = vmatmul.mubr.bf16.gmra.mrb[0].mxu0 %v5173
      %v5523 = vpop.f32.mrb[0].mxu0
      %v5524 = vadd.f32 0.0, %v5523
      %v5525 = vpop.f32.mrb[0].mxu0
      %v5526 = vpop.f32.mrb[0].mxu0
      %v5527 = vadd.f32 0.0, %v5526
      %v5528 = vpop.f32.mrb[0].mxu0
      %5529 = vdwg.mxu0
      %5530 = vmatprep.subr.bf16.mxu0 0
      %5531 = vmatpush1.bf16.msra.mxu0 %v5337
      %5532 = vmatprep.subr.bf16.mxu0 0
      %5533 = vmatpush1.bf16.msra.mxu0 %v5338
      %5534 = vmatprep.subr.bf16.mxu0 0
      %5535 = vmatpush1.bf16.msra.mxu0 %v5339
      %5536 = vmatprep.subr.bf16.mxu0 0
      %5537 = vmatpush1.bf16.msra.mxu0 %v5340
      %5538 = vmatprep.subr.bf16.mxu0 0
      %5539 = vmatpush1.bf16.msra.mxu0 %v5341
      %5540 = vmatprep.subr.bf16.mxu0 0
      %5541 = vmatpush1.bf16.msra.mxu0 %v5342
      %5542 = vmatprep.subr.bf16.mxu0 0
      %5543 = vmatpush1.bf16.msra.mxu0 %v5343
      %5544 = vmatprep.subr.bf16.mxu0 0
      %5545 = vmatpush1.bf16.msra.mxu0 %v5344
      %5546 = vmatprep.subr.bf16.mxu0 0
      %5547 = vmatpush1.bf16.msra.mxu0 0
      %5548 = vmatprep.subr.bf16.mxu0 0
      %5549 = vmatpush1.bf16.msra.mxu0 0
      %5550 = vmatprep.subr.bf16.mxu0 0
      %5551 = vmatpush1.bf16.msra.mxu0 0
      %5552 = vmatprep.subr.bf16.mxu0 0
      %5553 = vmatpush1.bf16.msra.mxu0 0
      %5554 = vmatprep.subr.bf16.mxu0 0
      %5555 = vmatpush1.bf16.msra.mxu0 0
      %5556 = vmatprep.subr.bf16.mxu0 0
      %5557 = vmatpush1.bf16.msra.mxu0 0
      %5558 = vmatprep.subr.bf16.mxu0 0
      %5559 = vmatpush1.bf16.msra.mxu0 0
      %5560 = vmatprep.subr.bf16.mxu0 0
      %5561 = vmatpush1.bf16.msra.mxu0 0
      %5562 = vmatprep.mubr.bf16.mxu0 0
      %5563 = vmatmul.mubr.bf16.gmra.mrb[0].mxu0 %v5130
      %v5564 = vpop.f32.mrb[0].mxu0
      %v5565 = vadd.f32 %v5404, %v5564
      %v5566 = vpop.f32.mrb[0].mxu0
      %v5567 = vpop.f32.mrb[0].mxu0
      %v5568 = vadd.f32 %v5407, %v5567
      %v5569 = vpop.f32.mrb[0].mxu0
      %5570 = vmatprep.mubr.bf16.mxu0 0
      %5571 = vmatmul.mubr.bf16.gmra.mrb[0].mxu0 %v5133
      %v5572 = vpop.f32.mrb[0].mxu0
      %v5573 = vadd.f32 %v5412, %v5572
      %v5574 = vpop.f32.mrb[0].mxu0
      %v5575 = vpop.f32.mrb[0].mxu0
      %v5576 = vadd.f32 %v5415, %v5575
      %v5577 = vpop.f32.mrb[0].mxu0
      %5578 = vmatprep.mubr.bf16.mxu0 0
      %5579 = vmatmul.mubr.bf16.gmra.mrb[0].mxu0 %v5136
      %v5580 = vpop.f32.mrb[0].mxu0
      %v5581 = vadd.f32 %v5420, %v5580
      %v5582 = vpop.f32.mrb[0].mxu0
      %v5583 = vpop.f32.mrb[0].mxu0
      %v5584 = vadd.f32 %v5423, %v5583
      %v5585 = vpop.f32.mrb[0].mxu0
      %5586 = vmatprep.mubr.bf16.mxu0 0
      %5587 = vmatmul.mubr.bf16.gmra.mrb[0].mxu0 %v5139
      %v5588 = vpop.f32.mrb[0].mxu0
      %v5589 = vadd.f32 %v5428, %v5588
      %v5590 = vpop.f32.mrb[0].mxu0
      %v5591 = vpop.f32.mrb[0].mxu0
      %v5592 = vadd.f32 %v5431, %v5591
      %v5593 = vpop.f32.mrb[0].mxu0
      %5594 = vmatprep.mubr.bf16.mxu0 0
      %5595 = vmatmul.mubr.bf16.gmra.mrb[0].mxu0 %v5142
      %v5596 = vpop.f32.mrb[0].mxu0
      %v5597 = vadd.f32 %v5436, %v5596
      %v5598 = vpop.f32.mrb[0].mxu0
      %v5599 = vpop.f32.mrb[0].mxu0
      %v5600 = vadd.f32 %v5439, %v5599
      %v5601 = vpop.f32.mrb[0].mxu0
      %5602 = vmatprep.mubr.bf16.mxu0 0
      %5603 = vmatmul.mubr.bf16.gmra.mrb[0].mxu0 %v5145
      %v5604 = vpop.f32.mrb[0].mxu0
      %v5605 = vadd.f32 %v5444, %v5604
      %v5606 = vpop.f32.mrb[0].mxu0
      %v5607 = vpop.f32.mrb[0].mxu0
      %v5608 = vadd.f32 %v5447, %v5607
      %v5609 = vpop.f32.mrb[0].mxu0
      %5610 = vmatprep.mubr.bf16.mxu0 0
      %5611 = vmatmul.mubr.bf16.gmra.mrb[0].mxu0 %v5148
      %v5612 = vpop.f32.mrb[0].mxu0
      %v5613 = vadd.f32 %v5452, %v5612
      %v5614 = vpop.f32.mrb[0].mxu0
      %v5615 = vpop.f32.mrb[0].mxu0
      %v5616 = vadd.f32 %v5455, %v5615
      %v5617 = vpop.f32.mrb[0].mxu0
      %5618 = vmatprep.mubr.bf16.mxu0 0
      %5619 = vmatmul.mubr.bf16.gmra.mrb[0].mxu0 %v5151
      %v5620 = vpop.f32.mrb[0].mxu0
      %v5621 = vadd.f32 %v5460, %v5620
      %v5622 = vpop.f32.mrb[0].mxu0
      %v5623 = vpop.f32.mrb[0].mxu0
      %v5624 = vadd.f32 %v5463, %v5623
      %v5625 = vpop.f32.mrb[0].mxu0
      %5626 = vmatprep.mubr.bf16.mxu0 0
      %5627 = vmatmul.mubr.bf16.gmra.mrb[0].mxu0 %v5154
      %v5628 = vpop.f32.mrb[0].mxu0
      %v5629 = vadd.f32 %v5468, %v5628
      %v5630 = vpop.f32.mrb[0].mxu0
      %v5631 = vpop.f32.mrb[0].mxu0
      %v5632 = vadd.f32 %v5471, %v5631
      %v5633 = vpop.f32.mrb[0].mxu0
      %5634 = vmatprep.mubr.bf16.mxu0 0
      %5635 = vmatmul.mubr.bf16.gmra.mrb[0].mxu0 %v5157
      %v5636 = vpop.f32.mrb[0].mxu0
      %v5637 = vadd.f32 %v5476, %v5636
      %v5638 = vpop.f32.mrb[0].mxu0
      %v5639 = vpop.f32.mrb[0].mxu0
      %v5640 = vadd.f32 %v5479, %v5639
      %v5641 = vpop.f32.mrb[0].mxu0
      %5642 = vmatprep.mubr.bf16.mxu0 0
      %5643 = vmatmul.mubr.bf16.gmra.mrb[0].mxu0 %v5160
      %v5644 = vpop.f32.mrb[0].mxu0
      %v5645 = vadd.f32 %v5484, %v5644
      %v5646 = vpop.f32.mrb[0].mxu0
      %v5647 = vpop.f32.mrb[0].mxu0
      %v5648 = vadd.f32 %v5487, %v5647
      %v5649 = vpop.f32.mrb[0].mxu0
      %5650 = vmatprep.mubr.bf16.mxu0 0
      %5651 = vmatmul.mubr.bf16.gmra.mrb[0].mxu0 %v5163
      %v5652 = vpop.f32.mrb[0].mxu0
      %v5653 = vadd.f32 %v5492, %v5652
      %v5654 = vpop.f32.mrb[0].mxu0
      %v5655 = vpop.f32.mrb[0].mxu0
      %v5656 = vadd.f32 %v5495, %v5655
      %v5657 = vpop.f32.mrb[0].mxu0
      %5658 = vmatprep.mubr.bf16.mxu0 0
      %5659 = vmatmul.mubr.bf16.gmra.mrb[0].mxu0 %v5166
      %v5660 = vpop.f32.mrb[0].mxu0
      %v5661 = vadd.f32 %v5500, %v5660
      %v5662 = vpop.f32.mrb[0].mxu0
      %v5663 = vpop.f32.mrb[0].mxu0
      %v5664 = vadd.f32 %v5503, %v5663
      %v5665 = vpop.f32.mrb[0].mxu0
      %5666 = vmatprep.mubr.bf16.mxu0 0
      %5667 = vmatmul.mubr.bf16.gmra.mrb[0].mxu0 %v5169
      %v5668 = vpop.f32.mrb[0].mxu0
      %v5669 = vadd.f32 %v5508, %v5668
      %v5670 = vpop.f32.mrb[0].mxu0
      %v5671 = vpop.f32.mrb[0].mxu0
      %v5672 = vadd.f32 %v5511, %v5671
      %v5673 = vpop.f32.mrb[0].mxu0
      %5674 = vmatprep.mubr.bf16.mxu0 0
      %5675 = vmatmul.mubr.bf16.gmra.mrb[0].mxu0 %v5172
      %v5676 = vpop.f32.mrb[0].mxu0
      %v5677 = vadd.f32 %v5516, %v5676
      %v5678 = vpop.f32.mrb[0].mxu0
      %v5679 = vpop.f32.mrb[0].mxu0
      %v5680 = vadd.f32 %v5519, %v5679
      %v5681 = vpop.f32.mrb[0].mxu0
      %5682 = vmatprep.mubr.bf16.mxu0 0
      %5683 = vmatmul.mubr.bf16.gmra.mrb[0].mxu0 %v5175
      %v5684 = vpop.f32.mrb[0].mxu0
      %v5685 = vadd.f32 %v5524, %v5684
      %v5686 = vpop.f32.mrb[0].mxu0
      %v5687 = vpop.f32.mrb[0].mxu0
      %v5688 = vadd.f32 %v5527, %v5687
      %v5689 = vpop.f32.mrb[0].mxu0
      %5690 = vdwg.mxu0
      %v5691 = vadd.f32 %v5002, %v5565
      %v5692 = vadd.f32 %v5005, %v5568
      %v5693 = vadd.f32 %v5010, %v5573
      %v5694 = vadd.f32 %v5013, %v5576
      %v5695 = vadd.f32 %v5018, %v5581
      %v5696 = vadd.f32 %v5021, %v5584
      %v5697 = vadd.f32 %v5026, %v5589
      %v5698 = vadd.f32 %v5029, %v5592
      %v5699 = vadd.f32 %v5034, %v5597
      %v5700 = vadd.f32 %v5037, %v5600
      %v5701 = vadd.f32 %v5042, %v5605
      %v5702 = vadd.f32 %v5045, %v5608
      %v5703 = vadd.f32 %v5050, %v5613
      %v5704 = vadd.f32 %v5053, %v5616
      %v5705 = vadd.f32 %v5058, %v5621
      %v5706 = vadd.f32 %v5061, %v5624
      %v5707 = vadd.f32 %v5066, %v5629
      %v5708 = vadd.f32 %v5069, %v5632
      %v5709 = vadd.f32 %v5074, %v5637
      %v5710 = vadd.f32 %v5077, %v5640
      %v5711 = vadd.f32 %v5082, %v5645
      %v5712 = vadd.f32 %v5085, %v5648
      %v5713 = vadd.f32 %v5090, %v5653
      %v5714 = vadd.f32 %v5093, %v5656
      %v5715 = vadd.f32 %v5098, %v5661
      %v5716 = vadd.f32 %v5101, %v5664
      %v5717 = vadd.f32 %v5106, %v5669
      %v5718 = vadd.f32 %v5109, %v5672
      %v5719 = vadd.f32 %v5114, %v5677
      %v5720 = vadd.f32 %v5117, %v5680
      %v5721 = vadd.f32 %v5122, %v5685
      %v5722 = vadd.f32 %v5125, %v5688
      %s5723 = scalar_lea.vmem %s503, 1
      %v5724 = vld [vmem:[%s5723] sm:$0x1]
      %s5725 = scalar_lea.vmem %s508, 1
      %v5726 = vld [vmem:[%s5725] sm:$0x1]
      %v5727 = vadd.f32 %v5691, %v5692
      %v5728 = vadd.f32 %v5727, %v5693
      %v5729 = vadd.f32 %v5728, %v5694
      %v5730 = vadd.f32 %v5729, %v5695
      %v5731 = vadd.f32 %v5730, %v5696
      %v5732 = vadd.f32 %v5731, %v5697
      %v5733 = vadd.f32 %v5732, %v5698
      %v5734 = vadd.f32 %v5733, %v5699
      %v5735 = vadd.f32 %v5734, %v5700
      %v5736 = vadd.f32 %v5735, %v5701
      %v5737 = vadd.f32 %v5736, %v5702
      %v5738 = vadd.f32 %v5737, %v5703
      %v5739 = vadd.f32 %v5738, %v5704
      %v5740 = vadd.f32 %v5739, %v5705
      %v5741 = vadd.f32 %v5740, %v5706
      %v5742 = vadd.f32 %v5741, %v5707
      %v5743 = vadd.f32 %v5742, %v5708
      %v5744 = vadd.f32 %v5743, %v5709
      %v5745 = vadd.f32 %v5744, %v5710
      %v5746 = vadd.f32 %v5745, %v5711
      %v5747 = vadd.f32 %v5746, %v5712
      %v5748 = vadd.f32 %v5747, %v5713
      %v5749 = vadd.f32 %v5748, %v5714
      %v5750 = vadd.f32 %v5749, %v5715
      %v5751 = vadd.f32 %v5750, %v5716
      %v5752 = vadd.f32 %v5751, %v5717
      %v5753 = vadd.f32 %v5752, %v5718
      %v5754 = vadd.f32 %v5753, %v5719
      %v5755 = vadd.f32 %v5754, %v5720
      %v5756 = vadd.f32 %v5755, %v5721
      %v5757 = vadd.f32 %v5756, %v5722
      %v5758 = vrot.slane %v5757, 4
      %v5759 = vadd.f32 %v5757, %v5758
      %v5760 = vrot.slane %v5759, 2
      %v5761 = vadd.f32 %v5759, %v5760
      %v5762 = vrot.slane %v5761, 1
      %v5763 = vadd.f32 %v5761, %v5762
      %v5764 = vmul.f32 %v5691, %v5691
      %v5765 = vmul.f32 %v5692, %v5692
      %v5766 = vmul.f32 %v5693, %v5693
      %v5767 = vmul.f32 %v5694, %v5694
      %v5768 = vmul.f32 %v5695, %v5695
      %v5769 = vmul.f32 %v5696, %v5696
      %v5770 = vmul.f32 %v5697, %v5697
      %v5771 = vmul.f32 %v5698, %v5698
      %v5772 = vmul.f32 %v5699, %v5699
      %v5773 = vmul.f32 %v5700, %v5700
      %v5774 = vmul.f32 %v5701, %v5701
      %v5775 = vmul.f32 %v5702, %v5702
      %v5776 = vmul.f32 %v5703, %v5703
      %v5777 = vmul.f32 %v5704, %v5704
      %v5778 = vmul.f32 %v5705, %v5705
      %v5779 = vmul.f32 %v5706, %v5706
      %v5780 = vmul.f32 %v5707, %v5707
      %v5781 = vmul.f32 %v5708, %v5708
      %v5782 = vmul.f32 %v5709, %v5709
      %v5783 = vmul.f32 %v5710, %v5710
      %v5784 = vmul.f32 %v5711, %v5711
      %v5785 = vmul.f32 %v5712, %v5712
      %v5786 = vmul.f32 %v5713, %v5713
      %v5787 = vmul.f32 %v5714, %v5714
      %v5788 = vmul.f32 %v5715, %v5715
      %v5789 = vmul.f32 %v5716, %v5716
      %v5790 = vmul.f32 %v5717, %v5717
      %v5791 = vmul.f32 %v5718, %v5718
      %v5792 = vmul.f32 %v5719, %v5719
      %v5793 = vmul.f32 %v5720, %v5720
      %v5794 = vmul.f32 %v5721, %v5721
      %v5795 = vmul.f32 %v5722, %v5722
      %v5796 = vadd.f32 %v5764, %v5765
      %v5797 = vadd.f32 %v5796, %v5766
      %v5798 = vadd.f32 %v5797, %v5767
      %v5799 = vadd.f32 %v5798, %v5768
      %v5800 = vadd.f32 %v5799, %v5769
      %v5801 = vadd.f32 %v5800, %v5770
      %v5802 = vadd.f32 %v5801, %v5771
      %v5803 = vadd.f32 %v5802, %v5772
      %v5804 = vadd.f32 %v5803, %v5773
      %v5805 = vadd.f32 %v5804, %v5774
      %v5806 = vadd.f32 %v5805, %v5775
      %v5807 = vadd.f32 %v5806, %v5776
      %v5808 = vadd.f32 %v5807, %v5777
      %v5809 = vadd.f32 %v5808, %v5778
      %v5810 = vadd.f32 %v5809, %v5779
      %v5811 = vadd.f32 %v5810, %v5780
      %v5812 = vadd.f32 %v5811, %v5781
      %v5813 = vadd.f32 %v5812, %v5782
      %v5814 = vadd.f32 %v5813, %v5783
      %v5815 = vadd.f32 %v5814, %v5784
      %v5816 = vadd.f32 %v5815, %v5785
      %v5817 = vadd.f32 %v5816, %v5786
      %v5818 = vadd.f32 %v5817, %v5787
      %v5819 = vadd.f32 %v5818, %v5788
      %v5820 = vadd.f32 %v5819, %v5789
      %v5821 = vadd.f32 %v5820, %v5790
      %v5822 = vadd.f32 %v5821, %v5791
      %v5823 = vadd.f32 %v5822, %v5792
      %v5824 = vadd.f32 %v5823, %v5793
      %v5825 = vadd.f32 %v5824, %v5794
      %v5826 = vadd.f32 %v5825, %v5795
      %v5827 = vrot.slane %v5826, 4
      %v5828 = vadd.f32 %v5826, %v5827
      %v5829 = vrot.slane %v5828, 2
      %v5830 = vadd.f32 %v5828, %v5829
      %v5831 = vrot.slane %v5830, 1
      %v5832 = vadd.f32 %v5830, %v5831
      %v5833 = vsel %vm1130, %v5763, %v5832
      %v5834 = vmul.f32 %v5833, 0.0009765625
      %v5835 = vld [vmem:[%s9] sm:$0xff]
      %v5836 = vld [vmem:[%s9 + $0x8] sm:$0xff]
      %v5837 = vld [vmem:[%s9 + $0x10] sm:$0xff]
      %v5838 = vld [vmem:[%s9 + $0x18] sm:$0xff]
      %v5839 = vld [vmem:[%s9 + $0x20] sm:$0xff]
      %v5840 = vld [vmem:[%s9 + $0x28] sm:$0xff]
      %v5841 = vld [vmem:[%s9 + $0x30] sm:$0xff]
      %v5842 = vld [vmem:[%s9 + $0x38] sm:$0xff]
      %v5843 = vld [vmem:[%s9 + $0x40] sm:$0xff]
      %v5844 = vld [vmem:[%s9 + $0x48] sm:$0xff]
      %v5845 = vld [vmem:[%s9 + $0x50] sm:$0xff]
      %v5846 = vld [vmem:[%s9 + $0x58] sm:$0xff]
      %v5847 = vld [vmem:[%s9 + $0x60] sm:$0xff]
      %v5848 = vld [vmem:[%s9 + $0x68] sm:$0xff]
      %v5849 = vld [vmem:[%s9 + $0x70] sm:$0xff]
      %v5850 = vld [vmem:[%s9 + $0x78] sm:$0xff]
      %5851 = vmatprep.subr.mxu0 0.0
      %5852 = vmatpush1.msra.mxu0 %v5835
      %5853 = vmatprep.subr.mxu0 0.0
      %5854 = vmatpush1.msra.mxu0 %v5836
      %5855 = vmatprep.subr.mxu0 0.0
      %5856 = vmatpush1.msra.mxu0 %v5837
      %5857 = vmatprep.subr.mxu0 0.0
      %5858 = vmatpush1.msra.mxu0 %v5838
      %5859 = vmatprep.subr.mxu0 0.0
      %5860 = vmatpush1.msra.mxu0 %v5839
      %5861 = vmatprep.subr.mxu0 0.0
      %5862 = vmatpush1.msra.mxu0 %v5840
      %5863 = vmatprep.subr.mxu0 0.0
      %5864 = vmatpush1.msra.mxu0 %v5841
      %5865 = vmatprep.subr.mxu0 0.0
      %5866 = vmatpush1.msra.mxu0 %v5842
      %5867 = vmatprep.subr.mxu0 0.0
      %5868 = vmatpush1.msra.mxu0 %v5843
      %5869 = vmatprep.subr.mxu0 0.0
      %5870 = vmatpush1.msra.mxu0 %v5844
      %5871 = vmatprep.subr.mxu0 0.0
      %5872 = vmatpush1.msra.mxu0 %v5845
      %5873 = vmatprep.subr.mxu0 0.0
      %5874 = vmatpush1.msra.mxu0 %v5846
      %5875 = vmatprep.subr.mxu0 0.0
      %5876 = vmatpush1.msra.mxu0 %v5847
      %5877 = vmatprep.subr.mxu0 0.0
      %5878 = vmatpush1.msra.mxu0 %v5848
      %5879 = vmatprep.subr.mxu0 0.0
      %5880 = vmatpush1.msra.mxu0 %v5849
      %5881 = vmatprep.subr.mxu0 0.0
      %5882 = vmatpush1.msra.mxu0 %v5850
      %5883 = vmatprep.subr.mxu0 0.0
      %5884 = vmatpush1.msra.mxu0 0.0
      %5885 = vmatprep.subr.mxu0 0.0
      %5886 = vmatpush1.msra.mxu0 0.0
      %5887 = vmatprep.subr.mxu0 0.0
      %5888 = vmatpush1.msra.mxu0 0.0
      %5889 = vmatprep.subr.mxu0 0.0
      %5890 = vmatpush1.msra.mxu0 0.0
      %5891 = vmatprep.subr.mxu0 0.0
      %5892 = vmatpush1.msra.mxu0 0.0
      %5893 = vmatprep.subr.mxu0 0.0
      %5894 = vmatpush1.msra.mxu0 0.0
      %5895 = vmatprep.subr.mxu0 0.0
      %5896 = vmatpush1.msra.mxu0 0.0
      %5897 = vmatprep.subr.mxu0 0.0
      %5898 = vmatpush1.msra.mxu0 0.0
      %5899 = vmatprep.subr.mxu0 0.0
      %5900 = vmatpush1.msra.mxu0 0.0
      %5901 = vmatprep.subr.mxu0 0.0
      %5902 = vmatpush1.msra.mxu0 0.0
      %5903 = vmatprep.subr.mxu0 0.0
      %5904 = vmatpush1.msra.mxu0 0.0
      %5905 = vmatprep.subr.mxu0 0.0
      %5906 = vmatpush1.msra.mxu0 0.0
      %5907 = vmatprep.subr.mxu0 0.0
      %5908 = vmatpush1.msra.mxu0 0.0
      %5909 = vmatprep.subr.mxu0 0.0
      %5910 = vmatpush1.msra.mxu0 0.0
      %5911 = vmatprep.subr.mxu0 0.0
      %5912 = vmatpush1.msra.mxu0 0.0
      %5913 = vmatprep.subr.mxu0 0.0
      %5914 = vmatpush1.msra.mxu0 0.0
      %5915 = vmatprep.mubr.f32.mxu0 0.0
      %5916 = vmatmul.mubr.f32.gmra.mrb[0].mxu0 %v5834
      %v5917 = vpop.f32.mrb[0].mxu0
      %v5918 = vadd.f32 0.0, %v5917
      %v5919 = vpop.f32.mrb[0].mxu0
      %5920 = vdwg.mxu0
      %v5921 = vmul.f32 %v5918, %v5918
      %v5923 = vrot.slane %v5921, 7
      %v5925 = vsub.f32 %v5918, %v5923
      %v5926 = vmax.f32 %v5925, 0.0
      %v5927 = vadd.f32 %v5926, 1e-05
      %v5928 = vrsqrt.pop %v5927
      %v5930 = vlaneseq
      %v5931 = vshrl.u32 %v5930, 7
      %v5932 = vsub.s32 0, %v5931
      %v5933 = vrot.slane %v5724, %v5932
      %v5935 = vmul.f32 %v5928, %v5933
      %v5937 = vrot.slane %v5935, 1
      %v5939 = vmul.f32 %v5918, %v5937
      %v5940 = vsub.f32 %v5726, %v5939
      %v5941 = vlaneseq
      %v5942 = vshrl.u32 %v5941, 7
      %v5943 = vsub.s32 1, %v5942
      %v5944 = vrot.slane %v5935, %v5943
      %v5945 = vmul.f32 %v5691, %v5944
      %v5946 = vmul.f32 %v5692, %v5944
      %v5947 = vmul.f32 %v5693, %v5944
      %v5948 = vmul.f32 %v5694, %v5944
      %v5949 = vmul.f32 %v5695, %v5944
      %v5950 = vmul.f32 %v5696, %v5944
      %v5951 = vmul.f32 %v5697, %v5944
      %v5952 = vmul.f32 %v5698, %v5944
      %v5953 = vmul.f32 %v5699, %v5944
      %v5954 = vmul.f32 %v5700, %v5944
      %v5955 = vmul.f32 %v5701, %v5944
      %v5956 = vmul.f32 %v5702, %v5944
      %v5957 = vmul.f32 %v5703, %v5944
      %v5958 = vmul.f32 %v5704, %v5944
      %v5959 = vmul.f32 %v5705, %v5944
      %v5960 = vmul.f32 %v5706, %v5944
      %v5961 = vmul.f32 %v5707, %v5944
      %v5962 = vmul.f32 %v5708, %v5944
      %v5963 = vmul.f32 %v5709, %v5944
      %v5964 = vmul.f32 %v5710, %v5944
      %v5965 = vmul.f32 %v5711, %v5944
      %v5966 = vmul.f32 %v5712, %v5944
      %v5967 = vmul.f32 %v5713, %v5944
      %v5968 = vmul.f32 %v5714, %v5944
      %v5969 = vmul.f32 %v5715, %v5944
      %v5970 = vmul.f32 %v5716, %v5944
      %v5971 = vmul.f32 %v5717, %v5944
      %v5972 = vmul.f32 %v5718, %v5944
      %v5973 = vmul.f32 %v5719, %v5944
      %v5974 = vmul.f32 %v5720, %v5944
      %v5975 = vmul.f32 %v5721, %v5944
      %v5976 = vmul.f32 %v5722, %v5944
      %v5978 = vlaneseq
      %v5979 = vshrl.u32 %v5978, 7
      %v5980 = vsub.s32 0, %v5979
      %v5981 = vrot.slane %v5940, %v5980
      %v5983 = vadd.f32 %v5945, %v5981
      %v5984 = vadd.f32 %v5946, %v5981
      %v5985 = vadd.f32 %v5947, %v5981
      %v5986 = vadd.f32 %v5948, %v5981
      %v5987 = vadd.f32 %v5949, %v5981
      %v5988 = vadd.f32 %v5950, %v5981
      %v5989 = vadd.f32 %v5951, %v5981
      %v5990 = vadd.f32 %v5952, %v5981
      %v5991 = vadd.f32 %v5953, %v5981
      %v5992 = vadd.f32 %v5954, %v5981
      %v5993 = vadd.f32 %v5955, %v5981
      %v5994 = vadd.f32 %v5956, %v5981
      %v5995 = vadd.f32 %v5957, %v5981
      %v5996 = vadd.f32 %v5958, %v5981
      %v5997 = vadd.f32 %v5959, %v5981
      %v5998 = vadd.f32 %v5960, %v5981
      %v5999 = vadd.f32 %v5961, %v5981
      %v6000 = vadd.f32 %v5962, %v5981
      %v6001 = vadd.f32 %v5963, %v5981
      %v6002 = vadd.f32 %v5964, %v5981
      %v6003 = vadd.f32 %v5965, %v5981
      %v6004 = vadd.f32 %v5966, %v5981
      %v6005 = vadd.f32 %v5967, %v5981
      %v6006 = vadd.f32 %v5968, %v5981
      %v6007 = vadd.f32 %v5969, %v5981
      %v6008 = vadd.f32 %v5970, %v5981
      %v6009 = vadd.f32 %v5971, %v5981
      %v6010 = vadd.f32 %v5972, %v5981
      %v6011 = vadd.f32 %v5973, %v5981
      %v6012 = vadd.f32 %v5974, %v5981
      %v6013 = vadd.f32 %v5975, %v5981
      %v6014 = vadd.f32 %v5976, %v5981
      %v6015 = vmax.f32 %v5983, 0.0
      %v6016 = vmax.f32 %v5984, 0.0
      %v6017 = vmax.f32 %v5985, 0.0
      %v6018 = vmax.f32 %v5986, 0.0
      %v6019 = vmax.f32 %v5987, 0.0
      %v6020 = vmax.f32 %v5988, 0.0
      %v6021 = vmax.f32 %v5989, 0.0
      %v6022 = vmax.f32 %v5990, 0.0
      %v6023 = vmax.f32 %v5991, 0.0
      %v6024 = vmax.f32 %v5992, 0.0
      %v6025 = vmax.f32 %v5993, 0.0
      %v6026 = vmax.f32 %v5994, 0.0
      %v6027 = vmax.f32 %v5995, 0.0
      %v6028 = vmax.f32 %v5996, 0.0
      %v6029 = vmax.f32 %v5997, 0.0
      %v6030 = vmax.f32 %v5998, 0.0
      %v6031 = vmax.f32 %v5999, 0.0
      %v6032 = vmax.f32 %v6000, 0.0
      %v6033 = vmax.f32 %v6001, 0.0
      %v6034 = vmax.f32 %v6002, 0.0
      %v6035 = vmax.f32 %v6003, 0.0
      %v6036 = vmax.f32 %v6004, 0.0
      %v6037 = vmax.f32 %v6005, 0.0
      %v6038 = vmax.f32 %v6006, 0.0
      %v6039 = vmax.f32 %v6007, 0.0
      %v6040 = vmax.f32 %v6008, 0.0
      %v6041 = vmax.f32 %v6009, 0.0
      %v6042 = vmax.f32 %v6010, 0.0
      %v6043 = vmax.f32 %v6011, 0.0
      %v6044 = vmax.f32 %v6012, 0.0
      %v6045 = vmax.f32 %v6013, 0.0
      %v6046 = vmax.f32 %v6014, 0.0
      %v6047 = vpack.c.bf16 %v6016, %v6015
      %v6048 = vpack.c.bf16 %v6018, %v6017
      %v6049 = vpack.c.bf16 %v6020, %v6019
      %v6050 = vpack.c.bf16 %v6022, %v6021
      %v6051 = vpack.c.bf16 %v6024, %v6023
      %v6052 = vpack.c.bf16 %v6026, %v6025
      %v6053 = vpack.c.bf16 %v6028, %v6027
      %v6054 = vpack.c.bf16 %v6030, %v6029
      %v6055 = vpack.c.bf16 %v6032, %v6031
      %v6056 = vpack.c.bf16 %v6034, %v6033
      %v6057 = vpack.c.bf16 %v6036, %v6035
      %v6058 = vpack.c.bf16 %v6038, %v6037
      %v6059 = vpack.c.bf16 %v6040, %v6039
      %v6060 = vpack.c.bf16 %v6042, %v6041
      %v6061 = vpack.c.bf16 %v6044, %v6043
      %v6062 = vpack.c.bf16 %v6046, %v6045
      %v6064 = vshrl.u32 %v6047, 16
      %v6066 = vrot.slane %v6064, 7
      %v6067 = vshll.u32 %v6047, 16
      %v6069 = vor.u32 %v6066, %v6067
      %v6071 = vshrl.u32 %v6048, 16
      %v6073 = vrot.slane %v6071, 7
      %v6074 = vshll.u32 %v6048, 16
      %v6076 = vor.u32 %v6073, %v6074
      %v6078 = vshrl.u32 %v6049, 16
      %v6080 = vrot.slane %v6078, 7
      %v6081 = vshll.u32 %v6049, 16
      %v6083 = vor.u32 %v6080, %v6081
      %v6085 = vshrl.u32 %v6050, 16
      %v6087 = vrot.slane %v6085, 7
      %v6088 = vshll.u32 %v6050, 16
      %v6090 = vor.u32 %v6087, %v6088
      %v6092 = vshrl.u32 %v6051, 16
      %v6094 = vrot.slane %v6092, 7
      %v6095 = vshll.u32 %v6051, 16
      %v6097 = vor.u32 %v6094, %v6095
      %v6099 = vshrl.u32 %v6052, 16
      %v6101 = vrot.slane %v6099, 7
      %v6102 = vshll.u32 %v6052, 16
      %v6104 = vor.u32 %v6101, %v6102
      %v6106 = vshrl.u32 %v6053, 16
      %v6108 = vrot.slane %v6106, 7
      %v6109 = vshll.u32 %v6053, 16
      %v6111 = vor.u32 %v6108, %v6109
      %v6113 = vshrl.u32 %v6054, 16
      %v6115 = vrot.slane %v6113, 7
      %v6116 = vshll.u32 %v6054, 16
      %v6118 = vor.u32 %v6115, %v6116
      %v6120 = vshrl.u32 %v6055, 16
      %v6122 = vrot.slane %v6120, 7
      %v6123 = vshll.u32 %v6055, 16
      %v6125 = vor.u32 %v6122, %v6123
      %v6127 = vshrl.u32 %v6056, 16
      %v6129 = vrot.slane %v6127, 7
      %v6130 = vshll.u32 %v6056, 16
      %v6132 = vor.u32 %v6129, %v6130
      %v6134 = vshrl.u32 %v6057, 16
      %v6136 = vrot.slane %v6134, 7
      %v6137 = vshll.u32 %v6057, 16
      %v6139 = vor.u32 %v6136, %v6137
      %v6141 = vshrl.u32 %v6058, 16
      %v6143 = vrot.slane %v6141, 7
      %v6144 = vshll.u32 %v6058, 16
      %v6146 = vor.u32 %v6143, %v6144
      %v6148 = vshrl.u32 %v6059, 16
      %v6150 = vrot.slane %v6148, 7
      %v6151 = vshll.u32 %v6059, 16
      %v6153 = vor.u32 %v6150, %v6151
      %v6155 = vshrl.u32 %v6060, 16
      %v6157 = vrot.slane %v6155, 7
      %v6158 = vshll.u32 %v6060, 16
      %v6160 = vor.u32 %v6157, %v6158
      %v6162 = vshrl.u32 %v6061, 16
      %v6164 = vrot.slane %v6162, 7
      %v6165 = vshll.u32 %v6061, 16
      %v6167 = vor.u32 %v6164, %v6165
      %v6169 = vshrl.u32 %v6062, 16
      %v6171 = vrot.slane %v6169, 7
      %v6172 = vshll.u32 %v6062, 16
      %v6174 = vor.u32 %v6171, %v6172
      %v6191 = vld [vmem:[%s1489] sm:$0xff]
      %v6192 = vsel %vm1492, %v6069, %v6191
      %6193 = vst [vmem:[%s1489] sm:$0xff] %v6192
      %v6194 = vld [vmem:[%s1489 + $0x18] sm:$0xff]
      %v6195 = vsel %vm1492, %v6076, %v6194
      %6196 = vst [vmem:[%s1489 + $0x18] sm:$0xff] %v6195
      %v6197 = vld [vmem:[%s1489 + $0x30] sm:$0xff]
      %v6198 = vsel %vm1492, %v6083, %v6197
      %6199 = vst [vmem:[%s1489 + $0x30] sm:$0xff] %v6198
      %v6200 = vld [vmem:[%s1489 + $0x48] sm:$0xff]
      %v6201 = vsel %vm1492, %v6090, %v6200
      %6202 = vst [vmem:[%s1489 + $0x48] sm:$0xff] %v6201
      %v6203 = vld [vmem:[%s1489 + $0x60] sm:$0xff]
      %v6204 = vsel %vm1492, %v6097, %v6203
      %6205 = vst [vmem:[%s1489 + $0x60] sm:$0xff] %v6204
      %v6206 = vld [vmem:[%s1489 + $0x78] sm:$0xff]
      %v6207 = vsel %vm1492, %v6104, %v6206
      %6208 = vst [vmem:[%s1489 + $0x78] sm:$0xff] %v6207
      %v6209 = vld [vmem:[%s1489 + $0x90] sm:$0xff]
      %v6210 = vsel %vm1492, %v6111, %v6209
      %6211 = vst [vmem:[%s1489 + $0x90] sm:$0xff] %v6210
      %v6212 = vld [vmem:[%s1489 + $0xa8] sm:$0xff]
      %v6213 = vsel %vm1492, %v6118, %v6212
      %6214 = vst [vmem:[%s1489 + $0xa8] sm:$0xff] %v6213
      %v6215 = vld [vmem:[%s1489 + $0xc0] sm:$0xff]
      %v6216 = vsel %vm1492, %v6125, %v6215
      %6217 = vst [vmem:[%s1489 + $0xc0] sm:$0xff] %v6216
      %v6218 = vld [vmem:[%s1489 + $0xd8] sm:$0xff]
      %v6219 = vsel %vm1492, %v6132, %v6218
      %6220 = vst [vmem:[%s1489 + $0xd8] sm:$0xff] %v6219
      %v6221 = vld [vmem:[%s1489 + $0xf0] sm:$0xff]
      %v6222 = vsel %vm1492, %v6139, %v6221
      %6223 = vst [vmem:[%s1489 + $0xf0] sm:$0xff] %v6222
      %v6224 = vld [vmem:[%s1489 + $0x108] sm:$0xff]
      %v6225 = vsel %vm1492, %v6146, %v6224
      %6226 = vst [vmem:[%s1489 + $0x108] sm:$0xff] %v6225
      %v6227 = vld [vmem:[%s1489 + $0x120] sm:$0xff]
      %v6228 = vsel %vm1492, %v6153, %v6227
      %6229 = vst [vmem:[%s1489 + $0x120] sm:$0xff] %v6228
      %v6230 = vld [vmem:[%s1489 + $0x138] sm:$0xff]
      %v6231 = vsel %vm1492, %v6160, %v6230
      %6232 = vst [vmem:[%s1489 + $0x138] sm:$0xff] %v6231
      %v6233 = vld [vmem:[%s1489 + $0x150] sm:$0xff]
      %v6234 = vsel %vm1492, %v6167, %v6233
      %6235 = vst [vmem:[%s1489 + $0x150] sm:$0xff] %v6234
      %v6236 = vld [vmem:[%s1489 + $0x168] sm:$0xff]
      %v6237 = vsel %vm1492, %v6174, %v6236
      %6238 = vst [vmem:[%s1489 + $0x168] sm:$0xff] %v6237
      %6239 = vst [vmem:[%s1489 + $0x8] sm:$0xff] %v6047
      %6240 = vst [vmem:[%s1489 + $0x20] sm:$0xff] %v6048
      %6241 = vst [vmem:[%s1489 + $0x38] sm:$0xff] %v6049
      %6242 = vst [vmem:[%s1489 + $0x50] sm:$0xff] %v6050
      %6243 = vst [vmem:[%s1489 + $0x68] sm:$0xff] %v6051
      %6244 = vst [vmem:[%s1489 + $0x80] sm:$0xff] %v6052
      %6245 = vst [vmem:[%s1489 + $0x98] sm:$0xff] %v6053
      %6246 = vst [vmem:[%s1489 + $0xb0] sm:$0xff] %v6054
      %6247 = vst [vmem:[%s1489 + $0xc8] sm:$0xff] %v6055
      %6248 = vst [vmem:[%s1489 + $0xe0] sm:$0xff] %v6056
      %6249 = vst [vmem:[%s1489 + $0xf8] sm:$0xff] %v6057
      %6250 = vst [vmem:[%s1489 + $0x110] sm:$0xff] %v6058
      %6251 = vst [vmem:[%s1489 + $0x128] sm:$0xff] %v6059
      %6252 = vst [vmem:[%s1489 + $0x140] sm:$0xff] %v6060
      %6253 = vst [vmem:[%s1489 + $0x158] sm:$0xff] %v6061
      %6254 = vst [vmem:[%s1489 + $0x170] sm:$0xff] %v6062
      %v6255 = vrot.slane %v6067, 1
      %v6256 = vor.u32 %v6064, %v6255
      %v6257 = vrot.slane %v6074, 1
      %v6258 = vor.u32 %v6071, %v6257
      %v6259 = vrot.slane %v6081, 1
      %v6260 = vor.u32 %v6078, %v6259
      %v6261 = vrot.slane %v6088, 1
      %v6262 = vor.u32 %v6085, %v6261
      %v6263 = vrot.slane %v6095, 1
      %v6264 = vor.u32 %v6092, %v6263
      %v6265 = vrot.slane %v6102, 1
      %v6266 = vor.u32 %v6099, %v6265
      %v6267 = vrot.slane %v6109, 1
      %v6268 = vor.u32 %v6106, %v6267
      %v6269 = vrot.slane %v6116, 1
      %v6270 = vor.u32 %v6113, %v6269
      %v6271 = vrot.slane %v6123, 1
      %v6272 = vor.u32 %v6120, %v6271
      %v6273 = vrot.slane %v6130, 1
      %v6274 = vor.u32 %v6127, %v6273
      %v6275 = vrot.slane %v6137, 1
      %v6276 = vor.u32 %v6134, %v6275
      %v6277 = vrot.slane %v6144, 1
      %v6278 = vor.u32 %v6141, %v6277
      %v6279 = vrot.slane %v6151, 1
      %v6280 = vor.u32 %v6148, %v6279
      %v6281 = vrot.slane %v6158, 1
      %v6282 = vor.u32 %v6155, %v6281
      %v6283 = vrot.slane %v6165, 1
      %v6284 = vor.u32 %v6162, %v6283
      %v6285 = vrot.slane %v6172, 1
      %v6286 = vor.u32 %v6169, %v6285
      %v6303 = vld [vmem:[%s1489 + $0x10] sm:$0xff]
      %v6304 = vsel %vm1606, %v6256, %v6303
      %6305 = vst [vmem:[%s1489 + $0x10] sm:$0xff] %v6304
      %v6306 = vld [vmem:[%s1489 + $0x28] sm:$0xff]
      %v6307 = vsel %vm1606, %v6258, %v6306
      %6308 = vst [vmem:[%s1489 + $0x28] sm:$0xff] %v6307
      %v6309 = vld [vmem:[%s1489 + $0x40] sm:$0xff]
      %v6310 = vsel %vm1606, %v6260, %v6309
      %6311 = vst [vmem:[%s1489 + $0x40] sm:$0xff] %v6310
      %v6312 = vld [vmem:[%s1489 + $0x58] sm:$0xff]
      %v6313 = vsel %vm1606, %v6262, %v6312
      %6314 = vst [vmem:[%s1489 + $0x58] sm:$0xff] %v6313
      %v6315 = vld [vmem:[%s1489 + $0x70] sm:$0xff]
      %v6316 = vsel %vm1606, %v6264, %v6315
      %6317 = vst [vmem:[%s1489 + $0x70] sm:$0xff] %v6316
      %v6318 = vld [vmem:[%s1489 + $0x88] sm:$0xff]
      %v6319 = vsel %vm1606, %v6266, %v6318
      %6320 = vst [vmem:[%s1489 + $0x88] sm:$0xff] %v6319
      %v6321 = vld [vmem:[%s1489 + $0xa0] sm:$0xff]
      %v6322 = vsel %vm1606, %v6268, %v6321
      %6323 = vst [vmem:[%s1489 + $0xa0] sm:$0xff] %v6322
      %v6324 = vld [vmem:[%s1489 + $0xb8] sm:$0xff]
      %v6325 = vsel %vm1606, %v6270, %v6324
      %6326 = vst [vmem:[%s1489 + $0xb8] sm:$0xff] %v6325
      %v6327 = vld [vmem:[%s1489 + $0xd0] sm:$0xff]
      %v6328 = vsel %vm1606, %v6272, %v6327
      %6329 = vst [vmem:[%s1489 + $0xd0] sm:$0xff] %v6328
      %v6330 = vld [vmem:[%s1489 + $0xe8] sm:$0xff]
      %v6331 = vsel %vm1606, %v6274, %v6330
      %6332 = vst [vmem:[%s1489 + $0xe8] sm:$0xff] %v6331
      %v6333 = vld [vmem:[%s1489 + $0x100] sm:$0xff]
      %v6334 = vsel %vm1606, %v6276, %v6333
      %6335 = vst [vmem:[%s1489 + $0x100] sm:$0xff] %v6334
      %v6336 = vld [vmem:[%s1489 + $0x118] sm:$0xff]
      %v6337 = vsel %vm1606, %v6278, %v6336
      %6338 = vst [vmem:[%s1489 + $0x118] sm:$0xff] %v6337
      %v6339 = vld [vmem:[%s1489 + $0x130] sm:$0xff]
      %v6340 = vsel %vm1606, %v6280, %v6339
      %6341 = vst [vmem:[%s1489 + $0x130] sm:$0xff] %v6340
      %v6342 = vld [vmem:[%s1489 + $0x148] sm:$0xff]
      %v6343 = vsel %vm1606, %v6282, %v6342
      %6344 = vst [vmem:[%s1489 + $0x148] sm:$0xff] %v6343
      %v6345 = vld [vmem:[%s1489 + $0x160] sm:$0xff]
      %v6346 = vsel %vm1606, %v6284, %v6345
      %6347 = vst [vmem:[%s1489 + $0x160] sm:$0xff] %v6346
      %v6348 = vld [vmem:[%s1489 + $0x178] sm:$0xff]
      %v6349 = vsel %vm1606, %v6286, %v6348
      %6350 = vst [vmem:[%s1489 + $0x178] sm:$0xff] %v6349
      %v6351 = vld [vmem:[#allocation2] sm:$0xff]
      %v6352 = vld [vmem:[#allocation2 + $0x8] sm:$0xff]
      %v6353 = vld [vmem:[#allocation2 + $0x10] sm:$0xff]
      %v6354 = vld [vmem:[#allocation2 + $0x18] sm:$0xff]
      %v6355 = vld [vmem:[#allocation2 + $0x20] sm:$0xff]
      %v6356 = vld [vmem:[#allocation2 + $0x28] sm:$0xff]
      %v6357 = vld [vmem:[#allocation2 + $0x30] sm:$0xff]
      %v6358 = vld [vmem:[#allocation2 + $0x38] sm:$0xff]
      %v6359 = vld [vmem:[#allocation2 + $0x40] sm:$0xff]
      %v6360 = vld [vmem:[#allocation2 + $0x48] sm:$0xff]
      %v6361 = vld [vmem:[#allocation2 + $0x50] sm:$0xff]
      %v6362 = vld [vmem:[#allocation2 + $0x58] sm:$0xff]
      %v6363 = vld [vmem:[#allocation2 + $0x60] sm:$0xff]
      %v6364 = vld [vmem:[#allocation2 + $0x68] sm:$0xff]
      %v6365 = vld [vmem:[#allocation2 + $0x70] sm:$0xff]
      %v6366 = vld [vmem:[#allocation2 + $0x78] sm:$0xff]
      %v6367 = vld [vmem:[#allocation2 + $0x80] sm:$0xff]
      %v6368 = vld [vmem:[#allocation2 + $0x88] sm:$0xff]
      %v6369 = vld [vmem:[#allocation2 + $0x90] sm:$0xff]
      %v6370 = vld [vmem:[#allocation2 + $0x98] sm:$0xff]
      %v6371 = vld [vmem:[#allocation2 + $0xa0] sm:$0xff]
      %v6372 = vld [vmem:[#allocation2 + $0xa8] sm:$0xff]
      %v6373 = vld [vmem:[#allocation2 + $0xb0] sm:$0xff]
      %v6374 = vld [vmem:[#allocation2 + $0xb8] sm:$0xff]
      %v6375 = vld [vmem:[#allocation2 + $0xc0] sm:$0xff]
      %v6376 = vld [vmem:[#allocation2 + $0xc8] sm:$0xff]
      %v6377 = vld [vmem:[#allocation2 + $0xd0] sm:$0xff]
      %v6378 = vld [vmem:[#allocation2 + $0xd8] sm:$0xff]
      %v6379 = vld [vmem:[#allocation2 + $0xe0] sm:$0xff]
      %v6380 = vld [vmem:[#allocation2 + $0xe8] sm:$0xff]
      %v6381 = vld [vmem:[#allocation2 + $0xf0] sm:$0xff]
      %v6382 = vld [vmem:[#allocation2 + $0xf8] sm:$0xff]
      %v6383 = vld [vmem:[#allocation2 + $0x100] sm:$0xff]
      %v6384 = vld [vmem:[#allocation2 + $0x108] sm:$0xff]
      %v6385 = vld [vmem:[#allocation2 + $0x110] sm:$0xff]
      %v6386 = vld [vmem:[#allocation2 + $0x118] sm:$0xff]
      %v6387 = vld [vmem:[#allocation2 + $0x120] sm:$0xff]
      %v6388 = vld [vmem:[#allocation2 + $0x128] sm:$0xff]
      %v6389 = vld [vmem:[#allocation2 + $0x130] sm:$0xff]
      %v6390 = vld [vmem:[#allocation2 + $0x138] sm:$0xff]
      %v6391 = vld [vmem:[#allocation2 + $0x140] sm:$0xff]
      %v6392 = vld [vmem:[#allocation2 + $0x148] sm:$0xff]
      %v6393 = vld [vmem:[#allocation2 + $0x150] sm:$0xff]
      %v6394 = vld [vmem:[#allocation2 + $0x158] sm:$0xff]
      %v6395 = vld [vmem:[#allocation2 + $0x160] sm:$0xff]
      %v6396 = vld [vmem:[#allocation2 + $0x168] sm:$0xff]
      %v6397 = vld [vmem:[#allocation2 + $0x170] sm:$0xff]
      %v6398 = vld [vmem:[#allocation2 + $0x178] sm:$0xff]
      %s6399 = scalar_lea.vmem %s498, 1152
      %v6400 = vld [vmem:[%s6399] sm:$0xf]
      %v6401 = vld [vmem:[%s6399 + $0x4] sm:$0xf]
      %v6402 = vld [vmem:[%s6399 + $0x8] sm:$0xf]
      %v6403 = vld [vmem:[%s6399 + $0xc] sm:$0xf]
      %v6404 = vld [vmem:[%s6399 + $0x10] sm:$0xf]
      %v6405 = vld [vmem:[%s6399 + $0x14] sm:$0xf]
      %v6406 = vld [vmem:[%s6399 + $0x18] sm:$0xf]
      %v6407 = vld [vmem:[%s6399 + $0x1c] sm:$0xf]
      %v6408 = vld [vmem:[%s6399 + $0x20] sm:$0xf]
      %v6409 = vld [vmem:[%s6399 + $0x24] sm:$0xf]
      %v6410 = vld [vmem:[%s6399 + $0x28] sm:$0xf]
      %v6411 = vld [vmem:[%s6399 + $0x2c] sm:$0xf]
      %v6412 = vld [vmem:[%s6399 + $0x30] sm:$0xf]
      %v6413 = vld [vmem:[%s6399 + $0x34] sm:$0xf]
      %v6414 = vld [vmem:[%s6399 + $0x38] sm:$0xf]
      %v6415 = vld [vmem:[%s6399 + $0x3c] sm:$0xf]
      %v6416 = vld [vmem:[%s6399 + $0x40] sm:$0xf]
      %v6417 = vld [vmem:[%s6399 + $0x44] sm:$0xf]
      %v6418 = vld [vmem:[%s6399 + $0x48] sm:$0xf]
      %v6419 = vld [vmem:[%s6399 + $0x4c] sm:$0xf]
      %v6420 = vld [vmem:[%s6399 + $0x50] sm:$0xf]
      %v6421 = vld [vmem:[%s6399 + $0x54] sm:$0xf]
      %v6422 = vld [vmem:[%s6399 + $0x58] sm:$0xf]
      %v6423 = vld [vmem:[%s6399 + $0x5c] sm:$0xf]
      %v6424 = vld [vmem:[%s6399 + $0x60] sm:$0xf]
      %v6425 = vld [vmem:[%s6399 + $0x64] sm:$0xf]
      %v6426 = vld [vmem:[%s6399 + $0x68] sm:$0xf]
      %v6427 = vld [vmem:[%s6399 + $0x6c] sm:$0xf]
      %v6428 = vld [vmem:[%s6399 + $0x70] sm:$0xf]
      %v6429 = vld [vmem:[%s6399 + $0x74] sm:$0xf]
      %v6430 = vld [vmem:[%s6399 + $0x78] sm:$0xf]
      %v6431 = vld [vmem:[%s6399 + $0x7c] sm:$0xf]
      %v6432 = vld [vmem:[%s6399 + $0x80] sm:$0xf]
      %v6433 = vld [vmem:[%s6399 + $0x84] sm:$0xf]
      %v6434 = vld [vmem:[%s6399 + $0x88] sm:$0xf]
      %v6435 = vld [vmem:[%s6399 + $0x8c] sm:$0xf]
      %v6436 = vld [vmem:[%s6399 + $0x90] sm:$0xf]
      %v6437 = vld [vmem:[%s6399 + $0x94] sm:$0xf]
      %v6438 = vld [vmem:[%s6399 + $0x98] sm:$0xf]
      %v6439 = vld [vmem:[%s6399 + $0x9c] sm:$0xf]
      %v6440 = vld [vmem:[%s6399 + $0xa0] sm:$0xf]
      %v6441 = vld [vmem:[%s6399 + $0xa4] sm:$0xf]
      %v6442 = vld [vmem:[%s6399 + $0xa8] sm:$0xf]
      %v6443 = vld [vmem:[%s6399 + $0xac] sm:$0xf]
      %v6444 = vld [vmem:[%s6399 + $0xb0] sm:$0xf]
      %v6445 = vld [vmem:[%s6399 + $0xb4] sm:$0xf]
      %v6446 = vld [vmem:[%s6399 + $0xb8] sm:$0xf]
      %v6447 = vld [vmem:[%s6399 + $0xbc] sm:$0xf]
      %v6448 = vld [vmem:[%s1489] sm:$0xff]
      %v6449 = vld [vmem:[%s1489 + $0x8] sm:$0xff]
      %v6450 = vld [vmem:[%s1489 + $0x10] sm:$0xff]
      %v6451 = vld [vmem:[%s1489 + $0x18] sm:$0xff]
      %v6452 = vld [vmem:[%s1489 + $0x20] sm:$0xff]
      %v6453 = vld [vmem:[%s1489 + $0x28] sm:$0xff]
      %v6454 = vld [vmem:[%s1489 + $0x30] sm:$0xff]
      %v6455 = vld [vmem:[%s1489 + $0x38] sm:$0xff]
      %v6456 = vld [vmem:[%s1489 + $0x40] sm:$0xff]
      %v6457 = vld [vmem:[%s1489 + $0x48] sm:$0xff]
      %v6458 = vld [vmem:[%s1489 + $0x50] sm:$0xff]
      %v6459 = vld [vmem:[%s1489 + $0x58] sm:$0xff]
      %v6460 = vld [vmem:[%s1489 + $0x60] sm:$0xff]
      %v6461 = vld [vmem:[%s1489 + $0x68] sm:$0xff]
      %v6462 = vld [vmem:[%s1489 + $0x70] sm:$0xff]
      %v6463 = vld [vmem:[%s1489 + $0x78] sm:$0xff]
      %v6464 = vld [vmem:[%s1489 + $0x80] sm:$0xff]
      %v6465 = vld [vmem:[%s1489 + $0x88] sm:$0xff]
      %v6466 = vld [vmem:[%s1489 + $0x90] sm:$0xff]
      %v6467 = vld [vmem:[%s1489 + $0x98] sm:$0xff]
      %v6468 = vld [vmem:[%s1489 + $0xa0] sm:$0xff]
      %v6469 = vld [vmem:[%s1489 + $0xa8] sm:$0xff]
      %v6470 = vld [vmem:[%s1489 + $0xb0] sm:$0xff]
      %v6471 = vld [vmem:[%s1489 + $0xb8] sm:$0xff]
      %v6472 = vld [vmem:[%s1489 + $0xc0] sm:$0xff]
      %v6473 = vld [vmem:[%s1489 + $0xc8] sm:$0xff]
      %v6474 = vld [vmem:[%s1489 + $0xd0] sm:$0xff]
      %v6475 = vld [vmem:[%s1489 + $0xd8] sm:$0xff]
      %v6476 = vld [vmem:[%s1489 + $0xe0] sm:$0xff]
      %v6477 = vld [vmem:[%s1489 + $0xe8] sm:$0xff]
      %v6478 = vld [vmem:[%s1489 + $0xf0] sm:$0xff]
      %v6479 = vld [vmem:[%s1489 + $0xf8] sm:$0xff]
      %v6480 = vld [vmem:[%s1489 + $0x100] sm:$0xff]
      %v6481 = vld [vmem:[%s1489 + $0x108] sm:$0xff]
      %v6482 = vld [vmem:[%s1489 + $0x110] sm:$0xff]
      %v6483 = vld [vmem:[%s1489 + $0x118] sm:$0xff]
      %v6484 = vld [vmem:[%s1489 + $0x120] sm:$0xff]
      %v6485 = vld [vmem:[%s1489 + $0x128] sm:$0xff]
      %v6486 = vld [vmem:[%s1489 + $0x130] sm:$0xff]
      %v6487 = vld [vmem:[%s1489 + $0x138] sm:$0xff]
      %v6488 = vld [vmem:[%s1489 + $0x140] sm:$0xff]
      %v6489 = vld [vmem:[%s1489 + $0x148] sm:$0xff]
      %v6490 = vld [vmem:[%s1489 + $0x150] sm:$0xff]
      %v6491 = vld [vmem:[%s1489 + $0x158] sm:$0xff]
      %v6492 = vld [vmem:[%s1489 + $0x160] sm:$0xff]
      %v6493 = vld [vmem:[%s1489 + $0x168] sm:$0xff]
      %v6494 = vld [vmem:[%s1489 + $0x170] sm:$0xff]
      %v6495 = vld [vmem:[%s1489 + $0x178] sm:$0xff]
      %s6496 = scalar_lea.vmem %s498, 1344
      %v6497 = vld [vmem:[%s6496] sm:$0xf]
      %v6498 = vld [vmem:[%s6496 + $0x4] sm:$0xf]
      %v6499 = vld [vmem:[%s6496 + $0x8] sm:$0xf]
      %v6500 = vld [vmem:[%s6496 + $0xc] sm:$0xf]
      %v6501 = vld [vmem:[%s6496 + $0x10] sm:$0xf]
      %v6502 = vld [vmem:[%s6496 + $0x14] sm:$0xf]
      %v6503 = vld [vmem:[%s6496 + $0x18] sm:$0xf]
      %v6504 = vld [vmem:[%s6496 + $0x1c] sm:$0xf]
      %v6505 = vld [vmem:[%s6496 + $0x20] sm:$0xf]
      %v6506 = vld [vmem:[%s6496 + $0x24] sm:$0xf]
      %v6507 = vld [vmem:[%s6496 + $0x28] sm:$0xf]
      %v6508 = vld [vmem:[%s6496 + $0x2c] sm:$0xf]
      %v6509 = vld [vmem:[%s6496 + $0x30] sm:$0xf]
      %v6510 = vld [vmem:[%s6496 + $0x34] sm:$0xf]
      %v6511 = vld [vmem:[%s6496 + $0x38] sm:$0xf]
      %v6512 = vld [vmem:[%s6496 + $0x3c] sm:$0xf]
      %v6513 = vld [vmem:[%s6496 + $0x40] sm:$0xf]
      %v6514 = vld [vmem:[%s6496 + $0x44] sm:$0xf]
      %v6515 = vld [vmem:[%s6496 + $0x48] sm:$0xf]
      %v6516 = vld [vmem:[%s6496 + $0x4c] sm:$0xf]
      %v6517 = vld [vmem:[%s6496 + $0x50] sm:$0xf]
      %v6518 = vld [vmem:[%s6496 + $0x54] sm:$0xf]
      %v6519 = vld [vmem:[%s6496 + $0x58] sm:$0xf]
      %v6520 = vld [vmem:[%s6496 + $0x5c] sm:$0xf]
      %v6521 = vld [vmem:[%s6496 + $0x60] sm:$0xf]
      %v6522 = vld [vmem:[%s6496 + $0x64] sm:$0xf]
      %v6523 = vld [vmem:[%s6496 + $0x68] sm:$0xf]
      %v6524 = vld [vmem:[%s6496 + $0x6c] sm:$0xf]
      %v6525 = vld [vmem:[%s6496 + $0x70] sm:$0xf]
      %v6526 = vld [vmem:[%s6496 + $0x74] sm:$0xf]
      %v6527 = vld [vmem:[%s6496 + $0x78] sm:$0xf]
      %v6528 = vld [vmem:[%s6496 + $0x7c] sm:$0xf]
      %v6529 = vld [vmem:[%s6496 + $0x80] sm:$0xf]
      %v6530 = vld [vmem:[%s6496 + $0x84] sm:$0xf]
      %v6531 = vld [vmem:[%s6496 + $0x88] sm:$0xf]
      %v6532 = vld [vmem:[%s6496 + $0x8c] sm:$0xf]
      %v6533 = vld [vmem:[%s6496 + $0x90] sm:$0xf]
      %v6534 = vld [vmem:[%s6496 + $0x94] sm:$0xf]
      %v6535 = vld [vmem:[%s6496 + $0x98] sm:$0xf]
      %v6536 = vld [vmem:[%s6496 + $0x9c] sm:$0xf]
      %v6537 = vld [vmem:[%s6496 + $0xa0] sm:$0xf]
      %v6538 = vld [vmem:[%s6496 + $0xa4] sm:$0xf]
      %v6539 = vld [vmem:[%s6496 + $0xa8] sm:$0xf]
      %v6540 = vld [vmem:[%s6496 + $0xac] sm:$0xf]
      %v6541 = vld [vmem:[%s6496 + $0xb0] sm:$0xf]
      %v6542 = vld [vmem:[%s6496 + $0xb4] sm:$0xf]
      %v6543 = vld [vmem:[%s6496 + $0xb8] sm:$0xf]
      %v6544 = vld [vmem:[%s6496 + $0xbc] sm:$0xf]
      %v6593 = vunpack.c.l.b16 %v6497
      %v6594 = vunpack.c.l.b16 %v6498
      %v6595 = vunpack.c.l.b16 %v6499
      %v6596 = vunpack.c.l.b16 %v6500
      %v6597 = vunpack.c.l.b16 %v6501
      %v6598 = vunpack.c.l.b16 %v6502
      %v6599 = vunpack.c.l.b16 %v6503
      %v6600 = vunpack.c.l.b16 %v6504
      %v6601 = vunpack.c.l.b16 %v6505
      %v6602 = vunpack.c.l.b16 %v6506
      %v6603 = vunpack.c.l.b16 %v6507
      %v6604 = vunpack.c.l.b16 %v6508
      %v6605 = vunpack.c.l.b16 %v6509
      %v6606 = vunpack.c.l.b16 %v6510
      %v6607 = vunpack.c.l.b16 %v6511
      %v6608 = vunpack.c.l.b16 %v6512
      %v6609 = vunpack.c.l.b16 %v6513
      %v6610 = vunpack.c.l.b16 %v6514
      %v6611 = vunpack.c.l.b16 %v6515
      %v6612 = vunpack.c.l.b16 %v6516
      %v6613 = vunpack.c.l.b16 %v6517
      %v6614 = vunpack.c.l.b16 %v6518
      %v6615 = vunpack.c.l.b16 %v6519
      %v6616 = vunpack.c.l.b16 %v6520
      %v6617 = vunpack.c.l.b16 %v6521
      %v6618 = vunpack.c.l.b16 %v6522
      %v6619 = vunpack.c.l.b16 %v6523
      %v6620 = vunpack.c.l.b16 %v6524
      %v6621 = vunpack.c.l.b16 %v6525
      %v6622 = vunpack.c.l.b16 %v6526
      %v6623 = vunpack.c.l.b16 %v6527
      %v6624 = vunpack.c.l.b16 %v6528
      %v6625 = vunpack.c.l.b16 %v6529
      %v6626 = vunpack.c.l.b16 %v6530
      %v6627 = vunpack.c.l.b16 %v6531
      %v6628 = vunpack.c.l.b16 %v6532
      %v6629 = vunpack.c.l.b16 %v6533
      %v6630 = vunpack.c.l.b16 %v6534
      %v6631 = vunpack.c.l.b16 %v6535
      %v6632 = vunpack.c.l.b16 %v6536
      %v6633 = vunpack.c.l.b16 %v6537
      %v6634 = vunpack.c.l.b16 %v6538
      %v6635 = vunpack.c.l.b16 %v6539
      %v6636 = vunpack.c.l.b16 %v6540
      %v6637 = vunpack.c.l.b16 %v6541
      %v6638 = vunpack.c.l.b16 %v6542
      %v6639 = vunpack.c.l.b16 %v6543
      %v6640 = vunpack.c.l.b16 %v6544
      %v6641 = vpack.c.b16 %v6594, %v6593
      %v6642 = vpack.c.b16 %v6596, %v6595
      %v6643 = vpack.c.b16 %v6598, %v6597
      %v6644 = vpack.c.b16 %v6600, %v6599
      %v6645 = vpack.c.b16 %v6602, %v6601
      %v6646 = vpack.c.b16 %v6604, %v6603
      %v6647 = vpack.c.b16 %v6606, %v6605
      %v6648 = vpack.c.b16 %v6608, %v6607
      %v6649 = vpack.c.b16 %v6610, %v6609
      %v6650 = vpack.c.b16 %v6612, %v6611
      %v6651 = vpack.c.b16 %v6614, %v6613
      %v6652 = vpack.c.b16 %v6616, %v6615
      %v6653 = vpack.c.b16 %v6618, %v6617
      %v6654 = vpack.c.b16 %v6620, %v6619
      %v6655 = vpack.c.b16 %v6622, %v6621
      %v6656 = vpack.c.b16 %v6624, %v6623
      %v6657 = vpack.c.b16 %v6626, %v6625
      %v6658 = vpack.c.b16 %v6628, %v6627
      %v6659 = vpack.c.b16 %v6630, %v6629
      %v6660 = vpack.c.b16 %v6632, %v6631
      %v6661 = vpack.c.b16 %v6634, %v6633
      %v6662 = vpack.c.b16 %v6636, %v6635
      %v6663 = vpack.c.b16 %v6638, %v6637
      %v6664 = vpack.c.b16 %v6640, %v6639
      %6689 = vmatprep.subr.bf16.mxu0 0
      %6690 = vmatpush1.bf16.msra.mxu0 %v6641
      %6691 = vmatprep.subr.bf16.mxu0 0
      %6692 = vmatpush1.bf16.msra.mxu0 %v6642
      %6693 = vmatprep.subr.bf16.mxu0 0
      %6694 = vmatpush1.bf16.msra.mxu0 %v6643
      %6695 = vmatprep.subr.bf16.mxu0 0
      %6696 = vmatpush1.bf16.msra.mxu0 %v6644
      %6697 = vmatprep.subr.bf16.mxu0 0
      %6698 = vmatpush1.bf16.msra.mxu0 %v6645
      %6699 = vmatprep.subr.bf16.mxu0 0
      %6700 = vmatpush1.bf16.msra.mxu0 %v6646
      %6701 = vmatprep.subr.bf16.mxu0 0
      %6702 = vmatpush1.bf16.msra.mxu0 %v6647
      %6703 = vmatprep.subr.bf16.mxu0 0
      %6704 = vmatpush1.bf16.msra.mxu0 %v6648
      %6705 = vmatprep.subr.bf16.mxu0 0
      %6706 = vmatpush1.bf16.msra.mxu0 %v6649
      %6707 = vmatprep.subr.bf16.mxu0 0
      %6708 = vmatpush1.bf16.msra.mxu0 %v6650
      %6709 = vmatprep.subr.bf16.mxu0 0
      %6710 = vmatpush1.bf16.msra.mxu0 %v6651
      %6711 = vmatprep.subr.bf16.mxu0 0
      %6712 = vmatpush1.bf16.msra.mxu0 %v6652
      %6713 = vmatprep.subr.bf16.mxu0 0
      %6714 = vmatpush1.bf16.msra.mxu0 %v6653
      %6715 = vmatprep.subr.bf16.mxu0 0
      %6716 = vmatpush1.bf16.msra.mxu0 %v6654
      %6717 = vmatprep.subr.bf16.mxu0 0
      %6718 = vmatpush1.bf16.msra.mxu0 %v6655
      %6719 = vmatprep.subr.bf16.mxu0 0
      %6720 = vmatpush1.bf16.msra.mxu0 %v6656
      %6721 = vmatprep.mubr.bf16.mxu0 %v6449
      %6722 = vmatmul.mubr.bf16.gmra.mrb[0].mxu0 %v6448
      %v6723 = vpop.f32.mrb[0].mxu0
      %v6724 = vadd.f32 0.0, %v6723
      %v6725 = vpop.f32.mrb[0].mxu0
      %v6726 = vpop.f32.mrb[0].mxu0
      %v6727 = vadd.f32 0.0, %v6726
      %v6728 = vpop.f32.mrb[0].mxu0
      %6729 = vmatprep.mubr.bf16.mxu0 %v6452
      %6730 = vmatmul.mubr.bf16.gmra.mrb[0].mxu0 %v6451
      %v6731 = vpop.f32.mrb[0].mxu0
      %v6732 = vadd.f32 0.0, %v6731
      %v6733 = vpop.f32.mrb[0].mxu0
      %v6734 = vpop.f32.mrb[0].mxu0
      %v6735 = vadd.f32 0.0, %v6734
      %v6736 = vpop.f32.mrb[0].mxu0
      %6737 = vmatprep.mubr.bf16.mxu0 %v6455
      %6738 = vmatmul.mubr.bf16.gmra.mrb[0].mxu0 %v6454
      %v6739 = vpop.f32.mrb[0].mxu0
      %v6740 = vadd.f32 0.0, %v6739
      %v6741 = vpop.f32.mrb[0].mxu0
      %v6742 = vpop.f32.mrb[0].mxu0
      %v6743 = vadd.f32 0.0, %v6742
      %v6744 = vpop.f32.mrb[0].mxu0
      %6745 = vmatprep.mubr.bf16.mxu0 %v6458
      %6746 = vmatmul.mubr.bf16.gmra.mrb[0].mxu0 %v6457
      %v6747 = vpop.f32.mrb[0].mxu0
      %v6748 = vadd.f32 0.0, %v6747
      %v6749 = vpop.f32.mrb[0].mxu0
      %v6750 = vpop.f32.mrb[0].mxu0
      %v6751 = vadd.f32 0.0, %v6750
      %v6752 = vpop.f32.mrb[0].mxu0
      %6753 = vmatprep.mubr.bf16.mxu0 %v6461
      %6754 = vmatmul.mubr.bf16.gmra.mrb[0].mxu0 %v6460
      %v6755 = vpop.f32.mrb[0].mxu0
      %v6756 = vadd.f32 0.0, %v6755
      %v6757 = vpop.f32.mrb[0].mxu0
      %v6758 = vpop.f32.mrb[0].mxu0
      %v6759 = vadd.f32 0.0, %v6758
      %v6760 = vpop.f32.mrb[0].mxu0
      %6761 = vmatprep.mubr.bf16.mxu0 %v6464
      %6762 = vmatmul.mubr.bf16.gmra.mrb[0].mxu0 %v6463
      %v6763 = vpop.f32.mrb[0].mxu0
      %v6764 = vadd.f32 0.0, %v6763
      %v6765 = vpop.f32.mrb[0].mxu0
      %v6766 = vpop.f32.mrb[0].mxu0
      %v6767 = vadd.f32 0.0, %v6766
      %v6768 = vpop.f32.mrb[0].mxu0
      %6769 = vmatprep.mubr.bf16.mxu0 %v6467
      %6770 = vmatmul.mubr.bf16.gmra.mrb[0].mxu0 %v6466
      %v6771 = vpop.f32.mrb[0].mxu0
      %v6772 = vadd.f32 0.0, %v6771
      %v6773 = vpop.f32.mrb[0].mxu0
      %v6774 = vpop.f32.mrb[0].mxu0
      %v6775 = vadd.f32 0.0, %v6774
      %v6776 = vpop.f32.mrb[0].mxu0
      %6777 = vmatprep.mubr.bf16.mxu0 %v6470
      %6778 = vmatmul.mubr.bf16.gmra.mrb[0].mxu0 %v6469
      %v6779 = vpop.f32.mrb[0].mxu0
      %v6780 = vadd.f32 0.0, %v6779
      %v6781 = vpop.f32.mrb[0].mxu0
      %v6782 = vpop.f32.mrb[0].mxu0
      %v6783 = vadd.f32 0.0, %v6782
      %v6784 = vpop.f32.mrb[0].mxu0
      %6785 = vmatprep.mubr.bf16.mxu0 %v6473
      %6786 = vmatmul.mubr.bf16.gmra.mrb[0].mxu0 %v6472
      %v6787 = vpop.f32.mrb[0].mxu0
      %v6788 = vadd.f32 0.0, %v6787
      %v6789 = vpop.f32.mrb[0].mxu0
      %v6790 = vpop.f32.mrb[0].mxu0
      %v6791 = vadd.f32 0.0, %v6790
      %v6792 = vpop.f32.mrb[0].mxu0
      %6793 = vmatprep.mubr.bf16.mxu0 %v6476
      %6794 = vmatmul.mubr.bf16.gmra.mrb[0].mxu0 %v6475
      %v6795 = vpop.f32.mrb[0].mxu0
      %v6796 = vadd.f32 0.0, %v6795
      %v6797 = vpop.f32.mrb[0].mxu0
      %v6798 = vpop.f32.mrb[0].mxu0
      %v6799 = vadd.f32 0.0, %v6798
      %v6800 = vpop.f32.mrb[0].mxu0
      %6801 = vmatprep.mubr.bf16.mxu0 %v6479
      %6802 = vmatmul.mubr.bf16.gmra.mrb[0].mxu0 %v6478
      %v6803 = vpop.f32.mrb[0].mxu0
      %v6804 = vadd.f32 0.0, %v6803
      %v6805 = vpop.f32.mrb[0].mxu0
      %v6806 = vpop.f32.mrb[0].mxu0
      %v6807 = vadd.f32 0.0, %v6806
      %v6808 = vpop.f32.mrb[0].mxu0
      %6809 = vmatprep.mubr.bf16.mxu0 %v6482
      %6810 = vmatmul.mubr.bf16.gmra.mrb[0].mxu0 %v6481
      %v6811 = vpop.f32.mrb[0].mxu0
      %v6812 = vadd.f32 0.0, %v6811
      %v6813 = vpop.f32.mrb[0].mxu0
      %v6814 = vpop.f32.mrb[0].mxu0
      %v6815 = vadd.f32 0.0, %v6814
      %v6816 = vpop.f32.mrb[0].mxu0
      %6817 = vmatprep.mubr.bf16.mxu0 %v6485
      %6818 = vmatmul.mubr.bf16.gmra.mrb[0].mxu0 %v6484
      %v6819 = vpop.f32.mrb[0].mxu0
      %v6820 = vadd.f32 0.0, %v6819
      %v6821 = vpop.f32.mrb[0].mxu0
      %v6822 = vpop.f32.mrb[0].mxu0
      %v6823 = vadd.f32 0.0, %v6822
      %v6824 = vpop.f32.mrb[0].mxu0
      %6825 = vmatprep.mubr.bf16.mxu0 %v6488
      %6826 = vmatmul.mubr.bf16.gmra.mrb[0].mxu0 %v6487
      %v6827 = vpop.f32.mrb[0].mxu0
      %v6828 = vadd.f32 0.0, %v6827
      %v6829 = vpop.f32.mrb[0].mxu0
      %v6830 = vpop.f32.mrb[0].mxu0
      %v6831 = vadd.f32 0.0, %v6830
      %v6832 = vpop.f32.mrb[0].mxu0
      %6833 = vmatprep.mubr.bf16.mxu0 %v6491
      %6834 = vmatmul.mubr.bf16.gmra.mrb[0].mxu0 %v6490
      %v6835 = vpop.f32.mrb[0].mxu0
      %v6836 = vadd.f32 0.0, %v6835
      %v6837 = vpop.f32.mrb[0].mxu0
      %v6838 = vpop.f32.mrb[0].mxu0
      %v6839 = vadd.f32 0.0, %v6838
      %v6840 = vpop.f32.mrb[0].mxu0
      %6841 = vmatprep.mubr.bf16.mxu0 %v6494
      %6842 = vmatmul.mubr.bf16.gmra.mrb[0].mxu0 %v6493
      %v6843 = vpop.f32.mrb[0].mxu0
      %v6844 = vadd.f32 0.0, %v6843
      %v6845 = vpop.f32.mrb[0].mxu0
      %v6846 = vpop.f32.mrb[0].mxu0
      %v6847 = vadd.f32 0.0, %v6846
      %v6848 = vpop.f32.mrb[0].mxu0
      %6849 = vdwg.mxu0
      %6850 = vmatprep.subr.bf16.mxu0 0
      %6851 = vmatpush1.bf16.msra.mxu0 %v6657
      %6852 = vmatprep.subr.bf16.mxu0 0
      %6853 = vmatpush1.bf16.msra.mxu0 %v6658
      %6854 = vmatprep.subr.bf16.mxu0 0
      %6855 = vmatpush1.bf16.msra.mxu0 %v6659
      %6856 = vmatprep.subr.bf16.mxu0 0
      %6857 = vmatpush1.bf16.msra.mxu0 %v6660
      %6858 = vmatprep.subr.bf16.mxu0 0
      %6859 = vmatpush1.bf16.msra.mxu0 %v6661
      %6860 = vmatprep.subr.bf16.mxu0 0
      %6861 = vmatpush1.bf16.msra.mxu0 %v6662
      %6862 = vmatprep.subr.bf16.mxu0 0
      %6863 = vmatpush1.bf16.msra.mxu0 %v6663
      %6864 = vmatprep.subr.bf16.mxu0 0
      %6865 = vmatpush1.bf16.msra.mxu0 %v6664
      %6866 = vmatprep.subr.bf16.mxu0 0
      %6867 = vmatpush1.bf16.msra.mxu0 0
      %6868 = vmatprep.subr.bf16.mxu0 0
      %6869 = vmatpush1.bf16.msra.mxu0 0
      %6870 = vmatprep.subr.bf16.mxu0 0
      %6871 = vmatpush1.bf16.msra.mxu0 0
      %6872 = vmatprep.subr.bf16.mxu0 0
      %6873 = vmatpush1.bf16.msra.mxu0 0
      %6874 = vmatprep.subr.bf16.mxu0 0
      %6875 = vmatpush1.bf16.msra.mxu0 0
      %6876 = vmatprep.subr.bf16.mxu0 0
      %6877 = vmatpush1.bf16.msra.mxu0 0
      %6878 = vmatprep.subr.bf16.mxu0 0
      %6879 = vmatpush1.bf16.msra.mxu0 0
      %6880 = vmatprep.subr.bf16.mxu0 0
      %6881 = vmatpush1.bf16.msra.mxu0 0
      %6882 = vmatprep.mubr.bf16.mxu0 0
      %6883 = vmatmul.mubr.bf16.gmra.mrb[0].mxu0 %v6450
      %v6884 = vpop.f32.mrb[0].mxu0
      %v6885 = vadd.f32 %v6724, %v6884
      %v6886 = vpop.f32.mrb[0].mxu0
      %v6887 = vpop.f32.mrb[0].mxu0
      %v6888 = vadd.f32 %v6727, %v6887
      %v6889 = vpop.f32.mrb[0].mxu0
      %6890 = vmatprep.mubr.bf16.mxu0 0
      %6891 = vmatmul.mubr.bf16.gmra.mrb[0].mxu0 %v6453
      %v6892 = vpop.f32.mrb[0].mxu0
      %v6893 = vadd.f32 %v6732, %v6892
      %v6894 = vpop.f32.mrb[0].mxu0
      %v6895 = vpop.f32.mrb[0].mxu0
      %v6896 = vadd.f32 %v6735, %v6895
      %v6897 = vpop.f32.mrb[0].mxu0
      %6898 = vmatprep.mubr.bf16.mxu0 0
      %6899 = vmatmul.mubr.bf16.gmra.mrb[0].mxu0 %v6456
      %v6900 = vpop.f32.mrb[0].mxu0
      %v6901 = vadd.f32 %v6740, %v6900
      %v6902 = vpop.f32.mrb[0].mxu0
      %v6903 = vpop.f32.mrb[0].mxu0
      %v6904 = vadd.f32 %v6743, %v6903
      %v6905 = vpop.f32.mrb[0].mxu0
      %6906 = vmatprep.mubr.bf16.mxu0 0
      %6907 = vmatmul.mubr.bf16.gmra.mrb[0].mxu0 %v6459
      %v6908 = vpop.f32.mrb[0].mxu0
      %v6909 = vadd.f32 %v6748, %v6908
      %v6910 = vpop.f32.mrb[0].mxu0
      %v6911 = vpop.f32.mrb[0].mxu0
      %v6912 = vadd.f32 %v6751, %v6911
      %v6913 = vpop.f32.mrb[0].mxu0
      %6914 = vmatprep.mubr.bf16.mxu0 0
      %6915 = vmatmul.mubr.bf16.gmra.mrb[0].mxu0 %v6462
      %v6916 = vpop.f32.mrb[0].mxu0
      %v6917 = vadd.f32 %v6756, %v6916
      %v6918 = vpop.f32.mrb[0].mxu0
      %v6919 = vpop.f32.mrb[0].mxu0
      %v6920 = vadd.f32 %v6759, %v6919
      %v6921 = vpop.f32.mrb[0].mxu0
      %6922 = vmatprep.mubr.bf16.mxu0 0
      %6923 = vmatmul.mubr.bf16.gmra.mrb[0].mxu0 %v6465
      %v6924 = vpop.f32.mrb[0].mxu0
      %v6925 = vadd.f32 %v6764, %v6924
      %v6926 = vpop.f32.mrb[0].mxu0
      %v6927 = vpop.f32.mrb[0].mxu0
      %v6928 = vadd.f32 %v6767, %v6927
      %v6929 = vpop.f32.mrb[0].mxu0
      %6930 = vmatprep.mubr.bf16.mxu0 0
      %6931 = vmatmul.mubr.bf16.gmra.mrb[0].mxu0 %v6468
      %v6932 = vpop.f32.mrb[0].mxu0
      %v6933 = vadd.f32 %v6772, %v6932
      %v6934 = vpop.f32.mrb[0].mxu0
      %v6935 = vpop.f32.mrb[0].mxu0
      %v6936 = vadd.f32 %v6775, %v6935
      %v6937 = vpop.f32.mrb[0].mxu0
      %6938 = vmatprep.mubr.bf16.mxu0 0
      %6939 = vmatmul.mubr.bf16.gmra.mrb[0].mxu0 %v6471
      %v6940 = vpop.f32.mrb[0].mxu0
      %v6941 = vadd.f32 %v6780, %v6940
      %v6942 = vpop.f32.mrb[0].mxu0
      %v6943 = vpop.f32.mrb[0].mxu0
      %v6944 = vadd.f32 %v6783, %v6943
      %v6945 = vpop.f32.mrb[0].mxu0
      %6946 = vmatprep.mubr.bf16.mxu0 0
      %6947 = vmatmul.mubr.bf16.gmra.mrb[0].mxu0 %v6474
      %v6948 = vpop.f32.mrb[0].mxu0
      %v6949 = vadd.f32 %v6788, %v6948
      %v6950 = vpop.f32.mrb[0].mxu0
      %v6951 = vpop.f32.mrb[0].mxu0
      %v6952 = vadd.f32 %v6791, %v6951
      %v6953 = vpop.f32.mrb[0].mxu0
      %6954 = vmatprep.mubr.bf16.mxu0 0
      %6955 = vmatmul.mubr.bf16.gmra.mrb[0].mxu0 %v6477
      %v6956 = vpop.f32.mrb[0].mxu0
      %v6957 = vadd.f32 %v6796, %v6956
      %v6958 = vpop.f32.mrb[0].mxu0
      %v6959 = vpop.f32.mrb[0].mxu0
      %v6960 = vadd.f32 %v6799, %v6959
      %v6961 = vpop.f32.mrb[0].mxu0
      %6962 = vmatprep.mubr.bf16.mxu0 0
      %6963 = vmatmul.mubr.bf16.gmra.mrb[0].mxu0 %v6480
      %v6964 = vpop.f32.mrb[0].mxu0
      %v6965 = vadd.f32 %v6804, %v6964
      %v6966 = vpop.f32.mrb[0].mxu0
      %v6967 = vpop.f32.mrb[0].mxu0
      %v6968 = vadd.f32 %v6807, %v6967
      %v6969 = vpop.f32.mrb[0].mxu0
      %6970 = vmatprep.mubr.bf16.mxu0 0
      %6971 = vmatmul.mubr.bf16.gmra.mrb[0].mxu0 %v6483
      %v6972 = vpop.f32.mrb[0].mxu0
      %v6973 = vadd.f32 %v6812, %v6972
      %v6974 = vpop.f32.mrb[0].mxu0
      %v6975 = vpop.f32.mrb[0].mxu0
      %v6976 = vadd.f32 %v6815, %v6975
      %v6977 = vpop.f32.mrb[0].mxu0
      %6978 = vmatprep.mubr.bf16.mxu0 0
      %6979 = vmatmul.mubr.bf16.gmra.mrb[0].mxu0 %v6486
      %v6980 = vpop.f32.mrb[0].mxu0
      %v6981 = vadd.f32 %v6820, %v6980
      %v6982 = vpop.f32.mrb[0].mxu0
      %v6983 = vpop.f32.mrb[0].mxu0
      %v6984 = vadd.f32 %v6823, %v6983
      %v6985 = vpop.f32.mrb[0].mxu0
      %6986 = vmatprep.mubr.bf16.mxu0 0
      %6987 = vmatmul.mubr.bf16.gmra.mrb[0].mxu0 %v6489
      %v6988 = vpop.f32.mrb[0].mxu0
      %v6989 = vadd.f32 %v6828, %v6988
      %v6990 = vpop.f32.mrb[0].mxu0
      %v6991 = vpop.f32.mrb[0].mxu0
      %v6992 = vadd.f32 %v6831, %v6991
      %v6993 = vpop.f32.mrb[0].mxu0
      %6994 = vmatprep.mubr.bf16.mxu0 0
      %6995 = vmatmul.mubr.bf16.gmra.mrb[0].mxu0 %v6492
      %v6996 = vpop.f32.mrb[0].mxu0
      %v6997 = vadd.f32 %v6836, %v6996
      %v6998 = vpop.f32.mrb[0].mxu0
      %v6999 = vpop.f32.mrb[0].mxu0
      %v7000 = vadd.f32 %v6839, %v6999
      %v7001 = vpop.f32.mrb[0].mxu0
      %7002 = vmatprep.mubr.bf16.mxu0 0
      %7003 = vmatmul.mubr.bf16.gmra.mrb[0].mxu0 %v6495
      %v7004 = vpop.f32.mrb[0].mxu0
      %v7005 = vadd.f32 %v6844, %v7004
      %v7006 = vpop.f32.mrb[0].mxu0
      %v7007 = vpop.f32.mrb[0].mxu0
      %v7008 = vadd.f32 %v6847, %v7007
      %v7009 = vpop.f32.mrb[0].mxu0
      %7010 = vdwg.mxu0
      %v7059 = vunpack.c.l.b16 %v6400
      %v7060 = vunpack.c.l.b16 %v6401
      %v7061 = vunpack.c.l.b16 %v6402
      %v7062 = vunpack.c.l.b16 %v6403
      %v7063 = vunpack.c.l.b16 %v6404
      %v7064 = vunpack.c.l.b16 %v6405
      %v7065 = vunpack.c.l.b16 %v6406
      %v7066 = vunpack.c.l.b16 %v6407
      %v7067 = vunpack.c.l.b16 %v6408
      %v7068 = vunpack.c.l.b16 %v6409
      %v7069 = vunpack.c.l.b16 %v6410
      %v7070 = vunpack.c.l.b16 %v6411
      %v7071 = vunpack.c.l.b16 %v6412
      %v7072 = vunpack.c.l.b16 %v6413
      %v7073 = vunpack.c.l.b16 %v6414
      %v7074 = vunpack.c.l.b16 %v6415
      %v7075 = vunpack.c.l.b16 %v6416
      %v7076 = vunpack.c.l.b16 %v6417
      %v7077 = vunpack.c.l.b16 %v6418
      %v7078 = vunpack.c.l.b16 %v6419
      %v7079 = vunpack.c.l.b16 %v6420
      %v7080 = vunpack.c.l.b16 %v6421
      %v7081 = vunpack.c.l.b16 %v6422
      %v7082 = vunpack.c.l.b16 %v6423
      %v7083 = vunpack.c.l.b16 %v6424
      %v7084 = vunpack.c.l.b16 %v6425
      %v7085 = vunpack.c.l.b16 %v6426
      %v7086 = vunpack.c.l.b16 %v6427
      %v7087 = vunpack.c.l.b16 %v6428
      %v7088 = vunpack.c.l.b16 %v6429
      %v7089 = vunpack.c.l.b16 %v6430
      %v7090 = vunpack.c.l.b16 %v6431
      %v7091 = vunpack.c.l.b16 %v6432
      %v7092 = vunpack.c.l.b16 %v6433
      %v7093 = vunpack.c.l.b16 %v6434
      %v7094 = vunpack.c.l.b16 %v6435
      %v7095 = vunpack.c.l.b16 %v6436
      %v7096 = vunpack.c.l.b16 %v6437
      %v7097 = vunpack.c.l.b16 %v6438
      %v7098 = vunpack.c.l.b16 %v6439
      %v7099 = vunpack.c.l.b16 %v6440
      %v7100 = vunpack.c.l.b16 %v6441
      %v7101 = vunpack.c.l.b16 %v6442
      %v7102 = vunpack.c.l.b16 %v6443
      %v7103 = vunpack.c.l.b16 %v6444
      %v7104 = vunpack.c.l.b16 %v6445
      %v7105 = vunpack.c.l.b16 %v6446
      %v7106 = vunpack.c.l.b16 %v6447
      %v7107 = vpack.c.b16 %v7060, %v7059
      %v7108 = vpack.c.b16 %v7062, %v7061
      %v7109 = vpack.c.b16 %v7064, %v7063
      %v7110 = vpack.c.b16 %v7066, %v7065
      %v7111 = vpack.c.b16 %v7068, %v7067
      %v7112 = vpack.c.b16 %v7070, %v7069
      %v7113 = vpack.c.b16 %v7072, %v7071
      %v7114 = vpack.c.b16 %v7074, %v7073
      %v7115 = vpack.c.b16 %v7076, %v7075
      %v7116 = vpack.c.b16 %v7078, %v7077
      %v7117 = vpack.c.b16 %v7080, %v7079
      %v7118 = vpack.c.b16 %v7082, %v7081
      %v7119 = vpack.c.b16 %v7084, %v7083
      %v7120 = vpack.c.b16 %v7086, %v7085
      %v7121 = vpack.c.b16 %v7088, %v7087
      %v7122 = vpack.c.b16 %v7090, %v7089
      %v7123 = vpack.c.b16 %v7092, %v7091
      %v7124 = vpack.c.b16 %v7094, %v7093
      %v7125 = vpack.c.b16 %v7096, %v7095
      %v7126 = vpack.c.b16 %v7098, %v7097
      %v7127 = vpack.c.b16 %v7100, %v7099
      %v7128 = vpack.c.b16 %v7102, %v7101
      %v7129 = vpack.c.b16 %v7104, %v7103
      %v7130 = vpack.c.b16 %v7106, %v7105
      %7155 = vmatprep.subr.bf16.mxu0 0
      %7156 = vmatpush1.bf16.msra.mxu0 %v7107
      %7157 = vmatprep.subr.bf16.mxu0 0
      %7158 = vmatpush1.bf16.msra.mxu0 %v7108
      %7159 = vmatprep.subr.bf16.mxu0 0
      %7160 = vmatpush1.bf16.msra.mxu0 %v7109
      %7161 = vmatprep.subr.bf16.mxu0 0
      %7162 = vmatpush1.bf16.msra.mxu0 %v7110
      %7163 = vmatprep.subr.bf16.mxu0 0
      %7164 = vmatpush1.bf16.msra.mxu0 %v7111
      %7165 = vmatprep.subr.bf16.mxu0 0
      %7166 = vmatpush1.bf16.msra.mxu0 %v7112
      %7167 = vmatprep.subr.bf16.mxu0 0
      %7168 = vmatpush1.bf16.msra.mxu0 %v7113
      %7169 = vmatprep.subr.bf16.mxu0 0
      %7170 = vmatpush1.bf16.msra.mxu0 %v7114
      %7171 = vmatprep.subr.bf16.mxu0 0
      %7172 = vmatpush1.bf16.msra.mxu0 %v7115
      %7173 = vmatprep.subr.bf16.mxu0 0
      %7174 = vmatpush1.bf16.msra.mxu0 %v7116
      %7175 = vmatprep.subr.bf16.mxu0 0
      %7176 = vmatpush1.bf16.msra.mxu0 %v7117
      %7177 = vmatprep.subr.bf16.mxu0 0
      %7178 = vmatpush1.bf16.msra.mxu0 %v7118
      %7179 = vmatprep.subr.bf16.mxu0 0
      %7180 = vmatpush1.bf16.msra.mxu0 %v7119
      %7181 = vmatprep.subr.bf16.mxu0 0
      %7182 = vmatpush1.bf16.msra.mxu0 %v7120
      %7183 = vmatprep.subr.bf16.mxu0 0
      %7184 = vmatpush1.bf16.msra.mxu0 %v7121
      %7185 = vmatprep.subr.bf16.mxu0 0
      %7186 = vmatpush1.bf16.msra.mxu0 %v7122
      %7187 = vmatprep.mubr.bf16.mxu0 %v6352
      %7188 = vmatmul.mubr.bf16.gmra.mrb[0].mxu0 %v6351
      %v7189 = vpop.f32.mrb[0].mxu0
      %v7190 = vadd.f32 %v6885, %v7189
      %v7191 = vpop.f32.mrb[0].mxu0
      %v7192 = vpop.f32.mrb[0].mxu0
      %v7193 = vadd.f32 %v6888, %v7192
      %v7194 = vpop.f32.mrb[0].mxu0
      %7195 = vmatprep.mubr.bf16.mxu0 %v6355
      %7196 = vmatmul.mubr.bf16.gmra.mrb[0].mxu0 %v6354
      %v7197 = vpop.f32.mrb[0].mxu0
      %v7198 = vadd.f32 %v6893, %v7197
      %v7199 = vpop.f32.mrb[0].mxu0
      %v7200 = vpop.f32.mrb[0].mxu0
      %v7201 = vadd.f32 %v6896, %v7200
      %v7202 = vpop.f32.mrb[0].mxu0
      %7203 = vmatprep.mubr.bf16.mxu0 %v6358
      %7204 = vmatmul.mubr.bf16.gmra.mrb[0].mxu0 %v6357
      %v7205 = vpop.f32.mrb[0].mxu0
      %v7206 = vadd.f32 %v6901, %v7205
      %v7207 = vpop.f32.mrb[0].mxu0
      %v7208 = vpop.f32.mrb[0].mxu0
      %v7209 = vadd.f32 %v6904, %v7208
      %v7210 = vpop.f32.mrb[0].mxu0
      %7211 = vmatprep.mubr.bf16.mxu0 %v6361
      %7212 = vmatmul.mubr.bf16.gmra.mrb[0].mxu0 %v6360
      %v7213 = vpop.f32.mrb[0].mxu0
      %v7214 = vadd.f32 %v6909, %v7213
      %v7215 = vpop.f32.mrb[0].mxu0
      %v7216 = vpop.f32.mrb[0].mxu0
      %v7217 = vadd.f32 %v6912, %v7216
      %v7218 = vpop.f32.mrb[0].mxu0
      %7219 = vmatprep.mubr.bf16.mxu0 %v6364
      %7220 = vmatmul.mubr.bf16.gmra.mrb[0].mxu0 %v6363
      %v7221 = vpop.f32.mrb[0].mxu0
      %v7222 = vadd.f32 %v6917, %v7221
      %v7223 = vpop.f32.mrb[0].mxu0
      %v7224 = vpop.f32.mrb[0].mxu0
      %v7225 = vadd.f32 %v6920, %v7224
      %v7226 = vpop.f32.mrb[0].mxu0
      %7227 = vmatprep.mubr.bf16.mxu0 %v6367
      %7228 = vmatmul.mubr.bf16.gmra.mrb[0].mxu0 %v6366
      %v7229 = vpop.f32.mrb[0].mxu0
      %v7230 = vadd.f32 %v6925, %v7229
      %v7231 = vpop.f32.mrb[0].mxu0
      %v7232 = vpop.f32.mrb[0].mxu0
      %v7233 = vadd.f32 %v6928, %v7232
      %v7234 = vpop.f32.mrb[0].mxu0
      %7235 = vmatprep.mubr.bf16.mxu0 %v6370
      %7236 = vmatmul.mubr.bf16.gmra.mrb[0].mxu0 %v6369
      %v7237 = vpop.f32.mrb[0].mxu0
      %v7238 = vadd.f32 %v6933, %v7237
      %v7239 = vpop.f32.mrb[0].mxu0
      %v7240 = vpop.f32.mrb[0].mxu0
      %v7241 = vadd.f32 %v6936, %v7240
      %v7242 = vpop.f32.mrb[0].mxu0
      %7243 = vmatprep.mubr.bf16.mxu0 %v6373
      %7244 = vmatmul.mubr.bf16.gmra.mrb[0].mxu0 %v6372
      %v7245 = vpop.f32.mrb[0].mxu0
      %v7246 = vadd.f32 %v6941, %v7245
      %v7247 = vpop.f32.mrb[0].mxu0
      %v7248 = vpop.f32.mrb[0].mxu0
      %v7249 = vadd.f32 %v6944, %v7248
      %v7250 = vpop.f32.mrb[0].mxu0
      %7251 = vmatprep.mubr.bf16.mxu0 %v6376
      %7252 = vmatmul.mubr.bf16.gmra.mrb[0].mxu0 %v6375
      %v7253 = vpop.f32.mrb[0].mxu0
      %v7254 = vadd.f32 %v6949, %v7253
      %v7255 = vpop.f32.mrb[0].mxu0
      %v7256 = vpop.f32.mrb[0].mxu0
      %v7257 = vadd.f32 %v6952, %v7256
      %v7258 = vpop.f32.mrb[0].mxu0
      %7259 = vmatprep.mubr.bf16.mxu0 %v6379
      %7260 = vmatmul.mubr.bf16.gmra.mrb[0].mxu0 %v6378
      %v7261 = vpop.f32.mrb[0].mxu0
      %v7262 = vadd.f32 %v6957, %v7261
      %v7263 = vpop.f32.mrb[0].mxu0
      %v7264 = vpop.f32.mrb[0].mxu0
      %v7265 = vadd.f32 %v6960, %v7264
      %v7266 = vpop.f32.mrb[0].mxu0
      %7267 = vmatprep.mubr.bf16.mxu0 %v6382
      %7268 = vmatmul.mubr.bf16.gmra.mrb[0].mxu0 %v6381
      %v7269 = vpop.f32.mrb[0].mxu0
      %v7270 = vadd.f32 %v6965, %v7269
      %v7271 = vpop.f32.mrb[0].mxu0
      %v7272 = vpop.f32.mrb[0].mxu0
      %v7273 = vadd.f32 %v6968, %v7272
      %v7274 = vpop.f32.mrb[0].mxu0
      %7275 = vmatprep.mubr.bf16.mxu0 %v6385
      %7276 = vmatmul.mubr.bf16.gmra.mrb[0].mxu0 %v6384
      %v7277 = vpop.f32.mrb[0].mxu0
      %v7278 = vadd.f32 %v6973, %v7277
      %v7279 = vpop.f32.mrb[0].mxu0
      %v7280 = vpop.f32.mrb[0].mxu0
      %v7281 = vadd.f32 %v6976, %v7280
      %v7282 = vpop.f32.mrb[0].mxu0
      %7283 = vmatprep.mubr.bf16.mxu0 %v6388
      %7284 = vmatmul.mubr.bf16.gmra.mrb[0].mxu0 %v6387
      %v7285 = vpop.f32.mrb[0].mxu0
      %v7286 = vadd.f32 %v6981, %v7285
      %v7287 = vpop.f32.mrb[0].mxu0
      %v7288 = vpop.f32.mrb[0].mxu0
      %v7289 = vadd.f32 %v6984, %v7288
      %v7290 = vpop.f32.mrb[0].mxu0
      %7291 = vmatprep.mubr.bf16.mxu0 %v6391
      %7292 = vmatmul.mubr.bf16.gmra.mrb[0].mxu0 %v6390
      %v7293 = vpop.f32.mrb[0].mxu0
      %v7294 = vadd.f32 %v6989, %v7293
      %v7295 = vpop.f32.mrb[0].mxu0
      %v7296 = vpop.f32.mrb[0].mxu0
      %v7297 = vadd.f32 %v6992, %v7296
      %v7298 = vpop.f32.mrb[0].mxu0
      %7299 = vmatprep.mubr.bf16.mxu0 %v6394
      %7300 = vmatmul.mubr.bf16.gmra.mrb[0].mxu0 %v6393
      %v7301 = vpop.f32.mrb[0].mxu0
      %v7302 = vadd.f32 %v6997, %v7301
      %v7303 = vpop.f32.mrb[0].mxu0
      %v7304 = vpop.f32.mrb[0].mxu0
      %v7305 = vadd.f32 %v7000, %v7304
      %v7306 = vpop.f32.mrb[0].mxu0
      %7307 = vmatprep.mubr.bf16.mxu0 %v6397
      %7308 = vmatmul.mubr.bf16.gmra.mrb[0].mxu0 %v6396
      %v7309 = vpop.f32.mrb[0].mxu0
      %v7310 = vadd.f32 %v7005, %v7309
      %v7311 = vpop.f32.mrb[0].mxu0
      %v7312 = vpop.f32.mrb[0].mxu0
      %v7313 = vadd.f32 %v7008, %v7312
      %v7314 = vpop.f32.mrb[0].mxu0
      %7315 = vdwg.mxu0
      %7316 = vmatprep.subr.bf16.mxu0 0
      %7317 = vmatpush1.bf16.msra.mxu0 %v7123
      %7318 = vmatprep.subr.bf16.mxu0 0
      %7319 = vmatpush1.bf16.msra.mxu0 %v7124
      %7320 = vmatprep.subr.bf16.mxu0 0
      %7321 = vmatpush1.bf16.msra.mxu0 %v7125
      %7322 = vmatprep.subr.bf16.mxu0 0
      %7323 = vmatpush1.bf16.msra.mxu0 %v7126
      %7324 = vmatprep.subr.bf16.mxu0 0
      %7325 = vmatpush1.bf16.msra.mxu0 %v7127
      %7326 = vmatprep.subr.bf16.mxu0 0
      %7327 = vmatpush1.bf16.msra.mxu0 %v7128
      %7328 = vmatprep.subr.bf16.mxu0 0
      %7329 = vmatpush1.bf16.msra.mxu0 %v7129
      %7330 = vmatprep.subr.bf16.mxu0 0
      %7331 = vmatpush1.bf16.msra.mxu0 %v7130
      %7332 = vmatprep.subr.bf16.mxu0 0
      %7333 = vmatpush1.bf16.msra.mxu0 0
      %7334 = vmatprep.subr.bf16.mxu0 0
      %7335 = vmatpush1.bf16.msra.mxu0 0
      %7336 = vmatprep.subr.bf16.mxu0 0
      %7337 = vmatpush1.bf16.msra.mxu0 0
      %7338 = vmatprep.subr.bf16.mxu0 0
      %7339 = vmatpush1.bf16.msra.mxu0 0
      %7340 = vmatprep.subr.bf16.mxu0 0
      %7341 = vmatpush1.bf16.msra.mxu0 0
      %7342 = vmatprep.subr.bf16.mxu0 0
      %7343 = vmatpush1.bf16.msra.mxu0 0
      %7344 = vmatprep.subr.bf16.mxu0 0
      %7345 = vmatpush1.bf16.msra.mxu0 0
      %7346 = vmatprep.subr.bf16.mxu0 0
      %7347 = vmatpush1.bf16.msra.mxu0 0
      %7348 = vmatprep.mubr.bf16.mxu0 0
      %7349 = vmatmul.mubr.bf16.gmra.mrb[0].mxu0 %v6353
      %v7350 = vpop.f32.mrb[0].mxu0
      %v7351 = vadd.f32 %v7190, %v7350
      %v7352 = vpop.f32.mrb[0].mxu0
      %v7353 = vpop.f32.mrb[0].mxu0
      %v7354 = vadd.f32 %v7193, %v7353
      %v7355 = vpop.f32.mrb[0].mxu0
      %7356 = vmatprep.mubr.bf16.mxu0 0
      %7357 = vmatmul.mubr.bf16.gmra.mrb[0].mxu0 %v6356
      %v7358 = vpop.f32.mrb[0].mxu0
      %v7359 = vadd.f32 %v7198, %v7358
      %v7360 = vpop.f32.mrb[0].mxu0
      %v7361 = vpop.f32.mrb[0].mxu0
      %v7362 = vadd.f32 %v7201, %v7361
      %v7363 = vpop.f32.mrb[0].mxu0
      %7364 = vmatprep.mubr.bf16.mxu0 0
      %7365 = vmatmul.mubr.bf16.gmra.mrb[0].mxu0 %v6359
      %v7366 = vpop.f32.mrb[0].mxu0
      %v7367 = vadd.f32 %v7206, %v7366
      %v7368 = vpop.f32.mrb[0].mxu0
      %v7369 = vpop.f32.mrb[0].mxu0
      %v7370 = vadd.f32 %v7209, %v7369
      %v7371 = vpop.f32.mrb[0].mxu0
      %7372 = vmatprep.mubr.bf16.mxu0 0
      %7373 = vmatmul.mubr.bf16.gmra.mrb[0].mxu0 %v6362
      %v7374 = vpop.f32.mrb[0].mxu0
      %v7375 = vadd.f32 %v7214, %v7374
      %v7376 = vpop.f32.mrb[0].mxu0
      %v7377 = vpop.f32.mrb[0].mxu0
      %v7378 = vadd.f32 %v7217, %v7377
      %v7379 = vpop.f32.mrb[0].mxu0
      %7380 = vmatprep.mubr.bf16.mxu0 0
      %7381 = vmatmul.mubr.bf16.gmra.mrb[0].mxu0 %v6365
      %v7382 = vpop.f32.mrb[0].mxu0
      %v7383 = vadd.f32 %v7222, %v7382
      %v7384 = vpop.f32.mrb[0].mxu0
      %v7385 = vpop.f32.mrb[0].mxu0
      %v7386 = vadd.f32 %v7225, %v7385
      %v7387 = vpop.f32.mrb[0].mxu0
      %7388 = vmatprep.mubr.bf16.mxu0 0
      %7389 = vmatmul.mubr.bf16.gmra.mrb[0].mxu0 %v6368
      %v7390 = vpop.f32.mrb[0].mxu0
      %v7391 = vadd.f32 %v7230, %v7390
      %v7392 = vpop.f32.mrb[0].mxu0
      %v7393 = vpop.f32.mrb[0].mxu0
      %v7394 = vadd.f32 %v7233, %v7393
      %v7395 = vpop.f32.mrb[0].mxu0
      %7396 = vmatprep.mubr.bf16.mxu0 0
      %7397 = vmatmul.mubr.bf16.gmra.mrb[0].mxu0 %v6371
      %v7398 = vpop.f32.mrb[0].mxu0
      %v7399 = vadd.f32 %v7238, %v7398
      %v7400 = vpop.f32.mrb[0].mxu0
      %v7401 = vpop.f32.mrb[0].mxu0
      %v7402 = vadd.f32 %v7241, %v7401
      %v7403 = vpop.f32.mrb[0].mxu0
      %7404 = vmatprep.mubr.bf16.mxu0 0
      %7405 = vmatmul.mubr.bf16.gmra.mrb[0].mxu0 %v6374
      %v7406 = vpop.f32.mrb[0].mxu0
      %v7407 = vadd.f32 %v7246, %v7406
      %v7408 = vpop.f32.mrb[0].mxu0
      %v7409 = vpop.f32.mrb[0].mxu0
      %v7410 = vadd.f32 %v7249, %v7409
      %v7411 = vpop.f32.mrb[0].mxu0
      %7412 = vmatprep.mubr.bf16.mxu0 0
      %7413 = vmatmul.mubr.bf16.gmra.mrb[0].mxu0 %v6377
      %v7414 = vpop.f32.mrb[0].mxu0
      %v7415 = vadd.f32 %v7254, %v7414
      %v7416 = vpop.f32.mrb[0].mxu0
      %v7417 = vpop.f32.mrb[0].mxu0
      %v7418 = vadd.f32 %v7257, %v7417
      %v7419 = vpop.f32.mrb[0].mxu0
      %7420 = vmatprep.mubr.bf16.mxu0 0
      %7421 = vmatmul.mubr.bf16.gmra.mrb[0].mxu0 %v6380
      %v7422 = vpop.f32.mrb[0].mxu0
      %v7423 = vadd.f32 %v7262, %v7422
      %v7424 = vpop.f32.mrb[0].mxu0
      %v7425 = vpop.f32.mrb[0].mxu0
      %v7426 = vadd.f32 %v7265, %v7425
      %v7427 = vpop.f32.mrb[0].mxu0
      %7428 = vmatprep.mubr.bf16.mxu0 0
      %7429 = vmatmul.mubr.bf16.gmra.mrb[0].mxu0 %v6383
      %v7430 = vpop.f32.mrb[0].mxu0
      %v7431 = vadd.f32 %v7270, %v7430
      %v7432 = vpop.f32.mrb[0].mxu0
      %v7433 = vpop.f32.mrb[0].mxu0
      %v7434 = vadd.f32 %v7273, %v7433
      %v7435 = vpop.f32.mrb[0].mxu0
      %7436 = vmatprep.mubr.bf16.mxu0 0
      %7437 = vmatmul.mubr.bf16.gmra.mrb[0].mxu0 %v6386
      %v7438 = vpop.f32.mrb[0].mxu0
      %v7439 = vadd.f32 %v7278, %v7438
      %v7440 = vpop.f32.mrb[0].mxu0
      %v7441 = vpop.f32.mrb[0].mxu0
      %v7442 = vadd.f32 %v7281, %v7441
      %v7443 = vpop.f32.mrb[0].mxu0
      %7444 = vmatprep.mubr.bf16.mxu0 0
      %7445 = vmatmul.mubr.bf16.gmra.mrb[0].mxu0 %v6389
      %v7446 = vpop.f32.mrb[0].mxu0
      %v7447 = vadd.f32 %v7286, %v7446
      %v7448 = vpop.f32.mrb[0].mxu0
      %v7449 = vpop.f32.mrb[0].mxu0
      %v7450 = vadd.f32 %v7289, %v7449
      %v7451 = vpop.f32.mrb[0].mxu0
      %7452 = vmatprep.mubr.bf16.mxu0 0
      %7453 = vmatmul.mubr.bf16.gmra.mrb[0].mxu0 %v6392
      %v7454 = vpop.f32.mrb[0].mxu0
      %v7455 = vadd.f32 %v7294, %v7454
      %v7456 = vpop.f32.mrb[0].mxu0
      %v7457 = vpop.f32.mrb[0].mxu0
      %v7458 = vadd.f32 %v7297, %v7457
      %v7459 = vpop.f32.mrb[0].mxu0
      %7460 = vmatprep.mubr.bf16.mxu0 0
      %7461 = vmatmul.mubr.bf16.gmra.mrb[0].mxu0 %v6395
      %v7462 = vpop.f32.mrb[0].mxu0
      %v7463 = vadd.f32 %v7302, %v7462
      %v7464 = vpop.f32.mrb[0].mxu0
      %v7465 = vpop.f32.mrb[0].mxu0
      %v7466 = vadd.f32 %v7305, %v7465
      %v7467 = vpop.f32.mrb[0].mxu0
      %7468 = vmatprep.mubr.bf16.mxu0 0
      %7469 = vmatmul.mubr.bf16.gmra.mrb[0].mxu0 %v6398
      %v7470 = vpop.f32.mrb[0].mxu0
      %v7471 = vadd.f32 %v7310, %v7470
      %v7472 = vpop.f32.mrb[0].mxu0
      %v7473 = vpop.f32.mrb[0].mxu0
      %v7474 = vadd.f32 %v7313, %v7473
      %v7475 = vpop.f32.mrb[0].mxu0
      %7476 = vdwg.mxu0
      %v7477 = vld [vmem:[%s2780] sm:$0xff]
      %v7478 = vld [vmem:[%s2780 + $0x8] sm:$0xff]
      %v7479 = vld [vmem:[%s2780 + $0x10] sm:$0xff]
      %v7480 = vld [vmem:[%s2780 + $0x18] sm:$0xff]
      %v7481 = vld [vmem:[%s2780 + $0x20] sm:$0xff]
      %v7482 = vld [vmem:[%s2780 + $0x28] sm:$0xff]
      %v7483 = vld [vmem:[%s2780 + $0x30] sm:$0xff]
      %v7484 = vld [vmem:[%s2780 + $0x38] sm:$0xff]
      %v7485 = vld [vmem:[%s2780 + $0x40] sm:$0xff]
      %v7486 = vld [vmem:[%s2780 + $0x48] sm:$0xff]
      %v7487 = vld [vmem:[%s2780 + $0x50] sm:$0xff]
      %v7488 = vld [vmem:[%s2780 + $0x58] sm:$0xff]
      %v7489 = vld [vmem:[%s2780 + $0x60] sm:$0xff]
      %v7490 = vld [vmem:[%s2780 + $0x68] sm:$0xff]
      %v7491 = vld [vmem:[%s2780 + $0x70] sm:$0xff]
      %v7492 = vld [vmem:[%s2780 + $0x78] sm:$0xff]
      %v7493 = vld [vmem:[%s2780 + $0x80] sm:$0xff]
      %v7494 = vld [vmem:[%s2780 + $0x88] sm:$0xff]
      %v7495 = vld [vmem:[%s2780 + $0x90] sm:$0xff]
      %v7496 = vld [vmem:[%s2780 + $0x98] sm:$0xff]
      %v7497 = vld [vmem:[%s2780 + $0xa0] sm:$0xff]
      %v7498 = vld [vmem:[%s2780 + $0xa8] sm:$0xff]
      %v7499 = vld [vmem:[%s2780 + $0xb0] sm:$0xff]
      %v7500 = vld [vmem:[%s2780 + $0xb8] sm:$0xff]
      %v7501 = vld [vmem:[%s2780 + $0xc0] sm:$0xff]
      %v7502 = vld [vmem:[%s2780 + $0xc8] sm:$0xff]
      %v7503 = vld [vmem:[%s2780 + $0xd0] sm:$0xff]
      %v7504 = vld [vmem:[%s2780 + $0xd8] sm:$0xff]
      %v7505 = vld [vmem:[%s2780 + $0xe0] sm:$0xff]
      %v7506 = vld [vmem:[%s2780 + $0xe8] sm:$0xff]
      %v7507 = vld [vmem:[%s2780 + $0xf0] sm:$0xff]
      %v7508 = vld [vmem:[%s2780 + $0xf8] sm:$0xff]
      %v7509 = vld [vmem:[%s2780 + $0x100] sm:$0xff]
      %v7510 = vld [vmem:[%s2780 + $0x108] sm:$0xff]
      %v7511 = vld [vmem:[%s2780 + $0x110] sm:$0xff]
      %v7512 = vld [vmem:[%s2780 + $0x118] sm:$0xff]
      %v7513 = vld [vmem:[%s2780 + $0x120] sm:$0xff]
      %v7514 = vld [vmem:[%s2780 + $0x128] sm:$0xff]
      %v7515 = vld [vmem:[%s2780 + $0x130] sm:$0xff]
      %v7516 = vld [vmem:[%s2780 + $0x138] sm:$0xff]
      %v7517 = vld [vmem:[%s2780 + $0x140] sm:$0xff]
      %v7518 = vld [vmem:[%s2780 + $0x148] sm:$0xff]
      %v7519 = vld [vmem:[%s2780 + $0x150] sm:$0xff]
      %v7520 = vld [vmem:[%s2780 + $0x158] sm:$0xff]
      %v7521 = vld [vmem:[%s2780 + $0x160] sm:$0xff]
      %v7522 = vld [vmem:[%s2780 + $0x168] sm:$0xff]
      %v7523 = vld [vmem:[%s2780 + $0x170] sm:$0xff]
      %v7524 = vld [vmem:[%s2780 + $0x178] sm:$0xff]
      %s7525 = scalar_lea.vmem %s498, 1536
      %v7526 = vld [vmem:[%s7525] sm:$0xf]
      %v7527 = vld [vmem:[%s7525 + $0x4] sm:$0xf]
      %v7528 = vld [vmem:[%s7525 + $0x8] sm:$0xf]
      %v7529 = vld [vmem:[%s7525 + $0xc] sm:$0xf]
      %v7530 = vld [vmem:[%s7525 + $0x10] sm:$0xf]
      %v7531 = vld [vmem:[%s7525 + $0x14] sm:$0xf]
      %v7532 = vld [vmem:[%s7525 + $0x18] sm:$0xf]
      %v7533 = vld [vmem:[%s7525 + $0x1c] sm:$0xf]
      %v7534 = vld [vmem:[%s7525 + $0x20] sm:$0xf]
      %v7535 = vld [vmem:[%s7525 + $0x24] sm:$0xf]
      %v7536 = vld [vmem:[%s7525 + $0x28] sm:$0xf]
      %v7537 = vld [vmem:[%s7525 + $0x2c] sm:$0xf]
      %v7538 = vld [vmem:[%s7525 + $0x30] sm:$0xf]
      %v7539 = vld [vmem:[%s7525 + $0x34] sm:$0xf]
      %v7540 = vld [vmem:[%s7525 + $0x38] sm:$0xf]
      %v7541 = vld [vmem:[%s7525 + $0x3c] sm:$0xf]
      %v7542 = vld [vmem:[%s7525 + $0x40] sm:$0xf]
      %v7543 = vld [vmem:[%s7525 + $0x44] sm:$0xf]
      %v7544 = vld [vmem:[%s7525 + $0x48] sm:$0xf]
      %v7545 = vld [vmem:[%s7525 + $0x4c] sm:$0xf]
      %v7546 = vld [vmem:[%s7525 + $0x50] sm:$0xf]
      %v7547 = vld [vmem:[%s7525 + $0x54] sm:$0xf]
      %v7548 = vld [vmem:[%s7525 + $0x58] sm:$0xf]
      %v7549 = vld [vmem:[%s7525 + $0x5c] sm:$0xf]
      %v7550 = vld [vmem:[%s7525 + $0x60] sm:$0xf]
      %v7551 = vld [vmem:[%s7525 + $0x64] sm:$0xf]
      %v7552 = vld [vmem:[%s7525 + $0x68] sm:$0xf]
      %v7553 = vld [vmem:[%s7525 + $0x6c] sm:$0xf]
      %v7554 = vld [vmem:[%s7525 + $0x70] sm:$0xf]
      %v7555 = vld [vmem:[%s7525 + $0x74] sm:$0xf]
      %v7556 = vld [vmem:[%s7525 + $0x78] sm:$0xf]
      %v7557 = vld [vmem:[%s7525 + $0x7c] sm:$0xf]
      %v7558 = vld [vmem:[%s7525 + $0x80] sm:$0xf]
      %v7559 = vld [vmem:[%s7525 + $0x84] sm:$0xf]
      %v7560 = vld [vmem:[%s7525 + $0x88] sm:$0xf]
      %v7561 = vld [vmem:[%s7525 + $0x8c] sm:$0xf]
      %v7562 = vld [vmem:[%s7525 + $0x90] sm:$0xf]
      %v7563 = vld [vmem:[%s7525 + $0x94] sm:$0xf]
      %v7564 = vld [vmem:[%s7525 + $0x98] sm:$0xf]
      %v7565 = vld [vmem:[%s7525 + $0x9c] sm:$0xf]
      %v7566 = vld [vmem:[%s7525 + $0xa0] sm:$0xf]
      %v7567 = vld [vmem:[%s7525 + $0xa4] sm:$0xf]
      %v7568 = vld [vmem:[%s7525 + $0xa8] sm:$0xf]
      %v7569 = vld [vmem:[%s7525 + $0xac] sm:$0xf]
      %v7570 = vld [vmem:[%s7525 + $0xb0] sm:$0xf]
      %v7571 = vld [vmem:[%s7525 + $0xb4] sm:$0xf]
      %v7572 = vld [vmem:[%s7525 + $0xb8] sm:$0xf]
      %v7573 = vld [vmem:[%s7525 + $0xbc] sm:$0xf]
      %v7622 = vunpack.c.l.b16 %v7526
      %v7623 = vunpack.c.l.b16 %v7527
      %v7624 = vunpack.c.l.b16 %v7528
      %v7625 = vunpack.c.l.b16 %v7529
      %v7626 = vunpack.c.l.b16 %v7530
      %v7627 = vunpack.c.l.b16 %v7531
      %v7628 = vunpack.c.l.b16 %v7532
      %v7629 = vunpack.c.l.b16 %v7533
      %v7630 = vunpack.c.l.b16 %v7534
      %v7631 = vunpack.c.l.b16 %v7535
      %v7632 = vunpack.c.l.b16 %v7536
      %v7633 = vunpack.c.l.b16 %v7537
      %v7634 = vunpack.c.l.b16 %v7538
      %v7635 = vunpack.c.l.b16 %v7539
      %v7636 = vunpack.c.l.b16 %v7540
      %v7637 = vunpack.c.l.b16 %v7541
      %v7638 = vunpack.c.l.b16 %v7542
      %v7639 = vunpack.c.l.b16 %v7543
      %v7640 = vunpack.c.l.b16 %v7544
      %v7641 = vunpack.c.l.b16 %v7545
      %v7642 = vunpack.c.l.b16 %v7546
      %v7643 = vunpack.c.l.b16 %v7547
      %v7644 = vunpack.c.l.b16 %v7548
      %v7645 = vunpack.c.l.b16 %v7549
      %v7646 = vunpack.c.l.b16 %v7550
      %v7647 = vunpack.c.l.b16 %v7551
      %v7648 = vunpack.c.l.b16 %v7552
      %v7649 = vunpack.c.l.b16 %v7553
      %v7650 = vunpack.c.l.b16 %v7554
      %v7651 = vunpack.c.l.b16 %v7555
      %v7652 = vunpack.c.l.b16 %v7556
      %v7653 = vunpack.c.l.b16 %v7557
      %v7654 = vunpack.c.l.b16 %v7558
      %v7655 = vunpack.c.l.b16 %v7559
      %v7656 = vunpack.c.l.b16 %v7560
      %v7657 = vunpack.c.l.b16 %v7561
      %v7658 = vunpack.c.l.b16 %v7562
      %v7659 = vunpack.c.l.b16 %v7563
      %v7660 = vunpack.c.l.b16 %v7564
      %v7661 = vunpack.c.l.b16 %v7565
      %v7662 = vunpack.c.l.b16 %v7566
      %v7663 = vunpack.c.l.b16 %v7567
      %v7664 = vunpack.c.l.b16 %v7568
      %v7665 = vunpack.c.l.b16 %v7569
      %v7666 = vunpack.c.l.b16 %v7570
      %v7667 = vunpack.c.l.b16 %v7571
      %v7668 = vunpack.c.l.b16 %v7572
      %v7669 = vunpack.c.l.b16 %v7573
      %v7670 = vpack.c.b16 %v7623, %v7622
      %v7671 = vpack.c.b16 %v7625, %v7624
      %v7672 = vpack.c.b16 %v7627, %v7626
      %v7673 = vpack.c.b16 %v7629, %v7628
      %v7674 = vpack.c.b16 %v7631, %v7630
      %v7675 = vpack.c.b16 %v7633, %v7632
      %v7676 = vpack.c.b16 %v7635, %v7634
      %v7677 = vpack.c.b16 %v7637, %v7636
      %v7678 = vpack.c.b16 %v7639, %v7638
      %v7679 = vpack.c.b16 %v7641, %v7640
      %v7680 = vpack.c.b16 %v7643, %v7642
      %v7681 = vpack.c.b16 %v7645, %v7644
      %v7682 = vpack.c.b16 %v7647, %v7646
      %v7683 = vpack.c.b16 %v7649, %v7648
      %v7684 = vpack.c.b16 %v7651, %v7650
      %v7685 = vpack.c.b16 %v7653, %v7652
      %v7686 = vpack.c.b16 %v7655, %v7654
      %v7687 = vpack.c.b16 %v7657, %v7656
      %v7688 = vpack.c.b16 %v7659, %v7658
      %v7689 = vpack.c.b16 %v7661, %v7660
      %v7690 = vpack.c.b16 %v7663, %v7662
      %v7691 = vpack.c.b16 %v7665, %v7664
      %v7692 = vpack.c.b16 %v7667, %v7666
      %v7693 = vpack.c.b16 %v7669, %v7668
      %7718 = vmatprep.subr.bf16.mxu0 0
      %7719 = vmatpush1.bf16.msra.mxu0 %v7670
      %7720 = vmatprep.subr.bf16.mxu0 0
      %7721 = vmatpush1.bf16.msra.mxu0 %v7671
      %7722 = vmatprep.subr.bf16.mxu0 0
      %7723 = vmatpush1.bf16.msra.mxu0 %v7672
      %7724 = vmatprep.subr.bf16.mxu0 0
      %7725 = vmatpush1.bf16.msra.mxu0 %v7673
      %7726 = vmatprep.subr.bf16.mxu0 0
      %7727 = vmatpush1.bf16.msra.mxu0 %v7674
      %7728 = vmatprep.subr.bf16.mxu0 0
      %7729 = vmatpush1.bf16.msra.mxu0 %v7675
      %7730 = vmatprep.subr.bf16.mxu0 0
      %7731 = vmatpush1.bf16.msra.mxu0 %v7676
      %7732 = vmatprep.subr.bf16.mxu0 0
      %7733 = vmatpush1.bf16.msra.mxu0 %v7677
      %7734 = vmatprep.subr.bf16.mxu0 0
      %7735 = vmatpush1.bf16.msra.mxu0 %v7678
      %7736 = vmatprep.subr.bf16.mxu0 0
      %7737 = vmatpush1.bf16.msra.mxu0 %v7679
      %7738 = vmatprep.subr.bf16.mxu0 0
      %7739 = vmatpush1.bf16.msra.mxu0 %v7680
      %7740 = vmatprep.subr.bf16.mxu0 0
      %7741 = vmatpush1.bf16.msra.mxu0 %v7681
      %7742 = vmatprep.subr.bf16.mxu0 0
      %7743 = vmatpush1.bf16.msra.mxu0 %v7682
      %7744 = vmatprep.subr.bf16.mxu0 0
      %7745 = vmatpush1.bf16.msra.mxu0 %v7683
      %7746 = vmatprep.subr.bf16.mxu0 0
      %7747 = vmatpush1.bf16.msra.mxu0 %v7684
      %7748 = vmatprep.subr.bf16.mxu0 0
      %7749 = vmatpush1.bf16.msra.mxu0 %v7685
      %7750 = vmatprep.mubr.bf16.mxu0 %v7478
      %7751 = vmatmul.mubr.bf16.gmra.mrb[0].mxu0 %v7477
      %v7752 = vpop.f32.mrb[0].mxu0
      %v7753 = vadd.f32 0.0, %v7752
      %v7754 = vpop.f32.mrb[0].mxu0
      %v7755 = vpop.f32.mrb[0].mxu0
      %v7756 = vadd.f32 0.0, %v7755
      %v7757 = vpop.f32.mrb[0].mxu0
      %7758 = vmatprep.mubr.bf16.mxu0 %v7481
      %7759 = vmatmul.mubr.bf16.gmra.mrb[0].mxu0 %v7480
      %v7760 = vpop.f32.mrb[0].mxu0
      %v7761 = vadd.f32 0.0, %v7760
      %v7762 = vpop.f32.mrb[0].mxu0
      %v7763 = vpop.f32.mrb[0].mxu0
      %v7764 = vadd.f32 0.0, %v7763
      %v7765 = vpop.f32.mrb[0].mxu0
      %7766 = vmatprep.mubr.bf16.mxu0 %v7484
      %7767 = vmatmul.mubr.bf16.gmra.mrb[0].mxu0 %v7483
      %v7768 = vpop.f32.mrb[0].mxu0
      %v7769 = vadd.f32 0.0, %v7768
      %v7770 = vpop.f32.mrb[0].mxu0
      %v7771 = vpop.f32.mrb[0].mxu0
      %v7772 = vadd.f32 0.0, %v7771
      %v7773 = vpop.f32.mrb[0].mxu0
      %7774 = vmatprep.mubr.bf16.mxu0 %v7487
      %7775 = vmatmul.mubr.bf16.gmra.mrb[0].mxu0 %v7486
      %v7776 = vpop.f32.mrb[0].mxu0
      %v7777 = vadd.f32 0.0, %v7776
      %v7778 = vpop.f32.mrb[0].mxu0
      %v7779 = vpop.f32.mrb[0].mxu0
      %v7780 = vadd.f32 0.0, %v7779
      %v7781 = vpop.f32.mrb[0].mxu0
      %7782 = vmatprep.mubr.bf16.mxu0 %v7490
      %7783 = vmatmul.mubr.bf16.gmra.mrb[0].mxu0 %v7489
      %v7784 = vpop.f32.mrb[0].mxu0
      %v7785 = vadd.f32 0.0, %v7784
      %v7786 = vpop.f32.mrb[0].mxu0
      %v7787 = vpop.f32.mrb[0].mxu0
      %v7788 = vadd.f32 0.0, %v7787
      %v7789 = vpop.f32.mrb[0].mxu0
      %7790 = vmatprep.mubr.bf16.mxu0 %v7493
      %7791 = vmatmul.mubr.bf16.gmra.mrb[0].mxu0 %v7492
      %v7792 = vpop.f32.mrb[0].mxu0
      %v7793 = vadd.f32 0.0, %v7792
      %v7794 = vpop.f32.mrb[0].mxu0
      %v7795 = vpop.f32.mrb[0].mxu0
      %v7796 = vadd.f32 0.0, %v7795
      %v7797 = vpop.f32.mrb[0].mxu0
      %7798 = vmatprep.mubr.bf16.mxu0 %v7496
      %7799 = vmatmul.mubr.bf16.gmra.mrb[0].mxu0 %v7495
      %v7800 = vpop.f32.mrb[0].mxu0
      %v7801 = vadd.f32 0.0, %v7800
      %v7802 = vpop.f32.mrb[0].mxu0
      %v7803 = vpop.f32.mrb[0].mxu0
      %v7804 = vadd.f32 0.0, %v7803
      %v7805 = vpop.f32.mrb[0].mxu0
      %7806 = vmatprep.mubr.bf16.mxu0 %v7499
      %7807 = vmatmul.mubr.bf16.gmra.mrb[0].mxu0 %v7498
      %v7808 = vpop.f32.mrb[0].mxu0
      %v7809 = vadd.f32 0.0, %v7808
      %v7810 = vpop.f32.mrb[0].mxu0
      %v7811 = vpop.f32.mrb[0].mxu0
      %v7812 = vadd.f32 0.0, %v7811
      %v7813 = vpop.f32.mrb[0].mxu0
      %7814 = vmatprep.mubr.bf16.mxu0 %v7502
      %7815 = vmatmul.mubr.bf16.gmra.mrb[0].mxu0 %v7501
      %v7816 = vpop.f32.mrb[0].mxu0
      %v7817 = vadd.f32 0.0, %v7816
      %v7818 = vpop.f32.mrb[0].mxu0
      %v7819 = vpop.f32.mrb[0].mxu0
      %v7820 = vadd.f32 0.0, %v7819
      %v7821 = vpop.f32.mrb[0].mxu0
      %7822 = vmatprep.mubr.bf16.mxu0 %v7505
      %7823 = vmatmul.mubr.bf16.gmra.mrb[0].mxu0 %v7504
      %v7824 = vpop.f32.mrb[0].mxu0
      %v7825 = vadd.f32 0.0, %v7824
      %v7826 = vpop.f32.mrb[0].mxu0
      %v7827 = vpop.f32.mrb[0].mxu0
      %v7828 = vadd.f32 0.0, %v7827
      %v7829 = vpop.f32.mrb[0].mxu0
      %7830 = vmatprep.mubr.bf16.mxu0 %v7508
      %7831 = vmatmul.mubr.bf16.gmra.mrb[0].mxu0 %v7507
      %v7832 = vpop.f32.mrb[0].mxu0
      %v7833 = vadd.f32 0.0, %v7832
      %v7834 = vpop.f32.mrb[0].mxu0
      %v7835 = vpop.f32.mrb[0].mxu0
      %v7836 = vadd.f32 0.0, %v7835
      %v7837 = vpop.f32.mrb[0].mxu0
      %7838 = vmatprep.mubr.bf16.mxu0 %v7511
      %7839 = vmatmul.mubr.bf16.gmra.mrb[0].mxu0 %v7510
      %v7840 = vpop.f32.mrb[0].mxu0
      %v7841 = vadd.f32 0.0, %v7840
      %v7842 = vpop.f32.mrb[0].mxu0
      %v7843 = vpop.f32.mrb[0].mxu0
      %v7844 = vadd.f32 0.0, %v7843
      %v7845 = vpop.f32.mrb[0].mxu0
      %7846 = vmatprep.mubr.bf16.mxu0 %v7514
      %7847 = vmatmul.mubr.bf16.gmra.mrb[0].mxu0 %v7513
      %v7848 = vpop.f32.mrb[0].mxu0
      %v7849 = vadd.f32 0.0, %v7848
      %v7850 = vpop.f32.mrb[0].mxu0
      %v7851 = vpop.f32.mrb[0].mxu0
      %v7852 = vadd.f32 0.0, %v7851
      %v7853 = vpop.f32.mrb[0].mxu0
      %7854 = vmatprep.mubr.bf16.mxu0 %v7517
      %7855 = vmatmul.mubr.bf16.gmra.mrb[0].mxu0 %v7516
      %v7856 = vpop.f32.mrb[0].mxu0
      %v7857 = vadd.f32 0.0, %v7856
      %v7858 = vpop.f32.mrb[0].mxu0
      %v7859 = vpop.f32.mrb[0].mxu0
      %v7860 = vadd.f32 0.0, %v7859
      %v7861 = vpop.f32.mrb[0].mxu0
      %7862 = vmatprep.mubr.bf16.mxu0 %v7520
      %7863 = vmatmul.mubr.bf16.gmra.mrb[0].mxu0 %v7519
      %v7864 = vpop.f32.mrb[0].mxu0
      %v7865 = vadd.f32 0.0, %v7864
      %v7866 = vpop.f32.mrb[0].mxu0
      %v7867 = vpop.f32.mrb[0].mxu0
      %v7868 = vadd.f32 0.0, %v7867
      %v7869 = vpop.f32.mrb[0].mxu0
      %7870 = vmatprep.mubr.bf16.mxu0 %v7523
      %7871 = vmatmul.mubr.bf16.gmra.mrb[0].mxu0 %v7522
      %v7872 = vpop.f32.mrb[0].mxu0
      %v7873 = vadd.f32 0.0, %v7872
      %v7874 = vpop.f32.mrb[0].mxu0
      %v7875 = vpop.f32.mrb[0].mxu0
      %v7876 = vadd.f32 0.0, %v7875
      %v7877 = vpop.f32.mrb[0].mxu0
      %7878 = vdwg.mxu0
      %7879 = vmatprep.subr.bf16.mxu0 0
      %7880 = vmatpush1.bf16.msra.mxu0 %v7686
      %7881 = vmatprep.subr.bf16.mxu0 0
      %7882 = vmatpush1.bf16.msra.mxu0 %v7687
      %7883 = vmatprep.subr.bf16.mxu0 0
      %7884 = vmatpush1.bf16.msra.mxu0 %v7688
      %7885 = vmatprep.subr.bf16.mxu0 0
      %7886 = vmatpush1.bf16.msra.mxu0 %v7689
      %7887 = vmatprep.subr.bf16.mxu0 0
      %7888 = vmatpush1.bf16.msra.mxu0 %v7690
      %7889 = vmatprep.subr.bf16.mxu0 0
      %7890 = vmatpush1.bf16.msra.mxu0 %v7691
      %7891 = vmatprep.subr.bf16.mxu0 0
      %7892 = vmatpush1.bf16.msra.mxu0 %v7692
      %7893 = vmatprep.subr.bf16.mxu0 0
      %7894 = vmatpush1.bf16.msra.mxu0 %v7693
      %7895 = vmatprep.subr.bf16.mxu0 0
      %7896 = vmatpush1.bf16.msra.mxu0 0
      %7897 = vmatprep.subr.bf16.mxu0 0
      %7898 = vmatpush1.bf16.msra.mxu0 0
      %7899 = vmatprep.subr.bf16.mxu0 0
      %7900 = vmatpush1.bf16.msra.mxu0 0
      %7901 = vmatprep.subr.bf16.mxu0 0
      %7902 = vmatpush1.bf16.msra.mxu0 0
      %7903 = vmatprep.subr.bf16.mxu0 0
      %7904 = vmatpush1.bf16.msra.mxu0 0
      %7905 = vmatprep.subr.bf16.mxu0 0
      %7906 = vmatpush1.bf16.msra.mxu0 0
      %7907 = vmatprep.subr.bf16.mxu0 0
      %7908 = vmatpush1.bf16.msra.mxu0 0
      %7909 = vmatprep.subr.bf16.mxu0 0
      %7910 = vmatpush1.bf16.msra.mxu0 0
      %7911 = vmatprep.mubr.bf16.mxu0 0
      %7912 = vmatmul.mubr.bf16.gmra.mrb[0].mxu0 %v7479
      %v7913 = vpop.f32.mrb[0].mxu0
      %v7914 = vadd.f32 %v7753, %v7913
      %v7915 = vpop.f32.mrb[0].mxu0
      %v7916 = vpop.f32.mrb[0].mxu0
      %v7917 = vadd.f32 %v7756, %v7916
      %v7918 = vpop.f32.mrb[0].mxu0
      %7919 = vmatprep.mubr.bf16.mxu0 0
      %7920 = vmatmul.mubr.bf16.gmra.mrb[0].mxu0 %v7482
      %v7921 = vpop.f32.mrb[0].mxu0
      %v7922 = vadd.f32 %v7761, %v7921
      %v7923 = vpop.f32.mrb[0].mxu0
      %v7924 = vpop.f32.mrb[0].mxu0
      %v7925 = vadd.f32 %v7764, %v7924
      %v7926 = vpop.f32.mrb[0].mxu0
      %7927 = vmatprep.mubr.bf16.mxu0 0
      %7928 = vmatmul.mubr.bf16.gmra.mrb[0].mxu0 %v7485
      %v7929 = vpop.f32.mrb[0].mxu0
      %v7930 = vadd.f32 %v7769, %v7929
      %v7931 = vpop.f32.mrb[0].mxu0
      %v7932 = vpop.f32.mrb[0].mxu0
      %v7933 = vadd.f32 %v7772, %v7932
      %v7934 = vpop.f32.mrb[0].mxu0
      %7935 = vmatprep.mubr.bf16.mxu0 0
      %7936 = vmatmul.mubr.bf16.gmra.mrb[0].mxu0 %v7488
      %v7937 = vpop.f32.mrb[0].mxu0
      %v7938 = vadd.f32 %v7777, %v7937
      %v7939 = vpop.f32.mrb[0].mxu0
      %v7940 = vpop.f32.mrb[0].mxu0
      %v7941 = vadd.f32 %v7780, %v7940
      %v7942 = vpop.f32.mrb[0].mxu0
      %7943 = vmatprep.mubr.bf16.mxu0 0
      %7944 = vmatmul.mubr.bf16.gmra.mrb[0].mxu0 %v7491
      %v7945 = vpop.f32.mrb[0].mxu0
      %v7946 = vadd.f32 %v7785, %v7945
      %v7947 = vpop.f32.mrb[0].mxu0
      %v7948 = vpop.f32.mrb[0].mxu0
      %v7949 = vadd.f32 %v7788, %v7948
      %v7950 = vpop.f32.mrb[0].mxu0
      %7951 = vmatprep.mubr.bf16.mxu0 0
      %7952 = vmatmul.mubr.bf16.gmra.mrb[0].mxu0 %v7494
      %v7953 = vpop.f32.mrb[0].mxu0
      %v7954 = vadd.f32 %v7793, %v7953
      %v7955 = vpop.f32.mrb[0].mxu0
      %v7956 = vpop.f32.mrb[0].mxu0
      %v7957 = vadd.f32 %v7796, %v7956
      %v7958 = vpop.f32.mrb[0].mxu0
      %7959 = vmatprep.mubr.bf16.mxu0 0
      %7960 = vmatmul.mubr.bf16.gmra.mrb[0].mxu0 %v7497
      %v7961 = vpop.f32.mrb[0].mxu0
      %v7962 = vadd.f32 %v7801, %v7961
      %v7963 = vpop.f32.mrb[0].mxu0
      %v7964 = vpop.f32.mrb[0].mxu0
      %v7965 = vadd.f32 %v7804, %v7964
      %v7966 = vpop.f32.mrb[0].mxu0
      %7967 = vmatprep.mubr.bf16.mxu0 0
      %7968 = vmatmul.mubr.bf16.gmra.mrb[0].mxu0 %v7500
      %v7969 = vpop.f32.mrb[0].mxu0
      %v7970 = vadd.f32 %v7809, %v7969
      %v7971 = vpop.f32.mrb[0].mxu0
      %v7972 = vpop.f32.mrb[0].mxu0
      %v7973 = vadd.f32 %v7812, %v7972
      %v7974 = vpop.f32.mrb[0].mxu0
      %7975 = vmatprep.mubr.bf16.mxu0 0
      %7976 = vmatmul.mubr.bf16.gmra.mrb[0].mxu0 %v7503
      %v7977 = vpop.f32.mrb[0].mxu0
      %v7978 = vadd.f32 %v7817, %v7977
      %v7979 = vpop.f32.mrb[0].mxu0
      %v7980 = vpop.f32.mrb[0].mxu0
      %v7981 = vadd.f32 %v7820, %v7980
      %v7982 = vpop.f32.mrb[0].mxu0
      %7983 = vmatprep.mubr.bf16.mxu0 0
      %7984 = vmatmul.mubr.bf16.gmra.mrb[0].mxu0 %v7506
      %v7985 = vpop.f32.mrb[0].mxu0
      %v7986 = vadd.f32 %v7825, %v7985
      %v7987 = vpop.f32.mrb[0].mxu0
      %v7988 = vpop.f32.mrb[0].mxu0
      %v7989 = vadd.f32 %v7828, %v7988
      %v7990 = vpop.f32.mrb[0].mxu0
      %7991 = vmatprep.mubr.bf16.mxu0 0
      %7992 = vmatmul.mubr.bf16.gmra.mrb[0].mxu0 %v7509
      %v7993 = vpop.f32.mrb[0].mxu0
      %v7994 = vadd.f32 %v7833, %v7993
      %v7995 = vpop.f32.mrb[0].mxu0
      %v7996 = vpop.f32.mrb[0].mxu0
      %v7997 = vadd.f32 %v7836, %v7996
      %v7998 = vpop.f32.mrb[0].mxu0
      %7999 = vmatprep.mubr.bf16.mxu0 0
      %8000 = vmatmul.mubr.bf16.gmra.mrb[0].mxu0 %v7512
      %v8001 = vpop.f32.mrb[0].mxu0
      %v8002 = vadd.f32 %v7841, %v8001
      %v8003 = vpop.f32.mrb[0].mxu0
      %v8004 = vpop.f32.mrb[0].mxu0
      %v8005 = vadd.f32 %v7844, %v8004
      %v8006 = vpop.f32.mrb[0].mxu0
      %8007 = vmatprep.mubr.bf16.mxu0 0
      %8008 = vmatmul.mubr.bf16.gmra.mrb[0].mxu0 %v7515
      %v8009 = vpop.f32.mrb[0].mxu0
      %v8010 = vadd.f32 %v7849, %v8009
      %v8011 = vpop.f32.mrb[0].mxu0
      %v8012 = vpop.f32.mrb[0].mxu0
      %v8013 = vadd.f32 %v7852, %v8012
      %v8014 = vpop.f32.mrb[0].mxu0
      %8015 = vmatprep.mubr.bf16.mxu0 0
      %8016 = vmatmul.mubr.bf16.gmra.mrb[0].mxu0 %v7518
      %v8017 = vpop.f32.mrb[0].mxu0
      %v8018 = vadd.f32 %v7857, %v8017
      %v8019 = vpop.f32.mrb[0].mxu0
      %v8020 = vpop.f32.mrb[0].mxu0
      %v8021 = vadd.f32 %v7860, %v8020
      %v8022 = vpop.f32.mrb[0].mxu0
      %8023 = vmatprep.mubr.bf16.mxu0 0
      %8024 = vmatmul.mubr.bf16.gmra.mrb[0].mxu0 %v7521
      %v8025 = vpop.f32.mrb[0].mxu0
      %v8026 = vadd.f32 %v7865, %v8025
      %v8027 = vpop.f32.mrb[0].mxu0
      %v8028 = vpop.f32.mrb[0].mxu0
      %v8029 = vadd.f32 %v7868, %v8028
      %v8030 = vpop.f32.mrb[0].mxu0
      %8031 = vmatprep.mubr.bf16.mxu0 0
      %8032 = vmatmul.mubr.bf16.gmra.mrb[0].mxu0 %v7524
      %v8033 = vpop.f32.mrb[0].mxu0
      %v8034 = vadd.f32 %v7873, %v8033
      %v8035 = vpop.f32.mrb[0].mxu0
      %v8036 = vpop.f32.mrb[0].mxu0
      %v8037 = vadd.f32 %v7876, %v8036
      %v8038 = vpop.f32.mrb[0].mxu0
      %8039 = vdwg.mxu0
      %v8040 = vadd.f32 %v7351, %v7914
      %v8041 = vadd.f32 %v7354, %v7917
      %v8042 = vadd.f32 %v7359, %v7922
      %v8043 = vadd.f32 %v7362, %v7925
      %v8044 = vadd.f32 %v7367, %v7930
      %v8045 = vadd.f32 %v7370, %v7933
      %v8046 = vadd.f32 %v7375, %v7938
      %v8047 = vadd.f32 %v7378, %v7941
      %v8048 = vadd.f32 %v7383, %v7946
      %v8049 = vadd.f32 %v7386, %v7949
      %v8050 = vadd.f32 %v7391, %v7954
      %v8051 = vadd.f32 %v7394, %v7957
      %v8052 = vadd.f32 %v7399, %v7962
      %v8053 = vadd.f32 %v7402, %v7965
      %v8054 = vadd.f32 %v7407, %v7970
      %v8055 = vadd.f32 %v7410, %v7973
      %v8056 = vadd.f32 %v7415, %v7978
      %v8057 = vadd.f32 %v7418, %v7981
      %v8058 = vadd.f32 %v7423, %v7986
      %v8059 = vadd.f32 %v7426, %v7989
      %v8060 = vadd.f32 %v7431, %v7994
      %v8061 = vadd.f32 %v7434, %v7997
      %v8062 = vadd.f32 %v7439, %v8002
      %v8063 = vadd.f32 %v7442, %v8005
      %v8064 = vadd.f32 %v7447, %v8010
      %v8065 = vadd.f32 %v7450, %v8013
      %v8066 = vadd.f32 %v7455, %v8018
      %v8067 = vadd.f32 %v7458, %v8021
      %v8068 = vadd.f32 %v7463, %v8026
      %v8069 = vadd.f32 %v7466, %v8029
      %v8070 = vadd.f32 %v7471, %v8034
      %v8071 = vadd.f32 %v7474, %v8037
      %s8072 = scalar_lea.vmem %s503, 2
      %v8073 = vld [vmem:[%s8072] sm:$0x1]
      %s8074 = scalar_lea.vmem %s508, 2
      %v8075 = vld [vmem:[%s8074] sm:$0x1]
      %v8076 = vadd.f32 %v8040, %v8041
      %v8077 = vadd.f32 %v8076, %v8042
      %v8078 = vadd.f32 %v8077, %v8043
      %v8079 = vadd.f32 %v8078, %v8044
      %v8080 = vadd.f32 %v8079, %v8045
      %v8081 = vadd.f32 %v8080, %v8046
      %v8082 = vadd.f32 %v8081, %v8047
      %v8083 = vadd.f32 %v8082, %v8048
      %v8084 = vadd.f32 %v8083, %v8049
      %v8085 = vadd.f32 %v8084, %v8050
      %v8086 = vadd.f32 %v8085, %v8051
      %v8087 = vadd.f32 %v8086, %v8052
      %v8088 = vadd.f32 %v8087, %v8053
      %v8089 = vadd.f32 %v8088, %v8054
      %v8090 = vadd.f32 %v8089, %v8055
      %v8091 = vadd.f32 %v8090, %v8056
      %v8092 = vadd.f32 %v8091, %v8057
      %v8093 = vadd.f32 %v8092, %v8058
      %v8094 = vadd.f32 %v8093, %v8059
      %v8095 = vadd.f32 %v8094, %v8060
      %v8096 = vadd.f32 %v8095, %v8061
      %v8097 = vadd.f32 %v8096, %v8062
      %v8098 = vadd.f32 %v8097, %v8063
      %v8099 = vadd.f32 %v8098, %v8064
      %v8100 = vadd.f32 %v8099, %v8065
      %v8101 = vadd.f32 %v8100, %v8066
      %v8102 = vadd.f32 %v8101, %v8067
      %v8103 = vadd.f32 %v8102, %v8068
      %v8104 = vadd.f32 %v8103, %v8069
      %v8105 = vadd.f32 %v8104, %v8070
      %v8106 = vadd.f32 %v8105, %v8071
      %v8107 = vrot.slane %v8106, 4
      %v8108 = vadd.f32 %v8106, %v8107
      %v8109 = vrot.slane %v8108, 2
      %v8110 = vadd.f32 %v8108, %v8109
      %v8111 = vrot.slane %v8110, 1
      %v8112 = vadd.f32 %v8110, %v8111
      %v8113 = vmul.f32 %v8040, %v8040
      %v8114 = vmul.f32 %v8041, %v8041
      %v8115 = vmul.f32 %v8042, %v8042
      %v8116 = vmul.f32 %v8043, %v8043
      %v8117 = vmul.f32 %v8044, %v8044
      %v8118 = vmul.f32 %v8045, %v8045
      %v8119 = vmul.f32 %v8046, %v8046
      %v8120 = vmul.f32 %v8047, %v8047
      %v8121 = vmul.f32 %v8048, %v8048
      %v8122 = vmul.f32 %v8049, %v8049
      %v8123 = vmul.f32 %v8050, %v8050
      %v8124 = vmul.f32 %v8051, %v8051
      %v8125 = vmul.f32 %v8052, %v8052
      %v8126 = vmul.f32 %v8053, %v8053
      %v8127 = vmul.f32 %v8054, %v8054
      %v8128 = vmul.f32 %v8055, %v8055
      %v8129 = vmul.f32 %v8056, %v8056
      %v8130 = vmul.f32 %v8057, %v8057
      %v8131 = vmul.f32 %v8058, %v8058
      %v8132 = vmul.f32 %v8059, %v8059
      %v8133 = vmul.f32 %v8060, %v8060
      %v8134 = vmul.f32 %v8061, %v8061
      %v8135 = vmul.f32 %v8062, %v8062
      %v8136 = vmul.f32 %v8063, %v8063
      %v8137 = vmul.f32 %v8064, %v8064
      %v8138 = vmul.f32 %v8065, %v8065
      %v8139 = vmul.f32 %v8066, %v8066
      %v8140 = vmul.f32 %v8067, %v8067
      %v8141 = vmul.f32 %v8068, %v8068
      %v8142 = vmul.f32 %v8069, %v8069
      %v8143 = vmul.f32 %v8070, %v8070
      %v8144 = vmul.f32 %v8071, %v8071
      %v8145 = vadd.f32 %v8113, %v8114
      %v8146 = vadd.f32 %v8145, %v8115
      %v8147 = vadd.f32 %v8146, %v8116
      %v8148 = vadd.f32 %v8147, %v8117
      %v8149 = vadd.f32 %v8148, %v8118
      %v8150 = vadd.f32 %v8149, %v8119
      %v8151 = vadd.f32 %v8150, %v8120
      %v8152 = vadd.f32 %v8151, %v8121
      %v8153 = vadd.f32 %v8152, %v8122
      %v8154 = vadd.f32 %v8153, %v8123
      %v8155 = vadd.f32 %v8154, %v8124
      %v8156 = vadd.f32 %v8155, %v8125
      %v8157 = vadd.f32 %v8156, %v8126
      %v8158 = vadd.f32 %v8157, %v8127
      %v8159 = vadd.f32 %v8158, %v8128
      %v8160 = vadd.f32 %v8159, %v8129
      %v8161 = vadd.f32 %v8160, %v8130
      %v8162 = vadd.f32 %v8161, %v8131
      %v8163 = vadd.f32 %v8162, %v8132
      %v8164 = vadd.f32 %v8163, %v8133
      %v8165 = vadd.f32 %v8164, %v8134
      %v8166 = vadd.f32 %v8165, %v8135
      %v8167 = vadd.f32 %v8166, %v8136
      %v8168 = vadd.f32 %v8167, %v8137
      %v8169 = vadd.f32 %v8168, %v8138
      %v8170 = vadd.f32 %v8169, %v8139
      %v8171 = vadd.f32 %v8170, %v8140
      %v8172 = vadd.f32 %v8171, %v8141
      %v8173 = vadd.f32 %v8172, %v8142
      %v8174 = vadd.f32 %v8173, %v8143
      %v8175 = vadd.f32 %v8174, %v8144
      %v8176 = vrot.slane %v8175, 4
      %v8177 = vadd.f32 %v8175, %v8176
      %v8178 = vrot.slane %v8177, 2
      %v8179 = vadd.f32 %v8177, %v8178
      %v8180 = vrot.slane %v8179, 1
      %v8181 = vadd.f32 %v8179, %v8180
      %v8182 = vsel %vm1130, %v8112, %v8181
      %v8183 = vmul.f32 %v8182, 0.0009765625
      %v8184 = vld [vmem:[%s9] sm:$0xff]
      %v8185 = vld [vmem:[%s9 + $0x8] sm:$0xff]
      %v8186 = vld [vmem:[%s9 + $0x10] sm:$0xff]
      %v8187 = vld [vmem:[%s9 + $0x18] sm:$0xff]
      %v8188 = vld [vmem:[%s9 + $0x20] sm:$0xff]
      %v8189 = vld [vmem:[%s9 + $0x28] sm:$0xff]
      %v8190 = vld [vmem:[%s9 + $0x30] sm:$0xff]
      %v8191 = vld [vmem:[%s9 + $0x38] sm:$0xff]
      %v8192 = vld [vmem:[%s9 + $0x40] sm:$0xff]
      %v8193 = vld [vmem:[%s9 + $0x48] sm:$0xff]
      %v8194 = vld [vmem:[%s9 + $0x50] sm:$0xff]
      %v8195 = vld [vmem:[%s9 + $0x58] sm:$0xff]
      %v8196 = vld [vmem:[%s9 + $0x60] sm:$0xff]
      %v8197 = vld [vmem:[%s9 + $0x68] sm:$0xff]
      %v8198 = vld [vmem:[%s9 + $0x70] sm:$0xff]
      %v8199 = vld [vmem:[%s9 + $0x78] sm:$0xff]
      %8200 = vmatprep.subr.mxu0 0.0
      %8201 = vmatpush1.msra.mxu0 %v8184
      %8202 = vmatprep.subr.mxu0 0.0
      %8203 = vmatpush1.msra.mxu0 %v8185
      %8204 = vmatprep.subr.mxu0 0.0
      %8205 = vmatpush1.msra.mxu0 %v8186
      %8206 = vmatprep.subr.mxu0 0.0
      %8207 = vmatpush1.msra.mxu0 %v8187
      %8208 = vmatprep.subr.mxu0 0.0
      %8209 = vmatpush1.msra.mxu0 %v8188
      %8210 = vmatprep.subr.mxu0 0.0
      %8211 = vmatpush1.msra.mxu0 %v8189
      %8212 = vmatprep.subr.mxu0 0.0
      %8213 = vmatpush1.msra.mxu0 %v8190
      %8214 = vmatprep.subr.mxu0 0.0
      %8215 = vmatpush1.msra.mxu0 %v8191
      %8216 = vmatprep.subr.mxu0 0.0
      %8217 = vmatpush1.msra.mxu0 %v8192
      %8218 = vmatprep.subr.mxu0 0.0
      %8219 = vmatpush1.msra.mxu0 %v8193
      %8220 = vmatprep.subr.mxu0 0.0
      %8221 = vmatpush1.msra.mxu0 %v8194
      %8222 = vmatprep.subr.mxu0 0.0
      %8223 = vmatpush1.msra.mxu0 %v8195
      %8224 = vmatprep.subr.mxu0 0.0
      %8225 = vmatpush1.msra.mxu0 %v8196
      %8226 = vmatprep.subr.mxu0 0.0
      %8227 = vmatpush1.msra.mxu0 %v8197
      %8228 = vmatprep.subr.mxu0 0.0
      %8229 = vmatpush1.msra.mxu0 %v8198
      %8230 = vmatprep.subr.mxu0 0.0
      %8231 = vmatpush1.msra.mxu0 %v8199
      %8232 = vmatprep.subr.mxu0 0.0
      %8233 = vmatpush1.msra.mxu0 0.0
      %8234 = vmatprep.subr.mxu0 0.0
      %8235 = vmatpush1.msra.mxu0 0.0
      %8236 = vmatprep.subr.mxu0 0.0
      %8237 = vmatpush1.msra.mxu0 0.0
      %8238 = vmatprep.subr.mxu0 0.0
      %8239 = vmatpush1.msra.mxu0 0.0
      %8240 = vmatprep.subr.mxu0 0.0
      %8241 = vmatpush1.msra.mxu0 0.0
      %8242 = vmatprep.subr.mxu0 0.0
      %8243 = vmatpush1.msra.mxu0 0.0
      %8244 = vmatprep.subr.mxu0 0.0
      %8245 = vmatpush1.msra.mxu0 0.0
      %8246 = vmatprep.subr.mxu0 0.0
      %8247 = vmatpush1.msra.mxu0 0.0
      %8248 = vmatprep.subr.mxu0 0.0
      %8249 = vmatpush1.msra.mxu0 0.0
      %8250 = vmatprep.subr.mxu0 0.0
      %8251 = vmatpush1.msra.mxu0 0.0
      %8252 = vmatprep.subr.mxu0 0.0
      %8253 = vmatpush1.msra.mxu0 0.0
      %8254 = vmatprep.subr.mxu0 0.0
      %8255 = vmatpush1.msra.mxu0 0.0
      %8256 = vmatprep.subr.mxu0 0.0
      %8257 = vmatpush1.msra.mxu0 0.0
      %8258 = vmatprep.subr.mxu0 0.0
      %8259 = vmatpush1.msra.mxu0 0.0
      %8260 = vmatprep.subr.mxu0 0.0
      %8261 = vmatpush1.msra.mxu0 0.0
      %8262 = vmatprep.subr.mxu0 0.0
      %8263 = vmatpush1.msra.mxu0 0.0
      %8264 = vmatprep.mubr.f32.mxu0 0.0
      %8265 = vmatmul.mubr.f32.gmra.mrb[0].mxu0 %v8183
      %v8266 = vpop.f32.mrb[0].mxu0
      %v8267 = vadd.f32 0.0, %v8266
      %v8268 = vpop.f32.mrb[0].mxu0
      %8269 = vdwg.mxu0
      %v8270 = vmul.f32 %v8267, %v8267
      %v8272 = vrot.slane %v8270, 7
      %v8274 = vsub.f32 %v8267, %v8272
      %v8275 = vmax.f32 %v8274, 0.0
      %v8276 = vadd.f32 %v8275, 1e-05
      %v8277 = vrsqrt.pop %v8276
      %v8279 = vlaneseq
      %v8280 = vshrl.u32 %v8279, 7
      %v8281 = vsub.s32 0, %v8280
      %v8282 = vrot.slane %v8073, %v8281
      %v8284 = vmul.f32 %v8277, %v8282
      %v8286 = vrot.slane %v8284, 1
      %v8288 = vmul.f32 %v8267, %v8286
      %v8289 = vsub.f32 %v8075, %v8288
      %v8290 = vlaneseq
      %v8291 = vshrl.u32 %v8290, 7
      %v8292 = vsub.s32 1, %v8291
      %v8293 = vrot.slane %v8284, %v8292
      %v8294 = vmul.f32 %v8040, %v8293
      %v8295 = vmul.f32 %v8041, %v8293
      %v8296 = vmul.f32 %v8042, %v8293
      %v8297 = vmul.f32 %v8043, %v8293
      %v8298 = vmul.f32 %v8044, %v8293
      %v8299 = vmul.f32 %v8045, %v8293
      %v8300 = vmul.f32 %v8046, %v8293
      %v8301 = vmul.f32 %v8047, %v8293
      %v8302 = vmul.f32 %v8048, %v8293
      %v8303 = vmul.f32 %v8049, %v8293
      %v8304 = vmul.f32 %v8050, %v8293
      %v8305 = vmul.f32 %v8051, %v8293
      %v8306 = vmul.f32 %v8052, %v8293
      %v8307 = vmul.f32 %v8053, %v8293
      %v8308 = vmul.f32 %v8054, %v8293
      %v8309 = vmul.f32 %v8055, %v8293
      %v8310 = vmul.f32 %v8056, %v8293
      %v8311 = vmul.f32 %v8057, %v8293
      %v8312 = vmul.f32 %v8058, %v8293
      %v8313 = vmul.f32 %v8059, %v8293
      %v8314 = vmul.f32 %v8060, %v8293
      %v8315 = vmul.f32 %v8061, %v8293
      %v8316 = vmul.f32 %v8062, %v8293
      %v8317 = vmul.f32 %v8063, %v8293
      %v8318 = vmul.f32 %v8064, %v8293
      %v8319 = vmul.f32 %v8065, %v8293
      %v8320 = vmul.f32 %v8066, %v8293
      %v8321 = vmul.f32 %v8067, %v8293
      %v8322 = vmul.f32 %v8068, %v8293
      %v8323 = vmul.f32 %v8069, %v8293
      %v8324 = vmul.f32 %v8070, %v8293
      %v8325 = vmul.f32 %v8071, %v8293
      %v8327 = vlaneseq
      %v8328 = vshrl.u32 %v8327, 7
      %v8329 = vsub.s32 0, %v8328
      %v8330 = vrot.slane %v8289, %v8329
      %v8332 = vadd.f32 %v8294, %v8330
      %v8333 = vadd.f32 %v8295, %v8330
      %v8334 = vadd.f32 %v8296, %v8330
      %v8335 = vadd.f32 %v8297, %v8330
      %v8336 = vadd.f32 %v8298, %v8330
      %v8337 = vadd.f32 %v8299, %v8330
      %v8338 = vadd.f32 %v8300, %v8330
      %v8339 = vadd.f32 %v8301, %v8330
      %v8340 = vadd.f32 %v8302, %v8330
      %v8341 = vadd.f32 %v8303, %v8330
      %v8342 = vadd.f32 %v8304, %v8330
      %v8343 = vadd.f32 %v8305, %v8330
      %v8344 = vadd.f32 %v8306, %v8330
      %v8345 = vadd.f32 %v8307, %v8330
      %v8346 = vadd.f32 %v8308, %v8330
      %v8347 = vadd.f32 %v8309, %v8330
      %v8348 = vadd.f32 %v8310, %v8330
      %v8349 = vadd.f32 %v8311, %v8330
      %v8350 = vadd.f32 %v8312, %v8330
      %v8351 = vadd.f32 %v8313, %v8330
      %v8352 = vadd.f32 %v8314, %v8330
      %v8353 = vadd.f32 %v8315, %v8330
      %v8354 = vadd.f32 %v8316, %v8330
      %v8355 = vadd.f32 %v8317, %v8330
      %v8356 = vadd.f32 %v8318, %v8330
      %v8357 = vadd.f32 %v8319, %v8330
      %v8358 = vadd.f32 %v8320, %v8330
      %v8359 = vadd.f32 %v8321, %v8330
      %v8360 = vadd.f32 %v8322, %v8330
      %v8361 = vadd.f32 %v8323, %v8330
      %v8362 = vadd.f32 %v8324, %v8330
      %v8363 = vadd.f32 %v8325, %v8330
      %v8364 = vmax.f32 %v8332, 0.0
      %v8365 = vmax.f32 %v8333, 0.0
      %v8366 = vmax.f32 %v8334, 0.0
      %v8367 = vmax.f32 %v8335, 0.0
      %v8368 = vmax.f32 %v8336, 0.0
      %v8369 = vmax.f32 %v8337, 0.0
      %v8370 = vmax.f32 %v8338, 0.0
      %v8371 = vmax.f32 %v8339, 0.0
      %v8372 = vmax.f32 %v8340, 0.0
      %v8373 = vmax.f32 %v8341, 0.0
      %v8374 = vmax.f32 %v8342, 0.0
      %v8375 = vmax.f32 %v8343, 0.0
      %v8376 = vmax.f32 %v8344, 0.0
      %v8377 = vmax.f32 %v8345, 0.0
      %v8378 = vmax.f32 %v8346, 0.0
      %v8379 = vmax.f32 %v8347, 0.0
      %v8380 = vmax.f32 %v8348, 0.0
      %v8381 = vmax.f32 %v8349, 0.0
      %v8382 = vmax.f32 %v8350, 0.0
      %v8383 = vmax.f32 %v8351, 0.0
      %v8384 = vmax.f32 %v8352, 0.0
      %v8385 = vmax.f32 %v8353, 0.0
      %v8386 = vmax.f32 %v8354, 0.0
      %v8387 = vmax.f32 %v8355, 0.0
      %v8388 = vmax.f32 %v8356, 0.0
      %v8389 = vmax.f32 %v8357, 0.0
      %v8390 = vmax.f32 %v8358, 0.0
      %v8391 = vmax.f32 %v8359, 0.0
      %v8392 = vmax.f32 %v8360, 0.0
      %v8393 = vmax.f32 %v8361, 0.0
      %v8394 = vmax.f32 %v8362, 0.0
      %v8395 = vmax.f32 %v8363, 0.0
      %v8396 = vpack.c.bf16 %v8365, %v8364
      %v8397 = vpack.c.bf16 %v8367, %v8366
      %v8398 = vpack.c.bf16 %v8369, %v8368
      %v8399 = vpack.c.bf16 %v8371, %v8370
      %v8400 = vpack.c.bf16 %v8373, %v8372
      %v8401 = vpack.c.bf16 %v8375, %v8374
      %v8402 = vpack.c.bf16 %v8377, %v8376
      %v8403 = vpack.c.bf16 %v8379, %v8378
      %v8404 = vpack.c.bf16 %v8381, %v8380
      %v8405 = vpack.c.bf16 %v8383, %v8382
      %v8406 = vpack.c.bf16 %v8385, %v8384
      %v8407 = vpack.c.bf16 %v8387, %v8386
      %v8408 = vpack.c.bf16 %v8389, %v8388
      %v8409 = vpack.c.bf16 %v8391, %v8390
      %v8410 = vpack.c.bf16 %v8393, %v8392
      %v8411 = vpack.c.bf16 %v8395, %v8394
      %v8413 = vshrl.u32 %v8396, 16
      %v8415 = vrot.slane %v8413, 7
      %v8416 = vshll.u32 %v8396, 16
      %v8418 = vor.u32 %v8415, %v8416
      %v8420 = vshrl.u32 %v8397, 16
      %v8422 = vrot.slane %v8420, 7
      %v8423 = vshll.u32 %v8397, 16
      %v8425 = vor.u32 %v8422, %v8423
      %v8427 = vshrl.u32 %v8398, 16
      %v8429 = vrot.slane %v8427, 7
      %v8430 = vshll.u32 %v8398, 16
      %v8432 = vor.u32 %v8429, %v8430
      %v8434 = vshrl.u32 %v8399, 16
      %v8436 = vrot.slane %v8434, 7
      %v8437 = vshll.u32 %v8399, 16
      %v8439 = vor.u32 %v8436, %v8437
      %v8441 = vshrl.u32 %v8400, 16
      %v8443 = vrot.slane %v8441, 7
      %v8444 = vshll.u32 %v8400, 16
      %v8446 = vor.u32 %v8443, %v8444
      %v8448 = vshrl.u32 %v8401, 16
      %v8450 = vrot.slane %v8448, 7
      %v8451 = vshll.u32 %v8401, 16
      %v8453 = vor.u32 %v8450, %v8451
      %v8455 = vshrl.u32 %v8402, 16
      %v8457 = vrot.slane %v8455, 7
      %v8458 = vshll.u32 %v8402, 16
      %v8460 = vor.u32 %v8457, %v8458
      %v8462 = vshrl.u32 %v8403, 16
      %v8464 = vrot.slane %v8462, 7
      %v8465 = vshll.u32 %v8403, 16
      %v8467 = vor.u32 %v8464, %v8465
      %v8469 = vshrl.u32 %v8404, 16
      %v8471 = vrot.slane %v8469, 7
      %v8472 = vshll.u32 %v8404, 16
      %v8474 = vor.u32 %v8471, %v8472
      %v8476 = vshrl.u32 %v8405, 16
      %v8478 = vrot.slane %v8476, 7
      %v8479 = vshll.u32 %v8405, 16
      %v8481 = vor.u32 %v8478, %v8479
      %v8483 = vshrl.u32 %v8406, 16
      %v8485 = vrot.slane %v8483, 7
      %v8486 = vshll.u32 %v8406, 16
      %v8488 = vor.u32 %v8485, %v8486
      %v8490 = vshrl.u32 %v8407, 16
      %v8492 = vrot.slane %v8490, 7
      %v8493 = vshll.u32 %v8407, 16
      %v8495 = vor.u32 %v8492, %v8493
      %v8497 = vshrl.u32 %v8408, 16
      %v8499 = vrot.slane %v8497, 7
      %v8500 = vshll.u32 %v8408, 16
      %v8502 = vor.u32 %v8499, %v8500
      %v8504 = vshrl.u32 %v8409, 16
      %v8506 = vrot.slane %v8504, 7
      %v8507 = vshll.u32 %v8409, 16
      %v8509 = vor.u32 %v8506, %v8507
      %v8511 = vshrl.u32 %v8410, 16
      %v8513 = vrot.slane %v8511, 7
      %v8514 = vshll.u32 %v8410, 16
      %v8516 = vor.u32 %v8513, %v8514
      %v8518 = vshrl.u32 %v8411, 16
      %v8520 = vrot.slane %v8518, 7
      %v8521 = vshll.u32 %v8411, 16
      %v8523 = vor.u32 %v8520, %v8521
      %v8540 = vld [vmem:[%s1489] sm:$0xff]
      %v8541 = vsel %vm1492, %v8418, %v8540
      %8542 = vst [vmem:[%s1489] sm:$0xff] %v8541
      %v8543 = vld [vmem:[%s1489 + $0x18] sm:$0xff]
      %v8544 = vsel %vm1492, %v8425, %v8543
      %8545 = vst [vmem:[%s1489 + $0x18] sm:$0xff] %v8544
      %v8546 = vld [vmem:[%s1489 + $0x30] sm:$0xff]
      %v8547 = vsel %vm1492, %v8432, %v8546
      %8548 = vst [vmem:[%s1489 + $0x30] sm:$0xff] %v8547
      %v8549 = vld [vmem:[%s1489 + $0x48] sm:$0xff]
      %v8550 = vsel %vm1492, %v8439, %v8549
      %8551 = vst [vmem:[%s1489 + $0x48] sm:$0xff] %v8550
      %v8552 = vld [vmem:[%s1489 + $0x60] sm:$0xff]
      %v8553 = vsel %vm1492, %v8446, %v8552
      %8554 = vst [vmem:[%s1489 + $0x60] sm:$0xff] %v8553
      %v8555 = vld [vmem:[%s1489 + $0x78] sm:$0xff]
      %v8556 = vsel %vm1492, %v8453, %v8555
      %8557 = vst [vmem:[%s1489 + $0x78] sm:$0xff] %v8556
      %v8558 = vld [vmem:[%s1489 + $0x90] sm:$0xff]
      %v8559 = vsel %vm1492, %v8460, %v8558
      %8560 = vst [vmem:[%s1489 + $0x90] sm:$0xff] %v8559
      %v8561 = vld [vmem:[%s1489 + $0xa8] sm:$0xff]
      %v8562 = vsel %vm1492, %v8467, %v8561
      %8563 = vst [vmem:[%s1489 + $0xa8] sm:$0xff] %v8562
      %v8564 = vld [vmem:[%s1489 + $0xc0] sm:$0xff]
      %v8565 = vsel %vm1492, %v8474, %v8564
      %8566 = vst [vmem:[%s1489 + $0xc0] sm:$0xff] %v8565
      %v8567 = vld [vmem:[%s1489 + $0xd8] sm:$0xff]
      %v8568 = vsel %vm1492, %v8481, %v8567
      %8569 = vst [vmem:[%s1489 + $0xd8] sm:$0xff] %v8568
      %v8570 = vld [vmem:[%s1489 + $0xf0] sm:$0xff]
      %v8571 = vsel %vm1492, %v8488, %v8570
      %8572 = vst [vmem:[%s1489 + $0xf0] sm:$0xff] %v8571
      %v8573 = vld [vmem:[%s1489 + $0x108] sm:$0xff]
      %v8574 = vsel %vm1492, %v8495, %v8573
      %8575 = vst [vmem:[%s1489 + $0x108] sm:$0xff] %v8574
      %v8576 = vld [vmem:[%s1489 + $0x120] sm:$0xff]
      %v8577 = vsel %vm1492, %v8502, %v8576
      %8578 = vst [vmem:[%s1489 + $0x120] sm:$0xff] %v8577
      %v8579 = vld [vmem:[%s1489 + $0x138] sm:$0xff]
      %v8580 = vsel %vm1492, %v8509, %v8579
      %8581 = vst [vmem:[%s1489 + $0x138] sm:$0xff] %v8580
      %v8582 = vld [vmem:[%s1489 + $0x150] sm:$0xff]
      %v8583 = vsel %vm1492, %v8516, %v8582
      %8584 = vst [vmem:[%s1489 + $0x150] sm:$0xff] %v8583
      %v8585 = vld [vmem:[%s1489 + $0x168] sm:$0xff]
      %v8586 = vsel %vm1492, %v8523, %v8585
      %8587 = vst [vmem:[%s1489 + $0x168] sm:$0xff] %v8586
      %8588 = vst [vmem:[%s1489 + $0x8] sm:$0xff] %v8396
      %8589 = vst [vmem:[%s1489 + $0x20] sm:$0xff] %v8397
      %8590 = vst [vmem:[%s1489 + $0x38] sm:$0xff] %v8398
      %8591 = vst [vmem:[%s1489 + $0x50] sm:$0xff] %v8399
      %8592 = vst [vmem:[%s1489 + $0x68] sm:$0xff] %v8400
      %8593 = vst [vmem:[%s1489 + $0x80] sm:$0xff] %v8401
      %8594 = vst [vmem:[%s1489 + $0x98] sm:$0xff] %v8402
      %8595 = vst [vmem:[%s1489 + $0xb0] sm:$0xff] %v8403
      %8596 = vst [vmem:[%s1489 + $0xc8] sm:$0xff] %v8404
      %8597 = vst [vmem:[%s1489 + $0xe0] sm:$0xff] %v8405
      %8598 = vst [vmem:[%s1489 + $0xf8] sm:$0xff] %v8406
      %8599 = vst [vmem:[%s1489 + $0x110] sm:$0xff] %v8407
      %8600 = vst [vmem:[%s1489 + $0x128] sm:$0xff] %v8408
      %8601 = vst [vmem:[%s1489 + $0x140] sm:$0xff] %v8409
      %8602 = vst [vmem:[%s1489 + $0x158] sm:$0xff] %v8410
      %8603 = vst [vmem:[%s1489 + $0x170] sm:$0xff] %v8411
      %v8604 = vrot.slane %v8416, 1
      %v8605 = vor.u32 %v8413, %v8604
      %v8606 = vrot.slane %v8423, 1
      %v8607 = vor.u32 %v8420, %v8606
      %v8608 = vrot.slane %v8430, 1
      %v8609 = vor.u32 %v8427, %v8608
      %v8610 = vrot.slane %v8437, 1
      %v8611 = vor.u32 %v8434, %v8610
      %v8612 = vrot.slane %v8444, 1
      %v8613 = vor.u32 %v8441, %v8612
      %v8614 = vrot.slane %v8451, 1
      %v8615 = vor.u32 %v8448, %v8614
      %v8616 = vrot.slane %v8458, 1
      %v8617 = vor.u32 %v8455, %v8616
      %v8618 = vrot.slane %v8465, 1
      %v8619 = vor.u32 %v8462, %v8618
      %v8620 = vrot.slane %v8472, 1
      %v8621 = vor.u32 %v8469, %v8620
      %v8622 = vrot.slane %v8479, 1
      %v8623 = vor.u32 %v8476, %v8622
      %v8624 = vrot.slane %v8486, 1
      %v8625 = vor.u32 %v8483, %v8624
      %v8626 = vrot.slane %v8493, 1
      %v8627 = vor.u32 %v8490, %v8626
      %v8628 = vrot.slane %v8500, 1
      %v8629 = vor.u32 %v8497, %v8628
      %v8630 = vrot.slane %v8507, 1
      %v8631 = vor.u32 %v8504, %v8630
      %v8632 = vrot.slane %v8514, 1
      %v8633 = vor.u32 %v8511, %v8632
      %v8634 = vrot.slane %v8521, 1
      %v8635 = vor.u32 %v8518, %v8634
      %v8652 = vld [vmem:[%s1489 + $0x10] sm:$0xff]
      %v8653 = vsel %vm1606, %v8605, %v8652
      %8654 = vst [vmem:[%s1489 + $0x10] sm:$0xff] %v8653
      %v8655 = vld [vmem:[%s1489 + $0x28] sm:$0xff]
      %v8656 = vsel %vm1606, %v8607, %v8655
      %8657 = vst [vmem:[%s1489 + $0x28] sm:$0xff] %v8656
      %v8658 = vld [vmem:[%s1489 + $0x40] sm:$0xff]
      %v8659 = vsel %vm1606, %v8609, %v8658
      %8660 = vst [vmem:[%s1489 + $0x40] sm:$0xff] %v8659
      %v8661 = vld [vmem:[%s1489 + $0x58] sm:$0xff]
      %v8662 = vsel %vm1606, %v8611, %v8661
      %8663 = vst [vmem:[%s1489 + $0x58] sm:$0xff] %v8662
      %v8664 = vld [vmem:[%s1489 + $0x70] sm:$0xff]
      %v8665 = vsel %vm1606, %v8613, %v8664
      %8666 = vst [vmem:[%s1489 + $0x70] sm:$0xff] %v8665
      %v8667 = vld [vmem:[%s1489 + $0x88] sm:$0xff]
      %v8668 = vsel %vm1606, %v8615, %v8667
      %8669 = vst [vmem:[%s1489 + $0x88] sm:$0xff] %v8668
      %v8670 = vld [vmem:[%s1489 + $0xa0] sm:$0xff]
      %v8671 = vsel %vm1606, %v8617, %v8670
      %8672 = vst [vmem:[%s1489 + $0xa0] sm:$0xff] %v8671
      %v8673 = vld [vmem:[%s1489 + $0xb8] sm:$0xff]
      %v8674 = vsel %vm1606, %v8619, %v8673
      %8675 = vst [vmem:[%s1489 + $0xb8] sm:$0xff] %v8674
      %v8676 = vld [vmem:[%s1489 + $0xd0] sm:$0xff]
      %v8677 = vsel %vm1606, %v8621, %v8676
      %8678 = vst [vmem:[%s1489 + $0xd0] sm:$0xff] %v8677
      %v8679 = vld [vmem:[%s1489 + $0xe8] sm:$0xff]
      %v8680 = vsel %vm1606, %v8623, %v8679
      %8681 = vst [vmem:[%s1489 + $0xe8] sm:$0xff] %v8680
      %v8682 = vld [vmem:[%s1489 + $0x100] sm:$0xff]
      %v8683 = vsel %vm1606, %v8625, %v8682
      %8684 = vst [vmem:[%s1489 + $0x100] sm:$0xff] %v8683
      %v8685 = vld [vmem:[%s1489 + $0x118] sm:$0xff]
      %v8686 = vsel %vm1606, %v8627, %v8685
      %8687 = vst [vmem:[%s1489 + $0x118] sm:$0xff] %v8686
      %v8688 = vld [vmem:[%s1489 + $0x130] sm:$0xff]
      %v8689 = vsel %vm1606, %v8629, %v8688
      %8690 = vst [vmem:[%s1489 + $0x130] sm:$0xff] %v8689
      %v8691 = vld [vmem:[%s1489 + $0x148] sm:$0xff]
      %v8692 = vsel %vm1606, %v8631, %v8691
      %8693 = vst [vmem:[%s1489 + $0x148] sm:$0xff] %v8692
      %v8694 = vld [vmem:[%s1489 + $0x160] sm:$0xff]
      %v8695 = vsel %vm1606, %v8633, %v8694
      %8696 = vst [vmem:[%s1489 + $0x160] sm:$0xff] %v8695
      %v8697 = vld [vmem:[%s1489 + $0x178] sm:$0xff]
      %v8698 = vsel %vm1606, %v8635, %v8697
      %8699 = vst [vmem:[%s1489 + $0x178] sm:$0xff] %v8698
      %v8700 = vld [vmem:[#allocation2] sm:$0xff]
      %v8701 = vld [vmem:[#allocation2 + $0x8] sm:$0xff]
      %v8702 = vld [vmem:[#allocation2 + $0x10] sm:$0xff]
      %v8703 = vld [vmem:[#allocation2 + $0x18] sm:$0xff]
      %v8704 = vld [vmem:[#allocation2 + $0x20] sm:$0xff]
      %v8705 = vld [vmem:[#allocation2 + $0x28] sm:$0xff]
      %v8706 = vld [vmem:[#allocation2 + $0x30] sm:$0xff]
      %v8707 = vld [vmem:[#allocation2 + $0x38] sm:$0xff]
      %v8708 = vld [vmem:[#allocation2 + $0x40] sm:$0xff]
      %v8709 = vld [vmem:[#allocation2 + $0x48] sm:$0xff]
      %v8710 = vld [vmem:[#allocation2 + $0x50] sm:$0xff]
      %v8711 = vld [vmem:[#allocation2 + $0x58] sm:$0xff]
      %v8712 = vld [vmem:[#allocation2 + $0x60] sm:$0xff]
      %v8713 = vld [vmem:[#allocation2 + $0x68] sm:$0xff]
      %v8714 = vld [vmem:[#allocation2 + $0x70] sm:$0xff]
      %v8715 = vld [vmem:[#allocation2 + $0x78] sm:$0xff]
      %v8716 = vld [vmem:[#allocation2 + $0x80] sm:$0xff]
      %v8717 = vld [vmem:[#allocation2 + $0x88] sm:$0xff]
      %v8718 = vld [vmem:[#allocation2 + $0x90] sm:$0xff]
      %v8719 = vld [vmem:[#allocation2 + $0x98] sm:$0xff]
      %v8720 = vld [vmem:[#allocation2 + $0xa0] sm:$0xff]
      %v8721 = vld [vmem:[#allocation2 + $0xa8] sm:$0xff]
      %v8722 = vld [vmem:[#allocation2 + $0xb0] sm:$0xff]
      %v8723 = vld [vmem:[#allocation2 + $0xb8] sm:$0xff]
      %v8724 = vld [vmem:[#allocation2 + $0xc0] sm:$0xff]
      %v8725 = vld [vmem:[#allocation2 + $0xc8] sm:$0xff]
      %v8726 = vld [vmem:[#allocation2 + $0xd0] sm:$0xff]
      %v8727 = vld [vmem:[#allocation2 + $0xd8] sm:$0xff]
      %v8728 = vld [vmem:[#allocation2 + $0xe0] sm:$0xff]
      %v8729 = vld [vmem:[#allocation2 + $0xe8] sm:$0xff]
      %v8730 = vld [vmem:[#allocation2 + $0xf0] sm:$0xff]
      %v8731 = vld [vmem:[#allocation2 + $0xf8] sm:$0xff]
      %v8732 = vld [vmem:[#allocation2 + $0x100] sm:$0xff]
      %v8733 = vld [vmem:[#allocation2 + $0x108] sm:$0xff]
      %v8734 = vld [vmem:[#allocation2 + $0x110] sm:$0xff]
      %v8735 = vld [vmem:[#allocation2 + $0x118] sm:$0xff]
      %v8736 = vld [vmem:[#allocation2 + $0x120] sm:$0xff]
      %v8737 = vld [vmem:[#allocation2 + $0x128] sm:$0xff]
      %v8738 = vld [vmem:[#allocation2 + $0x130] sm:$0xff]
      %v8739 = vld [vmem:[#allocation2 + $0x138] sm:$0xff]
      %v8740 = vld [vmem:[#allocation2 + $0x140] sm:$0xff]
      %v8741 = vld [vmem:[#allocation2 + $0x148] sm:$0xff]
      %v8742 = vld [vmem:[#allocation2 + $0x150] sm:$0xff]
      %v8743 = vld [vmem:[#allocation2 + $0x158] sm:$0xff]
      %v8744 = vld [vmem:[#allocation2 + $0x160] sm:$0xff]
      %v8745 = vld [vmem:[#allocation2 + $0x168] sm:$0xff]
      %v8746 = vld [vmem:[#allocation2 + $0x170] sm:$0xff]
      %v8747 = vld [vmem:[#allocation2 + $0x178] sm:$0xff]
      %v8748 = vld [vmem:[%s514] sm:$0xf]
      %v8749 = vld [vmem:[%s514 + $0x4] sm:$0xf]
      %v8750 = vld [vmem:[%s514 + $0x8] sm:$0xf]
      %v8751 = vld [vmem:[%s514 + $0xc] sm:$0xf]
      %v8752 = vld [vmem:[%s514 + $0x10] sm:$0xf]
      %v8753 = vld [vmem:[%s514 + $0x14] sm:$0xf]
      %v8754 = vld [vmem:[%s514 + $0x18] sm:$0xf]
      %v8755 = vld [vmem:[%s514 + $0x1c] sm:$0xf]
      %v8756 = vld [vmem:[%s514 + $0x20] sm:$0xf]
      %v8757 = vld [vmem:[%s514 + $0x24] sm:$0xf]
      %v8758 = vld [vmem:[%s514 + $0x28] sm:$0xf]
      %v8759 = vld [vmem:[%s514 + $0x2c] sm:$0xf]
      %v8760 = vld [vmem:[%s514 + $0x30] sm:$0xf]
      %v8761 = vld [vmem:[%s514 + $0x34] sm:$0xf]
      %v8762 = vld [vmem:[%s514 + $0x38] sm:$0xf]
      %v8763 = vld [vmem:[%s514 + $0x3c] sm:$0xf]
      %v8764 = vld [vmem:[%s514 + $0x40] sm:$0xf]
      %v8765 = vld [vmem:[%s514 + $0x44] sm:$0xf]
      %v8766 = vld [vmem:[%s514 + $0x48] sm:$0xf]
      %v8767 = vld [vmem:[%s514 + $0x4c] sm:$0xf]
      %v8768 = vld [vmem:[%s514 + $0x50] sm:$0xf]
      %v8769 = vld [vmem:[%s514 + $0x54] sm:$0xf]
      %v8770 = vld [vmem:[%s514 + $0x58] sm:$0xf]
      %v8771 = vld [vmem:[%s514 + $0x5c] sm:$0xf]
      %v8772 = vld [vmem:[%s514 + $0x60] sm:$0xf]
      %v8773 = vld [vmem:[%s514 + $0x64] sm:$0xf]
      %v8774 = vld [vmem:[%s514 + $0x68] sm:$0xf]
      %v8775 = vld [vmem:[%s514 + $0x6c] sm:$0xf]
      %v8776 = vld [vmem:[%s514 + $0x70] sm:$0xf]
      %v8777 = vld [vmem:[%s514 + $0x74] sm:$0xf]
      %v8778 = vld [vmem:[%s514 + $0x78] sm:$0xf]
      %v8779 = vld [vmem:[%s514 + $0x7c] sm:$0xf]
      %v8780 = vld [vmem:[%s514 + $0x80] sm:$0xf]
      %v8781 = vld [vmem:[%s514 + $0x84] sm:$0xf]
      %v8782 = vld [vmem:[%s514 + $0x88] sm:$0xf]
      %v8783 = vld [vmem:[%s514 + $0x8c] sm:$0xf]
      %v8784 = vld [vmem:[%s514 + $0x90] sm:$0xf]
      %v8785 = vld [vmem:[%s514 + $0x94] sm:$0xf]
      %v8786 = vld [vmem:[%s514 + $0x98] sm:$0xf]
      %v8787 = vld [vmem:[%s514 + $0x9c] sm:$0xf]
      %v8788 = vld [vmem:[%s514 + $0xa0] sm:$0xf]
      %v8789 = vld [vmem:[%s514 + $0xa4] sm:$0xf]
      %v8790 = vld [vmem:[%s514 + $0xa8] sm:$0xf]
      %v8791 = vld [vmem:[%s514 + $0xac] sm:$0xf]
      %v8792 = vld [vmem:[%s514 + $0xb0] sm:$0xf]
      %v8793 = vld [vmem:[%s514 + $0xb4] sm:$0xf]
      %v8794 = vld [vmem:[%s514 + $0xb8] sm:$0xf]
      %v8795 = vld [vmem:[%s514 + $0xbc] sm:$0xf]
      %v8796 = vld [vmem:[%s1489] sm:$0xff]
      %v8797 = vld [vmem:[%s1489 + $0x8] sm:$0xff]
      %v8798 = vld [vmem:[%s1489 + $0x10] sm:$0xff]
      %v8799 = vld [vmem:[%s1489 + $0x18] sm:$0xff]
      %v8800 = vld [vmem:[%s1489 + $0x20] sm:$0xff]
      %v8801 = vld [vmem:[%s1489 + $0x28] sm:$0xff]
      %v8802 = vld [vmem:[%s1489 + $0x30] sm:$0xff]
      %v8803 = vld [vmem:[%s1489 + $0x38] sm:$0xff]
      %v8804 = vld [vmem:[%s1489 + $0x40] sm:$0xff]
      %v8805 = vld [vmem:[%s1489 + $0x48] sm:$0xff]
      %v8806 = vld [vmem:[%s1489 + $0x50] sm:$0xff]
      %v8807 = vld [vmem:[%s1489 + $0x58] sm:$0xff]
      %v8808 = vld [vmem:[%s1489 + $0x60] sm:$0xff]
      %v8809 = vld [vmem:[%s1489 + $0x68] sm:$0xff]
      %v8810 = vld [vmem:[%s1489 + $0x70] sm:$0xff]
      %v8811 = vld [vmem:[%s1489 + $0x78] sm:$0xff]
      %v8812 = vld [vmem:[%s1489 + $0x80] sm:$0xff]
      %v8813 = vld [vmem:[%s1489 + $0x88] sm:$0xff]
      %v8814 = vld [vmem:[%s1489 + $0x90] sm:$0xff]
      %v8815 = vld [vmem:[%s1489 + $0x98] sm:$0xff]
      %v8816 = vld [vmem:[%s1489 + $0xa0] sm:$0xff]
      %v8817 = vld [vmem:[%s1489 + $0xa8] sm:$0xff]
      %v8818 = vld [vmem:[%s1489 + $0xb0] sm:$0xff]
      %v8819 = vld [vmem:[%s1489 + $0xb8] sm:$0xff]
      %v8820 = vld [vmem:[%s1489 + $0xc0] sm:$0xff]
      %v8821 = vld [vmem:[%s1489 + $0xc8] sm:$0xff]
      %v8822 = vld [vmem:[%s1489 + $0xd0] sm:$0xff]
      %v8823 = vld [vmem:[%s1489 + $0xd8] sm:$0xff]
      %v8824 = vld [vmem:[%s1489 + $0xe0] sm:$0xff]
      %v8825 = vld [vmem:[%s1489 + $0xe8] sm:$0xff]
      %v8826 = vld [vmem:[%s1489 + $0xf0] sm:$0xff]
      %v8827 = vld [vmem:[%s1489 + $0xf8] sm:$0xff]
      %v8828 = vld [vmem:[%s1489 + $0x100] sm:$0xff]
      %v8829 = vld [vmem:[%s1489 + $0x108] sm:$0xff]
      %v8830 = vld [vmem:[%s1489 + $0x110] sm:$0xff]
      %v8831 = vld [vmem:[%s1489 + $0x118] sm:$0xff]
      %v8832 = vld [vmem:[%s1489 + $0x120] sm:$0xff]
      %v8833 = vld [vmem:[%s1489 + $0x128] sm:$0xff]
      %v8834 = vld [vmem:[%s1489 + $0x130] sm:$0xff]
      %v8835 = vld [vmem:[%s1489 + $0x138] sm:$0xff]
      %v8836 = vld [vmem:[%s1489 + $0x140] sm:$0xff]
      %v8837 = vld [vmem:[%s1489 + $0x148] sm:$0xff]
      %v8838 = vld [vmem:[%s1489 + $0x150] sm:$0xff]
      %v8839 = vld [vmem:[%s1489 + $0x158] sm:$0xff]
      %v8840 = vld [vmem:[%s1489 + $0x160] sm:$0xff]
      %v8841 = vld [vmem:[%s1489 + $0x168] sm:$0xff]
      %v8842 = vld [vmem:[%s1489 + $0x170] sm:$0xff]
      %v8843 = vld [vmem:[%s1489 + $0x178] sm:$0xff]
      %s8844 = scalar_lea.vmem %s514, 192
      %v8845 = vld [vmem:[%s8844] sm:$0xf]
      %v8846 = vld [vmem:[%s8844 + $0x4] sm:$0xf]
      %v8847 = vld [vmem:[%s8844 + $0x8] sm:$0xf]
      %v8848 = vld [vmem:[%s8844 + $0xc] sm:$0xf]
      %v8849 = vld [vmem:[%s8844 + $0x10] sm:$0xf]
      %v8850 = vld [vmem:[%s8844 + $0x14] sm:$0xf]
      %v8851 = vld [vmem:[%s8844 + $0x18] sm:$0xf]
      %v8852 = vld [vmem:[%s8844 + $0x1c] sm:$0xf]
      %v8853 = vld [vmem:[%s8844 + $0x20] sm:$0xf]
      %v8854 = vld [vmem:[%s8844 + $0x24] sm:$0xf]
      %v8855 = vld [vmem:[%s8844 + $0x28] sm:$0xf]
      %v8856 = vld [vmem:[%s8844 + $0x2c] sm:$0xf]
      %v8857 = vld [vmem:[%s8844 + $0x30] sm:$0xf]
      %v8858 = vld [vmem:[%s8844 + $0x34] sm:$0xf]
      %v8859 = vld [vmem:[%s8844 + $0x38] sm:$0xf]
      %v8860 = vld [vmem:[%s8844 + $0x3c] sm:$0xf]
      %v8861 = vld [vmem:[%s8844 + $0x40] sm:$0xf]
      %v8862 = vld [vmem:[%s8844 + $0x44] sm:$0xf]
      %v8863 = vld [vmem:[%s8844 + $0x48] sm:$0xf]
      %v8864 = vld [vmem:[%s8844 + $0x4c] sm:$0xf]
      %v8865 = vld [vmem:[%s8844 + $0x50] sm:$0xf]
      %v8866 = vld [vmem:[%s8844 + $0x54] sm:$0xf]
      %v8867 = vld [vmem:[%s8844 + $0x58] sm:$0xf]
      %v8868 = vld [vmem:[%s8844 + $0x5c] sm:$0xf]
      %v8869 = vld [vmem:[%s8844 + $0x60] sm:$0xf]
      %v8870 = vld [vmem:[%s8844 + $0x64] sm:$0xf]
      %v8871 = vld [vmem:[%s8844 + $0x68] sm:$0xf]
      %v8872 = vld [vmem:[%s8844 + $0x6c] sm:$0xf]
      %v8873 = vld [vmem:[%s8844 + $0x70] sm:$0xf]
      %v8874 = vld [vmem:[%s8844 + $0x74] sm:$0xf]
      %v8875 = vld [vmem:[%s8844 + $0x78] sm:$0xf]
      %v8876 = vld [vmem:[%s8844 + $0x7c] sm:$0xf]
      %v8877 = vld [vmem:[%s8844 + $0x80] sm:$0xf]
      %v8878 = vld [vmem:[%s8844 + $0x84] sm:$0xf]
      %v8879 = vld [vmem:[%s8844 + $0x88] sm:$0xf]
      %v8880 = vld [vmem:[%s8844 + $0x8c] sm:$0xf]
      %v8881 = vld [vmem:[%s8844 + $0x90] sm:$0xf]
      %v8882 = vld [vmem:[%s8844 + $0x94] sm:$0xf]
      %v8883 = vld [vmem:[%s8844 + $0x98] sm:$0xf]
      %v8884 = vld [vmem:[%s8844 + $0x9c] sm:$0xf]
      %v8885 = vld [vmem:[%s8844 + $0xa0] sm:$0xf]
      %v8886 = vld [vmem:[%s8844 + $0xa4] sm:$0xf]
      %v8887 = vld [vmem:[%s8844 + $0xa8] sm:$0xf]
      %v8888 = vld [vmem:[%s8844 + $0xac] sm:$0xf]
      %v8889 = vld [vmem:[%s8844 + $0xb0] sm:$0xf]
      %v8890 = vld [vmem:[%s8844 + $0xb4] sm:$0xf]
      %v8891 = vld [vmem:[%s8844 + $0xb8] sm:$0xf]
      %v8892 = vld [vmem:[%s8844 + $0xbc] sm:$0xf]
      %v8941 = vunpack.c.l.b16 %v8845
      %v8942 = vunpack.c.l.b16 %v8846
      %v8943 = vunpack.c.l.b16 %v8847
      %v8944 = vunpack.c.l.b16 %v8848
      %v8945 = vunpack.c.l.b16 %v8849
      %v8946 = vunpack.c.l.b16 %v8850
      %v8947 = vunpack.c.l.b16 %v8851
      %v8948 = vunpack.c.l.b16 %v8852
      %v8949 = vunpack.c.l.b16 %v8853
      %v8950 = vunpack.c.l.b16 %v8854
      %v8951 = vunpack.c.l.b16 %v8855
      %v8952 = vunpack.c.l.b16 %v8856
      %v8953 = vunpack.c.l.b16 %v8857
      %v8954 = vunpack.c.l.b16 %v8858
      %v8955 = vunpack.c.l.b16 %v8859
      %v8956 = vunpack.c.l.b16 %v8860
      %v8957 = vunpack.c.l.b16 %v8861
      %v8958 = vunpack.c.l.b16 %v8862
      %v8959 = vunpack.c.l.b16 %v8863
      %v8960 = vunpack.c.l.b16 %v8864
      %v8961 = vunpack.c.l.b16 %v8865
      %v8962 = vunpack.c.l.b16 %v8866
      %v8963 = vunpack.c.l.b16 %v8867
      %v8964 = vunpack.c.l.b16 %v8868
      %v8965 = vunpack.c.l.b16 %v8869
      %v8966 = vunpack.c.l.b16 %v8870
      %v8967 = vunpack.c.l.b16 %v8871
      %v8968 = vunpack.c.l.b16 %v8872
      %v8969 = vunpack.c.l.b16 %v8873
      %v8970 = vunpack.c.l.b16 %v8874
      %v8971 = vunpack.c.l.b16 %v8875
      %v8972 = vunpack.c.l.b16 %v8876
      %v8973 = vunpack.c.l.b16 %v8877
      %v8974 = vunpack.c.l.b16 %v8878
      %v8975 = vunpack.c.l.b16 %v8879
      %v8976 = vunpack.c.l.b16 %v8880
      %v8977 = vunpack.c.l.b16 %v8881
      %v8978 = vunpack.c.l.b16 %v8882
      %v8979 = vunpack.c.l.b16 %v8883
      %v8980 = vunpack.c.l.b16 %v8884
      %v8981 = vunpack.c.l.b16 %v8885
      %v8982 = vunpack.c.l.b16 %v8886
      %v8983 = vunpack.c.l.b16 %v8887
      %v8984 = vunpack.c.l.b16 %v8888
      %v8985 = vunpack.c.l.b16 %v8889
      %v8986 = vunpack.c.l.b16 %v8890
      %v8987 = vunpack.c.l.b16 %v8891
      %v8988 = vunpack.c.l.b16 %v8892
      %v8989 = vpack.c.b16 %v8942, %v8941
      %v8990 = vpack.c.b16 %v8944, %v8943
      %v8991 = vpack.c.b16 %v8946, %v8945
      %v8992 = vpack.c.b16 %v8948, %v8947
      %v8993 = vpack.c.b16 %v8950, %v8949
      %v8994 = vpack.c.b16 %v8952, %v8951
      %v8995 = vpack.c.b16 %v8954, %v8953
      %v8996 = vpack.c.b16 %v8956, %v8955
      %v8997 = vpack.c.b16 %v8958, %v8957
      %v8998 = vpack.c.b16 %v8960, %v8959
      %v8999 = vpack.c.b16 %v8962, %v8961
      %v9000 = vpack.c.b16 %v8964, %v8963
      %v9001 = vpack.c.b16 %v8966, %v8965
      %v9002 = vpack.c.b16 %v8968, %v8967
      %v9003 = vpack.c.b16 %v8970, %v8969
      %v9004 = vpack.c.b16 %v8972, %v8971
      %v9005 = vpack.c.b16 %v8974, %v8973
      %v9006 = vpack.c.b16 %v8976, %v8975
      %v9007 = vpack.c.b16 %v8978, %v8977
      %v9008 = vpack.c.b16 %v8980, %v8979
      %v9009 = vpack.c.b16 %v8982, %v8981
      %v9010 = vpack.c.b16 %v8984, %v8983
      %v9011 = vpack.c.b16 %v8986, %v8985
      %v9012 = vpack.c.b16 %v8988, %v8987
      %9037 = vmatprep.subr.bf16.mxu0 0
      %9038 = vmatpush1.bf16.msra.mxu0 %v8989
      %9039 = vmatprep.subr.bf16.mxu0 0
      %9040 = vmatpush1.bf16.msra.mxu0 %v8990
      %9041 = vmatprep.subr.bf16.mxu0 0
      %9042 = vmatpush1.bf16.msra.mxu0 %v8991
      %9043 = vmatprep.subr.bf16.mxu0 0
      %9044 = vmatpush1.bf16.msra.mxu0 %v8992
      %9045 = vmatprep.subr.bf16.mxu0 0
      %9046 = vmatpush1.bf16.msra.mxu0 %v8993
      %9047 = vmatprep.subr.bf16.mxu0 0
      %9048 = vmatpush1.bf16.msra.mxu0 %v8994
      %9049 = vmatprep.subr.bf16.mxu0 0
      %9050 = vmatpush1.bf16.msra.mxu0 %v8995
      %9051 = vmatprep.subr.bf16.mxu0 0
      %9052 = vmatpush1.bf16.msra.mxu0 %v8996
      %9053 = vmatprep.subr.bf16.mxu0 0
      %9054 = vmatpush1.bf16.msra.mxu0 %v8997
      %9055 = vmatprep.subr.bf16.mxu0 0
      %9056 = vmatpush1.bf16.msra.mxu0 %v8998
      %9057 = vmatprep.subr.bf16.mxu0 0
      %9058 = vmatpush1.bf16.msra.mxu0 %v8999
      %9059 = vmatprep.subr.bf16.mxu0 0
      %9060 = vmatpush1.bf16.msra.mxu0 %v9000
      %9061 = vmatprep.subr.bf16.mxu0 0
      %9062 = vmatpush1.bf16.msra.mxu0 %v9001
      %9063 = vmatprep.subr.bf16.mxu0 0
      %9064 = vmatpush1.bf16.msra.mxu0 %v9002
      %9065 = vmatprep.subr.bf16.mxu0 0
      %9066 = vmatpush1.bf16.msra.mxu0 %v9003
      %9067 = vmatprep.subr.bf16.mxu0 0
      %9068 = vmatpush1.bf16.msra.mxu0 %v9004
      %9069 = vmatprep.mubr.bf16.mxu0 %v8797
      %9070 = vmatmul.mubr.bf16.gmra.mrb[0].mxu0 %v8796
      %v9071 = vpop.f32.mrb[0].mxu0
      %v9072 = vadd.f32 0.0, %v9071
      %v9073 = vpop.f32.mrb[0].mxu0
      %v9074 = vpop.f32.mrb[0].mxu0
      %v9075 = vadd.f32 0.0, %v9074
      %v9076 = vpop.f32.mrb[0].mxu0
      %9077 = vmatprep.mubr.bf16.mxu0 %v8800
      %9078 = vmatmul.mubr.bf16.gmra.mrb[0].mxu0 %v8799
      %v9079 = vpop.f32.mrb[0].mxu0
      %v9080 = vadd.f32 0.0, %v9079
      %v9081 = vpop.f32.mrb[0].mxu0
      %v9082 = vpop.f32.mrb[0].mxu0
      %v9083 = vadd.f32 0.0, %v9082
      %v9084 = vpop.f32.mrb[0].mxu0
      %9085 = vmatprep.mubr.bf16.mxu0 %v8803
      %9086 = vmatmul.mubr.bf16.gmra.mrb[0].mxu0 %v8802
      %v9087 = vpop.f32.mrb[0].mxu0
      %v9088 = vadd.f32 0.0, %v9087
      %v9089 = vpop.f32.mrb[0].mxu0
      %v9090 = vpop.f32.mrb[0].mxu0
      %v9091 = vadd.f32 0.0, %v9090
      %v9092 = vpop.f32.mrb[0].mxu0
      %9093 = vmatprep.mubr.bf16.mxu0 %v8806
      %9094 = vmatmul.mubr.bf16.gmra.mrb[0].mxu0 %v8805
      %v9095 = vpop.f32.mrb[0].mxu0
      %v9096 = vadd.f32 0.0, %v9095
      %v9097 = vpop.f32.mrb[0].mxu0
      %v9098 = vpop.f32.mrb[0].mxu0
      %v9099 = vadd.f32 0.0, %v9098
      %v9100 = vpop.f32.mrb[0].mxu0
      %9101 = vmatprep.mubr.bf16.mxu0 %v8809
      %9102 = vmatmul.mubr.bf16.gmra.mrb[0].mxu0 %v8808
      %v9103 = vpop.f32.mrb[0].mxu0
      %v9104 = vadd.f32 0.0, %v9103
      %v9105 = vpop.f32.mrb[0].mxu0
      %v9106 = vpop.f32.mrb[0].mxu0
      %v9107 = vadd.f32 0.0, %v9106
      %v9108 = vpop.f32.mrb[0].mxu0
      %9109 = vmatprep.mubr.bf16.mxu0 %v8812
      %9110 = vmatmul.mubr.bf16.gmra.mrb[0].mxu0 %v8811
      %v9111 = vpop.f32.mrb[0].mxu0
      %v9112 = vadd.f32 0.0, %v9111
      %v9113 = vpop.f32.mrb[0].mxu0
      %v9114 = vpop.f32.mrb[0].mxu0
      %v9115 = vadd.f32 0.0, %v9114
      %v9116 = vpop.f32.mrb[0].mxu0
      %9117 = vmatprep.mubr.bf16.mxu0 %v8815
      %9118 = vmatmul.mubr.bf16.gmra.mrb[0].mxu0 %v8814
      %v9119 = vpop.f32.mrb[0].mxu0
      %v9120 = vadd.f32 0.0, %v9119
      %v9121 = vpop.f32.mrb[0].mxu0
      %v9122 = vpop.f32.mrb[0].mxu0
      %v9123 = vadd.f32 0.0, %v9122
      %v9124 = vpop.f32.mrb[0].mxu0
      %9125 = vmatprep.mubr.bf16.mxu0 %v8818
      %9126 = vmatmul.mubr.bf16.gmra.mrb[0].mxu0 %v8817
      %v9127 = vpop.f32.mrb[0].mxu0
      %v9128 = vadd.f32 0.0, %v9127
      %v9129 = vpop.f32.mrb[0].mxu0
      %v9130 = vpop.f32.mrb[0].mxu0
      %v9131 = vadd.f32 0.0, %v9130
      %v9132 = vpop.f32.mrb[0].mxu0
      %9133 = vmatprep.mubr.bf16.mxu0 %v8821
      %9134 = vmatmul.mubr.bf16.gmra.mrb[0].mxu0 %v8820
      %v9135 = vpop.f32.mrb[0].mxu0
      %v9136 = vadd.f32 0.0, %v9135
      %v9137 = vpop.f32.mrb[0].mxu0
      %v9138 = vpop.f32.mrb[0].mxu0
      %v9139 = vadd.f32 0.0, %v9138
      %v9140 = vpop.f32.mrb[0].mxu0
      %9141 = vmatprep.mubr.bf16.mxu0 %v8824
      %9142 = vmatmul.mubr.bf16.gmra.mrb[0].mxu0 %v8823
      %v9143 = vpop.f32.mrb[0].mxu0
      %v9144 = vadd.f32 0.0, %v9143
      %v9145 = vpop.f32.mrb[0].mxu0
      %v9146 = vpop.f32.mrb[0].mxu0
      %v9147 = vadd.f32 0.0, %v9146
      %v9148 = vpop.f32.mrb[0].mxu0
      %9149 = vmatprep.mubr.bf16.mxu0 %v8827
      %9150 = vmatmul.mubr.bf16.gmra.mrb[0].mxu0 %v8826
      %v9151 = vpop.f32.mrb[0].mxu0
      %v9152 = vadd.f32 0.0, %v9151
      %v9153 = vpop.f32.mrb[0].mxu0
      %v9154 = vpop.f32.mrb[0].mxu0
      %v9155 = vadd.f32 0.0, %v9154
      %v9156 = vpop.f32.mrb[0].mxu0
      %9157 = vmatprep.mubr.bf16.mxu0 %v8830
      %9158 = vmatmul.mubr.bf16.gmra.mrb[0].mxu0 %v8829
      %v9159 = vpop.f32.mrb[0].mxu0
      %v9160 = vadd.f32 0.0, %v9159
      %v9161 = vpop.f32.mrb[0].mxu0
      %v9162 = vpop.f32.mrb[0].mxu0
      %v9163 = vadd.f32 0.0, %v9162
      %v9164 = vpop.f32.mrb[0].mxu0
      %9165 = vmatprep.mubr.bf16.mxu0 %v8833
      %9166 = vmatmul.mubr.bf16.gmra.mrb[0].mxu0 %v8832
      %v9167 = vpop.f32.mrb[0].mxu0
      %v9168 = vadd.f32 0.0, %v9167
      %v9169 = vpop.f32.mrb[0].mxu0
      %v9170 = vpop.f32.mrb[0].mxu0
      %v9171 = vadd.f32 0.0, %v9170
      %v9172 = vpop.f32.mrb[0].mxu0
      %9173 = vmatprep.mubr.bf16.mxu0 %v8836
      %9174 = vmatmul.mubr.bf16.gmra.mrb[0].mxu0 %v8835
      %v9175 = vpop.f32.mrb[0].mxu0
      %v9176 = vadd.f32 0.0, %v9175
      %v9177 = vpop.f32.mrb[0].mxu0
      %v9178 = vpop.f32.mrb[0].mxu0
      %v9179 = vadd.f32 0.0, %v9178
      %v9180 = vpop.f32.mrb[0].mxu0
      %9181 = vmatprep.mubr.bf16.mxu0 %v8839
      %9182 = vmatmul.mubr.bf16.gmra.mrb[0].mxu0 %v8838
      %v9183 = vpop.f32.mrb[0].mxu0
      %v9184 = vadd.f32 0.0, %v9183
      %v9185 = vpop.f32.mrb[0].mxu0
      %v9186 = vpop.f32.mrb[0].mxu0
      %v9187 = vadd.f32 0.0, %v9186
      %v9188 = vpop.f32.mrb[0].mxu0
      %9189 = vmatprep.mubr.bf16.mxu0 %v8842
      %9190 = vmatmul.mubr.bf16.gmra.mrb[0].mxu0 %v8841
      %v9191 = vpop.f32.mrb[0].mxu0
      %v9192 = vadd.f32 0.0, %v9191
      %v9193 = vpop.f32.mrb[0].mxu0
      %v9194 = vpop.f32.mrb[0].mxu0
      %v9195 = vadd.f32 0.0, %v9194
      %v9196 = vpop.f32.mrb[0].mxu0
      %9197 = vdwg.mxu0
      %9198 = vmatprep.subr.bf16.mxu0 0
      %9199 = vmatpush1.bf16.msra.mxu0 %v9005
      %9200 = vmatprep.subr.bf16.mxu0 0
      %9201 = vmatpush1.bf16.msra.mxu0 %v9006
      %9202 = vmatprep.subr.bf16.mxu0 0
      %9203 = vmatpush1.bf16.msra.mxu0 %v9007
      %9204 = vmatprep.subr.bf16.mxu0 0
      %9205 = vmatpush1.bf16.msra.mxu0 %v9008
      %9206 = vmatprep.subr.bf16.mxu0 0
      %9207 = vmatpush1.bf16.msra.mxu0 %v9009
      %9208 = vmatprep.subr.bf16.mxu0 0
      %9209 = vmatpush1.bf16.msra.mxu0 %v9010
      %9210 = vmatprep.subr.bf16.mxu0 0
      %9211 = vmatpush1.bf16.msra.mxu0 %v9011
      %9212 = vmatprep.subr.bf16.mxu0 0
      %9213 = vmatpush1.bf16.msra.mxu0 %v9012
      %9214 = vmatprep.subr.bf16.mxu0 0
      %9215 = vmatpush1.bf16.msra.mxu0 0
      %9216 = vmatprep.subr.bf16.mxu0 0
      %9217 = vmatpush1.bf16.msra.mxu0 0
      %9218 = vmatprep.subr.bf16.mxu0 0
      %9219 = vmatpush1.bf16.msra.mxu0 0
      %9220 = vmatprep.subr.bf16.mxu0 0
      %9221 = vmatpush1.bf16.msra.mxu0 0
      %9222 = vmatprep.subr.bf16.mxu0 0
      %9223 = vmatpush1.bf16.msra.mxu0 0
      %9224 = vmatprep.subr.bf16.mxu0 0
      %9225 = vmatpush1.bf16.msra.mxu0 0
      %9226 = vmatprep.subr.bf16.mxu0 0
      %9227 = vmatpush1.bf16.msra.mxu0 0
      %9228 = vmatprep.subr.bf16.mxu0 0
      %9229 = vmatpush1.bf16.msra.mxu0 0
      %9230 = vmatprep.mubr.bf16.mxu0 0
      %9231 = vmatmul.mubr.bf16.gmra.mrb[0].mxu0 %v8798
      %v9232 = vpop.f32.mrb[0].mxu0
      %v9233 = vadd.f32 %v9072, %v9232
      %v9234 = vpop.f32.mrb[0].mxu0
      %v9235 = vpop.f32.mrb[0].mxu0
      %v9236 = vadd.f32 %v9075, %v9235
      %v9237 = vpop.f32.mrb[0].mxu0
      %9238 = vmatprep.mubr.bf16.mxu0 0
      %9239 = vmatmul.mubr.bf16.gmra.mrb[0].mxu0 %v8801
      %v9240 = vpop.f32.mrb[0].mxu0
      %v9241 = vadd.f32 %v9080, %v9240
      %v9242 = vpop.f32.mrb[0].mxu0
      %v9243 = vpop.f32.mrb[0].mxu0
      %v9244 = vadd.f32 %v9083, %v9243
      %v9245 = vpop.f32.mrb[0].mxu0
      %9246 = vmatprep.mubr.bf16.mxu0 0
      %9247 = vmatmul.mubr.bf16.gmra.mrb[0].mxu0 %v8804
      %v9248 = vpop.f32.mrb[0].mxu0
      %v9249 = vadd.f32 %v9088, %v9248
      %v9250 = vpop.f32.mrb[0].mxu0
      %v9251 = vpop.f32.mrb[0].mxu0
      %v9252 = vadd.f32 %v9091, %v9251
      %v9253 = vpop.f32.mrb[0].mxu0
      %9254 = vmatprep.mubr.bf16.mxu0 0
      %9255 = vmatmul.mubr.bf16.gmra.mrb[0].mxu0 %v8807
      %v9256 = vpop.f32.mrb[0].mxu0
      %v9257 = vadd.f32 %v9096, %v9256
      %v9258 = vpop.f32.mrb[0].mxu0
      %v9259 = vpop.f32.mrb[0].mxu0
      %v9260 = vadd.f32 %v9099, %v9259
      %v9261 = vpop.f32.mrb[0].mxu0
      %9262 = vmatprep.mubr.bf16.mxu0 0
      %9263 = vmatmul.mubr.bf16.gmra.mrb[0].mxu0 %v8810
      %v9264 = vpop.f32.mrb[0].mxu0
      %v9265 = vadd.f32 %v9104, %v9264
      %v9266 = vpop.f32.mrb[0].mxu0
      %v9267 = vpop.f32.mrb[0].mxu0
      %v9268 = vadd.f32 %v9107, %v9267
      %v9269 = vpop.f32.mrb[0].mxu0
      %9270 = vmatprep.mubr.bf16.mxu0 0
      %9271 = vmatmul.mubr.bf16.gmra.mrb[0].mxu0 %v8813
      %v9272 = vpop.f32.mrb[0].mxu0
      %v9273 = vadd.f32 %v9112, %v9272
      %v9274 = vpop.f32.mrb[0].mxu0
      %v9275 = vpop.f32.mrb[0].mxu0
      %v9276 = vadd.f32 %v9115, %v9275
      %v9277 = vpop.f32.mrb[0].mxu0
      %9278 = vmatprep.mubr.bf16.mxu0 0
      %9279 = vmatmul.mubr.bf16.gmra.mrb[0].mxu0 %v8816
      %v9280 = vpop.f32.mrb[0].mxu0
      %v9281 = vadd.f32 %v9120, %v9280
      %v9282 = vpop.f32.mrb[0].mxu0
      %v9283 = vpop.f32.mrb[0].mxu0
      %v9284 = vadd.f32 %v9123, %v9283
      %v9285 = vpop.f32.mrb[0].mxu0
      %9286 = vmatprep.mubr.bf16.mxu0 0
      %9287 = vmatmul.mubr.bf16.gmra.mrb[0].mxu0 %v8819
      %v9288 = vpop.f32.mrb[0].mxu0
      %v9289 = vadd.f32 %v9128, %v9288
      %v9290 = vpop.f32.mrb[0].mxu0
      %v9291 = vpop.f32.mrb[0].mxu0
      %v9292 = vadd.f32 %v9131, %v9291
      %v9293 = vpop.f32.mrb[0].mxu0
      %9294 = vmatprep.mubr.bf16.mxu0 0
      %9295 = vmatmul.mubr.bf16.gmra.mrb[0].mxu0 %v8822
      %v9296 = vpop.f32.mrb[0].mxu0
      %v9297 = vadd.f32 %v9136, %v9296
      %v9298 = vpop.f32.mrb[0].mxu0
      %v9299 = vpop.f32.mrb[0].mxu0
      %v9300 = vadd.f32 %v9139, %v9299
      %v9301 = vpop.f32.mrb[0].mxu0
      %9302 = vmatprep.mubr.bf16.mxu0 0
      %9303 = vmatmul.mubr.bf16.gmra.mrb[0].mxu0 %v8825
      %v9304 = vpop.f32.mrb[0].mxu0
      %v9305 = vadd.f32 %v9144, %v9304
      %v9306 = vpop.f32.mrb[0].mxu0
      %v9307 = vpop.f32.mrb[0].mxu0
      %v9308 = vadd.f32 %v9147, %v9307
      %v9309 = vpop.f32.mrb[0].mxu0
      %9310 = vmatprep.mubr.bf16.mxu0 0
      %9311 = vmatmul.mubr.bf16.gmra.mrb[0].mxu0 %v8828
      %v9312 = vpop.f32.mrb[0].mxu0
      %v9313 = vadd.f32 %v9152, %v9312
      %v9314 = vpop.f32.mrb[0].mxu0
      %v9315 = vpop.f32.mrb[0].mxu0
      %v9316 = vadd.f32 %v9155, %v9315
      %v9317 = vpop.f32.mrb[0].mxu0
      %9318 = vmatprep.mubr.bf16.mxu0 0
      %9319 = vmatmul.mubr.bf16.gmra.mrb[0].mxu0 %v8831
      %v9320 = vpop.f32.mrb[0].mxu0
      %v9321 = vadd.f32 %v9160, %v9320
      %v9322 = vpop.f32.mrb[0].mxu0
      %v9323 = vpop.f32.mrb[0].mxu0
      %v9324 = vadd.f32 %v9163, %v9323
      %v9325 = vpop.f32.mrb[0].mxu0
      %9326 = vmatprep.mubr.bf16.mxu0 0
      %9327 = vmatmul.mubr.bf16.gmra.mrb[0].mxu0 %v8834
      %v9328 = vpop.f32.mrb[0].mxu0
      %v9329 = vadd.f32 %v9168, %v9328
      %v9330 = vpop.f32.mrb[0].mxu0
      %v9331 = vpop.f32.mrb[0].mxu0
      %v9332 = vadd.f32 %v9171, %v9331
      %v9333 = vpop.f32.mrb[0].mxu0
      %9334 = vmatprep.mubr.bf16.mxu0 0
      %9335 = vmatmul.mubr.bf16.gmra.mrb[0].mxu0 %v8837
      %v9336 = vpop.f32.mrb[0].mxu0
      %v9337 = vadd.f32 %v9176, %v9336
      %v9338 = vpop.f32.mrb[0].mxu0
      %v9339 = vpop.f32.mrb[0].mxu0
      %v9340 = vadd.f32 %v9179, %v9339
      %v9341 = vpop.f32.mrb[0].mxu0
      %9342 = vmatprep.mubr.bf16.mxu0 0
      %9343 = vmatmul.mubr.bf16.gmra.mrb[0].mxu0 %v8840
      %v9344 = vpop.f32.mrb[0].mxu0
      %v9345 = vadd.f32 %v9184, %v9344
      %v9346 = vpop.f32.mrb[0].mxu0
      %v9347 = vpop.f32.mrb[0].mxu0
      %v9348 = vadd.f32 %v9187, %v9347
      %v9349 = vpop.f32.mrb[0].mxu0
      %9350 = vmatprep.mubr.bf16.mxu0 0
      %9351 = vmatmul.mubr.bf16.gmra.mrb[0].mxu0 %v8843
      %v9352 = vpop.f32.mrb[0].mxu0
      %v9353 = vadd.f32 %v9192, %v9352
      %v9354 = vpop.f32.mrb[0].mxu0
      %v9355 = vpop.f32.mrb[0].mxu0
      %v9356 = vadd.f32 %v9195, %v9355
      %v9357 = vpop.f32.mrb[0].mxu0
      %9358 = vdwg.mxu0
      %v9407 = vunpack.c.l.b16 %v8748
      %v9408 = vunpack.c.l.b16 %v8749
      %v9409 = vunpack.c.l.b16 %v8750
      %v9410 = vunpack.c.l.b16 %v8751
      %v9411 = vunpack.c.l.b16 %v8752
      %v9412 = vunpack.c.l.b16 %v8753
      %v9413 = vunpack.c.l.b16 %v8754
      %v9414 = vunpack.c.l.b16 %v8755
      %v9415 = vunpack.c.l.b16 %v8756
      %v9416 = vunpack.c.l.b16 %v8757
      %v9417 = vunpack.c.l.b16 %v8758
      %v9418 = vunpack.c.l.b16 %v8759
      %v9419 = vunpack.c.l.b16 %v8760
      %v9420 = vunpack.c.l.b16 %v8761
      %v9421 = vunpack.c.l.b16 %v8762
      %v9422 = vunpack.c.l.b16 %v8763
      %v9423 = vunpack.c.l.b16 %v8764
      %v9424 = vunpack.c.l.b16 %v8765
      %v9425 = vunpack.c.l.b16 %v8766
      %v9426 = vunpack.c.l.b16 %v8767
      %v9427 = vunpack.c.l.b16 %v8768
      %v9428 = vunpack.c.l.b16 %v8769
      %v9429 = vunpack.c.l.b16 %v8770
      %v9430 = vunpack.c.l.b16 %v8771
      %v9431 = vunpack.c.l.b16 %v8772
      %v9432 = vunpack.c.l.b16 %v8773
      %v9433 = vunpack.c.l.b16 %v8774
      %v9434 = vunpack.c.l.b16 %v8775
      %v9435 = vunpack.c.l.b16 %v8776
      %v9436 = vunpack.c.l.b16 %v8777
      %v9437 = vunpack.c.l.b16 %v8778
      %v9438 = vunpack.c.l.b16 %v8779
      %v9439 = vunpack.c.l.b16 %v8780
      %v9440 = vunpack.c.l.b16 %v8781
      %v9441 = vunpack.c.l.b16 %v8782
      %v9442 = vunpack.c.l.b16 %v8783
      %v9443 = vunpack.c.l.b16 %v8784
      %v9444 = vunpack.c.l.b16 %v8785
      %v9445 = vunpack.c.l.b16 %v8786
      %v9446 = vunpack.c.l.b16 %v8787
      %v9447 = vunpack.c.l.b16 %v8788
      %v9448 = vunpack.c.l.b16 %v8789
      %v9449 = vunpack.c.l.b16 %v8790
      %v9450 = vunpack.c.l.b16 %v8791
      %v9451 = vunpack.c.l.b16 %v8792
      %v9452 = vunpack.c.l.b16 %v8793
      %v9453 = vunpack.c.l.b16 %v8794
      %v9454 = vunpack.c.l.b16 %v8795
      %v9455 = vpack.c.b16 %v9408, %v9407
      %v9456 = vpack.c.b16 %v9410, %v9409
      %v9457 = vpack.c.b16 %v9412, %v9411
      %v9458 = vpack.c.b16 %v9414, %v9413
      %v9459 = vpack.c.b16 %v9416, %v9415
      %v9460 = vpack.c.b16 %v9418, %v9417
      %v9461 = vpack.c.b16 %v9420, %v9419
      %v9462 = vpack.c.b16 %v9422, %v9421
      %v9463 = vpack.c.b16 %v9424, %v9423
      %v9464 = vpack.c.b16 %v9426, %v9425
      %v9465 = vpack.c.b16 %v9428, %v9427
      %v9466 = vpack.c.b16 %v9430, %v9429
      %v9467 = vpack.c.b16 %v9432, %v9431
      %v9468 = vpack.c.b16 %v9434, %v9433
      %v9469 = vpack.c.b16 %v9436, %v9435
      %v9470 = vpack.c.b16 %v9438, %v9437
      %v9471 = vpack.c.b16 %v9440, %v9439
      %v9472 = vpack.c.b16 %v9442, %v9441
      %v9473 = vpack.c.b16 %v9444, %v9443
      %v9474 = vpack.c.b16 %v9446, %v9445
      %v9475 = vpack.c.b16 %v9448, %v9447
      %v9476 = vpack.c.b16 %v9450, %v9449
      %v9477 = vpack.c.b16 %v9452, %v9451
      %v9478 = vpack.c.b16 %v9454, %v9453
      %9503 = vmatprep.subr.bf16.mxu0 0
      %9504 = vmatpush1.bf16.msra.mxu0 %v9455
      %9505 = vmatprep.subr.bf16.mxu0 0
      %9506 = vmatpush1.bf16.msra.mxu0 %v9456
      %9507 = vmatprep.subr.bf16.mxu0 0
      %9508 = vmatpush1.bf16.msra.mxu0 %v9457
      %9509 = vmatprep.subr.bf16.mxu0 0
      %9510 = vmatpush1.bf16.msra.mxu0 %v9458
      %9511 = vmatprep.subr.bf16.mxu0 0
      %9512 = vmatpush1.bf16.msra.mxu0 %v9459
      %9513 = vmatprep.subr.bf16.mxu0 0
      %9514 = vmatpush1.bf16.msra.mxu0 %v9460
      %9515 = vmatprep.subr.bf16.mxu0 0
      %9516 = vmatpush1.bf16.msra.mxu0 %v9461
      %9517 = vmatprep.subr.bf16.mxu0 0
      %9518 = vmatpush1.bf16.msra.mxu0 %v9462
      %9519 = vmatprep.subr.bf16.mxu0 0
      %9520 = vmatpush1.bf16.msra.mxu0 %v9463
      %9521 = vmatprep.subr.bf16.mxu0 0
      %9522 = vmatpush1.bf16.msra.mxu0 %v9464
      %9523 = vmatprep.subr.bf16.mxu0 0
      %9524 = vmatpush1.bf16.msra.mxu0 %v9465
      %9525 = vmatprep.subr.bf16.mxu0 0
      %9526 = vmatpush1.bf16.msra.mxu0 %v9466
      %9527 = vmatprep.subr.bf16.mxu0 0
      %9528 = vmatpush1.bf16.msra.mxu0 %v9467
      %9529 = vmatprep.subr.bf16.mxu0 0
      %9530 = vmatpush1.bf16.msra.mxu0 %v9468
      %9531 = vmatprep.subr.bf16.mxu0 0
      %9532 = vmatpush1.bf16.msra.mxu0 %v9469
      %9533 = vmatprep.subr.bf16.mxu0 0
      %9534 = vmatpush1.bf16.msra.mxu0 %v9470
      %9535 = vmatprep.mubr.bf16.mxu0 %v8701
      %9536 = vmatmul.mubr.bf16.gmra.mrb[0].mxu0 %v8700
      %v9537 = vpop.f32.mrb[0].mxu0
      %v9538 = vadd.f32 %v9233, %v9537
      %v9539 = vpop.f32.mrb[0].mxu0
      %v9540 = vpop.f32.mrb[0].mxu0
      %v9541 = vadd.f32 %v9236, %v9540
      %v9542 = vpop.f32.mrb[0].mxu0
      %9543 = vmatprep.mubr.bf16.mxu0 %v8704
      %9544 = vmatmul.mubr.bf16.gmra.mrb[0].mxu0 %v8703
      %v9545 = vpop.f32.mrb[0].mxu0
      %v9546 = vadd.f32 %v9241, %v9545
      %v9547 = vpop.f32.mrb[0].mxu0
      %v9548 = vpop.f32.mrb[0].mxu0
      %v9549 = vadd.f32 %v9244, %v9548
      %v9550 = vpop.f32.mrb[0].mxu0
      %9551 = vmatprep.mubr.bf16.mxu0 %v8707
      %9552 = vmatmul.mubr.bf16.gmra.mrb[0].mxu0 %v8706
      %v9553 = vpop.f32.mrb[0].mxu0
      %v9554 = vadd.f32 %v9249, %v9553
      %v9555 = vpop.f32.mrb[0].mxu0
      %v9556 = vpop.f32.mrb[0].mxu0
      %v9557 = vadd.f32 %v9252, %v9556
      %v9558 = vpop.f32.mrb[0].mxu0
      %9559 = vmatprep.mubr.bf16.mxu0 %v8710
      %9560 = vmatmul.mubr.bf16.gmra.mrb[0].mxu0 %v8709
      %v9561 = vpop.f32.mrb[0].mxu0
      %v9562 = vadd.f32 %v9257, %v9561
      %v9563 = vpop.f32.mrb[0].mxu0
      %v9564 = vpop.f32.mrb[0].mxu0
      %v9565 = vadd.f32 %v9260, %v9564
      %v9566 = vpop.f32.mrb[0].mxu0
      %9567 = vmatprep.mubr.bf16.mxu0 %v8713
      %9568 = vmatmul.mubr.bf16.gmra.mrb[0].mxu0 %v8712
      %v9569 = vpop.f32.mrb[0].mxu0
      %v9570 = vadd.f32 %v9265, %v9569
      %v9571 = vpop.f32.mrb[0].mxu0
      %v9572 = vpop.f32.mrb[0].mxu0
      %v9573 = vadd.f32 %v9268, %v9572
      %v9574 = vpop.f32.mrb[0].mxu0
      %9575 = vmatprep.mubr.bf16.mxu0 %v8716
      %9576 = vmatmul.mubr.bf16.gmra.mrb[0].mxu0 %v8715
      %v9577 = vpop.f32.mrb[0].mxu0
      %v9578 = vadd.f32 %v9273, %v9577
      %v9579 = vpop.f32.mrb[0].mxu0
      %v9580 = vpop.f32.mrb[0].mxu0
      %v9581 = vadd.f32 %v9276, %v9580
      %v9582 = vpop.f32.mrb[0].mxu0
      %9583 = vmatprep.mubr.bf16.mxu0 %v8719
      %9584 = vmatmul.mubr.bf16.gmra.mrb[0].mxu0 %v8718
      %v9585 = vpop.f32.mrb[0].mxu0
      %v9586 = vadd.f32 %v9281, %v9585
      %v9587 = vpop.f32.mrb[0].mxu0
      %v9588 = vpop.f32.mrb[0].mxu0
      %v9589 = vadd.f32 %v9284, %v9588
      %v9590 = vpop.f32.mrb[0].mxu0
      %9591 = vmatprep.mubr.bf16.mxu0 %v8722
      %9592 = vmatmul.mubr.bf16.gmra.mrb[0].mxu0 %v8721
      %v9593 = vpop.f32.mrb[0].mxu0
      %v9594 = vadd.f32 %v9289, %v9593
      %v9595 = vpop.f32.mrb[0].mxu0
      %v9596 = vpop.f32.mrb[0].mxu0
      %v9597 = vadd.f32 %v9292, %v9596
      %v9598 = vpop.f32.mrb[0].mxu0
      %9599 = vmatprep.mubr.bf16.mxu0 %v8725
      %9600 = vmatmul.mubr.bf16.gmra.mrb[0].mxu0 %v8724
      %v9601 = vpop.f32.mrb[0].mxu0
      %v9602 = vadd.f32 %v9297, %v9601
      %v9603 = vpop.f32.mrb[0].mxu0
      %v9604 = vpop.f32.mrb[0].mxu0
      %v9605 = vadd.f32 %v9300, %v9604
      %v9606 = vpop.f32.mrb[0].mxu0
      %9607 = vmatprep.mubr.bf16.mxu0 %v8728
      %9608 = vmatmul.mubr.bf16.gmra.mrb[0].mxu0 %v8727
      %v9609 = vpop.f32.mrb[0].mxu0
      %v9610 = vadd.f32 %v9305, %v9609
      %v9611 = vpop.f32.mrb[0].mxu0
      %v9612 = vpop.f32.mrb[0].mxu0
      %v9613 = vadd.f32 %v9308, %v9612
      %v9614 = vpop.f32.mrb[0].mxu0
      %9615 = vmatprep.mubr.bf16.mxu0 %v8731
      %9616 = vmatmul.mubr.bf16.gmra.mrb[0].mxu0 %v8730
      %v9617 = vpop.f32.mrb[0].mxu0
      %v9618 = vadd.f32 %v9313, %v9617
      %v9619 = vpop.f32.mrb[0].mxu0
      %v9620 = vpop.f32.mrb[0].mxu0
      %v9621 = vadd.f32 %v9316, %v9620
      %v9622 = vpop.f32.mrb[0].mxu0
      %9623 = vmatprep.mubr.bf16.mxu0 %v8734
      %9624 = vmatmul.mubr.bf16.gmra.mrb[0].mxu0 %v8733
      %v9625 = vpop.f32.mrb[0].mxu0
      %v9626 = vadd.f32 %v9321, %v9625
      %v9627 = vpop.f32.mrb[0].mxu0
      %v9628 = vpop.f32.mrb[0].mxu0
      %v9629 = vadd.f32 %v9324, %v9628
      %v9630 = vpop.f32.mrb[0].mxu0
      %9631 = vmatprep.mubr.bf16.mxu0 %v8737
      %9632 = vmatmul.mubr.bf16.gmra.mrb[0].mxu0 %v8736
      %v9633 = vpop.f32.mrb[0].mxu0
      %v9634 = vadd.f32 %v9329, %v9633
      %v9635 = vpop.f32.mrb[0].mxu0
      %v9636 = vpop.f32.mrb[0].mxu0
      %v9637 = vadd.f32 %v9332, %v9636
      %v9638 = vpop.f32.mrb[0].mxu0
      %9639 = vmatprep.mubr.bf16.mxu0 %v8740
      %9640 = vmatmul.mubr.bf16.gmra.mrb[0].mxu0 %v8739
      %v9641 = vpop.f32.mrb[0].mxu0
      %v9642 = vadd.f32 %v9337, %v9641
      %v9643 = vpop.f32.mrb[0].mxu0
      %v9644 = vpop.f32.mrb[0].mxu0
      %v9645 = vadd.f32 %v9340, %v9644
      %v9646 = vpop.f32.mrb[0].mxu0
      %9647 = vmatprep.mubr.bf16.mxu0 %v8743
      %9648 = vmatmul.mubr.bf16.gmra.mrb[0].mxu0 %v8742
      %v9649 = vpop.f32.mrb[0].mxu0
      %v9650 = vadd.f32 %v9345, %v9649
      %v9651 = vpop.f32.mrb[0].mxu0
      %v9652 = vpop.f32.mrb[0].mxu0
      %v9653 = vadd.f32 %v9348, %v9652
      %v9654 = vpop.f32.mrb[0].mxu0
      %9655 = vmatprep.mubr.bf16.mxu0 %v8746
      %9656 = vmatmul.mubr.bf16.gmra.mrb[0].mxu0 %v8745
      %v9657 = vpop.f32.mrb[0].mxu0
      %v9658 = vadd.f32 %v9353, %v9657
      %v9659 = vpop.f32.mrb[0].mxu0
      %v9660 = vpop.f32.mrb[0].mxu0
      %v9661 = vadd.f32 %v9356, %v9660
      %v9662 = vpop.f32.mrb[0].mxu0
      %9663 = vdwg.mxu0
      %9664 = vmatprep.subr.bf16.mxu0 0
      %9665 = vmatpush1.bf16.msra.mxu0 %v9471
      %9666 = vmatprep.subr.bf16.mxu0 0
      %9667 = vmatpush1.bf16.msra.mxu0 %v9472
      %9668 = vmatprep.subr.bf16.mxu0 0
      %9669 = vmatpush1.bf16.msra.mxu0 %v9473
      %9670 = vmatprep.subr.bf16.mxu0 0
      %9671 = vmatpush1.bf16.msra.mxu0 %v9474
      %9672 = vmatprep.subr.bf16.mxu0 0
      %9673 = vmatpush1.bf16.msra.mxu0 %v9475
      %9674 = vmatprep.subr.bf16.mxu0 0
      %9675 = vmatpush1.bf16.msra.mxu0 %v9476
      %9676 = vmatprep.subr.bf16.mxu0 0
      %9677 = vmatpush1.bf16.msra.mxu0 %v9477
      %9678 = vmatprep.subr.bf16.mxu0 0
      %9679 = vmatpush1.bf16.msra.mxu0 %v9478
      %9680 = vmatprep.subr.bf16.mxu0 0
      %9681 = vmatpush1.bf16.msra.mxu0 0
      %9682 = vmatprep.subr.bf16.mxu0 0
      %9683 = vmatpush1.bf16.msra.mxu0 0
      %9684 = vmatprep.subr.bf16.mxu0 0
      %9685 = vmatpush1.bf16.msra.mxu0 0
      %9686 = vmatprep.subr.bf16.mxu0 0
      %9687 = vmatpush1.bf16.msra.mxu0 0
      %9688 = vmatprep.subr.bf16.mxu0 0
      %9689 = vmatpush1.bf16.msra.mxu0 0
      %9690 = vmatprep.subr.bf16.mxu0 0
      %9691 = vmatpush1.bf16.msra.mxu0 0
      %9692 = vmatprep.subr.bf16.mxu0 0
      %9693 = vmatpush1.bf16.msra.mxu0 0
      %9694 = vmatprep.subr.bf16.mxu0 0
      %9695 = vmatpush1.bf16.msra.mxu0 0
      %9696 = vmatprep.mubr.bf16.mxu0 0
      %9697 = vmatmul.mubr.bf16.gmra.mrb[0].mxu0 %v8702
      %v9698 = vpop.f32.mrb[0].mxu0
      %v9699 = vadd.f32 %v9538, %v9698
      %v9700 = vpop.f32.mrb[0].mxu0
      %v9701 = vpop.f32.mrb[0].mxu0
      %v9702 = vadd.f32 %v9541, %v9701
      %v9703 = vpop.f32.mrb[0].mxu0
      %9704 = vmatprep.mubr.bf16.mxu0 0
      %9705 = vmatmul.mubr.bf16.gmra.mrb[0].mxu0 %v8705
      %v9706 = vpop.f32.mrb[0].mxu0
      %v9707 = vadd.f32 %v9546, %v9706
      %v9708 = vpop.f32.mrb[0].mxu0
      %v9709 = vpop.f32.mrb[0].mxu0
      %v9710 = vadd.f32 %v9549, %v9709
      %v9711 = vpop.f32.mrb[0].mxu0
      %9712 = vmatprep.mubr.bf16.mxu0 0
      %9713 = vmatmul.mubr.bf16.gmra.mrb[0].mxu0 %v8708
      %v9714 = vpop.f32.mrb[0].mxu0
      %v9715 = vadd.f32 %v9554, %v9714
      %v9716 = vpop.f32.mrb[0].mxu0
      %v9717 = vpop.f32.mrb[0].mxu0
      %v9718 = vadd.f32 %v9557, %v9717
      %v9719 = vpop.f32.mrb[0].mxu0
      %9720 = vmatprep.mubr.bf16.mxu0 0
      %9721 = vmatmul.mubr.bf16.gmra.mrb[0].mxu0 %v8711
      %v9722 = vpop.f32.mrb[0].mxu0
      %v9723 = vadd.f32 %v9562, %v9722
      %v9724 = vpop.f32.mrb[0].mxu0
      %v9725 = vpop.f32.mrb[0].mxu0
      %v9726 = vadd.f32 %v9565, %v9725
      %v9727 = vpop.f32.mrb[0].mxu0
      %9728 = vmatprep.mubr.bf16.mxu0 0
      %9729 = vmatmul.mubr.bf16.gmra.mrb[0].mxu0 %v8714
      %v9730 = vpop.f32.mrb[0].mxu0
      %v9731 = vadd.f32 %v9570, %v9730
      %v9732 = vpop.f32.mrb[0].mxu0
      %v9733 = vpop.f32.mrb[0].mxu0
      %v9734 = vadd.f32 %v9573, %v9733
      %v9735 = vpop.f32.mrb[0].mxu0
      %9736 = vmatprep.mubr.bf16.mxu0 0
      %9737 = vmatmul.mubr.bf16.gmra.mrb[0].mxu0 %v8717
      %v9738 = vpop.f32.mrb[0].mxu0
      %v9739 = vadd.f32 %v9578, %v9738
      %v9740 = vpop.f32.mrb[0].mxu0
      %v9741 = vpop.f32.mrb[0].mxu0
      %v9742 = vadd.f32 %v9581, %v9741
      %v9743 = vpop.f32.mrb[0].mxu0
      %9744 = vmatprep.mubr.bf16.mxu0 0
      %9745 = vmatmul.mubr.bf16.gmra.mrb[0].mxu0 %v8720
      %v9746 = vpop.f32.mrb[0].mxu0
      %v9747 = vadd.f32 %v9586, %v9746
      %v9748 = vpop.f32.mrb[0].mxu0
      %v9749 = vpop.f32.mrb[0].mxu0
      %v9750 = vadd.f32 %v9589, %v9749
      %v9751 = vpop.f32.mrb[0].mxu0
      %9752 = vmatprep.mubr.bf16.mxu0 0
      %9753 = vmatmul.mubr.bf16.gmra.mrb[0].mxu0 %v8723
      %v9754 = vpop.f32.mrb[0].mxu0
      %v9755 = vadd.f32 %v9594, %v9754
      %v9756 = vpop.f32.mrb[0].mxu0
      %v9757 = vpop.f32.mrb[0].mxu0
      %v9758 = vadd.f32 %v9597, %v9757
      %v9759 = vpop.f32.mrb[0].mxu0
      %9760 = vmatprep.mubr.bf16.mxu0 0
      %9761 = vmatmul.mubr.bf16.gmra.mrb[0].mxu0 %v8726
      %v9762 = vpop.f32.mrb[0].mxu0
      %v9763 = vadd.f32 %v9602, %v9762
      %v9764 = vpop.f32.mrb[0].mxu0
      %v9765 = vpop.f32.mrb[0].mxu0
      %v9766 = vadd.f32 %v9605, %v9765
      %v9767 = vpop.f32.mrb[0].mxu0
      %9768 = vmatprep.mubr.bf16.mxu0 0
      %9769 = vmatmul.mubr.bf16.gmra.mrb[0].mxu0 %v8729
      %v9770 = vpop.f32.mrb[0].mxu0
      %v9771 = vadd.f32 %v9610, %v9770
      %v9772 = vpop.f32.mrb[0].mxu0
      %v9773 = vpop.f32.mrb[0].mxu0
      %v9774 = vadd.f32 %v9613, %v9773
      %v9775 = vpop.f32.mrb[0].mxu0
      %9776 = vmatprep.mubr.bf16.mxu0 0
      %9777 = vmatmul.mubr.bf16.gmra.mrb[0].mxu0 %v8732
      %v9778 = vpop.f32.mrb[0].mxu0
      %v9779 = vadd.f32 %v9618, %v9778
      %v9780 = vpop.f32.mrb[0].mxu0
      %v9781 = vpop.f32.mrb[0].mxu0
      %v9782 = vadd.f32 %v9621, %v9781
      %v9783 = vpop.f32.mrb[0].mxu0
      %9784 = vmatprep.mubr.bf16.mxu0 0
      %9785 = vmatmul.mubr.bf16.gmra.mrb[0].mxu0 %v8735
      %v9786 = vpop.f32.mrb[0].mxu0
      %v9787 = vadd.f32 %v9626, %v9786
      %v9788 = vpop.f32.mrb[0].mxu0
      %v9789 = vpop.f32.mrb[0].mxu0
      %v9790 = vadd.f32 %v9629, %v9789
      %v9791 = vpop.f32.mrb[0].mxu0
      %9792 = vmatprep.mubr.bf16.mxu0 0
      %9793 = vmatmul.mubr.bf16.gmra.mrb[0].mxu0 %v8738
      %v9794 = vpop.f32.mrb[0].mxu0
      %v9795 = vadd.f32 %v9634, %v9794
      %v9796 = vpop.f32.mrb[0].mxu0
      %v9797 = vpop.f32.mrb[0].mxu0
      %v9798 = vadd.f32 %v9637, %v9797
      %v9799 = vpop.f32.mrb[0].mxu0
      %9800 = vmatprep.mubr.bf16.mxu0 0
      %9801 = vmatmul.mubr.bf16.gmra.mrb[0].mxu0 %v8741
      %v9802 = vpop.f32.mrb[0].mxu0
      %v9803 = vadd.f32 %v9642, %v9802
      %v9804 = vpop.f32.mrb[0].mxu0
      %v9805 = vpop.f32.mrb[0].mxu0
      %v9806 = vadd.f32 %v9645, %v9805
      %v9807 = vpop.f32.mrb[0].mxu0
      %9808 = vmatprep.mubr.bf16.mxu0 0
      %9809 = vmatmul.mubr.bf16.gmra.mrb[0].mxu0 %v8744
      %v9810 = vpop.f32.mrb[0].mxu0
      %v9811 = vadd.f32 %v9650, %v9810
      %v9812 = vpop.f32.mrb[0].mxu0
      %v9813 = vpop.f32.mrb[0].mxu0
      %v9814 = vadd.f32 %v9653, %v9813
      %v9815 = vpop.f32.mrb[0].mxu0
      %9816 = vmatprep.mubr.bf16.mxu0 0
      %9817 = vmatmul.mubr.bf16.gmra.mrb[0].mxu0 %v8747
      %v9818 = vpop.f32.mrb[0].mxu0
      %v9819 = vadd.f32 %v9658, %v9818
      %v9820 = vpop.f32.mrb[0].mxu0
      %v9821 = vpop.f32.mrb[0].mxu0
      %v9822 = vadd.f32 %v9661, %v9821
      %v9823 = vpop.f32.mrb[0].mxu0
      %9824 = vdwg.mxu0
      %v9825 = vld [vmem:[%s2780] sm:$0xff]
      %v9826 = vld [vmem:[%s2780 + $0x8] sm:$0xff]
      %v9827 = vld [vmem:[%s2780 + $0x10] sm:$0xff]
      %v9828 = vld [vmem:[%s2780 + $0x18] sm:$0xff]
      %v9829 = vld [vmem:[%s2780 + $0x20] sm:$0xff]
      %v9830 = vld [vmem:[%s2780 + $0x28] sm:$0xff]
      %v9831 = vld [vmem:[%s2780 + $0x30] sm:$0xff]
      %v9832 = vld [vmem:[%s2780 + $0x38] sm:$0xff]
      %v9833 = vld [vmem:[%s2780 + $0x40] sm:$0xff]
      %v9834 = vld [vmem:[%s2780 + $0x48] sm:$0xff]
      %v9835 = vld [vmem:[%s2780 + $0x50] sm:$0xff]
      %v9836 = vld [vmem:[%s2780 + $0x58] sm:$0xff]
      %v9837 = vld [vmem:[%s2780 + $0x60] sm:$0xff]
      %v9838 = vld [vmem:[%s2780 + $0x68] sm:$0xff]
      %v9839 = vld [vmem:[%s2780 + $0x70] sm:$0xff]
      %v9840 = vld [vmem:[%s2780 + $0x78] sm:$0xff]
      %v9841 = vld [vmem:[%s2780 + $0x80] sm:$0xff]
      %v9842 = vld [vmem:[%s2780 + $0x88] sm:$0xff]
      %v9843 = vld [vmem:[%s2780 + $0x90] sm:$0xff]
      %v9844 = vld [vmem:[%s2780 + $0x98] sm:$0xff]
      %v9845 = vld [vmem:[%s2780 + $0xa0] sm:$0xff]
      %v9846 = vld [vmem:[%s2780 + $0xa8] sm:$0xff]
      %v9847 = vld [vmem:[%s2780 + $0xb0] sm:$0xff]
      %v9848 = vld [vmem:[%s2780 + $0xb8] sm:$0xff]
      %v9849 = vld [vmem:[%s2780 + $0xc0] sm:$0xff]
      %v9850 = vld [vmem:[%s2780 + $0xc8] sm:$0xff]
      %v9851 = vld [vmem:[%s2780 + $0xd0] sm:$0xff]
      %v9852 = vld [vmem:[%s2780 + $0xd8] sm:$0xff]
      %v9853 = vld [vmem:[%s2780 + $0xe0] sm:$0xff]
      %v9854 = vld [vmem:[%s2780 + $0xe8] sm:$0xff]
      %v9855 = vld [vmem:[%s2780 + $0xf0] sm:$0xff]
      %v9856 = vld [vmem:[%s2780 + $0xf8] sm:$0xff]
      %v9857 = vld [vmem:[%s2780 + $0x100] sm:$0xff]
      %v9858 = vld [vmem:[%s2780 + $0x108] sm:$0xff]
      %v9859 = vld [vmem:[%s2780 + $0x110] sm:$0xff]
      %v9860 = vld [vmem:[%s2780 + $0x118] sm:$0xff]
      %v9861 = vld [vmem:[%s2780 + $0x120] sm:$0xff]
      %v9862 = vld [vmem:[%s2780 + $0x128] sm:$0xff]
      %v9863 = vld [vmem:[%s2780 + $0x130] sm:$0xff]
      %v9864 = vld [vmem:[%s2780 + $0x138] sm:$0xff]
      %v9865 = vld [vmem:[%s2780 + $0x140] sm:$0xff]
      %v9866 = vld [vmem:[%s2780 + $0x148] sm:$0xff]
      %v9867 = vld [vmem:[%s2780 + $0x150] sm:$0xff]
      %v9868 = vld [vmem:[%s2780 + $0x158] sm:$0xff]
      %v9869 = vld [vmem:[%s2780 + $0x160] sm:$0xff]
      %v9870 = vld [vmem:[%s2780 + $0x168] sm:$0xff]
      %v9871 = vld [vmem:[%s2780 + $0x170] sm:$0xff]
      %v9872 = vld [vmem:[%s2780 + $0x178] sm:$0xff]
      %s9873 = scalar_lea.vmem %s514, 384
      %v9874 = vld [vmem:[%s9873] sm:$0xf]
      %v9875 = vld [vmem:[%s9873 + $0x4] sm:$0xf]
      %v9876 = vld [vmem:[%s9873 + $0x8] sm:$0xf]
      %v9877 = vld [vmem:[%s9873 + $0xc] sm:$0xf]
      %v9878 = vld [vmem:[%s9873 + $0x10] sm:$0xf]
      %v9879 = vld [vmem:[%s9873 + $0x14] sm:$0xf]
      %v9880 = vld [vmem:[%s9873 + $0x18] sm:$0xf]
      %v9881 = vld [vmem:[%s9873 + $0x1c] sm:$0xf]
      %v9882 = vld [vmem:[%s9873 + $0x20] sm:$0xf]
      %v9883 = vld [vmem:[%s9873 + $0x24] sm:$0xf]
      %v9884 = vld [vmem:[%s9873 + $0x28] sm:$0xf]
      %v9885 = vld [vmem:[%s9873 + $0x2c] sm:$0xf]
      %v9886 = vld [vmem:[%s9873 + $0x30] sm:$0xf]
      %v9887 = vld [vmem:[%s9873 + $0x34] sm:$0xf]
      %v9888 = vld [vmem:[%s9873 + $0x38] sm:$0xf]
      %v9889 = vld [vmem:[%s9873 + $0x3c] sm:$0xf]
      %v9890 = vld [vmem:[%s9873 + $0x40] sm:$0xf]
      %v9891 = vld [vmem:[%s9873 + $0x44] sm:$0xf]
      %v9892 = vld [vmem:[%s9873 + $0x48] sm:$0xf]
      %v9893 = vld [vmem:[%s9873 + $0x4c] sm:$0xf]
      %v9894 = vld [vmem:[%s9873 + $0x50] sm:$0xf]
      %v9895 = vld [vmem:[%s9873 + $0x54] sm:$0xf]
      %v9896 = vld [vmem:[%s9873 + $0x58] sm:$0xf]
      %v9897 = vld [vmem:[%s9873 + $0x5c] sm:$0xf]
      %v9898 = vld [vmem:[%s9873 + $0x60] sm:$0xf]
      %v9899 = vld [vmem:[%s9873 + $0x64] sm:$0xf]
      %v9900 = vld [vmem:[%s9873 + $0x68] sm:$0xf]
      %v9901 = vld [vmem:[%s9873 + $0x6c] sm:$0xf]
      %v9902 = vld [vmem:[%s9873 + $0x70] sm:$0xf]
      %v9903 = vld [vmem:[%s9873 + $0x74] sm:$0xf]
      %v9904 = vld [vmem:[%s9873 + $0x78] sm:$0xf]
      %v9905 = vld [vmem:[%s9873 + $0x7c] sm:$0xf]
      %v9906 = vld [vmem:[%s9873 + $0x80] sm:$0xf]
      %v9907 = vld [vmem:[%s9873 + $0x84] sm:$0xf]
      %v9908 = vld [vmem:[%s9873 + $0x88] sm:$0xf]
      %v9909 = vld [vmem:[%s9873 + $0x8c] sm:$0xf]
      %v9910 = vld [vmem:[%s9873 + $0x90] sm:$0xf]
      %v9911 = vld [vmem:[%s9873 + $0x94] sm:$0xf]
      %v9912 = vld [vmem:[%s9873 + $0x98] sm:$0xf]
      %v9913 = vld [vmem:[%s9873 + $0x9c] sm:$0xf]
      %v9914 = vld [vmem:[%s9873 + $0xa0] sm:$0xf]
      %v9915 = vld [vmem:[%s9873 + $0xa4] sm:$0xf]
      %v9916 = vld [vmem:[%s9873 + $0xa8] sm:$0xf]
      %v9917 = vld [vmem:[%s9873 + $0xac] sm:$0xf]
      %v9918 = vld [vmem:[%s9873 + $0xb0] sm:$0xf]
      %v9919 = vld [vmem:[%s9873 + $0xb4] sm:$0xf]
      %v9920 = vld [vmem:[%s9873 + $0xb8] sm:$0xf]
      %v9921 = vld [vmem:[%s9873 + $0xbc] sm:$0xf]
      %v9970 = vunpack.c.l.b16 %v9874
      %v9971 = vunpack.c.l.b16 %v9875
      %v9972 = vunpack.c.l.b16 %v9876
      %v9973 = vunpack.c.l.b16 %v9877
      %v9974 = vunpack.c.l.b16 %v9878
      %v9975 = vunpack.c.l.b16 %v9879
      %v9976 = vunpack.c.l.b16 %v9880
      %v9977 = vunpack.c.l.b16 %v9881
      %v9978 = vunpack.c.l.b16 %v9882
      %v9979 = vunpack.c.l.b16 %v9883
      %v9980 = vunpack.c.l.b16 %v9884
      %v9981 = vunpack.c.l.b16 %v9885
      %v9982 = vunpack.c.l.b16 %v9886
      %v9983 = vunpack.c.l.b16 %v9887
      %v9984 = vunpack.c.l.b16 %v9888
      %v9985 = vunpack.c.l.b16 %v9889
      %v9986 = vunpack.c.l.b16 %v9890
      %v9987 = vunpack.c.l.b16 %v9891
      %v9988 = vunpack.c.l.b16 %v9892
      %v9989 = vunpack.c.l.b16 %v9893
      %v9990 = vunpack.c.l.b16 %v9894
      %v9991 = vunpack.c.l.b16 %v9895
      %v9992 = vunpack.c.l.b16 %v9896
      %v9993 = vunpack.c.l.b16 %v9897
      %v9994 = vunpack.c.l.b16 %v9898
      %v9995 = vunpack.c.l.b16 %v9899
      %v9996 = vunpack.c.l.b16 %v9900
      %v9997 = vunpack.c.l.b16 %v9901
      %v9998 = vunpack.c.l.b16 %v9902
      %v9999 = vunpack.c.l.b16 %v9903
      %v10000 = vunpack.c.l.b16 %v9904
      %v10001 = vunpack.c.l.b16 %v9905
      %v10002 = vunpack.c.l.b16 %v9906
      %v10003 = vunpack.c.l.b16 %v9907
      %v10004 = vunpack.c.l.b16 %v9908
      %v10005 = vunpack.c.l.b16 %v9909
      %v10006 = vunpack.c.l.b16 %v9910
      %v10007 = vunpack.c.l.b16 %v9911
      %v10008 = vunpack.c.l.b16 %v9912
      %v10009 = vunpack.c.l.b16 %v9913
      %v10010 = vunpack.c.l.b16 %v9914
      %v10011 = vunpack.c.l.b16 %v9915
      %v10012 = vunpack.c.l.b16 %v9916
      %v10013 = vunpack.c.l.b16 %v9917
      %v10014 = vunpack.c.l.b16 %v9918
      %v10015 = vunpack.c.l.b16 %v9919
      %v10016 = vunpack.c.l.b16 %v9920
      %v10017 = vunpack.c.l.b16 %v9921
      %v10018 = vpack.c.b16 %v9971, %v9970
      %v10019 = vpack.c.b16 %v9973, %v9972
      %v10020 = vpack.c.b16 %v9975, %v9974
      %v10021 = vpack.c.b16 %v9977, %v9976
      %v10022 = vpack.c.b16 %v9979, %v9978
      %v10023 = vpack.c.b16 %v9981, %v9980
      %v10024 = vpack.c.b16 %v9983, %v9982
      %v10025 = vpack.c.b16 %v9985, %v9984
      %v10026 = vpack.c.b16 %v9987, %v9986
      %v10027 = vpack.c.b16 %v9989, %v9988
      %v10028 = vpack.c.b16 %v9991, %v9990
      %v10029 = vpack.c.b16 %v9993, %v9992
      %v10030 = vpack.c.b16 %v9995, %v9994
      %v10031 = vpack.c.b16 %v9997, %v9996
      %v10032 = vpack.c.b16 %v9999, %v9998
      %v10033 = vpack.c.b16 %v10001, %v10000
      %v10034 = vpack.c.b16 %v10003, %v10002
      %v10035 = vpack.c.b16 %v10005, %v10004
      %v10036 = vpack.c.b16 %v10007, %v10006
      %v10037 = vpack.c.b16 %v10009, %v10008
      %v10038 = vpack.c.b16 %v10011, %v10010
      %v10039 = vpack.c.b16 %v10013, %v10012
      %v10040 = vpack.c.b16 %v10015, %v10014
      %v10041 = vpack.c.b16 %v10017, %v10016
      %10066 = vmatprep.subr.bf16.mxu0 0
      %10067 = vmatpush1.bf16.msra.mxu0 %v10018
      %10068 = vmatprep.subr.bf16.mxu0 0
      %10069 = vmatpush1.bf16.msra.mxu0 %v10019
      %10070 = vmatprep.subr.bf16.mxu0 0
      %10071 = vmatpush1.bf16.msra.mxu0 %v10020
      %10072 = vmatprep.subr.bf16.mxu0 0
      %10073 = vmatpush1.bf16.msra.mxu0 %v10021
      %10074 = vmatprep.subr.bf16.mxu0 0
      %10075 = vmatpush1.bf16.msra.mxu0 %v10022
      %10076 = vmatprep.subr.bf16.mxu0 0
      %10077 = vmatpush1.bf16.msra.mxu0 %v10023
      %10078 = vmatprep.subr.bf16.mxu0 0
      %10079 = vmatpush1.bf16.msra.mxu0 %v10024
      %10080 = vmatprep.subr.bf16.mxu0 0
      %10081 = vmatpush1.bf16.msra.mxu0 %v10025
      %10082 = vmatprep.subr.bf16.mxu0 0
      %10083 = vmatpush1.bf16.msra.mxu0 %v10026
      %10084 = vmatprep.subr.bf16.mxu0 0
      %10085 = vmatpush1.bf16.msra.mxu0 %v10027
      %10086 = vmatprep.subr.bf16.mxu0 0
      %10087 = vmatpush1.bf16.msra.mxu0 %v10028
      %10088 = vmatprep.subr.bf16.mxu0 0
      %10089 = vmatpush1.bf16.msra.mxu0 %v10029
      %10090 = vmatprep.subr.bf16.mxu0 0
      %10091 = vmatpush1.bf16.msra.mxu0 %v10030
      %10092 = vmatprep.subr.bf16.mxu0 0
      %10093 = vmatpush1.bf16.msra.mxu0 %v10031
      %10094 = vmatprep.subr.bf16.mxu0 0
      %10095 = vmatpush1.bf16.msra.mxu0 %v10032
      %10096 = vmatprep.subr.bf16.mxu0 0
      %10097 = vmatpush1.bf16.msra.mxu0 %v10033
      %10098 = vmatprep.mubr.bf16.mxu0 %v9826
      %10099 = vmatmul.mubr.bf16.gmra.mrb[0].mxu0 %v9825
      %v10100 = vpop.f32.mrb[0].mxu0
      %v10101 = vadd.f32 0.0, %v10100
      %v10102 = vpop.f32.mrb[0].mxu0
      %v10103 = vpop.f32.mrb[0].mxu0
      %v10104 = vadd.f32 0.0, %v10103
      %v10105 = vpop.f32.mrb[0].mxu0
      %10106 = vmatprep.mubr.bf16.mxu0 %v9829
      %10107 = vmatmul.mubr.bf16.gmra.mrb[0].mxu0 %v9828
      %v10108 = vpop.f32.mrb[0].mxu0
      %v10109 = vadd.f32 0.0, %v10108
      %v10110 = vpop.f32.mrb[0].mxu0
      %v10111 = vpop.f32.mrb[0].mxu0
      %v10112 = vadd.f32 0.0, %v10111
      %v10113 = vpop.f32.mrb[0].mxu0
      %10114 = vmatprep.mubr.bf16.mxu0 %v9832
      %10115 = vmatmul.mubr.bf16.gmra.mrb[0].mxu0 %v9831
      %v10116 = vpop.f32.mrb[0].mxu0
      %v10117 = vadd.f32 0.0, %v10116
      %v10118 = vpop.f32.mrb[0].mxu0
      %v10119 = vpop.f32.mrb[0].mxu0
      %v10120 = vadd.f32 0.0, %v10119
      %v10121 = vpop.f32.mrb[0].mxu0
      %10122 = vmatprep.mubr.bf16.mxu0 %v9835
      %10123 = vmatmul.mubr.bf16.gmra.mrb[0].mxu0 %v9834
      %v10124 = vpop.f32.mrb[0].mxu0
      %v10125 = vadd.f32 0.0, %v10124
      %v10126 = vpop.f32.mrb[0].mxu0
      %v10127 = vpop.f32.mrb[0].mxu0
      %v10128 = vadd.f32 0.0, %v10127
      %v10129 = vpop.f32.mrb[0].mxu0
      %10130 = vmatprep.mubr.bf16.mxu0 %v9838
      %10131 = vmatmul.mubr.bf16.gmra.mrb[0].mxu0 %v9837
      %v10132 = vpop.f32.mrb[0].mxu0
      %v10133 = vadd.f32 0.0, %v10132
      %v10134 = vpop.f32.mrb[0].mxu0
      %v10135 = vpop.f32.mrb[0].mxu0
      %v10136 = vadd.f32 0.0, %v10135
      %v10137 = vpop.f32.mrb[0].mxu0
      %10138 = vmatprep.mubr.bf16.mxu0 %v9841
      %10139 = vmatmul.mubr.bf16.gmra.mrb[0].mxu0 %v9840
      %v10140 = vpop.f32.mrb[0].mxu0
      %v10141 = vadd.f32 0.0, %v10140
      %v10142 = vpop.f32.mrb[0].mxu0
      %v10143 = vpop.f32.mrb[0].mxu0
      %v10144 = vadd.f32 0.0, %v10143
      %v10145 = vpop.f32.mrb[0].mxu0
      %10146 = vmatprep.mubr.bf16.mxu0 %v9844
      %10147 = vmatmul.mubr.bf16.gmra.mrb[0].mxu0 %v9843
      %v10148 = vpop.f32.mrb[0].mxu0
      %v10149 = vadd.f32 0.0, %v10148
      %v10150 = vpop.f32.mrb[0].mxu0
      %v10151 = vpop.f32.mrb[0].mxu0
      %v10152 = vadd.f32 0.0, %v10151
      %v10153 = vpop.f32.mrb[0].mxu0
      %10154 = vmatprep.mubr.bf16.mxu0 %v9847
      %10155 = vmatmul.mubr.bf16.gmra.mrb[0].mxu0 %v9846
      %v10156 = vpop.f32.mrb[0].mxu0
      %v10157 = vadd.f32 0.0, %v10156
      %v10158 = vpop.f32.mrb[0].mxu0
      %v10159 = vpop.f32.mrb[0].mxu0
      %v10160 = vadd.f32 0.0, %v10159
      %v10161 = vpop.f32.mrb[0].mxu0
      %10162 = vmatprep.mubr.bf16.mxu0 %v9850
      %10163 = vmatmul.mubr.bf16.gmra.mrb[0].mxu0 %v9849
      %v10164 = vpop.f32.mrb[0].mxu0
      %v10165 = vadd.f32 0.0, %v10164
      %v10166 = vpop.f32.mrb[0].mxu0
      %v10167 = vpop.f32.mrb[0].mxu0
      %v10168 = vadd.f32 0.0, %v10167
      %v10169 = vpop.f32.mrb[0].mxu0
      %10170 = vmatprep.mubr.bf16.mxu0 %v9853
      %10171 = vmatmul.mubr.bf16.gmra.mrb[0].mxu0 %v9852
      %v10172 = vpop.f32.mrb[0].mxu0
      %v10173 = vadd.f32 0.0, %v10172
      %v10174 = vpop.f32.mrb[0].mxu0
      %v10175 = vpop.f32.mrb[0].mxu0
      %v10176 = vadd.f32 0.0, %v10175
      %v10177 = vpop.f32.mrb[0].mxu0
      %10178 = vmatprep.mubr.bf16.mxu0 %v9856
      %10179 = vmatmul.mubr.bf16.gmra.mrb[0].mxu0 %v9855
      %v10180 = vpop.f32.mrb[0].mxu0
      %v10181 = vadd.f32 0.0, %v10180
      %v10182 = vpop.f32.mrb[0].mxu0
      %v10183 = vpop.f32.mrb[0].mxu0
      %v10184 = vadd.f32 0.0, %v10183
      %v10185 = vpop.f32.mrb[0].mxu0
      %10186 = vmatprep.mubr.bf16.mxu0 %v9859
      %10187 = vmatmul.mubr.bf16.gmra.mrb[0].mxu0 %v9858
      %v10188 = vpop.f32.mrb[0].mxu0
      %v10189 = vadd.f32 0.0, %v10188
      %v10190 = vpop.f32.mrb[0].mxu0
      %v10191 = vpop.f32.mrb[0].mxu0
      %v10192 = vadd.f32 0.0, %v10191
      %v10193 = vpop.f32.mrb[0].mxu0
      %10194 = vmatprep.mubr.bf16.mxu0 %v9862
      %10195 = vmatmul.mubr.bf16.gmra.mrb[0].mxu0 %v9861
      %v10196 = vpop.f32.mrb[0].mxu0
      %v10197 = vadd.f32 0.0, %v10196
      %v10198 = vpop.f32.mrb[0].mxu0
      %v10199 = vpop.f32.mrb[0].mxu0
      %v10200 = vadd.f32 0.0, %v10199
      %v10201 = vpop.f32.mrb[0].mxu0
      %10202 = vmatprep.mubr.bf16.mxu0 %v9865
      %10203 = vmatmul.mubr.bf16.gmra.mrb[0].mxu0 %v9864
      %v10204 = vpop.f32.mrb[0].mxu0
      %v10205 = vadd.f32 0.0, %v10204
      %v10206 = vpop.f32.mrb[0].mxu0
      %v10207 = vpop.f32.mrb[0].mxu0
      %v10208 = vadd.f32 0.0, %v10207
      %v10209 = vpop.f32.mrb[0].mxu0
      %10210 = vmatprep.mubr.bf16.mxu0 %v9868
      %10211 = vmatmul.mubr.bf16.gmra.mrb[0].mxu0 %v9867
      %v10212 = vpop.f32.mrb[0].mxu0
      %v10213 = vadd.f32 0.0, %v10212
      %v10214 = vpop.f32.mrb[0].mxu0
      %v10215 = vpop.f32.mrb[0].mxu0
      %v10216 = vadd.f32 0.0, %v10215
      %v10217 = vpop.f32.mrb[0].mxu0
      %10218 = vmatprep.mubr.bf16.mxu0 %v9871
      %10219 = vmatmul.mubr.bf16.gmra.mrb[0].mxu0 %v9870
      %v10220 = vpop.f32.mrb[0].mxu0
      %v10221 = vadd.f32 0.0, %v10220
      %v10222 = vpop.f32.mrb[0].mxu0
      %v10223 = vpop.f32.mrb[0].mxu0
      %v10224 = vadd.f32 0.0, %v10223
      %v10225 = vpop.f32.mrb[0].mxu0
      %10226 = vdwg.mxu0
      %10227 = vmatprep.subr.bf16.mxu0 0
      %10228 = vmatpush1.bf16.msra.mxu0 %v10034
      %10229 = vmatprep.subr.bf16.mxu0 0
      %10230 = vmatpush1.bf16.msra.mxu0 %v10035
      %10231 = vmatprep.subr.bf16.mxu0 0
      %10232 = vmatpush1.bf16.msra.mxu0 %v10036
      %10233 = vmatprep.subr.bf16.mxu0 0
      %10234 = vmatpush1.bf16.msra.mxu0 %v10037
      %10235 = vmatprep.subr.bf16.mxu0 0
      %10236 = vmatpush1.bf16.msra.mxu0 %v10038
      %10237 = vmatprep.subr.bf16.mxu0 0
      %10238 = vmatpush1.bf16.msra.mxu0 %v10039
      %10239 = vmatprep.subr.bf16.mxu0 0
      %10240 = vmatpush1.bf16.msra.mxu0 %v10040
      %10241 = vmatprep.subr.bf16.mxu0 0
      %10242 = vmatpush1.bf16.msra.mxu0 %v10041
      %10243 = vmatprep.subr.bf16.mxu0 0
      %10244 = vmatpush1.bf16.msra.mxu0 0
      %10245 = vmatprep.subr.bf16.mxu0 0
      %10246 = vmatpush1.bf16.msra.mxu0 0
      %10247 = vmatprep.subr.bf16.mxu0 0
      %10248 = vmatpush1.bf16.msra.mxu0 0
      %10249 = vmatprep.subr.bf16.mxu0 0
      %10250 = vmatpush1.bf16.msra.mxu0 0
      %10251 = vmatprep.subr.bf16.mxu0 0
      %10252 = vmatpush1.bf16.msra.mxu0 0
      %10253 = vmatprep.subr.bf16.mxu0 0
      %10254 = vmatpush1.bf16.msra.mxu0 0
      %10255 = vmatprep.subr.bf16.mxu0 0
      %10256 = vmatpush1.bf16.msra.mxu0 0
      %10257 = vmatprep.subr.bf16.mxu0 0
      %10258 = vmatpush1.bf16.msra.mxu0 0
      %10259 = vmatprep.mubr.bf16.mxu0 0
      %10260 = vmatmul.mubr.bf16.gmra.mrb[0].mxu0 %v9827
      %v10261 = vpop.f32.mrb[0].mxu0
      %v10262 = vadd.f32 %v10101, %v10261
      %v10263 = vpop.f32.mrb[0].mxu0
      %v10264 = vpop.f32.mrb[0].mxu0
      %v10265 = vadd.f32 %v10104, %v10264
      %v10266 = vpop.f32.mrb[0].mxu0
      %10267 = vmatprep.mubr.bf16.mxu0 0
      %10268 = vmatmul.mubr.bf16.gmra.mrb[0].mxu0 %v9830
      %v10269 = vpop.f32.mrb[0].mxu0
      %v10270 = vadd.f32 %v10109, %v10269
      %v10271 = vpop.f32.mrb[0].mxu0
      %v10272 = vpop.f32.mrb[0].mxu0
      %v10273 = vadd.f32 %v10112, %v10272
      %v10274 = vpop.f32.mrb[0].mxu0
      %10275 = vmatprep.mubr.bf16.mxu0 0
      %10276 = vmatmul.mubr.bf16.gmra.mrb[0].mxu0 %v9833
      %v10277 = vpop.f32.mrb[0].mxu0
      %v10278 = vadd.f32 %v10117, %v10277
      %v10279 = vpop.f32.mrb[0].mxu0
      %v10280 = vpop.f32.mrb[0].mxu0
      %v10281 = vadd.f32 %v10120, %v10280
      %v10282 = vpop.f32.mrb[0].mxu0
      %10283 = vmatprep.mubr.bf16.mxu0 0
      %10284 = vmatmul.mubr.bf16.gmra.mrb[0].mxu0 %v9836
      %v10285 = vpop.f32.mrb[0].mxu0
      %v10286 = vadd.f32 %v10125, %v10285
      %v10287 = vpop.f32.mrb[0].mxu0
      %v10288 = vpop.f32.mrb[0].mxu0
      %v10289 = vadd.f32 %v10128, %v10288
      %v10290 = vpop.f32.mrb[0].mxu0
      %10291 = vmatprep.mubr.bf16.mxu0 0
      %10292 = vmatmul.mubr.bf16.gmra.mrb[0].mxu0 %v9839
      %v10293 = vpop.f32.mrb[0].mxu0
      %v10294 = vadd.f32 %v10133, %v10293
      %v10295 = vpop.f32.mrb[0].mxu0
      %v10296 = vpop.f32.mrb[0].mxu0
      %v10297 = vadd.f32 %v10136, %v10296
      %v10298 = vpop.f32.mrb[0].mxu0
      %10299 = vmatprep.mubr.bf16.mxu0 0
      %10300 = vmatmul.mubr.bf16.gmra.mrb[0].mxu0 %v9842
      %v10301 = vpop.f32.mrb[0].mxu0
      %v10302 = vadd.f32 %v10141, %v10301
      %v10303 = vpop.f32.mrb[0].mxu0
      %v10304 = vpop.f32.mrb[0].mxu0
      %v10305 = vadd.f32 %v10144, %v10304
      %v10306 = vpop.f32.mrb[0].mxu0
      %10307 = vmatprep.mubr.bf16.mxu0 0
      %10308 = vmatmul.mubr.bf16.gmra.mrb[0].mxu0 %v9845
      %v10309 = vpop.f32.mrb[0].mxu0
      %v10310 = vadd.f32 %v10149, %v10309
      %v10311 = vpop.f32.mrb[0].mxu0
      %v10312 = vpop.f32.mrb[0].mxu0
      %v10313 = vadd.f32 %v10152, %v10312
      %v10314 = vpop.f32.mrb[0].mxu0
      %10315 = vmatprep.mubr.bf16.mxu0 0
      %10316 = vmatmul.mubr.bf16.gmra.mrb[0].mxu0 %v9848
      %v10317 = vpop.f32.mrb[0].mxu0
      %v10318 = vadd.f32 %v10157, %v10317
      %v10319 = vpop.f32.mrb[0].mxu0
      %v10320 = vpop.f32.mrb[0].mxu0
      %v10321 = vadd.f32 %v10160, %v10320
      %v10322 = vpop.f32.mrb[0].mxu0
      %10323 = vmatprep.mubr.bf16.mxu0 0
      %10324 = vmatmul.mubr.bf16.gmra.mrb[0].mxu0 %v9851
      %v10325 = vpop.f32.mrb[0].mxu0
      %v10326 = vadd.f32 %v10165, %v10325
      %v10327 = vpop.f32.mrb[0].mxu0
      %v10328 = vpop.f32.mrb[0].mxu0
      %v10329 = vadd.f32 %v10168, %v10328
      %v10330 = vpop.f32.mrb[0].mxu0
      %10331 = vmatprep.mubr.bf16.mxu0 0
      %10332 = vmatmul.mubr.bf16.gmra.mrb[0].mxu0 %v9854
      %v10333 = vpop.f32.mrb[0].mxu0
      %v10334 = vadd.f32 %v10173, %v10333
      %v10335 = vpop.f32.mrb[0].mxu0
      %v10336 = vpop.f32.mrb[0].mxu0
      %v10337 = vadd.f32 %v10176, %v10336
      %v10338 = vpop.f32.mrb[0].mxu0
      %10339 = vmatprep.mubr.bf16.mxu0 0
      %10340 = vmatmul.mubr.bf16.gmra.mrb[0].mxu0 %v9857
      %v10341 = vpop.f32.mrb[0].mxu0
      %v10342 = vadd.f32 %v10181, %v10341
      %v10343 = vpop.f32.mrb[0].mxu0
      %v10344 = vpop.f32.mrb[0].mxu0
      %v10345 = vadd.f32 %v10184, %v10344
      %v10346 = vpop.f32.mrb[0].mxu0
      %10347 = vmatprep.mubr.bf16.mxu0 0
      %10348 = vmatmul.mubr.bf16.gmra.mrb[0].mxu0 %v9860
      %v10349 = vpop.f32.mrb[0].mxu0
      %v10350 = vadd.f32 %v10189, %v10349
      %v10351 = vpop.f32.mrb[0].mxu0
      %v10352 = vpop.f32.mrb[0].mxu0
      %v10353 = vadd.f32 %v10192, %v10352
      %v10354 = vpop.f32.mrb[0].mxu0
      %10355 = vmatprep.mubr.bf16.mxu0 0
      %10356 = vmatmul.mubr.bf16.gmra.mrb[0].mxu0 %v9863
      %v10357 = vpop.f32.mrb[0].mxu0
      %v10358 = vadd.f32 %v10197, %v10357
      %v10359 = vpop.f32.mrb[0].mxu0
      %v10360 = vpop.f32.mrb[0].mxu0
      %v10361 = vadd.f32 %v10200, %v10360
      %v10362 = vpop.f32.mrb[0].mxu0
      %10363 = vmatprep.mubr.bf16.mxu0 0
      %10364 = vmatmul.mubr.bf16.gmra.mrb[0].mxu0 %v9866
      %v10365 = vpop.f32.mrb[0].mxu0
      %v10366 = vadd.f32 %v10205, %v10365
      %v10367 = vpop.f32.mrb[0].mxu0
      %v10368 = vpop.f32.mrb[0].mxu0
      %v10369 = vadd.f32 %v10208, %v10368
      %v10370 = vpop.f32.mrb[0].mxu0
      %10371 = vmatprep.mubr.bf16.mxu0 0
      %10372 = vmatmul.mubr.bf16.gmra.mrb[0].mxu0 %v9869
      %v10373 = vpop.f32.mrb[0].mxu0
      %v10374 = vadd.f32 %v10213, %v10373
      %v10375 = vpop.f32.mrb[0].mxu0
      %v10376 = vpop.f32.mrb[0].mxu0
      %v10377 = vadd.f32 %v10216, %v10376
      %v10378 = vpop.f32.mrb[0].mxu0
      %10379 = vmatprep.mubr.bf16.mxu0 0
      %10380 = vmatmul.mubr.bf16.gmra.mrb[0].mxu0 %v9872
      %v10381 = vpop.f32.mrb[0].mxu0
      %v10382 = vadd.f32 %v10221, %v10381
      %v10383 = vpop.f32.mrb[0].mxu0
      %v10384 = vpop.f32.mrb[0].mxu0
      %v10385 = vadd.f32 %v10224, %v10384
      %v10386 = vpop.f32.mrb[0].mxu0
      %10387 = vdwg.mxu0
      %v10388 = vadd.f32 %v9699, %v10262
      %v10389 = vadd.f32 %v9702, %v10265
      %v10390 = vadd.f32 %v9707, %v10270
      %v10391 = vadd.f32 %v9710, %v10273
      %v10392 = vadd.f32 %v9715, %v10278
      %v10393 = vadd.f32 %v9718, %v10281
      %v10394 = vadd.f32 %v9723, %v10286
      %v10395 = vadd.f32 %v9726, %v10289
      %v10396 = vadd.f32 %v9731, %v10294
      %v10397 = vadd.f32 %v9734, %v10297
      %v10398 = vadd.f32 %v9739, %v10302
      %v10399 = vadd.f32 %v9742, %v10305
      %v10400 = vadd.f32 %v9747, %v10310
      %v10401 = vadd.f32 %v9750, %v10313
      %v10402 = vadd.f32 %v9755, %v10318
      %v10403 = vadd.f32 %v9758, %v10321
      %v10404 = vadd.f32 %v9763, %v10326
      %v10405 = vadd.f32 %v9766, %v10329
      %v10406 = vadd.f32 %v9771, %v10334
      %v10407 = vadd.f32 %v9774, %v10337
      %v10408 = vadd.f32 %v9779, %v10342
      %v10409 = vadd.f32 %v9782, %v10345
      %v10410 = vadd.f32 %v9787, %v10350
      %v10411 = vadd.f32 %v9790, %v10353
      %v10412 = vadd.f32 %v9795, %v10358
      %v10413 = vadd.f32 %v9798, %v10361
      %v10414 = vadd.f32 %v9803, %v10366
      %v10415 = vadd.f32 %v9806, %v10369
      %v10416 = vadd.f32 %v9811, %v10374
      %v10417 = vadd.f32 %v9814, %v10377
      %v10418 = vadd.f32 %v9819, %v10382
      %v10419 = vadd.f32 %v9822, %v10385
      %v10420 = vld [vmem:[%s517] sm:$0x1]
      %v10422 = vlaneseq
      %v10423 = vshrl.u32 %v10422, 7
      %v10424 = vsub.s32 0, %v10423
      %v10425 = vrot.slane %v10420, %v10424
      %v10427 = vadd.f32 %v10388, %v10425
      %v10428 = vadd.f32 %v10389, %v10425
      %v10429 = vadd.f32 %v10390, %v10425
      %v10430 = vadd.f32 %v10391, %v10425
      %v10431 = vadd.f32 %v10392, %v10425
      %v10432 = vadd.f32 %v10393, %v10425
      %v10433 = vadd.f32 %v10394, %v10425
      %v10434 = vadd.f32 %v10395, %v10425
      %v10435 = vadd.f32 %v10396, %v10425
      %v10436 = vadd.f32 %v10397, %v10425
      %v10437 = vadd.f32 %v10398, %v10425
      %v10438 = vadd.f32 %v10399, %v10425
      %v10439 = vadd.f32 %v10400, %v10425
      %v10440 = vadd.f32 %v10401, %v10425
      %v10441 = vadd.f32 %v10402, %v10425
      %v10442 = vadd.f32 %v10403, %v10425
      %v10443 = vadd.f32 %v10404, %v10425
      %v10444 = vadd.f32 %v10405, %v10425
      %v10445 = vadd.f32 %v10406, %v10425
      %v10446 = vadd.f32 %v10407, %v10425
      %v10447 = vadd.f32 %v10408, %v10425
      %v10448 = vadd.f32 %v10409, %v10425
      %v10449 = vadd.f32 %v10410, %v10425
      %v10450 = vadd.f32 %v10411, %v10425
      %v10451 = vadd.f32 %v10412, %v10425
      %v10452 = vadd.f32 %v10413, %v10425
      %v10453 = vadd.f32 %v10414, %v10425
      %v10454 = vadd.f32 %v10415, %v10425
      %v10455 = vadd.f32 %v10416, %v10425
      %v10456 = vadd.f32 %v10417, %v10425
      %v10457 = vadd.f32 %v10418, %v10425
      %v10458 = vadd.f32 %v10419, %v10425
      %10459 = vst [vmem:[%s524] sm:$0xff] %v10427
      %10460 = vst [vmem:[%s524 + $0x8] sm:$0xff] %v10428
      %10461 = vst [vmem:[%s524 + $0x10] sm:$0xff] %v10429
      %10462 = vst [vmem:[%s524 + $0x18] sm:$0xff] %v10430
      %10463 = vst [vmem:[%s524 + $0x20] sm:$0xff] %v10431
      %10464 = vst [vmem:[%s524 + $0x28] sm:$0xff] %v10432
      %10465 = vst [vmem:[%s524 + $0x30] sm:$0xff] %v10433
      %10466 = vst [vmem:[%s524 + $0x38] sm:$0xff] %v10434
      %10467 = vst [vmem:[%s524 + $0x40] sm:$0xff] %v10435
      %10468 = vst [vmem:[%s524 + $0x48] sm:$0xff] %v10436
      %10469 = vst [vmem:[%s524 + $0x50] sm:$0xff] %v10437
      %10470 = vst [vmem:[%s524 + $0x58] sm:$0xff] %v10438
      %10471 = vst [vmem:[%s524 + $0x60] sm:$0xff] %v10439
      %10472 = vst [vmem:[%s524 + $0x68] sm:$0xff] %v10440
      %10473 = vst [vmem:[%s524 + $0x70] sm:$0xff] %v10441
      %10474 = vst [vmem:[%s524 + $0x78] sm:$0xff] %v10442
      %10475 = vst [vmem:[%s524 + $0x80] sm:$0xff] %v10443
      %10476 = vst [vmem:[%s524 + $0x88] sm:$0xff] %v10444
      %10477 = vst [vmem:[%s524 + $0x90] sm:$0xff] %v10445
      %10478 = vst [vmem:[%s524 + $0x98] sm:$0xff] %v10446
      %10479 = vst [vmem:[%s524 + $0xa0] sm:$0xff] %v10447
      %10480 = vst [vmem:[%s524 + $0xa8] sm:$0xff] %v10448
      %10481 = vst [vmem:[%s524 + $0xb0] sm:$0xff] %v10449
      %10482 = vst [vmem:[%s524 + $0xb8] sm:$0xff] %v10450
      %10483 = vst [vmem:[%s524 + $0xc0] sm:$0xff] %v10451
      %10484 = vst [vmem:[%s524 + $0xc8] sm:$0xff] %v10452
      %10485 = vst [vmem:[%s524 + $0xd0] sm:$0xff] %v10453
      %10486 = vst [vmem:[%s524 + $0xd8] sm:$0xff] %v10454
      %10487 = vst [vmem:[%s524 + $0xe0] sm:$0xff] %v10455
      %10488 = vst [vmem:[%s524 + $0xe8] sm:$0xff] %v10456
      %10489 = vst [vmem:[%s524 + $0xf0] sm:$0xff] %v10457
      %10490 = vst [vmem:[%s524 + $0xf8] sm:$0xff] %v10458
      %s10491 = smul.u32 %s25, 2
      %s10492 = sadd.s32 %s10491, %s26
      %p10493 = scmp.lt.s32.totalorder %s10492, 3
      %s10494 = scalar_select %p10493, %s10492, 3
      %s10495 = smul.addr %s10494, 32
      %s10496 = smul.addr %s10495, 8
      %s10497 = scalar_lea.vmem %s10, %s10496
      // Predicated region
      $region61: #{head_forward.1} parent=59 // pred_check
        %p10498 = pneg %p310
      $region62: #{head_forward.1} parent=59 // pred_check_branch
        %10500 = sbr.rel (%p10498) target = $region64
      $region63: #{head_forward.1} parent=59 // pred_region
        %s10501 = smul.u32 %s25, 2
        %s10502 = sadd.s32 %s10501, %s26
      $region64: #{head_forward.1} parent=59 // pred_fallthru
        _
    $region60: #{head_forward.1} parent=5 // pred_fallthru
      _
    %p10503 = scmp.le.s32.totalorder 2, %s16
    // Predicated region
    $region65: #{head_forward.1} parent=5 // pred_check
      %p10504 = pneg %p10503
    $region66: #{head_forward.1} parent=5 // pred_check_branch
      %10506 = sbr.rel (%p10504) target = $region68
    $region67: #{head_forward.1} parent=5 // pred_region
      %s10507 = ssub.s32 %s16, 2
      // Predicated region
      $region69: #{head_forward.1} parent=67 // pred_check
        %p10508 = pneg %p316
      $region70: #{head_forward.1} parent=67 // pred_check_branch
        %10510 = sbr.rel (%p10508) target = $region72
      $region71: #{head_forward.1} parent=67 // pred_region
        %s10511 = smul.u32 %s27, 2
        %s10512 = sadd.s32 %s10511, %s28
        %p10513 = scmp.lt.s32.totalorder %s10512, 3
        %s10514 = scalar_select %p10513, %s10512, 3
        %s10515 = smul.addr %s10514, 32
        %s10516 = smul.addr %s10515, 8
        %s10517 = scalar_lea.vmem %s10, %s10516
      $region72: #{head_forward.1} parent=67 // pred_fallthru
        _
    $region68: #{head_forward.1} parent=5 // pred_fallthru
      _
  $region6: #{head_forward.1} parent=0 // loop_footer
    %s20 = sadd.s32 1, %s16
  $region7: #{head_forward.1} parent=0 // loop_footer_branch
    %15 = sbr.rel target = $region3
  $region8: #{head_forward.1} parent=0 // loop_exit
    _

</llo_original>
